<compile_context>
chip_gen: v5e
topology: v5e:2x2
jax: 0.10.0
libtpu: 0.0.40
codegen_flags: <defaults>
</compile_context>

<pallas_src>
import functools

import jax
import jax.numpy as jnp
from jax.experimental import pallas as pl
from jax.experimental.pallas import tpu as pltpu

BN_EPS = 1e-5


# ---------------------------------------------------------------------------
# Pallas kernels
# ---------------------------------------------------------------------------

def _conv_bn_pool_kernel(xa_ref, xb_ref, w_ref, bias_ref, o_ref, patch_ref, *,
                         K, Cin, Hh, Wq):
  """Fused Conv3d(3^3, pad 1, stride 1) + folded BN + MaxPool3d(2) + ReLU.

  One (batch element, pooled depth slice) per grid step.

  xa_ref, xb_ref: (1, 2, 2, 2, Cin, Sp) bf16 - padded-depth blocks d and d+1
                  (together the 4-slice depth halo); dims are
                  (n, depth-in-block, h-parity, w-parity, channel, Hq*Wq+1).
  w_ref:    (Cout, K^3*Cin) bf16, BN scale folded, columns tap-major (dz,dy,dx,ci).
  bias_ref: (Cout, 1) f32 folded conv+BN bias.
  o_ref:    (1, 1, Cout, S) bf16 with S = Hh*Wq (one junk column per row).
  patch_ref: (K^3*Cin, 8*S) bf16 im2col staging for the 8 pool windows.
  """
  S = Hh * Wq

  # --- stage all 8 (dd, r, p) pool windows as full-width rows of one patch ---
  j = 0
  for dd in range(2):                 # conv depth slice inside the pooled pair
    for r in range(2):                # output row parity    (H pooling pair)
      for p in range(2):              # output column parity (W pooling pair)
        for dz in range(K):
          z = dd + dz                 # 0..3 across the two depth blocks
          src = xa_ref if z < 2 else xb_ref
          zz = z % 2
          for dy in range(K):
            rh, hoff = (r + dy) % 2, (r + dy) // 2
            for dx in range(K):
              rw, woff = (p + dx) % 2, (p + dx) // 2
              t = (dz * K + dy) * K + dx
              start = hoff * Wq + woff
              patch_ref[t * Cin:(t + 1) * Cin, j * S:(j + 1) * S] = (
                  src[0, zz, rh, rw, :, start:start + S])
        j += 1

  # --- ONE MXU matmul per step: (Cout, K^3*Cin) x (K^3*Cin, 8*S) -------------
  y = jnp.dot(w_ref[...], patch_ref[...], preferred_element_type=jnp.float32)

  # --- 2x2x2 max-pool = elementwise max over the 8 window slices (VPU) -------
  pooled = y[:, 0:S]
  for jj in range(1, 8):
    pooled = jnp.maximum(pooled, y[:, jj * S:(jj + 1) * S])

  # bias after the max is exact (constant over the pooled window); then ReLU.
  o_ref[0, 0] = jnp.maximum(pooled + bias_ref[...], 0.0).astype(o_ref.dtype)


def _pointwise_head_kernel(x_ref, w_ref, bias_ref, pw_ref, o_ref):
  """Conv3d(1x1x1) + folded BN + ReLU + AvgPool3d + flatten, whole batch.

  x_ref:  (Cin, N*S) bf16 ; w_ref: (Cout, Cin) bf16 ; bias_ref: (Cout, 1) f32
  pw_ref: (N*S, N) f32 block-diagonal average-pool weights
  o_ref:  (Cout, N) f32
  """
  y = jnp.dot(w_ref[...], x_ref[...], preferred_element_type=jnp.float32)
  y = jnp.maximum(y + bias_ref[...], 0.0)                        # (Cout, N*S)
  o_ref[...] = jnp.dot(y, pw_ref[...], preferred_element_type=jnp.float32)


# ---------------------------------------------------------------------------
# pallas_call wrappers
# ---------------------------------------------------------------------------

def conv_bn_pool_pallas(a, w_t, bias, *, K=3):
  """a: (N, D, Cin, H, W) bf16 -> (N, D//2, Cout, H//2, W//2) bf16."""
  N, D, Cin, H, W = a.shape
  Cout = w_t.shape[0]
  assert K == 3 and D % 2 == 0 and H % 2 == 0 and W % 2 == 0
  Dh, Hh, Wh = D // 2, H // 2, W // 2
  Hq, Wq = Hh + 1, Wh + 1
  Dp = D + 2
  S = Hh * Wq                   # per-window patch / output columns (1 junk/row)
  Sp = Hq * Wq + 1              # flattened padded parity plane (+1 halo element)

  # pad D/H/W by 1, split H and W into parity planes, flatten (Hq, Wq) to lanes.
  xp = jnp.pad(a, ((0, 0), (1, 1), (0, 0), (1, 1), (1, 1)))
  xs = xp.reshape(N, Dp, Cin, Hq, 2, Wq, 2).transpose(0, 1, 4, 6, 2, 3, 5)
  xs = xs.reshape(N, Dp, 2, 2, Cin, Hq * Wq)
  xs = jnp.pad(xs, ((0, 0),) * 5 + ((0, 1),))          # (N, Dp, 2, 2, Cin, Sp)

  kernel = functools.partial(_conv_bn_pool_kernel, K=K, Cin=Cin, Hh=Hh, Wq=Wq)
  in_block = (1, 2, 2, 2, Cin, Sp)

  # derive the VMEM budget from the actual block / scratch byte counts.
  blk_bytes = (
      2 * 2 * (2 * 2 * 2 * Cin * Sp * 2)       # two depth-halo inputs, dbl-buf
      + 2 * (Cout * K ** 3 * Cin * 2)          # weights
      + 2 * (Cout * 4)                         # bias
      + 2 * (Cout * S * 2)                     # output block, dbl-buf
      + (K ** 3 * Cin) * (8 * S) * 2)          # im2col scratch
  vmem_limit = int(min(2 * blk_bytes + (16 << 20), 40 << 20))

  out = pl.pallas_call(
      kernel,
      out_shape=jax.ShapeDtypeStruct((N, Dh, Cout, S), jnp.bfloat16),
      grid=(N, Dh),
      in_specs=[
          pl.BlockSpec(in_block, lambda n, d: (n, d, 0, 0, 0, 0)),
          pl.BlockSpec(in_block, lambda n, d: (n, d + 1, 0, 0, 0, 0)),
          pl.BlockSpec((Cout, K ** 3 * Cin), lambda n, d: (0, 0)),
          pl.BlockSpec((Cout, 1), lambda n, d: (0, 0)),
      ],
      out_specs=pl.BlockSpec((1, 1, Cout, S), lambda n, d: (n, d, 0, 0)),
      scratch_shapes=[pltpu.VMEM((K ** 3 * Cin, 8 * S), jnp.bfloat16)],
      compiler_params=pltpu.CompilerParams(
          dimension_semantics=("parallel", "parallel"),
          vmem_limit_bytes=vmem_limit),
  )(xs, xs, w_t, bias)

  # strip the junk column; keep the (N, D, C, H, W) inter-layer layout.
  return out.reshape(N, Dh, Cout, Hh, Wq)[..., :Wh]


def pointwise_head_pallas(a, w_t, bias, avg_shape):
  """a: (N, D, Cin, H, W) bf16 -> (N, Cout) f32 (conv1 + BN + ReLU + avgpool)."""
  N, D, Cin, H, W = a.shape
  Cout = w_t.shape[0]
  kd, kh, kw = avg_shape
  # PyTorch's final reshape(bsize, -1) matches this flattening only when the
  # pooled spatial output is exactly (1, 1, 1) -- true for the SFCN setup.
  assert D // kd == 1 and H // kh == 1 and W // kw == 1
  S = D * H * W
  x = jnp.transpose(a, (2, 0, 1, 3, 4)).reshape(Cin, N * S)
  mask = ((jnp.arange(D) < kd)[:, None, None]
          & (jnp.arange(H) < kh)[None, :, None]
          & (jnp.arange(W) < kw)[None, None, :]).reshape(S)
  pw_s = mask.astype(jnp.float32) / float(kd * kh * kw)            # (S,)
  pw = (jnp.eye(N, dtype=jnp.float32)[:, None, :]
        * pw_s[None, :, None]).reshape(N * S, N)                   # block-diag

  out = pl.pallas_call(
      _pointwise_head_kernel,
      out_shape=jax.ShapeDtypeStruct((Cout, N), jnp.float32),
      grid=(1,),
      in_specs=[
          pl.BlockSpec((Cin, N * S), lambda i: (0, 0)),
          pl.BlockSpec((Cout, Cin), lambda i: (0, 0)),
          pl.BlockSpec((Cout, 1), lambda i: (0, 0)),
          pl.BlockSpec((N * S, N), lambda i: (0, 0)),
      ],
      out_specs=pl.BlockSpec((Cout, N), lambda i: (0, 0)),
      compiler_params=pltpu.CompilerParams(
          dimension_semantics=("arbitrary",)),
  )(x, w_t, bias, pw)
  return out.T


# ---------------------------------------------------------------------------
# Parameters (deterministic, synthetic) and forward pass
# ---------------------------------------------------------------------------

def init_params(key, channel_number):
  """Deterministic synthetic parameters matching SFCNEncoder.__init__ shapes."""
  n_layer = len(channel_number)
  params = []
  for i in range(n_layer):
    cin = 1 if i == 0 else channel_number[i - 1]
    cout = channel_number[i]
    K = 3 if i < n_layer - 1 else 1
    key, kw, kb, kg, kbe, km, kv = jax.random.split(key, 7)
    fan_in = cin * K ** 3
    params.append(dict(
        K=K,
        w=jax.random.normal(kw, (cout, cin, K, K, K), jnp.float32)
          * (fan_in ** -0.5),                                   # Conv3d weight
        b=0.1 * jax.random.normal(kb, (cout,), jnp.float32),    # Conv3d bias
        gamma=1.0 + 0.1 * jax.random.normal(kg, (cout,), jnp.float32),
        beta=0.1 * jax.random.normal(kbe, (cout,), jnp.float32),
        rmean=0.1 * jax.random.normal(km, (cout,), jnp.float32),
        rvar=1.0 + 0.5 * jax.random.uniform(kv, (cout,), jnp.float32),
    ))
  return params


def fold_params(params):
  """Fold conv bias + eval-mode BN into the weights/bias used by the kernels."""
  folded = []
  for p in params:
    K = p['K']
    cout, cin = p['w'].shape[0], p['w'].shape[1]
    scale = p['gamma'] / jnp.sqrt(p['rvar'] + BN_EPS)                 # (Cout,)
    # (Cout, K^3*Cin) with columns tap-major (dz, dy, dx, cin).
    w_t = jnp.transpose(p['w'], (0, 2, 3, 4, 1)).reshape(cout, K ** 3 * cin)
    w_t = (w_t * scale[:, None]).astype(jnp.bfloat16)          # BN scale folded
    bias = ((p['b'] - p['rmean']) * scale + p['beta']).astype(jnp.float32)
    folded.append(dict(K=K, w=w_t, bias=bias[:, None]))
  return folded


def sfcn_encoder_forward(x_ncdhw, folded_params, avg_shape=(5, 6, 5)):
  # external input is PyTorch NCDHW; kernels run (N, D, C, H, W), bf16.
  a = jnp.transpose(x_ncdhw, (0, 2, 1, 3, 4)).astype(jnp.bfloat16)
  for p in folded_params[:-1]:
    a = conv_bn_pool_pallas(a, p['w'], p['bias'], K=p['K'])
  last = folded_params[-1]
  assert last['K'] == 1
  return pointwise_head_pallas(a, last['w'], last['bias'], avg_shape)


# ---------------------------------------------------------------------------
# Pure-JAX reference (eval-mode BN, f32) for numerical verification
# ---------------------------------------------------------------------------

def reference_forward(x, params, avg_shape=(5, 6, 5)):
  n_layer = len(params)
  y = x
  for i, p in enumerate(params):
    last = (i == n_layer - 1)
    pad = 1 if p['K'] == 3 else 0
    y = jax.lax.conv_general_dilated(
        y, p['w'], window_strides=(1, 1, 1), padding=[(pad, pad)] * 3,
        dimension_numbers=('NCDHW', 'OIDHW', 'NCDHW'),
        precision=jax.lax.Precision.HIGHEST)
    y = y + p['b'][None, :, None, None, None]
    scale = p['gamma'] / jnp.sqrt(p['rvar'] + BN_EPS)
    y = ((y - p['rmean'][None, :, None, None, None])
         * scale[None, :, None, None, None]
         + p['beta'][None, :, None, None, None])
    if not last:
      y = jax.lax.reduce_window(y, -jnp.inf, jax.lax.max,
                                (1, 1, 2, 2, 2), (1, 1, 2, 2, 2), 'VALID')
    y = jnp.maximum(y, 0.0)
  kd, kh, kw = avg_shape
  y = jax.lax.reduce_window(y, 0.0, jax.lax.add,
                            (1, 1, kd, kh, kw), (1, 1, kd, kh, kw),
                            'VALID') / float(kd * kh * kw)
  return y.reshape(y.shape[0], -1)


if __name__ == "__main__":
  key = jax.random.PRNGKey(0)
  kp, kx = jax.random.split(key)

  # Small config consistent with SFCNEncoder(channel_number=...):
  # 2 x [conv(3^3)+BN+maxpool+ReLU], then conv(1^3)+BN+ReLU, then
  # AvgPool3d([5, 6, 5]).  Spatial 20x24x32 -> 10x12x16 -> 5x6x8, so the
  # average pool output is (1, 1, 1), mirroring the original 160x192x160 use.
  channel_number = [8, 16, 8]
  params = init_params(kp, channel_number)
  folded = fold_params(params)

  x = jax.random.normal(kx, (2, 1, 20, 24, 32), jnp.float32)   # NCDHW

  out = jax.block_until_ready(sfcn_encoder_forward(x, folded))
  assert out.shape == (2, channel_number[-1]), out.shape

  ref = jax.block_until_ready(reference_forward(x, params))
  err = float(jnp.max(jnp.abs(out - ref)))
  # bf16 activations / bf16 MXU inputs (f32 accumulation) vs a full-f32
  # reference: allow a bf16-sized tolerance.
  assert err < 3e-2, f"max abs error vs reference too large: {err}"

  print("KERNEL_OK")
</pallas_src>

<mosaic_0001>
module attributes {stable_mosaic.version = 11 : i64} {
  func.func @_conv_bn_pool_kernel(%arg0: i32, %arg1: i32, %arg2: memref<1x2x2x2x1x222xbf16, #tpu.memory_space<vmem>>, %arg3: memref<1x2x2x2x1x222xbf16, #tpu.memory_space<vmem>>, %arg4: memref<8x27xbf16, #tpu.memory_space<vmem>>, %arg5: memref<8x1xf32, #tpu.memory_space<vmem>>, %arg6: memref<1x1x8x204xbf16, #tpu.memory_space<vmem>>, %arg7: memref<27x1632xbf16, #tpu.memory_space<vmem>>) attributes {dimension_semantics = [#tpu.dimension_semantics<parallel>, #tpu.dimension_semantics<parallel>], iteration_bounds = array<i64: 2, 10>, scalar_prefetch = 0 : i64, scratch_operands = 1 : i64, tpu.core_type = #tpu.core_type<tc>, window_params = [{transform_indices = @transform_0, window_bounds = array<i64: 1, 2, 2, 2, 1, 222>}, {transform_indices = @transform_1, window_bounds = array<i64: 1, 2, 2, 2, 1, 222>}, {pipeline_mode = #tpu.pipeline_mode<synchronous>, transform_indices = @transform_2, window_bounds = array<i64: 8, 27>}, {pipeline_mode = #tpu.pipeline_mode<synchronous>, transform_indices = @transform_3, window_bounds = array<i64: 8, 1>}, {transform_indices = @transform_4, window_bounds = array<i64: 1, 1, 8, 204>}]} {
    %c0 = arith.constant 0 : index
    %c0_0 = arith.constant 0 : index
    %c0_1 = arith.constant 0 : index
    %c0_2 = arith.constant 0 : index
    %c0_3 = arith.constant 0 : index
    %c0_4 = arith.constant 0 : index
    %0 = vector.load %arg2[%c0, %c0_0, %c0_1, %c0_2, %c0_3, %c0_4] : memref<1x2x2x2x1x222xbf16, #tpu.memory_space<vmem>>, vector<1x1x1x1x1x204xbf16>
    %1 = vector.shape_cast %0 : vector<1x1x1x1x1x204xbf16> to vector<1x204xbf16>
    %c0_5 = arith.constant 0 : index
    %c0_6 = arith.constant 0 : index
    %2 = vector.load %arg7[%c0_5, %c0_6] : memref<27x1632xbf16, #tpu.memory_space<vmem>>, vector<1x204xbf16>
    tpu.vector_store %arg7[%c0_5, %c0_6], %1 {strides = array<i32>} : memref<27x1632xbf16, #tpu.memory_space<vmem>>, vector<1x204xbf16>,
    %c0_7 = arith.constant 0 : index
    %c0_8 = arith.constant 0 : index
    %c0_9 = arith.constant 0 : index
    %c1 = arith.constant 1 : index
    %c0_10 = arith.constant 0 : index
    %c0_11 = arith.constant 0 : index
    %3 = vector.load %arg2[%c0_7, %c0_8, %c0_9, %c1, %c0_10, %c0_11] : memref<1x2x2x2x1x222xbf16, #tpu.memory_space<vmem>>, vector<1x1x1x1x1x204xbf16>
    %4 = vector.shape_cast %3 : vector<1x1x1x1x1x204xbf16> to vector<1x204xbf16>
    %c1_12 = arith.constant 1 : index
    %c0_13 = arith.constant 0 : index
    %5 = vector.load %arg7[%c1_12, %c0_13] : memref<27x1632xbf16, #tpu.memory_space<vmem>>, vector<1x204xbf16>
    tpu.vector_store %arg7[%c1_12, %c0_13], %4 {strides = array<i32>} : memref<27x1632xbf16, #tpu.memory_space<vmem>>, vector<1x204xbf16>,
    %c0_14 = arith.constant 0 : index
    %c0_15 = arith.constant 0 : index
    %c0_16 = arith.constant 0 : index
    %c0_17 = arith.constant 0 : index
    %c0_18 = arith.constant 0 : index
    %c1_19 = arith.constant 1 : index
    %6 = vector.load %arg2[%c0_14, %c0_15, %c0_16, %c0_17, %c0_18, %c1_19] : memref<1x2x2x2x1x222xbf16, #tpu.memory_space<vmem>>, vector<1x1x1x1x1x204xbf16>
    %7 = vector.shape_cast %6 : vector<1x1x1x1x1x204xbf16> to vector<1x204xbf16>
    %c2 = arith.constant 2 : index
    %c0_20 = arith.constant 0 : index
    %8 = vector.load %arg7[%c2, %c0_20] : memref<27x1632xbf16, #tpu.memory_space<vmem>>, vector<1x204xbf16>
    tpu.vector_store %arg7[%c2, %c0_20], %7 {strides = array<i32>} : memref<27x1632xbf16, #tpu.memory_space<vmem>>, vector<1x204xbf16>,
    %c0_21 = arith.constant 0 : index
    %c0_22 = arith.constant 0 : index
    %c1_23 = arith.constant 1 : index
    %c0_24 = arith.constant 0 : index
    %c0_25 = arith.constant 0 : index
    %c0_26 = arith.constant 0 : index
    %9 = vector.load %arg2[%c0_21, %c0_22, %c1_23, %c0_24, %c0_25, %c0_26] : memref<1x2x2x2x1x222xbf16, #tpu.memory_space<vmem>>, vector<1x1x1x1x1x204xbf16>
    %10 = vector.shape_cast %9 : vector<1x1x1x1x1x204xbf16> to vector<1x204xbf16>
    %c3 = arith.constant 3 : index
    %c0_27 = arith.constant 0 : index
    %11 = vector.load %arg7[%c3, %c0_27] : memref<27x1632xbf16, #tpu.memory_space<vmem>>, vector<1x204xbf16>
    tpu.vector_store %arg7[%c3, %c0_27], %10 {strides = array<i32>} : memref<27x1632xbf16, #tpu.memory_space<vmem>>, vector<1x204xbf16>,
    %c0_28 = arith.constant 0 : index
    %c0_29 = arith.constant 0 : index
    %c1_30 = arith.constant 1 : index
    %c1_31 = arith.constant 1 : index
    %c0_32 = arith.constant 0 : index
    %c0_33 = arith.constant 0 : index
    %12 = vector.load %arg2[%c0_28, %c0_29, %c1_30, %c1_31, %c0_32, %c0_33] : memref<1x2x2x2x1x222xbf16, #tpu.memory_space<vmem>>, vector<1x1x1x1x1x204xbf16>
    %13 = vector.shape_cast %12 : vector<1x1x1x1x1x204xbf16> to vector<1x204xbf16>
    %c4 = arith.constant 4 : index
    %c0_34 = arith.constant 0 : index
    %14 = vector.load %arg7[%c4, %c0_34] : memref<27x1632xbf16, #tpu.memory_space<vmem>>, vector<1x204xbf16>
    tpu.vector_store %arg7[%c4, %c0_34], %13 {strides = array<i32>} : memref<27x1632xbf16, #tpu.memory_space<vmem>>, vector<1x204xbf16>,
    %c0_35 = arith.constant 0 : index
    %c0_36 = arith.constant 0 : index
    %c1_37 = arith.constant 1 : index
    %c0_38 = arith.constant 0 : index
    %c0_39 = arith.constant 0 : index
    %c1_40 = arith.constant 1 : index
    %15 = vector.load %arg2[%c0_35, %c0_36, %c1_37, %c0_38, %c0_39, %c1_40] : memref<1x2x2x2x1x222xbf16, #tpu.memory_space<vmem>>, vector<1x1x1x1x1x204xbf16>
    %16 = vector.shape_cast %15 : vector<1x1x1x1x1x204xbf16> to vector<1x204xbf16>
    %c5 = arith.constant 5 : index
    %c0_41 = arith.constant 0 : index
    %17 = vector.load %arg7[%c5, %c0_41] : memref<27x1632xbf16, #tpu.memory_space<vmem>>, vector<1x204xbf16>
    tpu.vector_store %arg7[%c5, %c0_41], %16 {strides = array<i32>} : memref<27x1632xbf16, #tpu.memory_space<vmem>>, vector<1x204xbf16>,
    %c0_42 = arith.constant 0 : index
    %c0_43 = arith.constant 0 : index
    %c0_44 = arith.constant 0 : index
    %c0_45 = arith.constant 0 : index
    %c0_46 = arith.constant 0 : index
    %c17 = arith.constant 17 : index
    %18 = vector.load %arg2[%c0_42, %c0_43, %c0_44, %c0_45, %c0_46, %c17] : memref<1x2x2x2x1x222xbf16, #tpu.memory_space<vmem>>, vector<1x1x1x1x1x204xbf16>
    %19 = vector.shape_cast %18 : vector<1x1x1x1x1x204xbf16> to vector<1x204xbf16>
    %c6 = arith.constant 6 : index
    %c0_47 = arith.constant 0 : index
    %20 = vector.load %arg7[%c6, %c0_47] : memref<27x1632xbf16, #tpu.memory_space<vmem>>, vector<1x204xbf16>
    tpu.vector_store %arg7[%c6, %c0_47], %19 {strides = array<i32>} : memref<27x1632xbf16, #tpu.memory_space<vmem>>, vector<1x204xbf16>,
    %c0_48 = arith.constant 0 : index
    %c0_49 = arith.constant 0 : index
    %c0_50 = arith.constant 0 : index
    %c1_51 = arith.constant 1 : index
    %c0_52 = arith.constant 0 : index
    %c17_53 = arith.constant 17 : index
    %21 = vector.load %arg2[%c0_48, %c0_49, %c0_50, %c1_51, %c0_52, %c17_53] : memref<1x2x2x2x1x222xbf16, #tpu.memory_space<vmem>>, vector<1x1x1x1x1x204xbf16>
    %22 = vector.shape_cast %21 : vector<1x1x1x1x1x204xbf16> to vector<1x204xbf16>
    %c7 = arith.constant 7 : index
    %c0_54 = arith.constant 0 : index
    %23 = vector.load %arg7[%c7, %c0_54] : memref<27x1632xbf16, #tpu.memory_space<vmem>>, vector<1x204xbf16>
    tpu.vector_store %arg7[%c7, %c0_54], %22 {strides = array<i32>} : memref<27x1632xbf16, #tpu.memory_space<vmem>>, vector<1x204xbf16>,
    %c0_55 = arith.constant 0 : index
    %c0_56 = arith.constant 0 : index
    %c0_57 = arith.constant 0 : index
    %c0_58 = arith.constant 0 : index
    %c0_59 = arith.constant 0 : index
    %c18 = arith.constant 18 : index
    %24 = vector.load %arg2[%c0_55, %c0_56, %c0_57, %c0_58, %c0_59, %c18] : memref<1x2x2x2x1x222xbf16, #tpu.memory_space<vmem>>, vector<1x1x1x1x1x204xbf16>
    %25 = vector.shape_cast %24 : vector<1x1x1x1x1x204xbf16> to vector<1x204xbf16>
    %c8 = arith.constant 8 : index
    %c0_60 = arith.constant 0 : index
    %26 = vector.load %arg7[%c8, %c0_60] : memref<27x1632xbf16, #tpu.memory_space<vmem>>, vector<1x204xbf16>
    tpu.vector_store %arg7[%c8, %c0_60], %25 {strides = array<i32>} : memref<27x1632xbf16, #tpu.memory_space<vmem>>, vector<1x204xbf16>,
    %c0_61 = arith.constant 0 : index
    %c1_62 = arith.constant 1 : index
    %c0_63 = arith.constant 0 : index
    %c0_64 = arith.constant 0 : index
    %c0_65 = arith.constant 0 : index
    %c0_66 = arith.constant 0 : index
    %27 = vector.load %arg2[%c0_61, %c1_62, %c0_63, %c0_64, %c0_65, %c0_66] : memref<1x2x2x2x1x222xbf16, #tpu.memory_space<vmem>>, vector<1x1x1x1x1x204xbf16>
    %28 = vector.shape_cast %27 : vector<1x1x1x1x1x204xbf16> to vector<1x204xbf16>
    %c9 = arith.constant 9 : index
    %c0_67 = arith.constant 0 : index
    %29 = vector.load %arg7[%c9, %c0_67] : memref<27x1632xbf16, #tpu.memory_space<vmem>>, vector<1x204xbf16>
    tpu.vector_store %arg7[%c9, %c0_67], %28 {strides = array<i32>} : memref<27x1632xbf16, #tpu.memory_space<vmem>>, vector<1x204xbf16>,
    %c0_68 = arith.constant 0 : index
    %c1_69 = arith.constant 1 : index
    %c0_70 = arith.constant 0 : index
    %c1_71 = arith.constant 1 : index
    %c0_72 = arith.constant 0 : index
    %c0_73 = arith.constant 0 : index
    %30 = vector.load %arg2[%c0_68, %c1_69, %c0_70, %c1_71, %c0_72, %c0_73] : memref<1x2x2x2x1x222xbf16, #tpu.memory_space<vmem>>, vector<1x1x1x1x1x204xbf16>
    %31 = vector.shape_cast %30 : vector<1x1x1x1x1x204xbf16> to vector<1x204xbf16>
    %c10 = arith.constant 10 : index
    %c0_74 = arith.constant 0 : index
    %32 = vector.load %arg7[%c10, %c0_74] : memref<27x1632xbf16, #tpu.memory_space<vmem>>, vector<1x204xbf16>
    tpu.vector_store %arg7[%c10, %c0_74], %31 {strides = array<i32>} : memref<27x1632xbf16, #tpu.memory_space<vmem>>, vector<1x204xbf16>,
    %c0_75 = arith.constant 0 : index
    %c1_76 = arith.constant 1 : index
    %c0_77 = arith.constant 0 : index
    %c0_78 = arith.constant 0 : index
    %c0_79 = arith.constant 0 : index
    %c1_80 = arith.constant 1 : index
    %33 = vector.load %arg2[%c0_75, %c1_76, %c0_77, %c0_78, %c0_79, %c1_80] : memref<1x2x2x2x1x222xbf16, #tpu.memory_space<vmem>>, vector<1x1x1x1x1x204xbf16>
    %34 = vector.shape_cast %33 : vector<1x1x1x1x1x204xbf16> to vector<1x204xbf16>
    %c11 = arith.constant 11 : index
    %c0_81 = arith.constant 0 : index
    %35 = vector.load %arg7[%c11, %c0_81] : memref<27x1632xbf16, #tpu.memory_space<vmem>>, vector<1x204xbf16>
    tpu.vector_store %arg7[%c11, %c0_81], %34 {strides = array<i32>} : memref<27x1632xbf16, #tpu.memory_space<vmem>>, vector<1x204xbf16>,
    %c0_82 = arith.constant 0 : index
    %c1_83 = arith.constant 1 : index
    %c1_84 = arith.constant 1 : index
    %c0_85 = arith.constant 0 : index
    %c0_86 = arith.constant 0 : index
    %c0_87 = arith.constant 0 : index
    %36 = vector.load %arg2[%c0_82, %c1_83, %c1_84, %c0_85, %c0_86, %c0_87] : memref<1x2x2x2x1x222xbf16, #tpu.memory_space<vmem>>, vector<1x1x1x1x1x204xbf16>
    %37 = vector.shape_cast %36 : vector<1x1x1x1x1x204xbf16> to vector<1x204xbf16>
    %c12 = arith.constant 12 : index
    %c0_88 = arith.constant 0 : index
    %38 = vector.load %arg7[%c12, %c0_88] : memref<27x1632xbf16, #tpu.memory_space<vmem>>, vector<1x204xbf16>
    tpu.vector_store %arg7[%c12, %c0_88], %37 {strides = array<i32>} : memref<27x1632xbf16, #tpu.memory_space<vmem>>, vector<1x204xbf16>,
    %c0_89 = arith.constant 0 : index
    %c1_90 = arith.constant 1 : index
    %c1_91 = arith.constant 1 : index
    %c1_92 = arith.constant 1 : index
    %c0_93 = arith.constant 0 : index
    %c0_94 = arith.constant 0 : index
    %39 = vector.load %arg2[%c0_89, %c1_90, %c1_91, %c1_92, %c0_93, %c0_94] : memref<1x2x2x2x1x222xbf16, #tpu.memory_space<vmem>>, vector<1x1x1x1x1x204xbf16>
    %40 = vector.shape_cast %39 : vector<1x1x1x1x1x204xbf16> to vector<1x204xbf16>
    %c13 = arith.constant 13 : index
    %c0_95 = arith.constant 0 : index
    %41 = vector.load %arg7[%c13, %c0_95] : memref<27x1632xbf16, #tpu.memory_space<vmem>>, vector<1x204xbf16>
    tpu.vector_store %arg7[%c13, %c0_95], %40 {strides = array<i32>} : memref<27x1632xbf16, #tpu.memory_space<vmem>>, vector<1x204xbf16>,
    %c0_96 = arith.constant 0 : index
    %c1_97 = arith.constant 1 : index
    %c1_98 = arith.constant 1 : index
    %c0_99 = arith.constant 0 : index
    %c0_100 = arith.constant 0 : index
    %c1_101 = arith.constant 1 : index
    %42 = vector.load %arg2[%c0_96, %c1_97, %c1_98, %c0_99, %c0_100, %c1_101] : memref<1x2x2x2x1x222xbf16, #tpu.memory_space<vmem>>, vector<1x1x1x1x1x204xbf16>
    %43 = vector.shape_cast %42 : vector<1x1x1x1x1x204xbf16> to vector<1x204xbf16>
    %c14 = arith.constant 14 : index
    %c0_102 = arith.constant 0 : index
    %44 = vector.load %arg7[%c14, %c0_102] : memref<27x1632xbf16, #tpu.memory_space<vmem>>, vector<1x204xbf16>
    tpu.vector_store %arg7[%c14, %c0_102], %43 {strides = array<i32>} : memref<27x1632xbf16, #tpu.memory_space<vmem>>, vector<1x204xbf16>,
    %c0_103 = arith.constant 0 : index
    %c1_104 = arith.constant 1 : index
    %c0_105 = arith.constant 0 : index
    %c0_106 = arith.constant 0 : index
    %c0_107 = arith.constant 0 : index
    %c17_108 = arith.constant 17 : index
    %45 = vector.load %arg2[%c0_103, %c1_104, %c0_105, %c0_106, %c0_107, %c17_108] : memref<1x2x2x2x1x222xbf16, #tpu.memory_space<vmem>>, vector<1x1x1x1x1x204xbf16>
    %46 = vector.shape_cast %45 : vector<1x1x1x1x1x204xbf16> to vector<1x204xbf16>
    %c15 = arith.constant 15 : index
    %c0_109 = arith.constant 0 : index
    %47 = vector.load %arg7[%c15, %c0_109] : memref<27x1632xbf16, #tpu.memory_space<vmem>>, vector<1x204xbf16>
    tpu.vector_store %arg7[%c15, %c0_109], %46 {strides = array<i32>} : memref<27x1632xbf16, #tpu.memory_space<vmem>>, vector<1x204xbf16>,
    %c0_110 = arith.constant 0 : index
    %c1_111 = arith.constant 1 : index
    %c0_112 = arith.constant 0 : index
    %c1_113 = arith.constant 1 : index
    %c0_114 = arith.constant 0 : index
    %c17_115 = arith.constant 17 : index
    %48 = vector.load %arg2[%c0_110, %c1_111, %c0_112, %c1_113, %c0_114, %c17_115] : memref<1x2x2x2x1x222xbf16, #tpu.memory_space<vmem>>, vector<1x1x1x1x1x204xbf16>
    %49 = vector.shape_cast %48 : vector<1x1x1x1x1x204xbf16> to vector<1x204xbf16>
    %c16 = arith.constant 16 : index
    %c0_116 = arith.constant 0 : index
    %50 = vector.load %arg7[%c16, %c0_116] : memref<27x1632xbf16, #tpu.memory_space<vmem>>, vector<1x204xbf16>
    tpu.vector_store %arg7[%c16, %c0_116], %49 {strides = array<i32>} : memref<27x1632xbf16, #tpu.memory_space<vmem>>, vector<1x204xbf16>,
    %c0_117 = arith.constant 0 : index
    %c1_118 = arith.constant 1 : index
    %c0_119 = arith.constant 0 : index
    %c0_120 = arith.constant 0 : index
    %c0_121 = arith.constant 0 : index
    %c18_122 = arith.constant 18 : index
    %51 = vector.load %arg2[%c0_117, %c1_118, %c0_119, %c0_120, %c0_121, %c18_122] : memref<1x2x2x2x1x222xbf16, #tpu.memory_space<vmem>>, vector<1x1x1x1x1x204xbf16>
    %52 = vector.shape_cast %51 : vector<1x1x1x1x1x204xbf16> to vector<1x204xbf16>
    %c17_123 = arith.constant 17 : index
    %c0_124 = arith.constant 0 : index
    %53 = vector.load %arg7[%c17_123, %c0_124] : memref<27x1632xbf16, #tpu.memory_space<vmem>>, vector<1x204xbf16>
    tpu.vector_store %arg7[%c17_123, %c0_124], %52 {strides = array<i32>} : memref<27x1632xbf16, #tpu.memory_space<vmem>>, vector<1x204xbf16>,
    %c0_125 = arith.constant 0 : index
    %c0_126 = arith.constant 0 : index
    %c0_127 = arith.constant 0 : index
    %c0_128 = arith.constant 0 : index
    %c0_129 = arith.constant 0 : index
    %c0_130 = arith.constant 0 : index
    %54 = vector.load %arg3[%c0_125, %c0_126, %c0_127, %c0_128, %c0_129, %c0_130] : memref<1x2x2x2x1x222xbf16, #tpu.memory_space<vmem>>, vector<1x1x1x1x1x204xbf16>
    %55 = vector.shape_cast %54 : vector<1x1x1x1x1x204xbf16> to vector<1x204xbf16>
    %c18_131 = arith.constant 18 : index
    %c0_132 = arith.constant 0 : index
    %56 = vector.load %arg7[%c18_131, %c0_132] : memref<27x1632xbf16, #tpu.memory_space<vmem>>, vector<1x204xbf16>
    tpu.vector_store %arg7[%c18_131, %c0_132], %55 {strides = array<i32>} : memref<27x1632xbf16, #tpu.memory_space<vmem>>, vector<1x204xbf16>,
    %c0_133 = arith.constant 0 : index
    %c0_134 = arith.constant 0 : index
    %c0_135 = arith.constant 0 : index
    %c1_136 = arith.constant 1 : index
    %c0_137 = arith.constant 0 : index
    %c0_138 = arith.constant 0 : index
    %57 = vector.load %arg3[%c0_133, %c0_134, %c0_135, %c1_136, %c0_137, %c0_138] : memref<1x2x2x2x1x222xbf16, #tpu.memory_space<vmem>>, vector<1x1x1x1x1x204xbf16>
    %58 = vector.shape_cast %57 : vector<1x1x1x1x1x204xbf16> to vector<1x204xbf16>
    %c19 = arith.constant 19 : index
    %c0_139 = arith.constant 0 : index
    %59 = vector.load %arg7[%c19, %c0_139] : memref<27x1632xbf16, #tpu.memory_space<vmem>>, vector<1x204xbf16>
    tpu.vector_store %arg7[%c19, %c0_139], %58 {strides = array<i32>} : memref<27x1632xbf16, #tpu.memory_space<vmem>>, vector<1x204xbf16>,
    %c0_140 = arith.constant 0 : index
    %c0_141 = arith.constant 0 : index
    %c0_142 = arith.constant 0 : index
    %c0_143 = arith.constant 0 : index
    %c0_144 = arith.constant 0 : index
    %c1_145 = arith.constant 1 : index
    %60 = vector.load %arg3[%c0_140, %c0_141, %c0_142, %c0_143, %c0_144, %c1_145] : memref<1x2x2x2x1x222xbf16, #tpu.memory_space<vmem>>, vector<1x1x1x1x1x204xbf16>
    %61 = vector.shape_cast %60 : vector<1x1x1x1x1x204xbf16> to vector<1x204xbf16>
    %c20 = arith.constant 20 : index
    %c0_146 = arith.constant 0 : index
    %62 = vector.load %arg7[%c20, %c0_146] : memref<27x1632xbf16, #tpu.memory_space<vmem>>, vector<1x204xbf16>
    tpu.vector_store %arg7[%c20, %c0_146], %61 {strides = array<i32>} : memref<27x1632xbf16, #tpu.memory_space<vmem>>, vector<1x204xbf16>,
    %c0_147 = arith.constant 0 : index
    %c0_148 = arith.constant 0 : index
    %c1_149 = arith.constant 1 : index
    %c0_150 = arith.constant 0 : index
    %c0_151 = arith.constant 0 : index
    %c0_152 = arith.constant 0 : index
    %63 = vector.load %arg3[%c0_147, %c0_148, %c1_149, %c0_150, %c0_151, %c0_152] : memref<1x2x2x2x1x222xbf16, #tpu.memory_space<vmem>>, vector<1x1x1x1x1x204xbf16>
    %64 = vector.shape_cast %63 : vector<1x1x1x1x1x204xbf16> to vector<1x204xbf16>
    %c21 = arith.constant 21 : index
    %c0_153 = arith.constant 0 : index
    %65 = vector.load %arg7[%c21, %c0_153] : memref<27x1632xbf16, #tpu.memory_space<vmem>>, vector<1x204xbf16>
    tpu.vector_store %arg7[%c21, %c0_153], %64 {strides = array<i32>} : memref<27x1632xbf16, #tpu.memory_space<vmem>>, vector<1x204xbf16>,
    %c0_154 = arith.constant 0 : index
    %c0_155 = arith.constant 0 : index
    %c1_156 = arith.constant 1 : index
    %c1_157 = arith.constant 1 : index
    %c0_158 = arith.constant 0 : index
    %c0_159 = arith.constant 0 : index
    %66 = vector.load %arg3[%c0_154, %c0_155, %c1_156, %c1_157, %c0_158, %c0_159] : memref<1x2x2x2x1x222xbf16, #tpu.memory_space<vmem>>, vector<1x1x1x1x1x204xbf16>
    %67 = vector.shape_cast %66 : vector<1x1x1x1x1x204xbf16> to vector<1x204xbf16>
    %c22 = arith.constant 22 : index
    %c0_160 = arith.constant 0 : index
    %68 = vector.load %arg7[%c22, %c0_160] : memref<27x1632xbf16, #tpu.memory_space<vmem>>, vector<1x204xbf16>
    tpu.vector_store %arg7[%c22, %c0_160], %67 {strides = array<i32>} : memref<27x1632xbf16, #tpu.memory_space<vmem>>, vector<1x204xbf16>,
    %c0_161 = arith.constant 0 : index
    %c0_162 = arith.constant 0 : index
    %c1_163 = arith.constant 1 : index
    %c0_164 = arith.constant 0 : index
    %c0_165 = arith.constant 0 : index
    %c1_166 = arith.constant 1 : index
    %69 = vector.load %arg3[%c0_161, %c0_162, %c1_163, %c0_164, %c0_165, %c1_166] : memref<1x2x2x2x1x222xbf16, #tpu.memory_space<vmem>>, vector<1x1x1x1x1x204xbf16>
    %70 = vector.shape_cast %69 : vector<1x1x1x1x1x204xbf16> to vector<1x204xbf16>
    %c23 = arith.constant 23 : index
    %c0_167 = arith.constant 0 : index
    %71 = vector.load %arg7[%c23, %c0_167] : memref<27x1632xbf16, #tpu.memory_space<vmem>>, vector<1x204xbf16>
    tpu.vector_store %arg7[%c23, %c0_167], %70 {strides = array<i32>} : memref<27x1632xbf16, #tpu.memory_space<vmem>>, vector<1x204xbf16>,
    %c0_168 = arith.constant 0 : index
    %c0_169 = arith.constant 0 : index
    %c0_170 = arith.constant 0 : index
    %c0_171 = arith.constant 0 : index
    %c0_172 = arith.constant 0 : index
    %c17_173 = arith.constant 17 : index
    %72 = vector.load %arg3[%c0_168, %c0_169, %c0_170, %c0_171, %c0_172, %c17_173] : memref<1x2x2x2x1x222xbf16, #tpu.memory_space<vmem>>, vector<1x1x1x1x1x204xbf16>
    %73 = vector.shape_cast %72 : vector<1x1x1x1x1x204xbf16> to vector<1x204xbf16>
    %c24 = arith.constant 24 : index
    %c0_174 = arith.constant 0 : index
    %74 = vector.load %arg7[%c24, %c0_174] : memref<27x1632xbf16, #tpu.memory_space<vmem>>, vector<1x204xbf16>
    tpu.vector_store %arg7[%c24, %c0_174], %73 {strides = array<i32>} : memref<27x1632xbf16, #tpu.memory_space<vmem>>, vector<1x204xbf16>,
    %c0_175 = arith.constant 0 : index
    %c0_176 = arith.constant 0 : index
    %c0_177 = arith.constant 0 : index
    %c1_178 = arith.constant 1 : index
    %c0_179 = arith.constant 0 : index
    %c17_180 = arith.constant 17 : index
    %75 = vector.load %arg3[%c0_175, %c0_176, %c0_177, %c1_178, %c0_179, %c17_180] : memref<1x2x2x2x1x222xbf16, #tpu.memory_space<vmem>>, vector<1x1x1x1x1x204xbf16>
    %76 = vector.shape_cast %75 : vector<1x1x1x1x1x204xbf16> to vector<1x204xbf16>
    %c25 = arith.constant 25 : index
    %c0_181 = arith.constant 0 : index
    %77 = vector.load %arg7[%c25, %c0_181] : memref<27x1632xbf16, #tpu.memory_space<vmem>>, vector<1x204xbf16>
    tpu.vector_store %arg7[%c25, %c0_181], %76 {strides = array<i32>} : memref<27x1632xbf16, #tpu.memory_space<vmem>>, vector<1x204xbf16>,
    %c0_182 = arith.constant 0 : index
    %c0_183 = arith.constant 0 : index
    %c0_184 = arith.constant 0 : index
    %c0_185 = arith.constant 0 : index
    %c0_186 = arith.constant 0 : index
    %c18_187 = arith.constant 18 : index
    %78 = vector.load %arg3[%c0_182, %c0_183, %c0_184, %c0_185, %c0_186, %c18_187] : memref<1x2x2x2x1x222xbf16, #tpu.memory_space<vmem>>, vector<1x1x1x1x1x204xbf16>
    %79 = vector.shape_cast %78 : vector<1x1x1x1x1x204xbf16> to vector<1x204xbf16>
    %c26 = arith.constant 26 : index
    %c0_188 = arith.constant 0 : index
    %80 = vector.load %arg7[%c26, %c0_188] : memref<27x1632xbf16, #tpu.memory_space<vmem>>, vector<1x204xbf16>
    tpu.vector_store %arg7[%c26, %c0_188], %79 {strides = array<i32>} : memref<27x1632xbf16, #tpu.memory_space<vmem>>, vector<1x204xbf16>,
    %c0_189 = arith.constant 0 : index
    %c0_190 = arith.constant 0 : index
    %c0_191 = arith.constant 0 : index
    %c1_192 = arith.constant 1 : index
    %c0_193 = arith.constant 0 : index
    %c0_194 = arith.constant 0 : index
    %81 = vector.load %arg2[%c0_189, %c0_190, %c0_191, %c1_192, %c0_193, %c0_194] : memref<1x2x2x2x1x222xbf16, #tpu.memory_space<vmem>>, vector<1x1x1x1x1x204xbf16>
    %82 = vector.shape_cast %81 : vector<1x1x1x1x1x204xbf16> to vector<1x204xbf16>
    %c0_195 = arith.constant 0 : index
    %c204 = arith.constant 204 : index
    %83 = vector.load %arg7[%c0_195, %c204] : memref<27x1632xbf16, #tpu.memory_space<vmem>>, vector<1x204xbf16>
    tpu.vector_store %arg7[%c0_195, %c204], %82 {strides = array<i32>} : memref<27x1632xbf16, #tpu.memory_space<vmem>>, vector<1x204xbf16>,
    %c0_196 = arith.constant 0 : index
    %c0_197 = arith.constant 0 : index
    %c0_198 = arith.constant 0 : index
    %c0_199 = arith.constant 0 : index
    %c0_200 = arith.constant 0 : index
    %c1_201 = arith.constant 1 : index
    %84 = vector.load %arg2[%c0_196, %c0_197, %c0_198, %c0_199, %c0_200, %c1_201] : memref<1x2x2x2x1x222xbf16, #tpu.memory_space<vmem>>, vector<1x1x1x1x1x204xbf16>
    %85 = vector.shape_cast %84 : vector<1x1x1x1x1x204xbf16> to vector<1x204xbf16>
    %c1_202 = arith.constant 1 : index
    %c204_203 = arith.constant 204 : index
    %86 = vector.load %arg7[%c1_202, %c204_203] : memref<27x1632xbf16, #tpu.memory_space<vmem>>, vector<1x204xbf16>
    tpu.vector_store %arg7[%c1_202, %c204_203], %85 {strides = array<i32>} : memref<27x1632xbf16, #tpu.memory_space<vmem>>, vector<1x204xbf16>,
    %c0_204 = arith.constant 0 : index
    %c0_205 = arith.constant 0 : index
    %c0_206 = arith.constant 0 : index
    %c1_207 = arith.constant 1 : index
    %c0_208 = arith.constant 0 : index
    %c1_209 = arith.constant 1 : index
    %87 = vector.load %arg2[%c0_204, %c0_205, %c0_206, %c1_207, %c0_208, %c1_209] : memref<1x2x2x2x1x222xbf16, #tpu.memory_space<vmem>>, vector<1x1x1x1x1x204xbf16>
    %88 = vector.shape_cast %87 : vector<1x1x1x1x1x204xbf16> to vector<1x204xbf16>
    %c2_210 = arith.constant 2 : index
    %c204_211 = arith.constant 204 : index
    %89 = vector.load %arg7[%c2_210, %c204_211] : memref<27x1632xbf16, #tpu.memory_space<vmem>>, vector<1x204xbf16>
    tpu.vector_store %arg7[%c2_210, %c204_211], %88 {strides = array<i32>} : memref<27x1632xbf16, #tpu.memory_space<vmem>>, vector<1x204xbf16>,
    %c0_212 = arith.constant 0 : index
    %c0_213 = arith.constant 0 : index
    %c1_214 = arith.constant 1 : index
    %c1_215 = arith.constant 1 : index
    %c0_216 = arith.constant 0 : index
    %c0_217 = arith.constant 0 : index
    %90 = vector.load %arg2[%c0_212, %c0_213, %c1_214, %c1_215, %c0_216, %c0_217] : memref<1x2x2x2x1x222xbf16, #tpu.memory_space<vmem>>, vector<1x1x1x1x1x204xbf16>
    %91 = vector.shape_cast %90 : vector<1x1x1x1x1x204xbf16> to vector<1x204xbf16>
    %c3_218 = arith.constant 3 : index
    %c204_219 = arith.constant 204 : index
    %92 = vector.load %arg7[%c3_218, %c204_219] : memref<27x1632xbf16, #tpu.memory_space<vmem>>, vector<1x204xbf16>
    tpu.vector_store %arg7[%c3_218, %c204_219], %91 {strides = array<i32>} : memref<27x1632xbf16, #tpu.memory_space<vmem>>, vector<1x204xbf16>,
    %c0_220 = arith.constant 0 : index
    %c0_221 = arith.constant 0 : index
    %c1_222 = arith.constant 1 : index
    %c0_223 = arith.constant 0 : index
    %c0_224 = arith.constant 0 : index
    %c1_225 = arith.constant 1 : index
    %93 = vector.load %arg2[%c0_220, %c0_221, %c1_222, %c0_223, %c0_224, %c1_225] : memref<1x2x2x2x1x222xbf16, #tpu.memory_space<vmem>>, vector<1x1x1x1x1x204xbf16>
    %94 = vector.shape_cast %93 : vector<1x1x1x1x1x204xbf16> to vector<1x204xbf16>
    %c4_226 = arith.constant 4 : index
    %c204_227 = arith.constant 204 : index
    %95 = vector.load %arg7[%c4_226, %c204_227] : memref<27x1632xbf16, #tpu.memory_space<vmem>>, vector<1x204xbf16>
    tpu.vector_store %arg7[%c4_226, %c204_227], %94 {strides = array<i32>} : memref<27x1632xbf16, #tpu.memory_space<vmem>>, vector<1x204xbf16>,
    %c0_228 = arith.constant 0 : index
    %c0_229 = arith.constant 0 : index
    %c1_230 = arith.constant 1 : index
    %c1_231 = arith.constant 1 : index
    %c0_232 = arith.constant 0 : index
    %c1_233 = arith.constant 1 : index
    %96 = vector.load %arg2[%c0_228, %c0_229, %c1_230, %c1_231, %c0_232, %c1_233] : memref<1x2x2x2x1x222xbf16, #tpu.memory_space<vmem>>, vector<1x1x1x1x1x204xbf16>
    %97 = vector.shape_cast %96 : vector<1x1x1x1x1x204xbf16> to vector<1x204xbf16>
    %c5_234 = arith.constant 5 : index
    %c204_235 = arith.constant 204 : index
    %98 = vector.load %arg7[%c5_234, %c204_235] : memref<27x1632xbf16, #tpu.memory_space<vmem>>, vector<1x204xbf16>
    tpu.vector_store %arg7[%c5_234, %c204_235], %97 {strides = array<i32>} : memref<27x1632xbf16, #tpu.memory_space<vmem>>, vector<1x204xbf16>,
    %c0_236 = arith.constant 0 : index
    %c0_237 = arith.constant 0 : index
    %c0_238 = arith.constant 0 : index
    %c1_239 = arith.constant 1 : index
    %c0_240 = arith.constant 0 : index
    %c17_241 = arith.constant 17 : index
    %99 = vector.load %arg2[%c0_236, %c0_237, %c0_238, %c1_239, %c0_240, %c17_241] : memref<1x2x2x2x1x222xbf16, #tpu.memory_space<vmem>>, vector<1x1x1x1x1x204xbf16>
    %100 = vector.shape_cast %99 : vector<1x1x1x1x1x204xbf16> to vector<1x204xbf16>
    %c6_242 = arith.constant 6 : index
    %c204_243 = arith.constant 204 : index
    %101 = vector.load %arg7[%c6_242, %c204_243] : memref<27x1632xbf16, #tpu.memory_space<vmem>>, vector<1x204xbf16>
    tpu.vector_store %arg7[%c6_242, %c204_243], %100 {strides = array<i32>} : memref<27x1632xbf16, #tpu.memory_space<vmem>>, vector<1x204xbf16>,
    %c0_244 = arith.constant 0 : index
    %c0_245 = arith.constant 0 : index
    %c0_246 = arith.constant 0 : index
    %c0_247 = arith.constant 0 : index
    %c0_248 = arith.constant 0 : index
    %c18_249 = arith.constant 18 : index
    %102 = vector.load %arg2[%c0_244, %c0_245, %c0_246, %c0_247, %c0_248, %c18_249] : memref<1x2x2x2x1x222xbf16, #tpu.memory_space<vmem>>, vector<1x1x1x1x1x204xbf16>
    %103 = vector.shape_cast %102 : vector<1x1x1x1x1x204xbf16> to vector<1x204xbf16>
    %c7_250 = arith.constant 7 : index
    %c204_251 = arith.constant 204 : index
    %104 = vector.load %arg7[%c7_250, %c204_251] : memref<27x1632xbf16, #tpu.memory_space<vmem>>, vector<1x204xbf16>
    tpu.vector_store %arg7[%c7_250, %c204_251], %103 {strides = array<i32>} : memref<27x1632xbf16, #tpu.memory_space<vmem>>, vector<1x204xbf16>,
    %c0_252 = arith.constant 0 : index
    %c0_253 = arith.constant 0 : index
    %c0_254 = arith.constant 0 : index
    %c1_255 = arith.constant 1 : index
    %c0_256 = arith.constant 0 : index
    %c18_257 = arith.constant 18 : index
    %105 = vector.load %arg2[%c0_252, %c0_253, %c0_254, %c1_255, %c0_256, %c18_257] : memref<1x2x2x2x1x222xbf16, #tpu.memory_space<vmem>>, vector<1x1x1x1x1x204xbf16>
    %106 = vector.shape_cast %105 : vector<1x1x1x1x1x204xbf16> to vector<1x204xbf16>
    %c8_258 = arith.constant 8 : index
    %c204_259 = arith.constant 204 : index
    %107 = vector.load %arg7[%c8_258, %c204_259] : memref<27x1632xbf16, #tpu.memory_space<vmem>>, vector<1x204xbf16>
    tpu.vector_store %arg7[%c8_258, %c204_259], %106 {strides = array<i32>} : memref<27x1632xbf16, #tpu.memory_space<vmem>>, vector<1x204xbf16>,
    %c0_260 = arith.constant 0 : index
    %c1_261 = arith.constant 1 : index
    %c0_262 = arith.constant 0 : index
    %c1_263 = arith.constant 1 : index
    %c0_264 = arith.constant 0 : index
    %c0_265 = arith.constant 0 : index
    %108 = vector.load %arg2[%c0_260, %c1_261, %c0_262, %c1_263, %c0_264, %c0_265] : memref<1x2x2x2x1x222xbf16, #tpu.memory_space<vmem>>, vector<1x1x1x1x1x204xbf16>
    %109 = vector.shape_cast %108 : vector<1x1x1x1x1x204xbf16> to vector<1x204xbf16>
    %c9_266 = arith.constant 9 : index
    %c204_267 = arith.constant 204 : index
    %110 = vector.load %arg7[%c9_266, %c204_267] : memref<27x1632xbf16, #tpu.memory_space<vmem>>, vector<1x204xbf16>
    tpu.vector_store %arg7[%c9_266, %c204_267], %109 {strides = array<i32>} : memref<27x1632xbf16, #tpu.memory_space<vmem>>, vector<1x204xbf16>,
    %c0_268 = arith.constant 0 : index
    %c1_269 = arith.constant 1 : index
    %c0_270 = arith.constant 0 : index
    %c0_271 = arith.constant 0 : index
    %c0_272 = arith.constant 0 : index
    %c1_273 = arith.constant 1 : index
    %111 = vector.load %arg2[%c0_268, %c1_269, %c0_270, %c0_271, %c0_272, %c1_273] : memref<1x2x2x2x1x222xbf16, #tpu.memory_space<vmem>>, vector<1x1x1x1x1x204xbf16>
    %112 = vector.shape_cast %111 : vector<1x1x1x1x1x204xbf16> to vector<1x204xbf16>
    %c10_274 = arith.constant 10 : index
    %c204_275 = arith.constant 204 : index
    %113 = vector.load %arg7[%c10_274, %c204_275] : memref<27x1632xbf16, #tpu.memory_space<vmem>>, vector<1x204xbf16>
    tpu.vector_store %arg7[%c10_274, %c204_275], %112 {strides = array<i32>} : memref<27x1632xbf16, #tpu.memory_space<vmem>>, vector<1x204xbf16>,
    %c0_276 = arith.constant 0 : index
    %c1_277 = arith.constant 1 : index
    %c0_278 = arith.constant 0 : index
    %c1_279 = arith.constant 1 : index
    %c0_280 = arith.constant 0 : index
    %c1_281 = arith.constant 1 : index
    %114 = vector.load %arg2[%c0_276, %c1_277, %c0_278, %c1_279, %c0_280, %c1_281] : memref<1x2x2x2x1x222xbf16, #tpu.memory_space<vmem>>, vector<1x1x1x1x1x204xbf16>
    %115 = vector.shape_cast %114 : vector<1x1x1x1x1x204xbf16> to vector<1x204xbf16>
    %c11_282 = arith.constant 11 : index
    %c204_283 = arith.constant 204 : index
    %116 = vector.load %arg7[%c11_282, %c204_283] : memref<27x1632xbf16, #tpu.memory_space<vmem>>, vector<1x204xbf16>
    tpu.vector_store %arg7[%c11_282, %c204_283], %115 {strides = array<i32>} : memref<27x1632xbf16, #tpu.memory_space<vmem>>, vector<1x204xbf16>,
    %c0_284 = arith.constant 0 : index
    %c1_285 = arith.constant 1 : index
    %c1_286 = arith.constant 1 : index
    %c1_287 = arith.constant 1 : index
    %c0_288 = arith.constant 0 : index
    %c0_289 = arith.constant 0 : index
    %117 = vector.load %arg2[%c0_284, %c1_285, %c1_286, %c1_287, %c0_288, %c0_289] : memref<1x2x2x2x1x222xbf16, #tpu.memory_space<vmem>>, vector<1x1x1x1x1x204xbf16>
    %118 = vector.shape_cast %117 : vector<1x1x1x1x1x204xbf16> to vector<1x204xbf16>
    %c12_290 = arith.constant 12 : index
    %c204_291 = arith.constant 204 : index
    %119 = vector.load %arg7[%c12_290, %c204_291] : memref<27x1632xbf16, #tpu.memory_space<vmem>>, vector<1x204xbf16>
    tpu.vector_store %arg7[%c12_290, %c204_291], %118 {strides = array<i32>} : memref<27x1632xbf16, #tpu.memory_space<vmem>>, vector<1x204xbf16>,
    %c0_292 = arith.constant 0 : index
    %c1_293 = arith.constant 1 : index
    %c1_294 = arith.constant 1 : index
    %c0_295 = arith.constant 0 : index
    %c0_296 = arith.constant 0 : index
    %c1_297 = arith.constant 1 : index
    %120 = vector.load %arg2[%c0_292, %c1_293, %c1_294, %c0_295, %c0_296, %c1_297] : memref<1x2x2x2x1x222xbf16, #tpu.memory_space<vmem>>, vector<1x1x1x1x1x204xbf16>
    %121 = vector.shape_cast %120 : vector<1x1x1x1x1x204xbf16> to vector<1x204xbf16>
    %c13_298 = arith.constant 13 : index
    %c204_299 = arith.constant 204 : index
    %122 = vector.load %arg7[%c13_298, %c204_299] : memref<27x1632xbf16, #tpu.memory_space<vmem>>, vector<1x204xbf16>
    tpu.vector_store %arg7[%c13_298, %c204_299], %121 {strides = array<i32>} : memref<27x1632xbf16, #tpu.memory_space<vmem>>, vector<1x204xbf16>,
    %c0_300 = arith.constant 0 : index
    %c1_301 = arith.constant 1 : index
    %c1_302 = arith.constant 1 : index
    %c1_303 = arith.constant 1 : index
    %c0_304 = arith.constant 0 : index
    %c1_305 = arith.constant 1 : index
    %123 = vector.load %arg2[%c0_300, %c1_301, %c1_302, %c1_303, %c0_304, %c1_305] : memref<1x2x2x2x1x222xbf16, #tpu.memory_space<vmem>>, vector<1x1x1x1x1x204xbf16>
    %124 = vector.shape_cast %123 : vector<1x1x1x1x1x204xbf16> to vector<1x204xbf16>
    %c14_306 = arith.constant 14 : index
    %c204_307 = arith.constant 204 : index
    %125 = vector.load %arg7[%c14_306, %c204_307] : memref<27x1632xbf16, #tpu.memory_space<vmem>>, vector<1x204xbf16>
    tpu.vector_store %arg7[%c14_306, %c204_307], %124 {strides = array<i32>} : memref<27x1632xbf16, #tpu.memory_space<vmem>>, vector<1x204xbf16>,
    %c0_308 = arith.constant 0 : index
    %c1_309 = arith.constant 1 : index
    %c0_310 = arith.constant 0 : index
    %c1_311 = arith.constant 1 : index
    %c0_312 = arith.constant 0 : index
    %c17_313 = arith.constant 17 : index
    %126 = vector.load %arg2[%c0_308, %c1_309, %c0_310, %c1_311, %c0_312, %c17_313] : memref<1x2x2x2x1x222xbf16, #tpu.memory_space<vmem>>, vector<1x1x1x1x1x204xbf16>
    %127 = vector.shape_cast %126 : vector<1x1x1x1x1x204xbf16> to vector<1x204xbf16>
    %c15_314 = arith.constant 15 : index
    %c204_315 = arith.constant 204 : index
    %128 = vector.load %arg7[%c15_314, %c204_315] : memref<27x1632xbf16, #tpu.memory_space<vmem>>, vector<1x204xbf16>
    tpu.vector_store %arg7[%c15_314, %c204_315], %127 {strides = array<i32>} : memref<27x1632xbf16, #tpu.memory_space<vmem>>, vector<1x204xbf16>,
    %c0_316 = arith.constant 0 : index
    %c1_317 = arith.constant 1 : index
    %c0_318 = arith.constant 0 : index
    %c0_319 = arith.constant 0 : index
    %c0_320 = arith.constant 0 : index
    %c18_321 = arith.constant 18 : index
    %129 = vector.load %arg2[%c0_316, %c1_317, %c0_318, %c0_319, %c0_320, %c18_321] : memref<1x2x2x2x1x222xbf16, #tpu.memory_space<vmem>>, vector<1x1x1x1x1x204xbf16>
    %130 = vector.shape_cast %129 : vector<1x1x1x1x1x204xbf16> to vector<1x204xbf16>
    %c16_322 = arith.constant 16 : index
    %c204_323 = arith.constant 204 : index
    %131 = vector.load %arg7[%c16_322, %c204_323] : memref<27x1632xbf16, #tpu.memory_space<vmem>>, vector<1x204xbf16>
    tpu.vector_store %arg7[%c16_322, %c204_323], %130 {strides = array<i32>} : memref<27x1632xbf16, #tpu.memory_space<vmem>>, vector<1x204xbf16>,
    %c0_324 = arith.constant 0 : index
    %c1_325 = arith.constant 1 : index
    %c0_326 = arith.constant 0 : index
    %c1_327 = arith.constant 1 : index
    %c0_328 = arith.constant 0 : index
    %c18_329 = arith.constant 18 : index
    %132 = vector.load %arg2[%c0_324, %c1_325, %c0_326, %c1_327, %c0_328, %c18_329] : memref<1x2x2x2x1x222xbf16, #tpu.memory_space<vmem>>, vector<1x1x1x1x1x204xbf16>
    %133 = vector.shape_cast %132 : vector<1x1x1x1x1x204xbf16> to vector<1x204xbf16>
    %c17_330 = arith.constant 17 : index
    %c204_331 = arith.constant 204 : index
    %134 = vector.load %arg7[%c17_330, %c204_331] : memref<27x1632xbf16, #tpu.memory_space<vmem>>, vector<1x204xbf16>
    tpu.vector_store %arg7[%c17_330, %c204_331], %133 {strides = array<i32>} : memref<27x1632xbf16, #tpu.memory_space<vmem>>, vector<1x204xbf16>,
    %c0_332 = arith.constant 0 : index
    %c0_333 = arith.constant 0 : index
    %c0_334 = arith.constant 0 : index
    %c1_335 = arith.constant 1 : index
    %c0_336 = arith.constant 0 : index
    %c0_337 = arith.constant 0 : index
    %135 = vector.load %arg3[%c0_332, %c0_333, %c0_334, %c1_335, %c0_336, %c0_337] : memref<1x2x2x2x1x222xbf16, #tpu.memory_space<vmem>>, vector<1x1x1x1x1x204xbf16>
    %136 = vector.shape_cast %135 : vector<1x1x1x1x1x204xbf16> to vector<1x204xbf16>
    %c18_338 = arith.constant 18 : index
    %c204_339 = arith.constant 204 : index
    %137 = vector.load %arg7[%c18_338, %c204_339] : memref<27x1632xbf16, #tpu.memory_space<vmem>>, vector<1x204xbf16>
    tpu.vector_store %arg7[%c18_338, %c204_339], %136 {strides = array<i32>} : memref<27x1632xbf16, #tpu.memory_space<vmem>>, vector<1x204xbf16>,
    %c0_340 = arith.constant 0 : index
    %c0_341 = arith.constant 0 : index
    %c0_342 = arith.constant 0 : index
    %c0_343 = arith.constant 0 : index
    %c0_344 = arith.constant 0 : index
    %c1_345 = arith.constant 1 : index
    %138 = vector.load %arg3[%c0_340, %c0_341, %c0_342, %c0_343, %c0_344, %c1_345] : memref<1x2x2x2x1x222xbf16, #tpu.memory_space<vmem>>, vector<1x1x1x1x1x204xbf16>
    %139 = vector.shape_cast %138 : vector<1x1x1x1x1x204xbf16> to vector<1x204xbf16>
    %c19_346 = arith.constant 19 : index
    %c204_347 = arith.constant 204 : index
    %140 = vector.load %arg7[%c19_346, %c204_347] : memref<27x1632xbf16, #tpu.memory_space<vmem>>, vector<1x204xbf16>
    tpu.vector_store %arg7[%c19_346, %c204_347], %139 {strides = array<i32>} : memref<27x1632xbf16, #tpu.memory_space<vmem>>, vector<1x204xbf16>,
    %c0_348 = arith.constant 0 : index
    %c0_349 = arith.constant 0 : index
    %c0_350 = arith.constant 0 : index
    %c1_351 = arith.constant 1 : index
    %c0_352 = arith.constant 0 : index
    %c1_353 = arith.constant 1 : index
    %141 = vector.load %arg3[%c0_348, %c0_349, %c0_350, %c1_351, %c0_352, %c1_353] : memref<1x2x2x2x1x222xbf16, #tpu.memory_space<vmem>>, vector<1x1x1x1x1x204xbf16>
    %142 = vector.shape_cast %141 : vector<1x1x1x1x1x204xbf16> to vector<1x204xbf16>
    %c20_354 = arith.constant 20 : index
    %c204_355 = arith.constant 204 : index
    %143 = vector.load %arg7[%c20_354, %c204_355] : memref<27x1632xbf16, #tpu.memory_space<vmem>>, vector<1x204xbf16>
    tpu.vector_store %arg7[%c20_354, %c204_355], %142 {strides = array<i32>} : memref<27x1632xbf16, #tpu.memory_space<vmem>>, vector<1x204xbf16>,
    %c0_356 = arith.constant 0 : index
    %c0_357 = arith.constant 0 : index
    %c1_358 = arith.constant 1 : index
    %c1_359 = arith.constant 1 : index
    %c0_360 = arith.constant 0 : index
    %c0_361 = arith.constant 0 : index
    %144 = vector.load %arg3[%c0_356, %c0_357, %c1_358, %c1_359, %c0_360, %c0_361] : memref<1x2x2x2x1x222xbf16, #tpu.memory_space<vmem>>, vector<1x1x1x1x1x204xbf16>
    %145 = vector.shape_cast %144 : vector<1x1x1x1x1x204xbf16> to vector<1x204xbf16>
    %c21_362 = arith.constant 21 : index
    %c204_363 = arith.constant 204 : index
    %146 = vector.load %arg7[%c21_362, %c204_363] : memref<27x1632xbf16, #tpu.memory_space<vmem>>, vector<1x204xbf16>
    tpu.vector_store %arg7[%c21_362, %c204_363], %145 {strides = array<i32>} : memref<27x1632xbf16, #tpu.memory_space<vmem>>, vector<1x204xbf16>,
    %c0_364 = arith.constant 0 : index
    %c0_365 = arith.constant 0 : index
    %c1_366 = arith.constant 1 : index
    %c0_367 = arith.constant 0 : index
    %c0_368 = arith.constant 0 : index
    %c1_369 = arith.constant 1 : index
    %147 = vector.load %arg3[%c0_364, %c0_365, %c1_366, %c0_367, %c0_368, %c1_369] : memref<1x2x2x2x1x222xbf16, #tpu.memory_space<vmem>>, vector<1x1x1x1x1x204xbf16>
    %148 = vector.shape_cast %147 : vector<1x1x1x1x1x204xbf16> to vector<1x204xbf16>
    %c22_370 = arith.constant 22 : index
    %c204_371 = arith.constant 204 : index
    %149 = vector.load %arg7[%c22_370, %c204_371] : memref<27x1632xbf16, #tpu.memory_space<vmem>>, vector<1x204xbf16>
    tpu.vector_store %arg7[%c22_370, %c204_371], %148 {strides = array<i32>} : memref<27x1632xbf16, #tpu.memory_space<vmem>>, vector<1x204xbf16>,
    %c0_372 = arith.constant 0 : index
    %c0_373 = arith.constant 0 : index
    %c1_374 = arith.constant 1 : index
    %c1_375 = arith.constant 1 : index
    %c0_376 = arith.constant 0 : index
    %c1_377 = arith.constant 1 : index
    %150 = vector.load %arg3[%c0_372, %c0_373, %c1_374, %c1_375, %c0_376, %c1_377] : memref<1x2x2x2x1x222xbf16, #tpu.memory_space<vmem>>, vector<1x1x1x1x1x204xbf16>
    %151 = vector.shape_cast %150 : vector<1x1x1x1x1x204xbf16> to vector<1x204xbf16>
    %c23_378 = arith.constant 23 : index
    %c204_379 = arith.constant 204 : index
    %152 = vector.load %arg7[%c23_378, %c204_379] : memref<27x1632xbf16, #tpu.memory_space<vmem>>, vector<1x204xbf16>
    tpu.vector_store %arg7[%c23_378, %c204_379], %151 {strides = array<i32>} : memref<27x1632xbf16, #tpu.memory_space<vmem>>, vector<1x204xbf16>,
    %c0_380 = arith.constant 0 : index
    %c0_381 = arith.constant 0 : index
    %c0_382 = arith.constant 0 : index
    %c1_383 = arith.constant 1 : index
    %c0_384 = arith.constant 0 : index
    %c17_385 = arith.constant 17 : index
    %153 = vector.load %arg3[%c0_380, %c0_381, %c0_382, %c1_383, %c0_384, %c17_385] : memref<1x2x2x2x1x222xbf16, #tpu.memory_space<vmem>>, vector<1x1x1x1x1x204xbf16>
    %154 = vector.shape_cast %153 : vector<1x1x1x1x1x204xbf16> to vector<1x204xbf16>
    %c24_386 = arith.constant 24 : index
    %c204_387 = arith.constant 204 : index
    %155 = vector.load %arg7[%c24_386, %c204_387] : memref<27x1632xbf16, #tpu.memory_space<vmem>>, vector<1x204xbf16>
    tpu.vector_store %arg7[%c24_386, %c204_387], %154 {strides = array<i32>} : memref<27x1632xbf16, #tpu.memory_space<vmem>>, vector<1x204xbf16>,
    %c0_388 = arith.constant 0 : index
    %c0_389 = arith.constant 0 : index
    %c0_390 = arith.constant 0 : index
    %c0_391 = arith.constant 0 : index
    %c0_392 = arith.constant 0 : index
    %c18_393 = arith.constant 18 : index
    %156 = vector.load %arg3[%c0_388, %c0_389, %c0_390, %c0_391, %c0_392, %c18_393] : memref<1x2x2x2x1x222xbf16, #tpu.memory_space<vmem>>, vector<1x1x1x1x1x204xbf16>
    %157 = vector.shape_cast %156 : vector<1x1x1x1x1x204xbf16> to vector<1x204xbf16>
    %c25_394 = arith.constant 25 : index
    %c204_395 = arith.constant 204 : index
    %158 = vector.load %arg7[%c25_394, %c204_395] : memref<27x1632xbf16, #tpu.memory_space<vmem>>, vector<1x204xbf16>
    tpu.vector_store %arg7[%c25_394, %c204_395], %157 {strides = array<i32>} : memref<27x1632xbf16, #tpu.memory_space<vmem>>, vector<1x204xbf16>,
    %c0_396 = arith.constant 0 : index
    %c0_397 = arith.constant 0 : index
    %c0_398 = arith.constant 0 : index
    %c1_399 = arith.constant 1 : index
    %c0_400 = arith.constant 0 : index
    %c18_401 = arith.constant 18 : index
    %159 = vector.load %arg3[%c0_396, %c0_397, %c0_398, %c1_399, %c0_400, %c18_401] : memref<1x2x2x2x1x222xbf16, #tpu.memory_space<vmem>>, vector<1x1x1x1x1x204xbf16>
    %160 = vector.shape_cast %159 : vector<1x1x1x1x1x204xbf16> to vector<1x204xbf16>
    %c26_402 = arith.constant 26 : index
    %c204_403 = arith.constant 204 : index
    %161 = vector.load %arg7[%c26_402, %c204_403] : memref<27x1632xbf16, #tpu.memory_space<vmem>>, vector<1x204xbf16>
    tpu.vector_store %arg7[%c26_402, %c204_403], %160 {strides = array<i32>} : memref<27x1632xbf16, #tpu.memory_space<vmem>>, vector<1x204xbf16>,
    %c0_404 = arith.constant 0 : index
    %c0_405 = arith.constant 0 : index
    %c1_406 = arith.constant 1 : index
    %c0_407 = arith.constant 0 : index
    %c0_408 = arith.constant 0 : index
    %c0_409 = arith.constant 0 : index
    %162 = vector.load %arg2[%c0_404, %c0_405, %c1_406, %c0_407, %c0_408, %c0_409] : memref<1x2x2x2x1x222xbf16, #tpu.memory_space<vmem>>, vector<1x1x1x1x1x204xbf16>
    %163 = vector.shape_cast %162 : vector<1x1x1x1x1x204xbf16> to vector<1x204xbf16>
    %c0_410 = arith.constant 0 : index
    %c408 = arith.constant 408 : index
    %164 = vector.load %arg7[%c0_410, %c408] : memref<27x1632xbf16, #tpu.memory_space<vmem>>, vector<1x204xbf16>
    tpu.vector_store %arg7[%c0_410, %c408], %163 {strides = array<i32>} : memref<27x1632xbf16, #tpu.memory_space<vmem>>, vector<1x204xbf16>,
    %c0_411 = arith.constant 0 : index
    %c0_412 = arith.constant 0 : index
    %c1_413 = arith.constant 1 : index
    %c1_414 = arith.constant 1 : index
    %c0_415 = arith.constant 0 : index
    %c0_416 = arith.constant 0 : index
    %165 = vector.load %arg2[%c0_411, %c0_412, %c1_413, %c1_414, %c0_415, %c0_416] : memref<1x2x2x2x1x222xbf16, #tpu.memory_space<vmem>>, vector<1x1x1x1x1x204xbf16>
    %166 = vector.shape_cast %165 : vector<1x1x1x1x1x204xbf16> to vector<1x204xbf16>
    %c1_417 = arith.constant 1 : index
    %c408_418 = arith.constant 408 : index
    %167 = vector.load %arg7[%c1_417, %c408_418] : memref<27x1632xbf16, #tpu.memory_space<vmem>>, vector<1x204xbf16>
    tpu.vector_store %arg7[%c1_417, %c408_418], %166 {strides = array<i32>} : memref<27x1632xbf16, #tpu.memory_space<vmem>>, vector<1x204xbf16>,
    %c0_419 = arith.constant 0 : index
    %c0_420 = arith.constant 0 : index
    %c1_421 = arith.constant 1 : index
    %c0_422 = arith.constant 0 : index
    %c0_423 = arith.constant 0 : index
    %c1_424 = arith.constant 1 : index
    %168 = vector.load %arg2[%c0_419, %c0_420, %c1_421, %c0_422, %c0_423, %c1_424] : memref<1x2x2x2x1x222xbf16, #tpu.memory_space<vmem>>, vector<1x1x1x1x1x204xbf16>
    %169 = vector.shape_cast %168 : vector<1x1x1x1x1x204xbf16> to vector<1x204xbf16>
    %c2_425 = arith.constant 2 : index
    %c408_426 = arith.constant 408 : index
    %170 = vector.load %arg7[%c2_425, %c408_426] : memref<27x1632xbf16, #tpu.memory_space<vmem>>, vector<1x204xbf16>
    tpu.vector_store %arg7[%c2_425, %c408_426], %169 {strides = array<i32>} : memref<27x1632xbf16, #tpu.memory_space<vmem>>, vector<1x204xbf16>,
    %c0_427 = arith.constant 0 : index
    %c0_428 = arith.constant 0 : index
    %c0_429 = arith.constant 0 : index
    %c0_430 = arith.constant 0 : index
    %c0_431 = arith.constant 0 : index
    %c17_432 = arith.constant 17 : index
    %171 = vector.load %arg2[%c0_427, %c0_428, %c0_429, %c0_430, %c0_431, %c17_432] : memref<1x2x2x2x1x222xbf16, #tpu.memory_space<vmem>>, vector<1x1x1x1x1x204xbf16>
    %172 = vector.shape_cast %171 : vector<1x1x1x1x1x204xbf16> to vector<1x204xbf16>
    %c3_433 = arith.constant 3 : index
    %c408_434 = arith.constant 408 : index
    %173 = vector.load %arg7[%c3_433, %c408_434] : memref<27x1632xbf16, #tpu.memory_space<vmem>>, vector<1x204xbf16>
    tpu.vector_store %arg7[%c3_433, %c408_434], %172 {strides = array<i32>} : memref<27x1632xbf16, #tpu.memory_space<vmem>>, vector<1x204xbf16>,
    %c0_435 = arith.constant 0 : index
    %c0_436 = arith.constant 0 : index
    %c0_437 = arith.constant 0 : index
    %c1_438 = arith.constant 1 : index
    %c0_439 = arith.constant 0 : index
    %c17_440 = arith.constant 17 : index
    %174 = vector.load %arg2[%c0_435, %c0_436, %c0_437, %c1_438, %c0_439, %c17_440] : memref<1x2x2x2x1x222xbf16, #tpu.memory_space<vmem>>, vector<1x1x1x1x1x204xbf16>
    %175 = vector.shape_cast %174 : vector<1x1x1x1x1x204xbf16> to vector<1x204xbf16>
    %c4_441 = arith.constant 4 : index
    %c408_442 = arith.constant 408 : index
    %176 = vector.load %arg7[%c4_441, %c408_442] : memref<27x1632xbf16, #tpu.memory_space<vmem>>, vector<1x204xbf16>
    tpu.vector_store %arg7[%c4_441, %c408_442], %175 {strides = array<i32>} : memref<27x1632xbf16, #tpu.memory_space<vmem>>, vector<1x204xbf16>,
    %c0_443 = arith.constant 0 : index
    %c0_444 = arith.constant 0 : index
    %c0_445 = arith.constant 0 : index
    %c0_446 = arith.constant 0 : index
    %c0_447 = arith.constant 0 : index
    %c18_448 = arith.constant 18 : index
    %177 = vector.load %arg2[%c0_443, %c0_444, %c0_445, %c0_446, %c0_447, %c18_448] : memref<1x2x2x2x1x222xbf16, #tpu.memory_space<vmem>>, vector<1x1x1x1x1x204xbf16>
    %178 = vector.shape_cast %177 : vector<1x1x1x1x1x204xbf16> to vector<1x204xbf16>
    %c5_449 = arith.constant 5 : index
    %c408_450 = arith.constant 408 : index
    %179 = vector.load %arg7[%c5_449, %c408_450] : memref<27x1632xbf16, #tpu.memory_space<vmem>>, vector<1x204xbf16>
    tpu.vector_store %arg7[%c5_449, %c408_450], %178 {strides = array<i32>} : memref<27x1632xbf16, #tpu.memory_space<vmem>>, vector<1x204xbf16>,
    %c0_451 = arith.constant 0 : index
    %c0_452 = arith.constant 0 : index
    %c1_453 = arith.constant 1 : index
    %c0_454 = arith.constant 0 : index
    %c0_455 = arith.constant 0 : index
    %c17_456 = arith.constant 17 : index
    %180 = vector.load %arg2[%c0_451, %c0_452, %c1_453, %c0_454, %c0_455, %c17_456] : memref<1x2x2x2x1x222xbf16, #tpu.memory_space<vmem>>, vector<1x1x1x1x1x204xbf16>
    %181 = vector.shape_cast %180 : vector<1x1x1x1x1x204xbf16> to vector<1x204xbf16>
    %c6_457 = arith.constant 6 : index
    %c408_458 = arith.constant 408 : index
    %182 = vector.load %arg7[%c6_457, %c408_458] : memref<27x1632xbf16, #tpu.memory_space<vmem>>, vector<1x204xbf16>
    tpu.vector_store %arg7[%c6_457, %c408_458], %181 {strides = array<i32>} : memref<27x1632xbf16, #tpu.memory_space<vmem>>, vector<1x204xbf16>,
    %c0_459 = arith.constant 0 : index
    %c0_460 = arith.constant 0 : index
    %c1_461 = arith.constant 1 : index
    %c1_462 = arith.constant 1 : index
    %c0_463 = arith.constant 0 : index
    %c17_464 = arith.constant 17 : index
    %183 = vector.load %arg2[%c0_459, %c0_460, %c1_461, %c1_462, %c0_463, %c17_464] : memref<1x2x2x2x1x222xbf16, #tpu.memory_space<vmem>>, vector<1x1x1x1x1x204xbf16>
    %184 = vector.shape_cast %183 : vector<1x1x1x1x1x204xbf16> to vector<1x204xbf16>
    %c7_465 = arith.constant 7 : index
    %c408_466 = arith.constant 408 : index
    %185 = vector.load %arg7[%c7_465, %c408_466] : memref<27x1632xbf16, #tpu.memory_space<vmem>>, vector<1x204xbf16>
    tpu.vector_store %arg7[%c7_465, %c408_466], %184 {strides = array<i32>} : memref<27x1632xbf16, #tpu.memory_space<vmem>>, vector<1x204xbf16>,
    %c0_467 = arith.constant 0 : index
    %c0_468 = arith.constant 0 : index
    %c1_469 = arith.constant 1 : index
    %c0_470 = arith.constant 0 : index
    %c0_471 = arith.constant 0 : index
    %c18_472 = arith.constant 18 : index
    %186 = vector.load %arg2[%c0_467, %c0_468, %c1_469, %c0_470, %c0_471, %c18_472] : memref<1x2x2x2x1x222xbf16, #tpu.memory_space<vmem>>, vector<1x1x1x1x1x204xbf16>
    %187 = vector.shape_cast %186 : vector<1x1x1x1x1x204xbf16> to vector<1x204xbf16>
    %c8_473 = arith.constant 8 : index
    %c408_474 = arith.constant 408 : index
    %188 = vector.load %arg7[%c8_473, %c408_474] : memref<27x1632xbf16, #tpu.memory_space<vmem>>, vector<1x204xbf16>
    tpu.vector_store %arg7[%c8_473, %c408_474], %187 {strides = array<i32>} : memref<27x1632xbf16, #tpu.memory_space<vmem>>, vector<1x204xbf16>,
    %c0_475 = arith.constant 0 : index
    %c1_476 = arith.constant 1 : index
    %c1_477 = arith.constant 1 : index
    %c0_478 = arith.constant 0 : index
    %c0_479 = arith.constant 0 : index
    %c0_480 = arith.constant 0 : index
    %189 = vector.load %arg2[%c0_475, %c1_476, %c1_477, %c0_478, %c0_479, %c0_480] : memref<1x2x2x2x1x222xbf16, #tpu.memory_space<vmem>>, vector<1x1x1x1x1x204xbf16>
    %190 = vector.shape_cast %189 : vector<1x1x1x1x1x204xbf16> to vector<1x204xbf16>
    %c9_481 = arith.constant 9 : index
    %c408_482 = arith.constant 408 : index
    %191 = vector.load %arg7[%c9_481, %c408_482] : memref<27x1632xbf16, #tpu.memory_space<vmem>>, vector<1x204xbf16>
    tpu.vector_store %arg7[%c9_481, %c408_482], %190 {strides = array<i32>} : memref<27x1632xbf16, #tpu.memory_space<vmem>>, vector<1x204xbf16>,
    %c0_483 = arith.constant 0 : index
    %c1_484 = arith.constant 1 : index
    %c1_485 = arith.constant 1 : index
    %c1_486 = arith.constant 1 : index
    %c0_487 = arith.constant 0 : index
    %c0_488 = arith.constant 0 : index
    %192 = vector.load %arg2[%c0_483, %c1_484, %c1_485, %c1_486, %c0_487, %c0_488] : memref<1x2x2x2x1x222xbf16, #tpu.memory_space<vmem>>, vector<1x1x1x1x1x204xbf16>
    %193 = vector.shape_cast %192 : vector<1x1x1x1x1x204xbf16> to vector<1x204xbf16>
    %c10_489 = arith.constant 10 : index
    %c408_490 = arith.constant 408 : index
    %194 = vector.load %arg7[%c10_489, %c408_490] : memref<27x1632xbf16, #tpu.memory_space<vmem>>, vector<1x204xbf16>
    tpu.vector_store %arg7[%c10_489, %c408_490], %193 {strides = array<i32>} : memref<27x1632xbf16, #tpu.memory_space<vmem>>, vector<1x204xbf16>,
    %c0_491 = arith.constant 0 : index
    %c1_492 = arith.constant 1 : index
    %c1_493 = arith.constant 1 : index
    %c0_494 = arith.constant 0 : index
    %c0_495 = arith.constant 0 : index
    %c1_496 = arith.constant 1 : index
    %195 = vector.load %arg2[%c0_491, %c1_492, %c1_493, %c0_494, %c0_495, %c1_496] : memref<1x2x2x2x1x222xbf16, #tpu.memory_space<vmem>>, vector<1x1x1x1x1x204xbf16>
    %196 = vector.shape_cast %195 : vector<1x1x1x1x1x204xbf16> to vector<1x204xbf16>
    %c11_497 = arith.constant 11 : index
    %c408_498 = arith.constant 408 : index
    %197 = vector.load %arg7[%c11_497, %c408_498] : memref<27x1632xbf16, #tpu.memory_space<vmem>>, vector<1x204xbf16>
    tpu.vector_store %arg7[%c11_497, %c408_498], %196 {strides = array<i32>} : memref<27x1632xbf16, #tpu.memory_space<vmem>>, vector<1x204xbf16>,
    %c0_499 = arith.constant 0 : index
    %c1_500 = arith.constant 1 : index
    %c0_501 = arith.constant 0 : index
    %c0_502 = arith.constant 0 : index
    %c0_503 = arith.constant 0 : index
    %c17_504 = arith.constant 17 : index
    %198 = vector.load %arg2[%c0_499, %c1_500, %c0_501, %c0_502, %c0_503, %c17_504] : memref<1x2x2x2x1x222xbf16, #tpu.memory_space<vmem>>, vector<1x1x1x1x1x204xbf16>
    %199 = vector.shape_cast %198 : vector<1x1x1x1x1x204xbf16> to vector<1x204xbf16>
    %c12_505 = arith.constant 12 : index
    %c408_506 = arith.constant 408 : index
    %200 = vector.load %arg7[%c12_505, %c408_506] : memref<27x1632xbf16, #tpu.memory_space<vmem>>, vector<1x204xbf16>
    tpu.vector_store %arg7[%c12_505, %c408_506], %199 {strides = array<i32>} : memref<27x1632xbf16, #tpu.memory_space<vmem>>, vector<1x204xbf16>,
    %c0_507 = arith.constant 0 : index
    %c1_508 = arith.constant 1 : index
    %c0_509 = arith.constant 0 : index
    %c1_510 = arith.constant 1 : index
    %c0_511 = arith.constant 0 : index
    %c17_512 = arith.constant 17 : index
    %201 = vector.load %arg2[%c0_507, %c1_508, %c0_509, %c1_510, %c0_511, %c17_512] : memref<1x2x2x2x1x222xbf16, #tpu.memory_space<vmem>>, vector<1x1x1x1x1x204xbf16>
    %202 = vector.shape_cast %201 : vector<1x1x1x1x1x204xbf16> to vector<1x204xbf16>
    %c13_513 = arith.constant 13 : index
    %c408_514 = arith.constant 408 : index
    %203 = vector.load %arg7[%c13_513, %c408_514] : memref<27x1632xbf16, #tpu.memory_space<vmem>>, vector<1x204xbf16>
    tpu.vector_store %arg7[%c13_513, %c408_514], %202 {strides = array<i32>} : memref<27x1632xbf16, #tpu.memory_space<vmem>>, vector<1x204xbf16>,
    %c0_515 = arith.constant 0 : index
    %c1_516 = arith.constant 1 : index
    %c0_517 = arith.constant 0 : index
    %c0_518 = arith.constant 0 : index
    %c0_519 = arith.constant 0 : index
    %c18_520 = arith.constant 18 : index
    %204 = vector.load %arg2[%c0_515, %c1_516, %c0_517, %c0_518, %c0_519, %c18_520] : memref<1x2x2x2x1x222xbf16, #tpu.memory_space<vmem>>, vector<1x1x1x1x1x204xbf16>
    %205 = vector.shape_cast %204 : vector<1x1x1x1x1x204xbf16> to vector<1x204xbf16>
    %c14_521 = arith.constant 14 : index
    %c408_522 = arith.constant 408 : index
    %206 = vector.load %arg7[%c14_521, %c408_522] : memref<27x1632xbf16, #tpu.memory_space<vmem>>, vector<1x204xbf16>
    tpu.vector_store %arg7[%c14_521, %c408_522], %205 {strides = array<i32>} : memref<27x1632xbf16, #tpu.memory_space<vmem>>, vector<1x204xbf16>,
    %c0_523 = arith.constant 0 : index
    %c1_524 = arith.constant 1 : index
    %c1_525 = arith.constant 1 : index
    %c0_526 = arith.constant 0 : index
    %c0_527 = arith.constant 0 : index
    %c17_528 = arith.constant 17 : index
    %207 = vector.load %arg2[%c0_523, %c1_524, %c1_525, %c0_526, %c0_527, %c17_528] : memref<1x2x2x2x1x222xbf16, #tpu.memory_space<vmem>>, vector<1x1x1x1x1x204xbf16>
    %208 = vector.shape_cast %207 : vector<1x1x1x1x1x204xbf16> to vector<1x204xbf16>
    %c15_529 = arith.constant 15 : index
    %c408_530 = arith.constant 408 : index
    %209 = vector.load %arg7[%c15_529, %c408_530] : memref<27x1632xbf16, #tpu.memory_space<vmem>>, vector<1x204xbf16>
    tpu.vector_store %arg7[%c15_529, %c408_530], %208 {strides = array<i32>} : memref<27x1632xbf16, #tpu.memory_space<vmem>>, vector<1x204xbf16>,
    %c0_531 = arith.constant 0 : index
    %c1_532 = arith.constant 1 : index
    %c1_533 = arith.constant 1 : index
    %c1_534 = arith.constant 1 : index
    %c0_535 = arith.constant 0 : index
    %c17_536 = arith.constant 17 : index
    %210 = vector.load %arg2[%c0_531, %c1_532, %c1_533, %c1_534, %c0_535, %c17_536] : memref<1x2x2x2x1x222xbf16, #tpu.memory_space<vmem>>, vector<1x1x1x1x1x204xbf16>
    %211 = vector.shape_cast %210 : vector<1x1x1x1x1x204xbf16> to vector<1x204xbf16>
    %c16_537 = arith.constant 16 : index
    %c408_538 = arith.constant 408 : index
    %212 = vector.load %arg7[%c16_537, %c408_538] : memref<27x1632xbf16, #tpu.memory_space<vmem>>, vector<1x204xbf16>
    tpu.vector_store %arg7[%c16_537, %c408_538], %211 {strides = array<i32>} : memref<27x1632xbf16, #tpu.memory_space<vmem>>, vector<1x204xbf16>,
    %c0_539 = arith.constant 0 : index
    %c1_540 = arith.constant 1 : index
    %c1_541 = arith.constant 1 : index
    %c0_542 = arith.constant 0 : index
    %c0_543 = arith.constant 0 : index
    %c18_544 = arith.constant 18 : index
    %213 = vector.load %arg2[%c0_539, %c1_540, %c1_541, %c0_542, %c0_543, %c18_544] : memref<1x2x2x2x1x222xbf16, #tpu.memory_space<vmem>>, vector<1x1x1x1x1x204xbf16>
    %214 = vector.shape_cast %213 : vector<1x1x1x1x1x204xbf16> to vector<1x204xbf16>
    %c17_545 = arith.constant 17 : index
    %c408_546 = arith.constant 408 : index
    %215 = vector.load %arg7[%c17_545, %c408_546] : memref<27x1632xbf16, #tpu.memory_space<vmem>>, vector<1x204xbf16>
    tpu.vector_store %arg7[%c17_545, %c408_546], %214 {strides = array<i32>} : memref<27x1632xbf16, #tpu.memory_space<vmem>>, vector<1x204xbf16>,
    %c0_547 = arith.constant 0 : index
    %c0_548 = arith.constant 0 : index
    %c1_549 = arith.constant 1 : index
    %c0_550 = arith.constant 0 : index
    %c0_551 = arith.constant 0 : index
    %c0_552 = arith.constant 0 : index
    %216 = vector.load %arg3[%c0_547, %c0_548, %c1_549, %c0_550, %c0_551, %c0_552] : memref<1x2x2x2x1x222xbf16, #tpu.memory_space<vmem>>, vector<1x1x1x1x1x204xbf16>
    %217 = vector.shape_cast %216 : vector<1x1x1x1x1x204xbf16> to vector<1x204xbf16>
    %c18_553 = arith.constant 18 : index
    %c408_554 = arith.constant 408 : index
    %218 = vector.load %arg7[%c18_553, %c408_554] : memref<27x1632xbf16, #tpu.memory_space<vmem>>, vector<1x204xbf16>
    tpu.vector_store %arg7[%c18_553, %c408_554], %217 {strides = array<i32>} : memref<27x1632xbf16, #tpu.memory_space<vmem>>, vector<1x204xbf16>,
    %c0_555 = arith.constant 0 : index
    %c0_556 = arith.constant 0 : index
    %c1_557 = arith.constant 1 : index
    %c1_558 = arith.constant 1 : index
    %c0_559 = arith.constant 0 : index
    %c0_560 = arith.constant 0 : index
    %219 = vector.load %arg3[%c0_555, %c0_556, %c1_557, %c1_558, %c0_559, %c0_560] : memref<1x2x2x2x1x222xbf16, #tpu.memory_space<vmem>>, vector<1x1x1x1x1x204xbf16>
    %220 = vector.shape_cast %219 : vector<1x1x1x1x1x204xbf16> to vector<1x204xbf16>
    %c19_561 = arith.constant 19 : index
    %c408_562 = arith.constant 408 : index
    %221 = vector.load %arg7[%c19_561, %c408_562] : memref<27x1632xbf16, #tpu.memory_space<vmem>>, vector<1x204xbf16>
    tpu.vector_store %arg7[%c19_561, %c408_562], %220 {strides = array<i32>} : memref<27x1632xbf16, #tpu.memory_space<vmem>>, vector<1x204xbf16>,
    %c0_563 = arith.constant 0 : index
    %c0_564 = arith.constant 0 : index
    %c1_565 = arith.constant 1 : index
    %c0_566 = arith.constant 0 : index
    %c0_567 = arith.constant 0 : index
    %c1_568 = arith.constant 1 : index
    %222 = vector.load %arg3[%c0_563, %c0_564, %c1_565, %c0_566, %c0_567, %c1_568] : memref<1x2x2x2x1x222xbf16, #tpu.memory_space<vmem>>, vector<1x1x1x1x1x204xbf16>
    %223 = vector.shape_cast %222 : vector<1x1x1x1x1x204xbf16> to vector<1x204xbf16>
    %c20_569 = arith.constant 20 : index
    %c408_570 = arith.constant 408 : index
    %224 = vector.load %arg7[%c20_569, %c408_570] : memref<27x1632xbf16, #tpu.memory_space<vmem>>, vector<1x204xbf16>
    tpu.vector_store %arg7[%c20_569, %c408_570], %223 {strides = array<i32>} : memref<27x1632xbf16, #tpu.memory_space<vmem>>, vector<1x204xbf16>,
    %c0_571 = arith.constant 0 : index
    %c0_572 = arith.constant 0 : index
    %c0_573 = arith.constant 0 : index
    %c0_574 = arith.constant 0 : index
    %c0_575 = arith.constant 0 : index
    %c17_576 = arith.constant 17 : index
    %225 = vector.load %arg3[%c0_571, %c0_572, %c0_573, %c0_574, %c0_575, %c17_576] : memref<1x2x2x2x1x222xbf16, #tpu.memory_space<vmem>>, vector<1x1x1x1x1x204xbf16>
    %226 = vector.shape_cast %225 : vector<1x1x1x1x1x204xbf16> to vector<1x204xbf16>
    %c21_577 = arith.constant 21 : index
    %c408_578 = arith.constant 408 : index
    %227 = vector.load %arg7[%c21_577, %c408_578] : memref<27x1632xbf16, #tpu.memory_space<vmem>>, vector<1x204xbf16>
    tpu.vector_store %arg7[%c21_577, %c408_578], %226 {strides = array<i32>} : memref<27x1632xbf16, #tpu.memory_space<vmem>>, vector<1x204xbf16>,
    %c0_579 = arith.constant 0 : index
    %c0_580 = arith.constant 0 : index
    %c0_581 = arith.constant 0 : index
    %c1_582 = arith.constant 1 : index
    %c0_583 = arith.constant 0 : index
    %c17_584 = arith.constant 17 : index
    %228 = vector.load %arg3[%c0_579, %c0_580, %c0_581, %c1_582, %c0_583, %c17_584] : memref<1x2x2x2x1x222xbf16, #tpu.memory_space<vmem>>, vector<1x1x1x1x1x204xbf16>
    %229 = vector.shape_cast %228 : vector<1x1x1x1x1x204xbf16> to vector<1x204xbf16>
    %c22_585 = arith.constant 22 : index
    %c408_586 = arith.constant 408 : index
    %230 = vector.load %arg7[%c22_585, %c408_586] : memref<27x1632xbf16, #tpu.memory_space<vmem>>, vector<1x204xbf16>
    tpu.vector_store %arg7[%c22_585, %c408_586], %229 {strides = array<i32>} : memref<27x1632xbf16, #tpu.memory_space<vmem>>, vector<1x204xbf16>,
    %c0_587 = arith.constant 0 : index
    %c0_588 = arith.constant 0 : index
    %c0_589 = arith.constant 0 : index
    %c0_590 = arith.constant 0 : index
    %c0_591 = arith.constant 0 : index
    %c18_592 = arith.constant 18 : index
    %231 = vector.load %arg3[%c0_587, %c0_588, %c0_589, %c0_590, %c0_591, %c18_592] : memref<1x2x2x2x1x222xbf16, #tpu.memory_space<vmem>>, vector<1x1x1x1x1x204xbf16>
    %232 = vector.shape_cast %231 : vector<1x1x1x1x1x204xbf16> to vector<1x204xbf16>
    %c23_593 = arith.constant 23 : index
    %c408_594 = arith.constant 408 : index
    %233 = vector.load %arg7[%c23_593, %c408_594] : memref<27x1632xbf16, #tpu.memory_space<vmem>>, vector<1x204xbf16>
    tpu.vector_store %arg7[%c23_593, %c408_594], %232 {strides = array<i32>} : memref<27x1632xbf16, #tpu.memory_space<vmem>>, vector<1x204xbf16>,
    %c0_595 = arith.constant 0 : index
    %c0_596 = arith.constant 0 : index
    %c1_597 = arith.constant 1 : index
    %c0_598 = arith.constant 0 : index
    %c0_599 = arith.constant 0 : index
    %c17_600 = arith.constant 17 : index
    %234 = vector.load %arg3[%c0_595, %c0_596, %c1_597, %c0_598, %c0_599, %c17_600] : memref<1x2x2x2x1x222xbf16, #tpu.memory_space<vmem>>, vector<1x1x1x1x1x204xbf16>
    %235 = vector.shape_cast %234 : vector<1x1x1x1x1x204xbf16> to vector<1x204xbf16>
    %c24_601 = arith.constant 24 : index
    %c408_602 = arith.constant 408 : index
    %236 = vector.load %arg7[%c24_601, %c408_602] : memref<27x1632xbf16, #tpu.memory_space<vmem>>, vector<1x204xbf16>
    tpu.vector_store %arg7[%c24_601, %c408_602], %235 {strides = array<i32>} : memref<27x1632xbf16, #tpu.memory_space<vmem>>, vector<1x204xbf16>,
    %c0_603 = arith.constant 0 : index
    %c0_604 = arith.constant 0 : index
    %c1_605 = arith.constant 1 : index
    %c1_606 = arith.constant 1 : index
    %c0_607 = arith.constant 0 : index
    %c17_608 = arith.constant 17 : index
    %237 = vector.load %arg3[%c0_603, %c0_604, %c1_605, %c1_606, %c0_607, %c17_608] : memref<1x2x2x2x1x222xbf16, #tpu.memory_space<vmem>>, vector<1x1x1x1x1x204xbf16>
    %238 = vector.shape_cast %237 : vector<1x1x1x1x1x204xbf16> to vector<1x204xbf16>
    %c25_609 = arith.constant 25 : index
    %c408_610 = arith.constant 408 : index
    %239 = vector.load %arg7[%c25_609, %c408_610] : memref<27x1632xbf16, #tpu.memory_space<vmem>>, vector<1x204xbf16>
    tpu.vector_store %arg7[%c25_609, %c408_610], %238 {strides = array<i32>} : memref<27x1632xbf16, #tpu.memory_space<vmem>>, vector<1x204xbf16>,
    %c0_611 = arith.constant 0 : index
    %c0_612 = arith.constant 0 : index
    %c1_613 = arith.constant 1 : index
    %c0_614 = arith.constant 0 : index
    %c0_615 = arith.constant 0 : index
    %c18_616 = arith.constant 18 : index
    %240 = vector.load %arg3[%c0_611, %c0_612, %c1_613, %c0_614, %c0_615, %c18_616] : memref<1x2x2x2x1x222xbf16, #tpu.memory_space<vmem>>, vector<1x1x1x1x1x204xbf16>
    %241 = vector.shape_cast %240 : vector<1x1x1x1x1x204xbf16> to vector<1x204xbf16>
    %c26_617 = arith.constant 26 : index
    %c408_618 = arith.constant 408 : index
    %242 = vector.load %arg7[%c26_617, %c408_618] : memref<27x1632xbf16, #tpu.memory_space<vmem>>, vector<1x204xbf16>
    tpu.vector_store %arg7[%c26_617, %c408_618], %241 {strides = array<i32>} : memref<27x1632xbf16, #tpu.memory_space<vmem>>, vector<1x204xbf16>,
    %c0_619 = arith.constant 0 : index
    %c0_620 = arith.constant 0 : index
    %c1_621 = arith.constant 1 : index
    %c1_622 = arith.constant 1 : index
    %c0_623 = arith.constant 0 : index
    %c0_624 = arith.constant 0 : index
    %243 = vector.load %arg2[%c0_619, %c0_620, %c1_621, %c1_622, %c0_623, %c0_624] : memref<1x2x2x2x1x222xbf16, #tpu.memory_space<vmem>>, vector<1x1x1x1x1x204xbf16>
    %244 = vector.shape_cast %243 : vector<1x1x1x1x1x204xbf16> to vector<1x204xbf16>
    %c0_625 = arith.constant 0 : index
    %c612 = arith.constant 612 : index
    %245 = vector.load %arg7[%c0_625, %c612] : memref<27x1632xbf16, #tpu.memory_space<vmem>>, vector<1x204xbf16>
    tpu.vector_store %arg7[%c0_625, %c612], %244 {strides = array<i32>} : memref<27x1632xbf16, #tpu.memory_space<vmem>>, vector<1x204xbf16>,
    %c0_626 = arith.constant 0 : index
    %c0_627 = arith.constant 0 : index
    %c1_628 = arith.constant 1 : index
    %c0_629 = arith.constant 0 : index
    %c0_630 = arith.constant 0 : index
    %c1_631 = arith.constant 1 : index
    %246 = vector.load %arg2[%c0_626, %c0_627, %c1_628, %c0_629, %c0_630, %c1_631] : memref<1x2x2x2x1x222xbf16, #tpu.memory_space<vmem>>, vector<1x1x1x1x1x204xbf16>
    %247 = vector.shape_cast %246 : vector<1x1x1x1x1x204xbf16> to vector<1x204xbf16>
    %c1_632 = arith.constant 1 : index
    %c612_633 = arith.constant 612 : index
    %248 = vector.load %arg7[%c1_632, %c612_633] : memref<27x1632xbf16, #tpu.memory_space<vmem>>, vector<1x204xbf16>
    tpu.vector_store %arg7[%c1_632, %c612_633], %247 {strides = array<i32>} : memref<27x1632xbf16, #tpu.memory_space<vmem>>, vector<1x204xbf16>,
    %c0_634 = arith.constant 0 : index
    %c0_635 = arith.constant 0 : index
    %c1_636 = arith.constant 1 : index
    %c1_637 = arith.constant 1 : index
    %c0_638 = arith.constant 0 : index
    %c1_639 = arith.constant 1 : index
    %249 = vector.load %arg2[%c0_634, %c0_635, %c1_636, %c1_637, %c0_638, %c1_639] : memref<1x2x2x2x1x222xbf16, #tpu.memory_space<vmem>>, vector<1x1x1x1x1x204xbf16>
    %250 = vector.shape_cast %249 : vector<1x1x1x1x1x204xbf16> to vector<1x204xbf16>
    %c2_640 = arith.constant 2 : index
    %c612_641 = arith.constant 612 : index
    %251 = vector.load %arg7[%c2_640, %c612_641] : memref<27x1632xbf16, #tpu.memory_space<vmem>>, vector<1x204xbf16>
    tpu.vector_store %arg7[%c2_640, %c612_641], %250 {strides = array<i32>} : memref<27x1632xbf16, #tpu.memory_space<vmem>>, vector<1x204xbf16>,
    %c0_642 = arith.constant 0 : index
    %c0_643 = arith.constant 0 : index
    %c0_644 = arith.constant 0 : index
    %c1_645 = arith.constant 1 : index
    %c0_646 = arith.constant 0 : index
    %c17_647 = arith.constant 17 : index
    %252 = vector.load %arg2[%c0_642, %c0_643, %c0_644, %c1_645, %c0_646, %c17_647] : memref<1x2x2x2x1x222xbf16, #tpu.memory_space<vmem>>, vector<1x1x1x1x1x204xbf16>
    %253 = vector.shape_cast %252 : vector<1x1x1x1x1x204xbf16> to vector<1x204xbf16>
    %c3_648 = arith.constant 3 : index
    %c612_649 = arith.constant 612 : index
    %254 = vector.load %arg7[%c3_648, %c612_649] : memref<27x1632xbf16, #tpu.memory_space<vmem>>, vector<1x204xbf16>
    tpu.vector_store %arg7[%c3_648, %c612_649], %253 {strides = array<i32>} : memref<27x1632xbf16, #tpu.memory_space<vmem>>, vector<1x204xbf16>,
    %c0_650 = arith.constant 0 : index
    %c0_651 = arith.constant 0 : index
    %c0_652 = arith.constant 0 : index
    %c0_653 = arith.constant 0 : index
    %c0_654 = arith.constant 0 : index
    %c18_655 = arith.constant 18 : index
    %255 = vector.load %arg2[%c0_650, %c0_651, %c0_652, %c0_653, %c0_654, %c18_655] : memref<1x2x2x2x1x222xbf16, #tpu.memory_space<vmem>>, vector<1x1x1x1x1x204xbf16>
    %256 = vector.shape_cast %255 : vector<1x1x1x1x1x204xbf16> to vector<1x204xbf16>
    %c4_656 = arith.constant 4 : index
    %c612_657 = arith.constant 612 : index
    %257 = vector.load %arg7[%c4_656, %c612_657] : memref<27x1632xbf16, #tpu.memory_space<vmem>>, vector<1x204xbf16>
    tpu.vector_store %arg7[%c4_656, %c612_657], %256 {strides = array<i32>} : memref<27x1632xbf16, #tpu.memory_space<vmem>>, vector<1x204xbf16>,
    %c0_658 = arith.constant 0 : index
    %c0_659 = arith.constant 0 : index
    %c0_660 = arith.constant 0 : index
    %c1_661 = arith.constant 1 : index
    %c0_662 = arith.constant 0 : index
    %c18_663 = arith.constant 18 : index
    %258 = vector.load %arg2[%c0_658, %c0_659, %c0_660, %c1_661, %c0_662, %c18_663] : memref<1x2x2x2x1x222xbf16, #tpu.memory_space<vmem>>, vector<1x1x1x1x1x204xbf16>
    %259 = vector.shape_cast %258 : vector<1x1x1x1x1x204xbf16> to vector<1x204xbf16>
    %c5_664 = arith.constant 5 : index
    %c612_665 = arith.constant 612 : index
    %260 = vector.load %arg7[%c5_664, %c612_665] : memref<27x1632xbf16, #tpu.memory_space<vmem>>, vector<1x204xbf16>
    tpu.vector_store %arg7[%c5_664, %c612_665], %259 {strides = array<i32>} : memref<27x1632xbf16, #tpu.memory_space<vmem>>, vector<1x204xbf16>,
    %c0_666 = arith.constant 0 : index
    %c0_667 = arith.constant 0 : index
    %c1_668 = arith.constant 1 : index
    %c1_669 = arith.constant 1 : index
    %c0_670 = arith.constant 0 : index
    %c17_671 = arith.constant 17 : index
    %261 = vector.load %arg2[%c0_666, %c0_667, %c1_668, %c1_669, %c0_670, %c17_671] : memref<1x2x2x2x1x222xbf16, #tpu.memory_space<vmem>>, vector<1x1x1x1x1x204xbf16>
    %262 = vector.shape_cast %261 : vector<1x1x1x1x1x204xbf16> to vector<1x204xbf16>
    %c6_672 = arith.constant 6 : index
    %c612_673 = arith.constant 612 : index
    %263 = vector.load %arg7[%c6_672, %c612_673] : memref<27x1632xbf16, #tpu.memory_space<vmem>>, vector<1x204xbf16>
    tpu.vector_store %arg7[%c6_672, %c612_673], %262 {strides = array<i32>} : memref<27x1632xbf16, #tpu.memory_space<vmem>>, vector<1x204xbf16>,
    %c0_674 = arith.constant 0 : index
    %c0_675 = arith.constant 0 : index
    %c1_676 = arith.constant 1 : index
    %c0_677 = arith.constant 0 : index
    %c0_678 = arith.constant 0 : index
    %c18_679 = arith.constant 18 : index
    %264 = vector.load %arg2[%c0_674, %c0_675, %c1_676, %c0_677, %c0_678, %c18_679] : memref<1x2x2x2x1x222xbf16, #tpu.memory_space<vmem>>, vector<1x1x1x1x1x204xbf16>
    %265 = vector.shape_cast %264 : vector<1x1x1x1x1x204xbf16> to vector<1x204xbf16>
    %c7_680 = arith.constant 7 : index
    %c612_681 = arith.constant 612 : index
    %266 = vector.load %arg7[%c7_680, %c612_681] : memref<27x1632xbf16, #tpu.memory_space<vmem>>, vector<1x204xbf16>
    tpu.vector_store %arg7[%c7_680, %c612_681], %265 {strides = array<i32>} : memref<27x1632xbf16, #tpu.memory_space<vmem>>, vector<1x204xbf16>,
    %c0_682 = arith.constant 0 : index
    %c0_683 = arith.constant 0 : index
    %c1_684 = arith.constant 1 : index
    %c1_685 = arith.constant 1 : index
    %c0_686 = arith.constant 0 : index
    %c18_687 = arith.constant 18 : index
    %267 = vector.load %arg2[%c0_682, %c0_683, %c1_684, %c1_685, %c0_686, %c18_687] : memref<1x2x2x2x1x222xbf16, #tpu.memory_space<vmem>>, vector<1x1x1x1x1x204xbf16>
    %268 = vector.shape_cast %267 : vector<1x1x1x1x1x204xbf16> to vector<1x204xbf16>
    %c8_688 = arith.constant 8 : index
    %c612_689 = arith.constant 612 : index
    %269 = vector.load %arg7[%c8_688, %c612_689] : memref<27x1632xbf16, #tpu.memory_space<vmem>>, vector<1x204xbf16>
    tpu.vector_store %arg7[%c8_688, %c612_689], %268 {strides = array<i32>} : memref<27x1632xbf16, #tpu.memory_space<vmem>>, vector<1x204xbf16>,
    %c0_690 = arith.constant 0 : index
    %c1_691 = arith.constant 1 : index
    %c1_692 = arith.constant 1 : index
    %c1_693 = arith.constant 1 : index
    %c0_694 = arith.constant 0 : index
    %c0_695 = arith.constant 0 : index
    %270 = vector.load %arg2[%c0_690, %c1_691, %c1_692, %c1_693, %c0_694, %c0_695] : memref<1x2x2x2x1x222xbf16, #tpu.memory_space<vmem>>, vector<1x1x1x1x1x204xbf16>
    %271 = vector.shape_cast %270 : vector<1x1x1x1x1x204xbf16> to vector<1x204xbf16>
    %c9_696 = arith.constant 9 : index
    %c612_697 = arith.constant 612 : index
    %272 = vector.load %arg7[%c9_696, %c612_697] : memref<27x1632xbf16, #tpu.memory_space<vmem>>, vector<1x204xbf16>
    tpu.vector_store %arg7[%c9_696, %c612_697], %271 {strides = array<i32>} : memref<27x1632xbf16, #tpu.memory_space<vmem>>, vector<1x204xbf16>,
    %c0_698 = arith.constant 0 : index
    %c1_699 = arith.constant 1 : index
    %c1_700 = arith.constant 1 : index
    %c0_701 = arith.constant 0 : index
    %c0_702 = arith.constant 0 : index
    %c1_703 = arith.constant 1 : index
    %273 = vector.load %arg2[%c0_698, %c1_699, %c1_700, %c0_701, %c0_702, %c1_703] : memref<1x2x2x2x1x222xbf16, #tpu.memory_space<vmem>>, vector<1x1x1x1x1x204xbf16>
    %274 = vector.shape_cast %273 : vector<1x1x1x1x1x204xbf16> to vector<1x204xbf16>
    %c10_704 = arith.constant 10 : index
    %c612_705 = arith.constant 612 : index
    %275 = vector.load %arg7[%c10_704, %c612_705] : memref<27x1632xbf16, #tpu.memory_space<vmem>>, vector<1x204xbf16>
    tpu.vector_store %arg7[%c10_704, %c612_705], %274 {strides = array<i32>} : memref<27x1632xbf16, #tpu.memory_space<vmem>>, vector<1x204xbf16>,
    %c0_706 = arith.constant 0 : index
    %c1_707 = arith.constant 1 : index
    %c1_708 = arith.constant 1 : index
    %c1_709 = arith.constant 1 : index
    %c0_710 = arith.constant 0 : index
    %c1_711 = arith.constant 1 : index
    %276 = vector.load %arg2[%c0_706, %c1_707, %c1_708, %c1_709, %c0_710, %c1_711] : memref<1x2x2x2x1x222xbf16, #tpu.memory_space<vmem>>, vector<1x1x1x1x1x204xbf16>
    %277 = vector.shape_cast %276 : vector<1x1x1x1x1x204xbf16> to vector<1x204xbf16>
    %c11_712 = arith.constant 11 : index
    %c612_713 = arith.constant 612 : index
    %278 = vector.load %arg7[%c11_712, %c612_713] : memref<27x1632xbf16, #tpu.memory_space<vmem>>, vector<1x204xbf16>
    tpu.vector_store %arg7[%c11_712, %c612_713], %277 {strides = array<i32>} : memref<27x1632xbf16, #tpu.memory_space<vmem>>, vector<1x204xbf16>,
    %c0_714 = arith.constant 0 : index
    %c1_715 = arith.constant 1 : index
    %c0_716 = arith.constant 0 : index
    %c1_717 = arith.constant 1 : index
    %c0_718 = arith.constant 0 : index
    %c17_719 = arith.constant 17 : index
    %279 = vector.load %arg2[%c0_714, %c1_715, %c0_716, %c1_717, %c0_718, %c17_719] : memref<1x2x2x2x1x222xbf16, #tpu.memory_space<vmem>>, vector<1x1x1x1x1x204xbf16>
    %280 = vector.shape_cast %279 : vector<1x1x1x1x1x204xbf16> to vector<1x204xbf16>
    %c12_720 = arith.constant 12 : index
    %c612_721 = arith.constant 612 : index
    %281 = vector.load %arg7[%c12_720, %c612_721] : memref<27x1632xbf16, #tpu.memory_space<vmem>>, vector<1x204xbf16>
    tpu.vector_store %arg7[%c12_720, %c612_721], %280 {strides = array<i32>} : memref<27x1632xbf16, #tpu.memory_space<vmem>>, vector<1x204xbf16>,
    %c0_722 = arith.constant 0 : index
    %c1_723 = arith.constant 1 : index
    %c0_724 = arith.constant 0 : index
    %c0_725 = arith.constant 0 : index
    %c0_726 = arith.constant 0 : index
    %c18_727 = arith.constant 18 : index
    %282 = vector.load %arg2[%c0_722, %c1_723, %c0_724, %c0_725, %c0_726, %c18_727] : memref<1x2x2x2x1x222xbf16, #tpu.memory_space<vmem>>, vector<1x1x1x1x1x204xbf16>
    %283 = vector.shape_cast %282 : vector<1x1x1x1x1x204xbf16> to vector<1x204xbf16>
    %c13_728 = arith.constant 13 : index
    %c612_729 = arith.constant 612 : index
    %284 = vector.load %arg7[%c13_728, %c612_729] : memref<27x1632xbf16, #tpu.memory_space<vmem>>, vector<1x204xbf16>
    tpu.vector_store %arg7[%c13_728, %c612_729], %283 {strides = array<i32>} : memref<27x1632xbf16, #tpu.memory_space<vmem>>, vector<1x204xbf16>,
    %c0_730 = arith.constant 0 : index
    %c1_731 = arith.constant 1 : index
    %c0_732 = arith.constant 0 : index
    %c1_733 = arith.constant 1 : index
    %c0_734 = arith.constant 0 : index
    %c18_735 = arith.constant 18 : index
    %285 = vector.load %arg2[%c0_730, %c1_731, %c0_732, %c1_733, %c0_734, %c18_735] : memref<1x2x2x2x1x222xbf16, #tpu.memory_space<vmem>>, vector<1x1x1x1x1x204xbf16>
    %286 = vector.shape_cast %285 : vector<1x1x1x1x1x204xbf16> to vector<1x204xbf16>
    %c14_736 = arith.constant 14 : index
    %c612_737 = arith.constant 612 : index
    %287 = vector.load %arg7[%c14_736, %c612_737] : memref<27x1632xbf16, #tpu.memory_space<vmem>>, vector<1x204xbf16>
    tpu.vector_store %arg7[%c14_736, %c612_737], %286 {strides = array<i32>} : memref<27x1632xbf16, #tpu.memory_space<vmem>>, vector<1x204xbf16>,
    %c0_738 = arith.constant 0 : index
    %c1_739 = arith.constant 1 : index
    %c1_740 = arith.constant 1 : index
    %c1_741 = arith.constant 1 : index
    %c0_742 = arith.constant 0 : index
    %c17_743 = arith.constant 17 : index
    %288 = vector.load %arg2[%c0_738, %c1_739, %c1_740, %c1_741, %c0_742, %c17_743] : memref<1x2x2x2x1x222xbf16, #tpu.memory_space<vmem>>, vector<1x1x1x1x1x204xbf16>
    %289 = vector.shape_cast %288 : vector<1x1x1x1x1x204xbf16> to vector<1x204xbf16>
    %c15_744 = arith.constant 15 : index
    %c612_745 = arith.constant 612 : index
    %290 = vector.load %arg7[%c15_744, %c612_745] : memref<27x1632xbf16, #tpu.memory_space<vmem>>, vector<1x204xbf16>
    tpu.vector_store %arg7[%c15_744, %c612_745], %289 {strides = array<i32>} : memref<27x1632xbf16, #tpu.memory_space<vmem>>, vector<1x204xbf16>,
    %c0_746 = arith.constant 0 : index
    %c1_747 = arith.constant 1 : index
    %c1_748 = arith.constant 1 : index
    %c0_749 = arith.constant 0 : index
    %c0_750 = arith.constant 0 : index
    %c18_751 = arith.constant 18 : index
    %291 = vector.load %arg2[%c0_746, %c1_747, %c1_748, %c0_749, %c0_750, %c18_751] : memref<1x2x2x2x1x222xbf16, #tpu.memory_space<vmem>>, vector<1x1x1x1x1x204xbf16>
    %292 = vector.shape_cast %291 : vector<1x1x1x1x1x204xbf16> to vector<1x204xbf16>
    %c16_752 = arith.constant 16 : index
    %c612_753 = arith.constant 612 : index
    %293 = vector.load %arg7[%c16_752, %c612_753] : memref<27x1632xbf16, #tpu.memory_space<vmem>>, vector<1x204xbf16>
    tpu.vector_store %arg7[%c16_752, %c612_753], %292 {strides = array<i32>} : memref<27x1632xbf16, #tpu.memory_space<vmem>>, vector<1x204xbf16>,
    %c0_754 = arith.constant 0 : index
    %c1_755 = arith.constant 1 : index
    %c1_756 = arith.constant 1 : index
    %c1_757 = arith.constant 1 : index
    %c0_758 = arith.constant 0 : index
    %c18_759 = arith.constant 18 : index
    %294 = vector.load %arg2[%c0_754, %c1_755, %c1_756, %c1_757, %c0_758, %c18_759] : memref<1x2x2x2x1x222xbf16, #tpu.memory_space<vmem>>, vector<1x1x1x1x1x204xbf16>
    %295 = vector.shape_cast %294 : vector<1x1x1x1x1x204xbf16> to vector<1x204xbf16>
    %c17_760 = arith.constant 17 : index
    %c612_761 = arith.constant 612 : index
    %296 = vector.load %arg7[%c17_760, %c612_761] : memref<27x1632xbf16, #tpu.memory_space<vmem>>, vector<1x204xbf16>
    tpu.vector_store %arg7[%c17_760, %c612_761], %295 {strides = array<i32>} : memref<27x1632xbf16, #tpu.memory_space<vmem>>, vector<1x204xbf16>,
    %c0_762 = arith.constant 0 : index
    %c0_763 = arith.constant 0 : index
    %c1_764 = arith.constant 1 : index
    %c1_765 = arith.constant 1 : index
    %c0_766 = arith.constant 0 : index
    %c0_767 = arith.constant 0 : index
    %297 = vector.load %arg3[%c0_762, %c0_763, %c1_764, %c1_765, %c0_766, %c0_767] : memref<1x2x2x2x1x222xbf16, #tpu.memory_space<vmem>>, vector<1x1x1x1x1x204xbf16>
    %298 = vector.shape_cast %297 : vector<1x1x1x1x1x204xbf16> to vector<1x204xbf16>
    %c18_768 = arith.constant 18 : index
    %c612_769 = arith.constant 612 : index
    %299 = vector.load %arg7[%c18_768, %c612_769] : memref<27x1632xbf16, #tpu.memory_space<vmem>>, vector<1x204xbf16>
    tpu.vector_store %arg7[%c18_768, %c612_769], %298 {strides = array<i32>} : memref<27x1632xbf16, #tpu.memory_space<vmem>>, vector<1x204xbf16>,
    %c0_770 = arith.constant 0 : index
    %c0_771 = arith.constant 0 : index
    %c1_772 = arith.constant 1 : index
    %c0_773 = arith.constant 0 : index
    %c0_774 = arith.constant 0 : index
    %c1_775 = arith.constant 1 : index
    %300 = vector.load %arg3[%c0_770, %c0_771, %c1_772, %c0_773, %c0_774, %c1_775] : memref<1x2x2x2x1x222xbf16, #tpu.memory_space<vmem>>, vector<1x1x1x1x1x204xbf16>
    %301 = vector.shape_cast %300 : vector<1x1x1x1x1x204xbf16> to vector<1x204xbf16>
    %c19_776 = arith.constant 19 : index
    %c612_777 = arith.constant 612 : index
    %302 = vector.load %arg7[%c19_776, %c612_777] : memref<27x1632xbf16, #tpu.memory_space<vmem>>, vector<1x204xbf16>
    tpu.vector_store %arg7[%c19_776, %c612_777], %301 {strides = array<i32>} : memref<27x1632xbf16, #tpu.memory_space<vmem>>, vector<1x204xbf16>,
    %c0_778 = arith.constant 0 : index
    %c0_779 = arith.constant 0 : index
    %c1_780 = arith.constant 1 : index
    %c1_781 = arith.constant 1 : index
    %c0_782 = arith.constant 0 : index
    %c1_783 = arith.constant 1 : index
    %303 = vector.load %arg3[%c0_778, %c0_779, %c1_780, %c1_781, %c0_782, %c1_783] : memref<1x2x2x2x1x222xbf16, #tpu.memory_space<vmem>>, vector<1x1x1x1x1x204xbf16>
    %304 = vector.shape_cast %303 : vector<1x1x1x1x1x204xbf16> to vector<1x204xbf16>
    %c20_784 = arith.constant 20 : index
    %c612_785 = arith.constant 612 : index
    %305 = vector.load %arg7[%c20_784, %c612_785] : memref<27x1632xbf16, #tpu.memory_space<vmem>>, vector<1x204xbf16>
    tpu.vector_store %arg7[%c20_784, %c612_785], %304 {strides = array<i32>} : memref<27x1632xbf16, #tpu.memory_space<vmem>>, vector<1x204xbf16>,
    %c0_786 = arith.constant 0 : index
    %c0_787 = arith.constant 0 : index
    %c0_788 = arith.constant 0 : index
    %c1_789 = arith.constant 1 : index
    %c0_790 = arith.constant 0 : index
    %c17_791 = arith.constant 17 : index
    %306 = vector.load %arg3[%c0_786, %c0_787, %c0_788, %c1_789, %c0_790, %c17_791] : memref<1x2x2x2x1x222xbf16, #tpu.memory_space<vmem>>, vector<1x1x1x1x1x204xbf16>
    %307 = vector.shape_cast %306 : vector<1x1x1x1x1x204xbf16> to vector<1x204xbf16>
    %c21_792 = arith.constant 21 : index
    %c612_793 = arith.constant 612 : index
    %308 = vector.load %arg7[%c21_792, %c612_793] : memref<27x1632xbf16, #tpu.memory_space<vmem>>, vector<1x204xbf16>
    tpu.vector_store %arg7[%c21_792, %c612_793], %307 {strides = array<i32>} : memref<27x1632xbf16, #tpu.memory_space<vmem>>, vector<1x204xbf16>,
    %c0_794 = arith.constant 0 : index
    %c0_795 = arith.constant 0 : index
    %c0_796 = arith.constant 0 : index
    %c0_797 = arith.constant 0 : index
    %c0_798 = arith.constant 0 : index
    %c18_799 = arith.constant 18 : index
    %309 = vector.load %arg3[%c0_794, %c0_795, %c0_796, %c0_797, %c0_798, %c18_799] : memref<1x2x2x2x1x222xbf16, #tpu.memory_space<vmem>>, vector<1x1x1x1x1x204xbf16>
    %310 = vector.shape_cast %309 : vector<1x1x1x1x1x204xbf16> to vector<1x204xbf16>
    %c22_800 = arith.constant 22 : index
    %c612_801 = arith.constant 612 : index
    %311 = vector.load %arg7[%c22_800, %c612_801] : memref<27x1632xbf16, #tpu.memory_space<vmem>>, vector<1x204xbf16>
    tpu.vector_store %arg7[%c22_800, %c612_801], %310 {strides = array<i32>} : memref<27x1632xbf16, #tpu.memory_space<vmem>>, vector<1x204xbf16>,
    %c0_802 = arith.constant 0 : index
    %c0_803 = arith.constant 0 : index
    %c0_804 = arith.constant 0 : index
    %c1_805 = arith.constant 1 : index
    %c0_806 = arith.constant 0 : index
    %c18_807 = arith.constant 18 : index
    %312 = vector.load %arg3[%c0_802, %c0_803, %c0_804, %c1_805, %c0_806, %c18_807] : memref<1x2x2x2x1x222xbf16, #tpu.memory_space<vmem>>, vector<1x1x1x1x1x204xbf16>
    %313 = vector.shape_cast %312 : vector<1x1x1x1x1x204xbf16> to vector<1x204xbf16>
    %c23_808 = arith.constant 23 : index
    %c612_809 = arith.constant 612 : index
    %314 = vector.load %arg7[%c23_808, %c612_809] : memref<27x1632xbf16, #tpu.memory_space<vmem>>, vector<1x204xbf16>
    tpu.vector_store %arg7[%c23_808, %c612_809], %313 {strides = array<i32>} : memref<27x1632xbf16, #tpu.memory_space<vmem>>, vector<1x204xbf16>,
    %c0_810 = arith.constant 0 : index
    %c0_811 = arith.constant 0 : index
    %c1_812 = arith.constant 1 : index
    %c1_813 = arith.constant 1 : index
    %c0_814 = arith.constant 0 : index
    %c17_815 = arith.constant 17 : index
    %315 = vector.load %arg3[%c0_810, %c0_811, %c1_812, %c1_813, %c0_814, %c17_815] : memref<1x2x2x2x1x222xbf16, #tpu.memory_space<vmem>>, vector<1x1x1x1x1x204xbf16>
    %316 = vector.shape_cast %315 : vector<1x1x1x1x1x204xbf16> to vector<1x204xbf16>
    %c24_816 = arith.constant 24 : index
    %c612_817 = arith.constant 612 : index
    %317 = vector.load %arg7[%c24_816, %c612_817] : memref<27x1632xbf16, #tpu.memory_space<vmem>>, vector<1x204xbf16>
    tpu.vector_store %arg7[%c24_816, %c612_817], %316 {strides = array<i32>} : memref<27x1632xbf16, #tpu.memory_space<vmem>>, vector<1x204xbf16>,
    %c0_818 = arith.constant 0 : index
    %c0_819 = arith.constant 0 : index
    %c1_820 = arith.constant 1 : index
    %c0_821 = arith.constant 0 : index
    %c0_822 = arith.constant 0 : index
    %c18_823 = arith.constant 18 : index
    %318 = vector.load %arg3[%c0_818, %c0_819, %c1_820, %c0_821, %c0_822, %c18_823] : memref<1x2x2x2x1x222xbf16, #tpu.memory_space<vmem>>, vector<1x1x1x1x1x204xbf16>
    %319 = vector.shape_cast %318 : vector<1x1x1x1x1x204xbf16> to vector<1x204xbf16>
    %c25_824 = arith.constant 25 : index
    %c612_825 = arith.constant 612 : index
    %320 = vector.load %arg7[%c25_824, %c612_825] : memref<27x1632xbf16, #tpu.memory_space<vmem>>, vector<1x204xbf16>
    tpu.vector_store %arg7[%c25_824, %c612_825], %319 {strides = array<i32>} : memref<27x1632xbf16, #tpu.memory_space<vmem>>, vector<1x204xbf16>,
    %c0_826 = arith.constant 0 : index
    %c0_827 = arith.constant 0 : index
    %c1_828 = arith.constant 1 : index
    %c1_829 = arith.constant 1 : index
    %c0_830 = arith.constant 0 : index
    %c18_831 = arith.constant 18 : index
    %321 = vector.load %arg3[%c0_826, %c0_827, %c1_828, %c1_829, %c0_830, %c18_831] : memref<1x2x2x2x1x222xbf16, #tpu.memory_space<vmem>>, vector<1x1x1x1x1x204xbf16>
    %322 = vector.shape_cast %321 : vector<1x1x1x1x1x204xbf16> to vector<1x204xbf16>
    %c26_832 = arith.constant 26 : index
    %c612_833 = arith.constant 612 : index
    %323 = vector.load %arg7[%c26_832, %c612_833] : memref<27x1632xbf16, #tpu.memory_space<vmem>>, vector<1x204xbf16>
    tpu.vector_store %arg7[%c26_832, %c612_833], %322 {strides = array<i32>} : memref<27x1632xbf16, #tpu.memory_space<vmem>>, vector<1x204xbf16>,
    %c0_834 = arith.constant 0 : index
    %c1_835 = arith.constant 1 : index
    %c0_836 = arith.constant 0 : index
    %c0_837 = arith.constant 0 : index
    %c0_838 = arith.constant 0 : index
    %c0_839 = arith.constant 0 : index
    %324 = vector.load %arg2[%c0_834, %c1_835, %c0_836, %c0_837, %c0_838, %c0_839] : memref<1x2x2x2x1x222xbf16, #tpu.memory_space<vmem>>, vector<1x1x1x1x1x204xbf16>
    %325 = vector.shape_cast %324 : vector<1x1x1x1x1x204xbf16> to vector<1x204xbf16>
    %c0_840 = arith.constant 0 : index
    %c816 = arith.constant 816 : index
    %326 = vector.load %arg7[%c0_840, %c816] : memref<27x1632xbf16, #tpu.memory_space<vmem>>, vector<1x204xbf16>
    tpu.vector_store %arg7[%c0_840, %c816], %325 {strides = array<i32>} : memref<27x1632xbf16, #tpu.memory_space<vmem>>, vector<1x204xbf16>,
    %c0_841 = arith.constant 0 : index
    %c1_842 = arith.constant 1 : index
    %c0_843 = arith.constant 0 : index
    %c1_844 = arith.constant 1 : index
    %c0_845 = arith.constant 0 : index
    %c0_846 = arith.constant 0 : index
    %327 = vector.load %arg2[%c0_841, %c1_842, %c0_843, %c1_844, %c0_845, %c0_846] : memref<1x2x2x2x1x222xbf16, #tpu.memory_space<vmem>>, vector<1x1x1x1x1x204xbf16>
    %328 = vector.shape_cast %327 : vector<1x1x1x1x1x204xbf16> to vector<1x204xbf16>
    %c1_847 = arith.constant 1 : index
    %c816_848 = arith.constant 816 : index
    %329 = vector.load %arg7[%c1_847, %c816_848] : memref<27x1632xbf16, #tpu.memory_space<vmem>>, vector<1x204xbf16>
    tpu.vector_store %arg7[%c1_847, %c816_848], %328 {strides = array<i32>} : memref<27x1632xbf16, #tpu.memory_space<vmem>>, vector<1x204xbf16>,
    %c0_849 = arith.constant 0 : index
    %c1_850 = arith.constant 1 : index
    %c0_851 = arith.constant 0 : index
    %c0_852 = arith.constant 0 : index
    %c0_853 = arith.constant 0 : index
    %c1_854 = arith.constant 1 : index
    %330 = vector.load %arg2[%c0_849, %c1_850, %c0_851, %c0_852, %c0_853, %c1_854] : memref<1x2x2x2x1x222xbf16, #tpu.memory_space<vmem>>, vector<1x1x1x1x1x204xbf16>
    %331 = vector.shape_cast %330 : vector<1x1x1x1x1x204xbf16> to vector<1x204xbf16>
    %c2_855 = arith.constant 2 : index
    %c816_856 = arith.constant 816 : index
    %332 = vector.load %arg7[%c2_855, %c816_856] : memref<27x1632xbf16, #tpu.memory_space<vmem>>, vector<1x204xbf16>
    tpu.vector_store %arg7[%c2_855, %c816_856], %331 {strides = array<i32>} : memref<27x1632xbf16, #tpu.memory_space<vmem>>, vector<1x204xbf16>,
    %c0_857 = arith.constant 0 : index
    %c1_858 = arith.constant 1 : index
    %c1_859 = arith.constant 1 : index
    %c0_860 = arith.constant 0 : index
    %c0_861 = arith.constant 0 : index
    %c0_862 = arith.constant 0 : index
    %333 = vector.load %arg2[%c0_857, %c1_858, %c1_859, %c0_860, %c0_861, %c0_862] : memref<1x2x2x2x1x222xbf16, #tpu.memory_space<vmem>>, vector<1x1x1x1x1x204xbf16>
    %334 = vector.shape_cast %333 : vector<1x1x1x1x1x204xbf16> to vector<1x204xbf16>
    %c3_863 = arith.constant 3 : index
    %c816_864 = arith.constant 816 : index
    %335 = vector.load %arg7[%c3_863, %c816_864] : memref<27x1632xbf16, #tpu.memory_space<vmem>>, vector<1x204xbf16>
    tpu.vector_store %arg7[%c3_863, %c816_864], %334 {strides = array<i32>} : memref<27x1632xbf16, #tpu.memory_space<vmem>>, vector<1x204xbf16>,
    %c0_865 = arith.constant 0 : index
    %c1_866 = arith.constant 1 : index
    %c1_867 = arith.constant 1 : index
    %c1_868 = arith.constant 1 : index
    %c0_869 = arith.constant 0 : index
    %c0_870 = arith.constant 0 : index
    %336 = vector.load %arg2[%c0_865, %c1_866, %c1_867, %c1_868, %c0_869, %c0_870] : memref<1x2x2x2x1x222xbf16, #tpu.memory_space<vmem>>, vector<1x1x1x1x1x204xbf16>
    %337 = vector.shape_cast %336 : vector<1x1x1x1x1x204xbf16> to vector<1x204xbf16>
    %c4_871 = arith.constant 4 : index
    %c816_872 = arith.constant 816 : index
    %338 = vector.load %arg7[%c4_871, %c816_872] : memref<27x1632xbf16, #tpu.memory_space<vmem>>, vector<1x204xbf16>
    tpu.vector_store %arg7[%c4_871, %c816_872], %337 {strides = array<i32>} : memref<27x1632xbf16, #tpu.memory_space<vmem>>, vector<1x204xbf16>,
    %c0_873 = arith.constant 0 : index
    %c1_874 = arith.constant 1 : index
    %c1_875 = arith.constant 1 : index
    %c0_876 = arith.constant 0 : index
    %c0_877 = arith.constant 0 : index
    %c1_878 = arith.constant 1 : index
    %339 = vector.load %arg2[%c0_873, %c1_874, %c1_875, %c0_876, %c0_877, %c1_878] : memref<1x2x2x2x1x222xbf16, #tpu.memory_space<vmem>>, vector<1x1x1x1x1x204xbf16>
    %340 = vector.shape_cast %339 : vector<1x1x1x1x1x204xbf16> to vector<1x204xbf16>
    %c5_879 = arith.constant 5 : index
    %c816_880 = arith.constant 816 : index
    %341 = vector.load %arg7[%c5_879, %c816_880] : memref<27x1632xbf16, #tpu.memory_space<vmem>>, vector<1x204xbf16>
    tpu.vector_store %arg7[%c5_879, %c816_880], %340 {strides = array<i32>} : memref<27x1632xbf16, #tpu.memory_space<vmem>>, vector<1x204xbf16>,
    %c0_881 = arith.constant 0 : index
    %c1_882 = arith.constant 1 : index
    %c0_883 = arith.constant 0 : index
    %c0_884 = arith.constant 0 : index
    %c0_885 = arith.constant 0 : index
    %c17_886 = arith.constant 17 : index
    %342 = vector.load %arg2[%c0_881, %c1_882, %c0_883, %c0_884, %c0_885, %c17_886] : memref<1x2x2x2x1x222xbf16, #tpu.memory_space<vmem>>, vector<1x1x1x1x1x204xbf16>
    %343 = vector.shape_cast %342 : vector<1x1x1x1x1x204xbf16> to vector<1x204xbf16>
    %c6_887 = arith.constant 6 : index
    %c816_888 = arith.constant 816 : index
    %344 = vector.load %arg7[%c6_887, %c816_888] : memref<27x1632xbf16, #tpu.memory_space<vmem>>, vector<1x204xbf16>
    tpu.vector_store %arg7[%c6_887, %c816_888], %343 {strides = array<i32>} : memref<27x1632xbf16, #tpu.memory_space<vmem>>, vector<1x204xbf16>,
    %c0_889 = arith.constant 0 : index
    %c1_890 = arith.constant 1 : index
    %c0_891 = arith.constant 0 : index
    %c1_892 = arith.constant 1 : index
    %c0_893 = arith.constant 0 : index
    %c17_894 = arith.constant 17 : index
    %345 = vector.load %arg2[%c0_889, %c1_890, %c0_891, %c1_892, %c0_893, %c17_894] : memref<1x2x2x2x1x222xbf16, #tpu.memory_space<vmem>>, vector<1x1x1x1x1x204xbf16>
    %346 = vector.shape_cast %345 : vector<1x1x1x1x1x204xbf16> to vector<1x204xbf16>
    %c7_895 = arith.constant 7 : index
    %c816_896 = arith.constant 816 : index
    %347 = vector.load %arg7[%c7_895, %c816_896] : memref<27x1632xbf16, #tpu.memory_space<vmem>>, vector<1x204xbf16>
    tpu.vector_store %arg7[%c7_895, %c816_896], %346 {strides = array<i32>} : memref<27x1632xbf16, #tpu.memory_space<vmem>>, vector<1x204xbf16>,
    %c0_897 = arith.constant 0 : index
    %c1_898 = arith.constant 1 : index
    %c0_899 = arith.constant 0 : index
    %c0_900 = arith.constant 0 : index
    %c0_901 = arith.constant 0 : index
    %c18_902 = arith.constant 18 : index
    %348 = vector.load %arg2[%c0_897, %c1_898, %c0_899, %c0_900, %c0_901, %c18_902] : memref<1x2x2x2x1x222xbf16, #tpu.memory_space<vmem>>, vector<1x1x1x1x1x204xbf16>
    %349 = vector.shape_cast %348 : vector<1x1x1x1x1x204xbf16> to vector<1x204xbf16>
    %c8_903 = arith.constant 8 : index
    %c816_904 = arith.constant 816 : index
    %350 = vector.load %arg7[%c8_903, %c816_904] : memref<27x1632xbf16, #tpu.memory_space<vmem>>, vector<1x204xbf16>
    tpu.vector_store %arg7[%c8_903, %c816_904], %349 {strides = array<i32>} : memref<27x1632xbf16, #tpu.memory_space<vmem>>, vector<1x204xbf16>,
    %c0_905 = arith.constant 0 : index
    %c0_906 = arith.constant 0 : index
    %c0_907 = arith.constant 0 : index
    %c0_908 = arith.constant 0 : index
    %c0_909 = arith.constant 0 : index
    %c0_910 = arith.constant 0 : index
    %351 = vector.load %arg3[%c0_905, %c0_906, %c0_907, %c0_908, %c0_909, %c0_910] : memref<1x2x2x2x1x222xbf16, #tpu.memory_space<vmem>>, vector<1x1x1x1x1x204xbf16>
    %352 = vector.shape_cast %351 : vector<1x1x1x1x1x204xbf16> to vector<1x204xbf16>
    %c9_911 = arith.constant 9 : index
    %c816_912 = arith.constant 816 : index
    %353 = vector.load %arg7[%c9_911, %c816_912] : memref<27x1632xbf16, #tpu.memory_space<vmem>>, vector<1x204xbf16>
    tpu.vector_store %arg7[%c9_911, %c816_912], %352 {strides = array<i32>} : memref<27x1632xbf16, #tpu.memory_space<vmem>>, vector<1x204xbf16>,
    %c0_913 = arith.constant 0 : index
    %c0_914 = arith.constant 0 : index
    %c0_915 = arith.constant 0 : index
    %c1_916 = arith.constant 1 : index
    %c0_917 = arith.constant 0 : index
    %c0_918 = arith.constant 0 : index
    %354 = vector.load %arg3[%c0_913, %c0_914, %c0_915, %c1_916, %c0_917, %c0_918] : memref<1x2x2x2x1x222xbf16, #tpu.memory_space<vmem>>, vector<1x1x1x1x1x204xbf16>
    %355 = vector.shape_cast %354 : vector<1x1x1x1x1x204xbf16> to vector<1x204xbf16>
    %c10_919 = arith.constant 10 : index
    %c816_920 = arith.constant 816 : index
    %356 = vector.load %arg7[%c10_919, %c816_920] : memref<27x1632xbf16, #tpu.memory_space<vmem>>, vector<1x204xbf16>
    tpu.vector_store %arg7[%c10_919, %c816_920], %355 {strides = array<i32>} : memref<27x1632xbf16, #tpu.memory_space<vmem>>, vector<1x204xbf16>,
    %c0_921 = arith.constant 0 : index
    %c0_922 = arith.constant 0 : index
    %c0_923 = arith.constant 0 : index
    %c0_924 = arith.constant 0 : index
    %c0_925 = arith.constant 0 : index
    %c1_926 = arith.constant 1 : index
    %357 = vector.load %arg3[%c0_921, %c0_922, %c0_923, %c0_924, %c0_925, %c1_926] : memref<1x2x2x2x1x222xbf16, #tpu.memory_space<vmem>>, vector<1x1x1x1x1x204xbf16>
    %358 = vector.shape_cast %357 : vector<1x1x1x1x1x204xbf16> to vector<1x204xbf16>
    %c11_927 = arith.constant 11 : index
    %c816_928 = arith.constant 816 : index
    %359 = vector.load %arg7[%c11_927, %c816_928] : memref<27x1632xbf16, #tpu.memory_space<vmem>>, vector<1x204xbf16>
    tpu.vector_store %arg7[%c11_927, %c816_928], %358 {strides = array<i32>} : memref<27x1632xbf16, #tpu.memory_space<vmem>>, vector<1x204xbf16>,
    %c0_929 = arith.constant 0 : index
    %c0_930 = arith.constant 0 : index
    %c1_931 = arith.constant 1 : index
    %c0_932 = arith.constant 0 : index
    %c0_933 = arith.constant 0 : index
    %c0_934 = arith.constant 0 : index
    %360 = vector.load %arg3[%c0_929, %c0_930, %c1_931, %c0_932, %c0_933, %c0_934] : memref<1x2x2x2x1x222xbf16, #tpu.memory_space<vmem>>, vector<1x1x1x1x1x204xbf16>
    %361 = vector.shape_cast %360 : vector<1x1x1x1x1x204xbf16> to vector<1x204xbf16>
    %c12_935 = arith.constant 12 : index
    %c816_936 = arith.constant 816 : index
    %362 = vector.load %arg7[%c12_935, %c816_936] : memref<27x1632xbf16, #tpu.memory_space<vmem>>, vector<1x204xbf16>
    tpu.vector_store %arg7[%c12_935, %c816_936], %361 {strides = array<i32>} : memref<27x1632xbf16, #tpu.memory_space<vmem>>, vector<1x204xbf16>,
    %c0_937 = arith.constant 0 : index
    %c0_938 = arith.constant 0 : index
    %c1_939 = arith.constant 1 : index
    %c1_940 = arith.constant 1 : index
    %c0_941 = arith.constant 0 : index
    %c0_942 = arith.constant 0 : index
    %363 = vector.load %arg3[%c0_937, %c0_938, %c1_939, %c1_940, %c0_941, %c0_942] : memref<1x2x2x2x1x222xbf16, #tpu.memory_space<vmem>>, vector<1x1x1x1x1x204xbf16>
    %364 = vector.shape_cast %363 : vector<1x1x1x1x1x204xbf16> to vector<1x204xbf16>
    %c13_943 = arith.constant 13 : index
    %c816_944 = arith.constant 816 : index
    %365 = vector.load %arg7[%c13_943, %c816_944] : memref<27x1632xbf16, #tpu.memory_space<vmem>>, vector<1x204xbf16>
    tpu.vector_store %arg7[%c13_943, %c816_944], %364 {strides = array<i32>} : memref<27x1632xbf16, #tpu.memory_space<vmem>>, vector<1x204xbf16>,
    %c0_945 = arith.constant 0 : index
    %c0_946 = arith.constant 0 : index
    %c1_947 = arith.constant 1 : index
    %c0_948 = arith.constant 0 : index
    %c0_949 = arith.constant 0 : index
    %c1_950 = arith.constant 1 : index
    %366 = vector.load %arg3[%c0_945, %c0_946, %c1_947, %c0_948, %c0_949, %c1_950] : memref<1x2x2x2x1x222xbf16, #tpu.memory_space<vmem>>, vector<1x1x1x1x1x204xbf16>
    %367 = vector.shape_cast %366 : vector<1x1x1x1x1x204xbf16> to vector<1x204xbf16>
    %c14_951 = arith.constant 14 : index
    %c816_952 = arith.constant 816 : index
    %368 = vector.load %arg7[%c14_951, %c816_952] : memref<27x1632xbf16, #tpu.memory_space<vmem>>, vector<1x204xbf16>
    tpu.vector_store %arg7[%c14_951, %c816_952], %367 {strides = array<i32>} : memref<27x1632xbf16, #tpu.memory_space<vmem>>, vector<1x204xbf16>,
    %c0_953 = arith.constant 0 : index
    %c0_954 = arith.constant 0 : index
    %c0_955 = arith.constant 0 : index
    %c0_956 = arith.constant 0 : index
    %c0_957 = arith.constant 0 : index
    %c17_958 = arith.constant 17 : index
    %369 = vector.load %arg3[%c0_953, %c0_954, %c0_955, %c0_956, %c0_957, %c17_958] : memref<1x2x2x2x1x222xbf16, #tpu.memory_space<vmem>>, vector<1x1x1x1x1x204xbf16>
    %370 = vector.shape_cast %369 : vector<1x1x1x1x1x204xbf16> to vector<1x204xbf16>
    %c15_959 = arith.constant 15 : index
    %c816_960 = arith.constant 816 : index
    %371 = vector.load %arg7[%c15_959, %c816_960] : memref<27x1632xbf16, #tpu.memory_space<vmem>>, vector<1x204xbf16>
    tpu.vector_store %arg7[%c15_959, %c816_960], %370 {strides = array<i32>} : memref<27x1632xbf16, #tpu.memory_space<vmem>>, vector<1x204xbf16>,
    %c0_961 = arith.constant 0 : index
    %c0_962 = arith.constant 0 : index
    %c0_963 = arith.constant 0 : index
    %c1_964 = arith.constant 1 : index
    %c0_965 = arith.constant 0 : index
    %c17_966 = arith.constant 17 : index
    %372 = vector.load %arg3[%c0_961, %c0_962, %c0_963, %c1_964, %c0_965, %c17_966] : memref<1x2x2x2x1x222xbf16, #tpu.memory_space<vmem>>, vector<1x1x1x1x1x204xbf16>
    %373 = vector.shape_cast %372 : vector<1x1x1x1x1x204xbf16> to vector<1x204xbf16>
    %c16_967 = arith.constant 16 : index
    %c816_968 = arith.constant 816 : index
    %374 = vector.load %arg7[%c16_967, %c816_968] : memref<27x1632xbf16, #tpu.memory_space<vmem>>, vector<1x204xbf16>
    tpu.vector_store %arg7[%c16_967, %c816_968], %373 {strides = array<i32>} : memref<27x1632xbf16, #tpu.memory_space<vmem>>, vector<1x204xbf16>,
    %c0_969 = arith.constant 0 : index
    %c0_970 = arith.constant 0 : index
    %c0_971 = arith.constant 0 : index
    %c0_972 = arith.constant 0 : index
    %c0_973 = arith.constant 0 : index
    %c18_974 = arith.constant 18 : index
    %375 = vector.load %arg3[%c0_969, %c0_970, %c0_971, %c0_972, %c0_973, %c18_974] : memref<1x2x2x2x1x222xbf16, #tpu.memory_space<vmem>>, vector<1x1x1x1x1x204xbf16>
    %376 = vector.shape_cast %375 : vector<1x1x1x1x1x204xbf16> to vector<1x204xbf16>
    %c17_975 = arith.constant 17 : index
    %c816_976 = arith.constant 816 : index
    %377 = vector.load %arg7[%c17_975, %c816_976] : memref<27x1632xbf16, #tpu.memory_space<vmem>>, vector<1x204xbf16>
    tpu.vector_store %arg7[%c17_975, %c816_976], %376 {strides = array<i32>} : memref<27x1632xbf16, #tpu.memory_space<vmem>>, vector<1x204xbf16>,
    %c0_977 = arith.constant 0 : index
    %c1_978 = arith.constant 1 : index
    %c0_979 = arith.constant 0 : index
    %c0_980 = arith.constant 0 : index
    %c0_981 = arith.constant 0 : index
    %c0_982 = arith.constant 0 : index
    %378 = vector.load %arg3[%c0_977, %c1_978, %c0_979, %c0_980, %c0_981, %c0_982] : memref<1x2x2x2x1x222xbf16, #tpu.memory_space<vmem>>, vector<1x1x1x1x1x204xbf16>
    %379 = vector.shape_cast %378 : vector<1x1x1x1x1x204xbf16> to vector<1x204xbf16>
    %c18_983 = arith.constant 18 : index
    %c816_984 = arith.constant 816 : index
    %380 = vector.load %arg7[%c18_983, %c816_984] : memref<27x1632xbf16, #tpu.memory_space<vmem>>, vector<1x204xbf16>
    tpu.vector_store %arg7[%c18_983, %c816_984], %379 {strides = array<i32>} : memref<27x1632xbf16, #tpu.memory_space<vmem>>, vector<1x204xbf16>,
    %c0_985 = arith.constant 0 : index
    %c1_986 = arith.constant 1 : index
    %c0_987 = arith.constant 0 : index
    %c1_988 = arith.constant 1 : index
    %c0_989 = arith.constant 0 : index
    %c0_990 = arith.constant 0 : index
    %381 = vector.load %arg3[%c0_985, %c1_986, %c0_987, %c1_988, %c0_989, %c0_990] : memref<1x2x2x2x1x222xbf16, #tpu.memory_space<vmem>>, vector<1x1x1x1x1x204xbf16>
    %382 = vector.shape_cast %381 : vector<1x1x1x1x1x204xbf16> to vector<1x204xbf16>
    %c19_991 = arith.constant 19 : index
    %c816_992 = arith.constant 816 : index
    %383 = vector.load %arg7[%c19_991, %c816_992] : memref<27x1632xbf16, #tpu.memory_space<vmem>>, vector<1x204xbf16>
    tpu.vector_store %arg7[%c19_991, %c816_992], %382 {strides = array<i32>} : memref<27x1632xbf16, #tpu.memory_space<vmem>>, vector<1x204xbf16>,
    %c0_993 = arith.constant 0 : index
    %c1_994 = arith.constant 1 : index
    %c0_995 = arith.constant 0 : index
    %c0_996 = arith.constant 0 : index
    %c0_997 = arith.constant 0 : index
    %c1_998 = arith.constant 1 : index
    %384 = vector.load %arg3[%c0_993, %c1_994, %c0_995, %c0_996, %c0_997, %c1_998] : memref<1x2x2x2x1x222xbf16, #tpu.memory_space<vmem>>, vector<1x1x1x1x1x204xbf16>
    %385 = vector.shape_cast %384 : vector<1x1x1x1x1x204xbf16> to vector<1x204xbf16>
    %c20_999 = arith.constant 20 : index
    %c816_1000 = arith.constant 816 : index
    %386 = vector.load %arg7[%c20_999, %c816_1000] : memref<27x1632xbf16, #tpu.memory_space<vmem>>, vector<1x204xbf16>
    tpu.vector_store %arg7[%c20_999, %c816_1000], %385 {strides = array<i32>} : memref<27x1632xbf16, #tpu.memory_space<vmem>>, vector<1x204xbf16>,
    %c0_1001 = arith.constant 0 : index
    %c1_1002 = arith.constant 1 : index
    %c1_1003 = arith.constant 1 : index
    %c0_1004 = arith.constant 0 : index
    %c0_1005 = arith.constant 0 : index
    %c0_1006 = arith.constant 0 : index
    %387 = vector.load %arg3[%c0_1001, %c1_1002, %c1_1003, %c0_1004, %c0_1005, %c0_1006] : memref<1x2x2x2x1x222xbf16, #tpu.memory_space<vmem>>, vector<1x1x1x1x1x204xbf16>
    %388 = vector.shape_cast %387 : vector<1x1x1x1x1x204xbf16> to vector<1x204xbf16>
    %c21_1007 = arith.constant 21 : index
    %c816_1008 = arith.constant 816 : index
    %389 = vector.load %arg7[%c21_1007, %c816_1008] : memref<27x1632xbf16, #tpu.memory_space<vmem>>, vector<1x204xbf16>
    tpu.vector_store %arg7[%c21_1007, %c816_1008], %388 {strides = array<i32>} : memref<27x1632xbf16, #tpu.memory_space<vmem>>, vector<1x204xbf16>,
    %c0_1009 = arith.constant 0 : index
    %c1_1010 = arith.constant 1 : index
    %c1_1011 = arith.constant 1 : index
    %c1_1012 = arith.constant 1 : index
    %c0_1013 = arith.constant 0 : index
    %c0_1014 = arith.constant 0 : index
    %390 = vector.load %arg3[%c0_1009, %c1_1010, %c1_1011, %c1_1012, %c0_1013, %c0_1014] : memref<1x2x2x2x1x222xbf16, #tpu.memory_space<vmem>>, vector<1x1x1x1x1x204xbf16>
    %391 = vector.shape_cast %390 : vector<1x1x1x1x1x204xbf16> to vector<1x204xbf16>
    %c22_1015 = arith.constant 22 : index
    %c816_1016 = arith.constant 816 : index
    %392 = vector.load %arg7[%c22_1015, %c816_1016] : memref<27x1632xbf16, #tpu.memory_space<vmem>>, vector<1x204xbf16>
    tpu.vector_store %arg7[%c22_1015, %c816_1016], %391 {strides = array<i32>} : memref<27x1632xbf16, #tpu.memory_space<vmem>>, vector<1x204xbf16>,
    %c0_1017 = arith.constant 0 : index
    %c1_1018 = arith.constant 1 : index
    %c1_1019 = arith.constant 1 : index
    %c0_1020 = arith.constant 0 : index
    %c0_1021 = arith.constant 0 : index
    %c1_1022 = arith.constant 1 : index
    %393 = vector.load %arg3[%c0_1017, %c1_1018, %c1_1019, %c0_1020, %c0_1021, %c1_1022] : memref<1x2x2x2x1x222xbf16, #tpu.memory_space<vmem>>, vector<1x1x1x1x1x204xbf16>
    %394 = vector.shape_cast %393 : vector<1x1x1x1x1x204xbf16> to vector<1x204xbf16>
    %c23_1023 = arith.constant 23 : index
    %c816_1024 = arith.constant 816 : index
    %395 = vector.load %arg7[%c23_1023, %c816_1024] : memref<27x1632xbf16, #tpu.memory_space<vmem>>, vector<1x204xbf16>
    tpu.vector_store %arg7[%c23_1023, %c816_1024], %394 {strides = array<i32>} : memref<27x1632xbf16, #tpu.memory_space<vmem>>, vector<1x204xbf16>,
    %c0_1025 = arith.constant 0 : index
    %c1_1026 = arith.constant 1 : index
    %c0_1027 = arith.constant 0 : index
    %c0_1028 = arith.constant 0 : index
    %c0_1029 = arith.constant 0 : index
    %c17_1030 = arith.constant 17 : index
    %396 = vector.load %arg3[%c0_1025, %c1_1026, %c0_1027, %c0_1028, %c0_1029, %c17_1030] : memref<1x2x2x2x1x222xbf16, #tpu.memory_space<vmem>>, vector<1x1x1x1x1x204xbf16>
    %397 = vector.shape_cast %396 : vector<1x1x1x1x1x204xbf16> to vector<1x204xbf16>
    %c24_1031 = arith.constant 24 : index
    %c816_1032 = arith.constant 816 : index
    %398 = vector.load %arg7[%c24_1031, %c816_1032] : memref<27x1632xbf16, #tpu.memory_space<vmem>>, vector<1x204xbf16>
    tpu.vector_store %arg7[%c24_1031, %c816_1032], %397 {strides = array<i32>} : memref<27x1632xbf16, #tpu.memory_space<vmem>>, vector<1x204xbf16>,
    %c0_1033 = arith.constant 0 : index
    %c1_1034 = arith.constant 1 : index
    %c0_1035 = arith.constant 0 : index
    %c1_1036 = arith.constant 1 : index
    %c0_1037 = arith.constant 0 : index
    %c17_1038 = arith.constant 17 : index
    %399 = vector.load %arg3[%c0_1033, %c1_1034, %c0_1035, %c1_1036, %c0_1037, %c17_1038] : memref<1x2x2x2x1x222xbf16, #tpu.memory_space<vmem>>, vector<1x1x1x1x1x204xbf16>
    %400 = vector.shape_cast %399 : vector<1x1x1x1x1x204xbf16> to vector<1x204xbf16>
    %c25_1039 = arith.constant 25 : index
    %c816_1040 = arith.constant 816 : index
    %401 = vector.load %arg7[%c25_1039, %c816_1040] : memref<27x1632xbf16, #tpu.memory_space<vmem>>, vector<1x204xbf16>
    tpu.vector_store %arg7[%c25_1039, %c816_1040], %400 {strides = array<i32>} : memref<27x1632xbf16, #tpu.memory_space<vmem>>, vector<1x204xbf16>,
    %c0_1041 = arith.constant 0 : index
    %c1_1042 = arith.constant 1 : index
    %c0_1043 = arith.constant 0 : index
    %c0_1044 = arith.constant 0 : index
    %c0_1045 = arith.constant 0 : index
    %c18_1046 = arith.constant 18 : index
    %402 = vector.load %arg3[%c0_1041, %c1_1042, %c0_1043, %c0_1044, %c0_1045, %c18_1046] : memref<1x2x2x2x1x222xbf16, #tpu.memory_space<vmem>>, vector<1x1x1x1x1x204xbf16>
    %403 = vector.shape_cast %402 : vector<1x1x1x1x1x204xbf16> to vector<1x204xbf16>
    %c26_1047 = arith.constant 26 : index
    %c816_1048 = arith.constant 816 : index
    %404 = vector.load %arg7[%c26_1047, %c816_1048] : memref<27x1632xbf16, #tpu.memory_space<vmem>>, vector<1x204xbf16>
    tpu.vector_store %arg7[%c26_1047, %c816_1048], %403 {strides = array<i32>} : memref<27x1632xbf16, #tpu.memory_space<vmem>>, vector<1x204xbf16>,
    %c0_1049 = arith.constant 0 : index
    %c1_1050 = arith.constant 1 : index
    %c0_1051 = arith.constant 0 : index
    %c1_1052 = arith.constant 1 : index
    %c0_1053 = arith.constant 0 : index
    %c0_1054 = arith.constant 0 : index
    %405 = vector.load %arg2[%c0_1049, %c1_1050, %c0_1051, %c1_1052, %c0_1053, %c0_1054] : memref<1x2x2x2x1x222xbf16, #tpu.memory_space<vmem>>, vector<1x1x1x1x1x204xbf16>
    %406 = vector.shape_cast %405 : vector<1x1x1x1x1x204xbf16> to vector<1x204xbf16>
    %c0_1055 = arith.constant 0 : index
    %c1020 = arith.constant 1020 : index
    %407 = vector.load %arg7[%c0_1055, %c1020] : memref<27x1632xbf16, #tpu.memory_space<vmem>>, vector<1x204xbf16>
    tpu.vector_store %arg7[%c0_1055, %c1020], %406 {strides = array<i32>} : memref<27x1632xbf16, #tpu.memory_space<vmem>>, vector<1x204xbf16>,
    %c0_1056 = arith.constant 0 : index
    %c1_1057 = arith.constant 1 : index
    %c0_1058 = arith.constant 0 : index
    %c0_1059 = arith.constant 0 : index
    %c0_1060 = arith.constant 0 : index
    %c1_1061 = arith.constant 1 : index
    %408 = vector.load %arg2[%c0_1056, %c1_1057, %c0_1058, %c0_1059, %c0_1060, %c1_1061] : memref<1x2x2x2x1x222xbf16, #tpu.memory_space<vmem>>, vector<1x1x1x1x1x204xbf16>
    %409 = vector.shape_cast %408 : vector<1x1x1x1x1x204xbf16> to vector<1x204xbf16>
    %c1_1062 = arith.constant 1 : index
    %c1020_1063 = arith.constant 1020 : index
    %410 = vector.load %arg7[%c1_1062, %c1020_1063] : memref<27x1632xbf16, #tpu.memory_space<vmem>>, vector<1x204xbf16>
    tpu.vector_store %arg7[%c1_1062, %c1020_1063], %409 {strides = array<i32>} : memref<27x1632xbf16, #tpu.memory_space<vmem>>, vector<1x204xbf16>,
    %c0_1064 = arith.constant 0 : index
    %c1_1065 = arith.constant 1 : index
    %c0_1066 = arith.constant 0 : index
    %c1_1067 = arith.constant 1 : index
    %c0_1068 = arith.constant 0 : index
    %c1_1069 = arith.constant 1 : index
    %411 = vector.load %arg2[%c0_1064, %c1_1065, %c0_1066, %c1_1067, %c0_1068, %c1_1069] : memref<1x2x2x2x1x222xbf16, #tpu.memory_space<vmem>>, vector<1x1x1x1x1x204xbf16>
    %412 = vector.shape_cast %411 : vector<1x1x1x1x1x204xbf16> to vector<1x204xbf16>
    %c2_1070 = arith.constant 2 : index
    %c1020_1071 = arith.constant 1020 : index
    %413 = vector.load %arg7[%c2_1070, %c1020_1071] : memref<27x1632xbf16, #tpu.memory_space<vmem>>, vector<1x204xbf16>
    tpu.vector_store %arg7[%c2_1070, %c1020_1071], %412 {strides = array<i32>} : memref<27x1632xbf16, #tpu.memory_space<vmem>>, vector<1x204xbf16>,
    %c0_1072 = arith.constant 0 : index
    %c1_1073 = arith.constant 1 : index
    %c1_1074 = arith.constant 1 : index
    %c1_1075 = arith.constant 1 : index
    %c0_1076 = arith.constant 0 : index
    %c0_1077 = arith.constant 0 : index
    %414 = vector.load %arg2[%c0_1072, %c1_1073, %c1_1074, %c1_1075, %c0_1076, %c0_1077] : memref<1x2x2x2x1x222xbf16, #tpu.memory_space<vmem>>, vector<1x1x1x1x1x204xbf16>
    %415 = vector.shape_cast %414 : vector<1x1x1x1x1x204xbf16> to vector<1x204xbf16>
    %c3_1078 = arith.constant 3 : index
    %c1020_1079 = arith.constant 1020 : index
    %416 = vector.load %arg7[%c3_1078, %c1020_1079] : memref<27x1632xbf16, #tpu.memory_space<vmem>>, vector<1x204xbf16>
    tpu.vector_store %arg7[%c3_1078, %c1020_1079], %415 {strides = array<i32>} : memref<27x1632xbf16, #tpu.memory_space<vmem>>, vector<1x204xbf16>,
    %c0_1080 = arith.constant 0 : index
    %c1_1081 = arith.constant 1 : index
    %c1_1082 = arith.constant 1 : index
    %c0_1083 = arith.constant 0 : index
    %c0_1084 = arith.constant 0 : index
    %c1_1085 = arith.constant 1 : index
    %417 = vector.load %arg2[%c0_1080, %c1_1081, %c1_1082, %c0_1083, %c0_1084, %c1_1085] : memref<1x2x2x2x1x222xbf16, #tpu.memory_space<vmem>>, vector<1x1x1x1x1x204xbf16>
    %418 = vector.shape_cast %417 : vector<1x1x1x1x1x204xbf16> to vector<1x204xbf16>
    %c4_1086 = arith.constant 4 : index
    %c1020_1087 = arith.constant 1020 : index
    %419 = vector.load %arg7[%c4_1086, %c1020_1087] : memref<27x1632xbf16, #tpu.memory_space<vmem>>, vector<1x204xbf16>
    tpu.vector_store %arg7[%c4_1086, %c1020_1087], %418 {strides = array<i32>} : memref<27x1632xbf16, #tpu.memory_space<vmem>>, vector<1x204xbf16>,
    %c0_1088 = arith.constant 0 : index
    %c1_1089 = arith.constant 1 : index
    %c1_1090 = arith.constant 1 : index
    %c1_1091 = arith.constant 1 : index
    %c0_1092 = arith.constant 0 : index
    %c1_1093 = arith.constant 1 : index
    %420 = vector.load %arg2[%c0_1088, %c1_1089, %c1_1090, %c1_1091, %c0_1092, %c1_1093] : memref<1x2x2x2x1x222xbf16, #tpu.memory_space<vmem>>, vector<1x1x1x1x1x204xbf16>
    %421 = vector.shape_cast %420 : vector<1x1x1x1x1x204xbf16> to vector<1x204xbf16>
    %c5_1094 = arith.constant 5 : index
    %c1020_1095 = arith.constant 1020 : index
    %422 = vector.load %arg7[%c5_1094, %c1020_1095] : memref<27x1632xbf16, #tpu.memory_space<vmem>>, vector<1x204xbf16>
    tpu.vector_store %arg7[%c5_1094, %c1020_1095], %421 {strides = array<i32>} : memref<27x1632xbf16, #tpu.memory_space<vmem>>, vector<1x204xbf16>,
    %c0_1096 = arith.constant 0 : index
    %c1_1097 = arith.constant 1 : index
    %c0_1098 = arith.constant 0 : index
    %c1_1099 = arith.constant 1 : index
    %c0_1100 = arith.constant 0 : index
    %c17_1101 = arith.constant 17 : index
    %423 = vector.load %arg2[%c0_1096, %c1_1097, %c0_1098, %c1_1099, %c0_1100, %c17_1101] : memref<1x2x2x2x1x222xbf16, #tpu.memory_space<vmem>>, vector<1x1x1x1x1x204xbf16>
    %424 = vector.shape_cast %423 : vector<1x1x1x1x1x204xbf16> to vector<1x204xbf16>
    %c6_1102 = arith.constant 6 : index
    %c1020_1103 = arith.constant 1020 : index
    %425 = vector.load %arg7[%c6_1102, %c1020_1103] : memref<27x1632xbf16, #tpu.memory_space<vmem>>, vector<1x204xbf16>
    tpu.vector_store %arg7[%c6_1102, %c1020_1103], %424 {strides = array<i32>} : memref<27x1632xbf16, #tpu.memory_space<vmem>>, vector<1x204xbf16>,
    %c0_1104 = arith.constant 0 : index
    %c1_1105 = arith.constant 1 : index
    %c0_1106 = arith.constant 0 : index
    %c0_1107 = arith.constant 0 : index
    %c0_1108 = arith.constant 0 : index
    %c18_1109 = arith.constant 18 : index
    %426 = vector.load %arg2[%c0_1104, %c1_1105, %c0_1106, %c0_1107, %c0_1108, %c18_1109] : memref<1x2x2x2x1x222xbf16, #tpu.memory_space<vmem>>, vector<1x1x1x1x1x204xbf16>
    %427 = vector.shape_cast %426 : vector<1x1x1x1x1x204xbf16> to vector<1x204xbf16>
    %c7_1110 = arith.constant 7 : index
    %c1020_1111 = arith.constant 1020 : index
    %428 = vector.load %arg7[%c7_1110, %c1020_1111] : memref<27x1632xbf16, #tpu.memory_space<vmem>>, vector<1x204xbf16>
    tpu.vector_store %arg7[%c7_1110, %c1020_1111], %427 {strides = array<i32>} : memref<27x1632xbf16, #tpu.memory_space<vmem>>, vector<1x204xbf16>,
    %c0_1112 = arith.constant 0 : index
    %c1_1113 = arith.constant 1 : index
    %c0_1114 = arith.constant 0 : index
    %c1_1115 = arith.constant 1 : index
    %c0_1116 = arith.constant 0 : index
    %c18_1117 = arith.constant 18 : index
    %429 = vector.load %arg2[%c0_1112, %c1_1113, %c0_1114, %c1_1115, %c0_1116, %c18_1117] : memref<1x2x2x2x1x222xbf16, #tpu.memory_space<vmem>>, vector<1x1x1x1x1x204xbf16>
    %430 = vector.shape_cast %429 : vector<1x1x1x1x1x204xbf16> to vector<1x204xbf16>
    %c8_1118 = arith.constant 8 : index
    %c1020_1119 = arith.constant 1020 : index
    %431 = vector.load %arg7[%c8_1118, %c1020_1119] : memref<27x1632xbf16, #tpu.memory_space<vmem>>, vector<1x204xbf16>
    tpu.vector_store %arg7[%c8_1118, %c1020_1119], %430 {strides = array<i32>} : memref<27x1632xbf16, #tpu.memory_space<vmem>>, vector<1x204xbf16>,
    %c0_1120 = arith.constant 0 : index
    %c0_1121 = arith.constant 0 : index
    %c0_1122 = arith.constant 0 : index
    %c1_1123 = arith.constant 1 : index
    %c0_1124 = arith.constant 0 : index
    %c0_1125 = arith.constant 0 : index
    %432 = vector.load %arg3[%c0_1120, %c0_1121, %c0_1122, %c1_1123, %c0_1124, %c0_1125] : memref<1x2x2x2x1x222xbf16, #tpu.memory_space<vmem>>, vector<1x1x1x1x1x204xbf16>
    %433 = vector.shape_cast %432 : vector<1x1x1x1x1x204xbf16> to vector<1x204xbf16>
    %c9_1126 = arith.constant 9 : index
    %c1020_1127 = arith.constant 1020 : index
    %434 = vector.load %arg7[%c9_1126, %c1020_1127] : memref<27x1632xbf16, #tpu.memory_space<vmem>>, vector<1x204xbf16>
    tpu.vector_store %arg7[%c9_1126, %c1020_1127], %433 {strides = array<i32>} : memref<27x1632xbf16, #tpu.memory_space<vmem>>, vector<1x204xbf16>,
    %c0_1128 = arith.constant 0 : index
    %c0_1129 = arith.constant 0 : index
    %c0_1130 = arith.constant 0 : index
    %c0_1131 = arith.constant 0 : index
    %c0_1132 = arith.constant 0 : index
    %c1_1133 = arith.constant 1 : index
    %435 = vector.load %arg3[%c0_1128, %c0_1129, %c0_1130, %c0_1131, %c0_1132, %c1_1133] : memref<1x2x2x2x1x222xbf16, #tpu.memory_space<vmem>>, vector<1x1x1x1x1x204xbf16>
    %436 = vector.shape_cast %435 : vector<1x1x1x1x1x204xbf16> to vector<1x204xbf16>
    %c10_1134 = arith.constant 10 : index
    %c1020_1135 = arith.constant 1020 : index
    %437 = vector.load %arg7[%c10_1134, %c1020_1135] : memref<27x1632xbf16, #tpu.memory_space<vmem>>, vector<1x204xbf16>
    tpu.vector_store %arg7[%c10_1134, %c1020_1135], %436 {strides = array<i32>} : memref<27x1632xbf16, #tpu.memory_space<vmem>>, vector<1x204xbf16>,
    %c0_1136 = arith.constant 0 : index
    %c0_1137 = arith.constant 0 : index
    %c0_1138 = arith.constant 0 : index
    %c1_1139 = arith.constant 1 : index
    %c0_1140 = arith.constant 0 : index
    %c1_1141 = arith.constant 1 : index
    %438 = vector.load %arg3[%c0_1136, %c0_1137, %c0_1138, %c1_1139, %c0_1140, %c1_1141] : memref<1x2x2x2x1x222xbf16, #tpu.memory_space<vmem>>, vector<1x1x1x1x1x204xbf16>
    %439 = vector.shape_cast %438 : vector<1x1x1x1x1x204xbf16> to vector<1x204xbf16>
    %c11_1142 = arith.constant 11 : index
    %c1020_1143 = arith.constant 1020 : index
    %440 = vector.load %arg7[%c11_1142, %c1020_1143] : memref<27x1632xbf16, #tpu.memory_space<vmem>>, vector<1x204xbf16>
    tpu.vector_store %arg7[%c11_1142, %c1020_1143], %439 {strides = array<i32>} : memref<27x1632xbf16, #tpu.memory_space<vmem>>, vector<1x204xbf16>,
    %c0_1144 = arith.constant 0 : index
    %c0_1145 = arith.constant 0 : index
    %c1_1146 = arith.constant 1 : index
    %c1_1147 = arith.constant 1 : index
    %c0_1148 = arith.constant 0 : index
    %c0_1149 = arith.constant 0 : index
    %441 = vector.load %arg3[%c0_1144, %c0_1145, %c1_1146, %c1_1147, %c0_1148, %c0_1149] : memref<1x2x2x2x1x222xbf16, #tpu.memory_space<vmem>>, vector<1x1x1x1x1x204xbf16>
    %442 = vector.shape_cast %441 : vector<1x1x1x1x1x204xbf16> to vector<1x204xbf16>
    %c12_1150 = arith.constant 12 : index
    %c1020_1151 = arith.constant 1020 : index
    %443 = vector.load %arg7[%c12_1150, %c1020_1151] : memref<27x1632xbf16, #tpu.memory_space<vmem>>, vector<1x204xbf16>
    tpu.vector_store %arg7[%c12_1150, %c1020_1151], %442 {strides = array<i32>} : memref<27x1632xbf16, #tpu.memory_space<vmem>>, vector<1x204xbf16>,
    %c0_1152 = arith.constant 0 : index
    %c0_1153 = arith.constant 0 : index
    %c1_1154 = arith.constant 1 : index
    %c0_1155 = arith.constant 0 : index
    %c0_1156 = arith.constant 0 : index
    %c1_1157 = arith.constant 1 : index
    %444 = vector.load %arg3[%c0_1152, %c0_1153, %c1_1154, %c0_1155, %c0_1156, %c1_1157] : memref<1x2x2x2x1x222xbf16, #tpu.memory_space<vmem>>, vector<1x1x1x1x1x204xbf16>
    %445 = vector.shape_cast %444 : vector<1x1x1x1x1x204xbf16> to vector<1x204xbf16>
    %c13_1158 = arith.constant 13 : index
    %c1020_1159 = arith.constant 1020 : index
    %446 = vector.load %arg7[%c13_1158, %c1020_1159] : memref<27x1632xbf16, #tpu.memory_space<vmem>>, vector<1x204xbf16>
    tpu.vector_store %arg7[%c13_1158, %c1020_1159], %445 {strides = array<i32>} : memref<27x1632xbf16, #tpu.memory_space<vmem>>, vector<1x204xbf16>,
    %c0_1160 = arith.constant 0 : index
    %c0_1161 = arith.constant 0 : index
    %c1_1162 = arith.constant 1 : index
    %c1_1163 = arith.constant 1 : index
    %c0_1164 = arith.constant 0 : index
    %c1_1165 = arith.constant 1 : index
    %447 = vector.load %arg3[%c0_1160, %c0_1161, %c1_1162, %c1_1163, %c0_1164, %c1_1165] : memref<1x2x2x2x1x222xbf16, #tpu.memory_space<vmem>>, vector<1x1x1x1x1x204xbf16>
    %448 = vector.shape_cast %447 : vector<1x1x1x1x1x204xbf16> to vector<1x204xbf16>
    %c14_1166 = arith.constant 14 : index
    %c1020_1167 = arith.constant 1020 : index
    %449 = vector.load %arg7[%c14_1166, %c1020_1167] : memref<27x1632xbf16, #tpu.memory_space<vmem>>, vector<1x204xbf16>
    tpu.vector_store %arg7[%c14_1166, %c1020_1167], %448 {strides = array<i32>} : memref<27x1632xbf16, #tpu.memory_space<vmem>>, vector<1x204xbf16>,
    %c0_1168 = arith.constant 0 : index
    %c0_1169 = arith.constant 0 : index
    %c0_1170 = arith.constant 0 : index
    %c1_1171 = arith.constant 1 : index
    %c0_1172 = arith.constant 0 : index
    %c17_1173 = arith.constant 17 : index
    %450 = vector.load %arg3[%c0_1168, %c0_1169, %c0_1170, %c1_1171, %c0_1172, %c17_1173] : memref<1x2x2x2x1x222xbf16, #tpu.memory_space<vmem>>, vector<1x1x1x1x1x204xbf16>
    %451 = vector.shape_cast %450 : vector<1x1x1x1x1x204xbf16> to vector<1x204xbf16>
    %c15_1174 = arith.constant 15 : index
    %c1020_1175 = arith.constant 1020 : index
    %452 = vector.load %arg7[%c15_1174, %c1020_1175] : memref<27x1632xbf16, #tpu.memory_space<vmem>>, vector<1x204xbf16>
    tpu.vector_store %arg7[%c15_1174, %c1020_1175], %451 {strides = array<i32>} : memref<27x1632xbf16, #tpu.memory_space<vmem>>, vector<1x204xbf16>,
    %c0_1176 = arith.constant 0 : index
    %c0_1177 = arith.constant 0 : index
    %c0_1178 = arith.constant 0 : index
    %c0_1179 = arith.constant 0 : index
    %c0_1180 = arith.constant 0 : index
    %c18_1181 = arith.constant 18 : index
    %453 = vector.load %arg3[%c0_1176, %c0_1177, %c0_1178, %c0_1179, %c0_1180, %c18_1181] : memref<1x2x2x2x1x222xbf16, #tpu.memory_space<vmem>>, vector<1x1x1x1x1x204xbf16>
    %454 = vector.shape_cast %453 : vector<1x1x1x1x1x204xbf16> to vector<1x204xbf16>
    %c16_1182 = arith.constant 16 : index
    %c1020_1183 = arith.constant 1020 : index
    %455 = vector.load %arg7[%c16_1182, %c1020_1183] : memref<27x1632xbf16, #tpu.memory_space<vmem>>, vector<1x204xbf16>
    tpu.vector_store %arg7[%c16_1182, %c1020_1183], %454 {strides = array<i32>} : memref<27x1632xbf16, #tpu.memory_space<vmem>>, vector<1x204xbf16>,
    %c0_1184 = arith.constant 0 : index
    %c0_1185 = arith.constant 0 : index
    %c0_1186 = arith.constant 0 : index
    %c1_1187 = arith.constant 1 : index
    %c0_1188 = arith.constant 0 : index
    %c18_1189 = arith.constant 18 : index
    %456 = vector.load %arg3[%c0_1184, %c0_1185, %c0_1186, %c1_1187, %c0_1188, %c18_1189] : memref<1x2x2x2x1x222xbf16, #tpu.memory_space<vmem>>, vector<1x1x1x1x1x204xbf16>
    %457 = vector.shape_cast %456 : vector<1x1x1x1x1x204xbf16> to vector<1x204xbf16>
    %c17_1190 = arith.constant 17 : index
    %c1020_1191 = arith.constant 1020 : index
    %458 = vector.load %arg7[%c17_1190, %c1020_1191] : memref<27x1632xbf16, #tpu.memory_space<vmem>>, vector<1x204xbf16>
    tpu.vector_store %arg7[%c17_1190, %c1020_1191], %457 {strides = array<i32>} : memref<27x1632xbf16, #tpu.memory_space<vmem>>, vector<1x204xbf16>,
    %c0_1192 = arith.constant 0 : index
    %c1_1193 = arith.constant 1 : index
    %c0_1194 = arith.constant 0 : index
    %c1_1195 = arith.constant 1 : index
    %c0_1196 = arith.constant 0 : index
    %c0_1197 = arith.constant 0 : index
    %459 = vector.load %arg3[%c0_1192, %c1_1193, %c0_1194, %c1_1195, %c0_1196, %c0_1197] : memref<1x2x2x2x1x222xbf16, #tpu.memory_space<vmem>>, vector<1x1x1x1x1x204xbf16>
    %460 = vector.shape_cast %459 : vector<1x1x1x1x1x204xbf16> to vector<1x204xbf16>
    %c18_1198 = arith.constant 18 : index
    %c1020_1199 = arith.constant 1020 : index
    %461 = vector.load %arg7[%c18_1198, %c1020_1199] : memref<27x1632xbf16, #tpu.memory_space<vmem>>, vector<1x204xbf16>
    tpu.vector_store %arg7[%c18_1198, %c1020_1199], %460 {strides = array<i32>} : memref<27x1632xbf16, #tpu.memory_space<vmem>>, vector<1x204xbf16>,
    %c0_1200 = arith.constant 0 : index
    %c1_1201 = arith.constant 1 : index
    %c0_1202 = arith.constant 0 : index
    %c0_1203 = arith.constant 0 : index
    %c0_1204 = arith.constant 0 : index
    %c1_1205 = arith.constant 1 : index
    %462 = vector.load %arg3[%c0_1200, %c1_1201, %c0_1202, %c0_1203, %c0_1204, %c1_1205] : memref<1x2x2x2x1x222xbf16, #tpu.memory_space<vmem>>, vector<1x1x1x1x1x204xbf16>
    %463 = vector.shape_cast %462 : vector<1x1x1x1x1x204xbf16> to vector<1x204xbf16>
    %c19_1206 = arith.constant 19 : index
    %c1020_1207 = arith.constant 1020 : index
    %464 = vector.load %arg7[%c19_1206, %c1020_1207] : memref<27x1632xbf16, #tpu.memory_space<vmem>>, vector<1x204xbf16>
    tpu.vector_store %arg7[%c19_1206, %c1020_1207], %463 {strides = array<i32>} : memref<27x1632xbf16, #tpu.memory_space<vmem>>, vector<1x204xbf16>,
    %c0_1208 = arith.constant 0 : index
    %c1_1209 = arith.constant 1 : index
    %c0_1210 = arith.constant 0 : index
    %c1_1211 = arith.constant 1 : index
    %c0_1212 = arith.constant 0 : index
    %c1_1213 = arith.constant 1 : index
    %465 = vector.load %arg3[%c0_1208, %c1_1209, %c0_1210, %c1_1211, %c0_1212, %c1_1213] : memref<1x2x2x2x1x222xbf16, #tpu.memory_space<vmem>>, vector<1x1x1x1x1x204xbf16>
    %466 = vector.shape_cast %465 : vector<1x1x1x1x1x204xbf16> to vector<1x204xbf16>
    %c20_1214 = arith.constant 20 : index
    %c1020_1215 = arith.constant 1020 : index
    %467 = vector.load %arg7[%c20_1214, %c1020_1215] : memref<27x1632xbf16, #tpu.memory_space<vmem>>, vector<1x204xbf16>
    tpu.vector_store %arg7[%c20_1214, %c1020_1215], %466 {strides = array<i32>} : memref<27x1632xbf16, #tpu.memory_space<vmem>>, vector<1x204xbf16>,
    %c0_1216 = arith.constant 0 : index
    %c1_1217 = arith.constant 1 : index
    %c1_1218 = arith.constant 1 : index
    %c1_1219 = arith.constant 1 : index
    %c0_1220 = arith.constant 0 : index
    %c0_1221 = arith.constant 0 : index
    %468 = vector.load %arg3[%c0_1216, %c1_1217, %c1_1218, %c1_1219, %c0_1220, %c0_1221] : memref<1x2x2x2x1x222xbf16, #tpu.memory_space<vmem>>, vector<1x1x1x1x1x204xbf16>
    %469 = vector.shape_cast %468 : vector<1x1x1x1x1x204xbf16> to vector<1x204xbf16>
    %c21_1222 = arith.constant 21 : index
    %c1020_1223 = arith.constant 1020 : index
    %470 = vector.load %arg7[%c21_1222, %c1020_1223] : memref<27x1632xbf16, #tpu.memory_space<vmem>>, vector<1x204xbf16>
    tpu.vector_store %arg7[%c21_1222, %c1020_1223], %469 {strides = array<i32>} : memref<27x1632xbf16, #tpu.memory_space<vmem>>, vector<1x204xbf16>,
    %c0_1224 = arith.constant 0 : index
    %c1_1225 = arith.constant 1 : index
    %c1_1226 = arith.constant 1 : index
    %c0_1227 = arith.constant 0 : index
    %c0_1228 = arith.constant 0 : index
    %c1_1229 = arith.constant 1 : index
    %471 = vector.load %arg3[%c0_1224, %c1_1225, %c1_1226, %c0_1227, %c0_1228, %c1_1229] : memref<1x2x2x2x1x222xbf16, #tpu.memory_space<vmem>>, vector<1x1x1x1x1x204xbf16>
    %472 = vector.shape_cast %471 : vector<1x1x1x1x1x204xbf16> to vector<1x204xbf16>
    %c22_1230 = arith.constant 22 : index
    %c1020_1231 = arith.constant 1020 : index
    %473 = vector.load %arg7[%c22_1230, %c1020_1231] : memref<27x1632xbf16, #tpu.memory_space<vmem>>, vector<1x204xbf16>
    tpu.vector_store %arg7[%c22_1230, %c1020_1231], %472 {strides = array<i32>} : memref<27x1632xbf16, #tpu.memory_space<vmem>>, vector<1x204xbf16>,
    %c0_1232 = arith.constant 0 : index
    %c1_1233 = arith.constant 1 : index
    %c1_1234 = arith.constant 1 : index
    %c1_1235 = arith.constant 1 : index
    %c0_1236 = arith.constant 0 : index
    %c1_1237 = arith.constant 1 : index
    %474 = vector.load %arg3[%c0_1232, %c1_1233, %c1_1234, %c1_1235, %c0_1236, %c1_1237] : memref<1x2x2x2x1x222xbf16, #tpu.memory_space<vmem>>, vector<1x1x1x1x1x204xbf16>
    %475 = vector.shape_cast %474 : vector<1x1x1x1x1x204xbf16> to vector<1x204xbf16>
    %c23_1238 = arith.constant 23 : index
    %c1020_1239 = arith.constant 1020 : index
    %476 = vector.load %arg7[%c23_1238, %c1020_1239] : memref<27x1632xbf16, #tpu.memory_space<vmem>>, vector<1x204xbf16>
    tpu.vector_store %arg7[%c23_1238, %c1020_1239], %475 {strides = array<i32>} : memref<27x1632xbf16, #tpu.memory_space<vmem>>, vector<1x204xbf16>,
    %c0_1240 = arith.constant 0 : index
    %c1_1241 = arith.constant 1 : index
    %c0_1242 = arith.constant 0 : index
    %c1_1243 = arith.constant 1 : index
    %c0_1244 = arith.constant 0 : index
    %c17_1245 = arith.constant 17 : index
    %477 = vector.load %arg3[%c0_1240, %c1_1241, %c0_1242, %c1_1243, %c0_1244, %c17_1245] : memref<1x2x2x2x1x222xbf16, #tpu.memory_space<vmem>>, vector<1x1x1x1x1x204xbf16>
    %478 = vector.shape_cast %477 : vector<1x1x1x1x1x204xbf16> to vector<1x204xbf16>
    %c24_1246 = arith.constant 24 : index
    %c1020_1247 = arith.constant 1020 : index
    %479 = vector.load %arg7[%c24_1246, %c1020_1247] : memref<27x1632xbf16, #tpu.memory_space<vmem>>, vector<1x204xbf16>
    tpu.vector_store %arg7[%c24_1246, %c1020_1247], %478 {strides = array<i32>} : memref<27x1632xbf16, #tpu.memory_space<vmem>>, vector<1x204xbf16>,
    %c0_1248 = arith.constant 0 : index
    %c1_1249 = arith.constant 1 : index
    %c0_1250 = arith.constant 0 : index
    %c0_1251 = arith.constant 0 : index
    %c0_1252 = arith.constant 0 : index
    %c18_1253 = arith.constant 18 : index
    %480 = vector.load %arg3[%c0_1248, %c1_1249, %c0_1250, %c0_1251, %c0_1252, %c18_1253] : memref<1x2x2x2x1x222xbf16, #tpu.memory_space<vmem>>, vector<1x1x1x1x1x204xbf16>
    %481 = vector.shape_cast %480 : vector<1x1x1x1x1x204xbf16> to vector<1x204xbf16>
    %c25_1254 = arith.constant 25 : index
    %c1020_1255 = arith.constant 1020 : index
    %482 = vector.load %arg7[%c25_1254, %c1020_1255] : memref<27x1632xbf16, #tpu.memory_space<vmem>>, vector<1x204xbf16>
    tpu.vector_store %arg7[%c25_1254, %c1020_1255], %481 {strides = array<i32>} : memref<27x1632xbf16, #tpu.memory_space<vmem>>, vector<1x204xbf16>,
    %c0_1256 = arith.constant 0 : index
    %c1_1257 = arith.constant 1 : index
    %c0_1258 = arith.constant 0 : index
    %c1_1259 = arith.constant 1 : index
    %c0_1260 = arith.constant 0 : index
    %c18_1261 = arith.constant 18 : index
    %483 = vector.load %arg3[%c0_1256, %c1_1257, %c0_1258, %c1_1259, %c0_1260, %c18_1261] : memref<1x2x2x2x1x222xbf16, #tpu.memory_space<vmem>>, vector<1x1x1x1x1x204xbf16>
    %484 = vector.shape_cast %483 : vector<1x1x1x1x1x204xbf16> to vector<1x204xbf16>
    %c26_1262 = arith.constant 26 : index
    %c1020_1263 = arith.constant 1020 : index
    %485 = vector.load %arg7[%c26_1262, %c1020_1263] : memref<27x1632xbf16, #tpu.memory_space<vmem>>, vector<1x204xbf16>
    tpu.vector_store %arg7[%c26_1262, %c1020_1263], %484 {strides = array<i32>} : memref<27x1632xbf16, #tpu.memory_space<vmem>>, vector<1x204xbf16>,
    %c0_1264 = arith.constant 0 : index
    %c1_1265 = arith.constant 1 : index
    %c1_1266 = arith.constant 1 : index
    %c0_1267 = arith.constant 0 : index
    %c0_1268 = arith.constant 0 : index
    %c0_1269 = arith.constant 0 : index
    %486 = vector.load %arg2[%c0_1264, %c1_1265, %c1_1266, %c0_1267, %c0_1268, %c0_1269] : memref<1x2x2x2x1x222xbf16, #tpu.memory_space<vmem>>, vector<1x1x1x1x1x204xbf16>
    %487 = vector.shape_cast %486 : vector<1x1x1x1x1x204xbf16> to vector<1x204xbf16>
    %c0_1270 = arith.constant 0 : index
    %c1224 = arith.constant 1224 : index
    %488 = vector.load %arg7[%c0_1270, %c1224] : memref<27x1632xbf16, #tpu.memory_space<vmem>>, vector<1x204xbf16>
    tpu.vector_store %arg7[%c0_1270, %c1224], %487 {strides = array<i32>} : memref<27x1632xbf16, #tpu.memory_space<vmem>>, vector<1x204xbf16>,
    %c0_1271 = arith.constant 0 : index
    %c1_1272 = arith.constant 1 : index
    %c1_1273 = arith.constant 1 : index
    %c1_1274 = arith.constant 1 : index
    %c0_1275 = arith.constant 0 : index
    %c0_1276 = arith.constant 0 : index
    %489 = vector.load %arg2[%c0_1271, %c1_1272, %c1_1273, %c1_1274, %c0_1275, %c0_1276] : memref<1x2x2x2x1x222xbf16, #tpu.memory_space<vmem>>, vector<1x1x1x1x1x204xbf16>
    %490 = vector.shape_cast %489 : vector<1x1x1x1x1x204xbf16> to vector<1x204xbf16>
    %c1_1277 = arith.constant 1 : index
    %c1224_1278 = arith.constant 1224 : index
    %491 = vector.load %arg7[%c1_1277, %c1224_1278] : memref<27x1632xbf16, #tpu.memory_space<vmem>>, vector<1x204xbf16>
    tpu.vector_store %arg7[%c1_1277, %c1224_1278], %490 {strides = array<i32>} : memref<27x1632xbf16, #tpu.memory_space<vmem>>, vector<1x204xbf16>,
    %c0_1279 = arith.constant 0 : index
    %c1_1280 = arith.constant 1 : index
    %c1_1281 = arith.constant 1 : index
    %c0_1282 = arith.constant 0 : index
    %c0_1283 = arith.constant 0 : index
    %c1_1284 = arith.constant 1 : index
    %492 = vector.load %arg2[%c0_1279, %c1_1280, %c1_1281, %c0_1282, %c0_1283, %c1_1284] : memref<1x2x2x2x1x222xbf16, #tpu.memory_space<vmem>>, vector<1x1x1x1x1x204xbf16>
    %493 = vector.shape_cast %492 : vector<1x1x1x1x1x204xbf16> to vector<1x204xbf16>
    %c2_1285 = arith.constant 2 : index
    %c1224_1286 = arith.constant 1224 : index
    %494 = vector.load %arg7[%c2_1285, %c1224_1286] : memref<27x1632xbf16, #tpu.memory_space<vmem>>, vector<1x204xbf16>
    tpu.vector_store %arg7[%c2_1285, %c1224_1286], %493 {strides = array<i32>} : memref<27x1632xbf16, #tpu.memory_space<vmem>>, vector<1x204xbf16>,
    %c0_1287 = arith.constant 0 : index
    %c1_1288 = arith.constant 1 : index
    %c0_1289 = arith.constant 0 : index
    %c0_1290 = arith.constant 0 : index
    %c0_1291 = arith.constant 0 : index
    %c17_1292 = arith.constant 17 : index
    %495 = vector.load %arg2[%c0_1287, %c1_1288, %c0_1289, %c0_1290, %c0_1291, %c17_1292] : memref<1x2x2x2x1x222xbf16, #tpu.memory_space<vmem>>, vector<1x1x1x1x1x204xbf16>
    %496 = vector.shape_cast %495 : vector<1x1x1x1x1x204xbf16> to vector<1x204xbf16>
    %c3_1293 = arith.constant 3 : index
    %c1224_1294 = arith.constant 1224 : index
    %497 = vector.load %arg7[%c3_1293, %c1224_1294] : memref<27x1632xbf16, #tpu.memory_space<vmem>>, vector<1x204xbf16>
    tpu.vector_store %arg7[%c3_1293, %c1224_1294], %496 {strides = array<i32>} : memref<27x1632xbf16, #tpu.memory_space<vmem>>, vector<1x204xbf16>,
    %c0_1295 = arith.constant 0 : index
    %c1_1296 = arith.constant 1 : index
    %c0_1297 = arith.constant 0 : index
    %c1_1298 = arith.constant 1 : index
    %c0_1299 = arith.constant 0 : index
    %c17_1300 = arith.constant 17 : index
    %498 = vector.load %arg2[%c0_1295, %c1_1296, %c0_1297, %c1_1298, %c0_1299, %c17_1300] : memref<1x2x2x2x1x222xbf16, #tpu.memory_space<vmem>>, vector<1x1x1x1x1x204xbf16>
    %499 = vector.shape_cast %498 : vector<1x1x1x1x1x204xbf16> to vector<1x204xbf16>
    %c4_1301 = arith.constant 4 : index
    %c1224_1302 = arith.constant 1224 : index
    %500 = vector.load %arg7[%c4_1301, %c1224_1302] : memref<27x1632xbf16, #tpu.memory_space<vmem>>, vector<1x204xbf16>
    tpu.vector_store %arg7[%c4_1301, %c1224_1302], %499 {strides = array<i32>} : memref<27x1632xbf16, #tpu.memory_space<vmem>>, vector<1x204xbf16>,
    %c0_1303 = arith.constant 0 : index
    %c1_1304 = arith.constant 1 : index
    %c0_1305 = arith.constant 0 : index
    %c0_1306 = arith.constant 0 : index
    %c0_1307 = arith.constant 0 : index
    %c18_1308 = arith.constant 18 : index
    %501 = vector.load %arg2[%c0_1303, %c1_1304, %c0_1305, %c0_1306, %c0_1307, %c18_1308] : memref<1x2x2x2x1x222xbf16, #tpu.memory_space<vmem>>, vector<1x1x1x1x1x204xbf16>
    %502 = vector.shape_cast %501 : vector<1x1x1x1x1x204xbf16> to vector<1x204xbf16>
    %c5_1309 = arith.constant 5 : index
    %c1224_1310 = arith.constant 1224 : index
    %503 = vector.load %arg7[%c5_1309, %c1224_1310] : memref<27x1632xbf16, #tpu.memory_space<vmem>>, vector<1x204xbf16>
    tpu.vector_store %arg7[%c5_1309, %c1224_1310], %502 {strides = array<i32>} : memref<27x1632xbf16, #tpu.memory_space<vmem>>, vector<1x204xbf16>,
    %c0_1311 = arith.constant 0 : index
    %c1_1312 = arith.constant 1 : index
    %c1_1313 = arith.constant 1 : index
    %c0_1314 = arith.constant 0 : index
    %c0_1315 = arith.constant 0 : index
    %c17_1316 = arith.constant 17 : index
    %504 = vector.load %arg2[%c0_1311, %c1_1312, %c1_1313, %c0_1314, %c0_1315, %c17_1316] : memref<1x2x2x2x1x222xbf16, #tpu.memory_space<vmem>>, vector<1x1x1x1x1x204xbf16>
    %505 = vector.shape_cast %504 : vector<1x1x1x1x1x204xbf16> to vector<1x204xbf16>
    %c6_1317 = arith.constant 6 : index
    %c1224_1318 = arith.constant 1224 : index
    %506 = vector.load %arg7[%c6_1317, %c1224_1318] : memref<27x1632xbf16, #tpu.memory_space<vmem>>, vector<1x204xbf16>
    tpu.vector_store %arg7[%c6_1317, %c1224_1318], %505 {strides = array<i32>} : memref<27x1632xbf16, #tpu.memory_space<vmem>>, vector<1x204xbf16>,
    %c0_1319 = arith.constant 0 : index
    %c1_1320 = arith.constant 1 : index
    %c1_1321 = arith.constant 1 : index
    %c1_1322 = arith.constant 1 : index
    %c0_1323 = arith.constant 0 : index
    %c17_1324 = arith.constant 17 : index
    %507 = vector.load %arg2[%c0_1319, %c1_1320, %c1_1321, %c1_1322, %c0_1323, %c17_1324] : memref<1x2x2x2x1x222xbf16, #tpu.memory_space<vmem>>, vector<1x1x1x1x1x204xbf16>
    %508 = vector.shape_cast %507 : vector<1x1x1x1x1x204xbf16> to vector<1x204xbf16>
    %c7_1325 = arith.constant 7 : index
    %c1224_1326 = arith.constant 1224 : index
    %509 = vector.load %arg7[%c7_1325, %c1224_1326] : memref<27x1632xbf16, #tpu.memory_space<vmem>>, vector<1x204xbf16>
    tpu.vector_store %arg7[%c7_1325, %c1224_1326], %508 {strides = array<i32>} : memref<27x1632xbf16, #tpu.memory_space<vmem>>, vector<1x204xbf16>,
    %c0_1327 = arith.constant 0 : index
    %c1_1328 = arith.constant 1 : index
    %c1_1329 = arith.constant 1 : index
    %c0_1330 = arith.constant 0 : index
    %c0_1331 = arith.constant 0 : index
    %c18_1332 = arith.constant 18 : index
    %510 = vector.load %arg2[%c0_1327, %c1_1328, %c1_1329, %c0_1330, %c0_1331, %c18_1332] : memref<1x2x2x2x1x222xbf16, #tpu.memory_space<vmem>>, vector<1x1x1x1x1x204xbf16>
    %511 = vector.shape_cast %510 : vector<1x1x1x1x1x204xbf16> to vector<1x204xbf16>
    %c8_1333 = arith.constant 8 : index
    %c1224_1334 = arith.constant 1224 : index
    %512 = vector.load %arg7[%c8_1333, %c1224_1334] : memref<27x1632xbf16, #tpu.memory_space<vmem>>, vector<1x204xbf16>
    tpu.vector_store %arg7[%c8_1333, %c1224_1334], %511 {strides = array<i32>} : memref<27x1632xbf16, #tpu.memory_space<vmem>>, vector<1x204xbf16>,
    %c0_1335 = arith.constant 0 : index
    %c0_1336 = arith.constant 0 : index
    %c1_1337 = arith.constant 1 : index
    %c0_1338 = arith.constant 0 : index
    %c0_1339 = arith.constant 0 : index
    %c0_1340 = arith.constant 0 : index
    %513 = vector.load %arg3[%c0_1335, %c0_1336, %c1_1337, %c0_1338, %c0_1339, %c0_1340] : memref<1x2x2x2x1x222xbf16, #tpu.memory_space<vmem>>, vector<1x1x1x1x1x204xbf16>
    %514 = vector.shape_cast %513 : vector<1x1x1x1x1x204xbf16> to vector<1x204xbf16>
    %c9_1341 = arith.constant 9 : index
    %c1224_1342 = arith.constant 1224 : index
    %515 = vector.load %arg7[%c9_1341, %c1224_1342] : memref<27x1632xbf16, #tpu.memory_space<vmem>>, vector<1x204xbf16>
    tpu.vector_store %arg7[%c9_1341, %c1224_1342], %514 {strides = array<i32>} : memref<27x1632xbf16, #tpu.memory_space<vmem>>, vector<1x204xbf16>,
    %c0_1343 = arith.constant 0 : index
    %c0_1344 = arith.constant 0 : index
    %c1_1345 = arith.constant 1 : index
    %c1_1346 = arith.constant 1 : index
    %c0_1347 = arith.constant 0 : index
    %c0_1348 = arith.constant 0 : index
    %516 = vector.load %arg3[%c0_1343, %c0_1344, %c1_1345, %c1_1346, %c0_1347, %c0_1348] : memref<1x2x2x2x1x222xbf16, #tpu.memory_space<vmem>>, vector<1x1x1x1x1x204xbf16>
    %517 = vector.shape_cast %516 : vector<1x1x1x1x1x204xbf16> to vector<1x204xbf16>
    %c10_1349 = arith.constant 10 : index
    %c1224_1350 = arith.constant 1224 : index
    %518 = vector.load %arg7[%c10_1349, %c1224_1350] : memref<27x1632xbf16, #tpu.memory_space<vmem>>, vector<1x204xbf16>
    tpu.vector_store %arg7[%c10_1349, %c1224_1350], %517 {strides = array<i32>} : memref<27x1632xbf16, #tpu.memory_space<vmem>>, vector<1x204xbf16>,
    %c0_1351 = arith.constant 0 : index
    %c0_1352 = arith.constant 0 : index
    %c1_1353 = arith.constant 1 : index
    %c0_1354 = arith.constant 0 : index
    %c0_1355 = arith.constant 0 : index
    %c1_1356 = arith.constant 1 : index
    %519 = vector.load %arg3[%c0_1351, %c0_1352, %c1_1353, %c0_1354, %c0_1355, %c1_1356] : memref<1x2x2x2x1x222xbf16, #tpu.memory_space<vmem>>, vector<1x1x1x1x1x204xbf16>
    %520 = vector.shape_cast %519 : vector<1x1x1x1x1x204xbf16> to vector<1x204xbf16>
    %c11_1357 = arith.constant 11 : index
    %c1224_1358 = arith.constant 1224 : index
    %521 = vector.load %arg7[%c11_1357, %c1224_1358] : memref<27x1632xbf16, #tpu.memory_space<vmem>>, vector<1x204xbf16>
    tpu.vector_store %arg7[%c11_1357, %c1224_1358], %520 {strides = array<i32>} : memref<27x1632xbf16, #tpu.memory_space<vmem>>, vector<1x204xbf16>,
    %c0_1359 = arith.constant 0 : index
    %c0_1360 = arith.constant 0 : index
    %c0_1361 = arith.constant 0 : index
    %c0_1362 = arith.constant 0 : index
    %c0_1363 = arith.constant 0 : index
    %c17_1364 = arith.constant 17 : index
    %522 = vector.load %arg3[%c0_1359, %c0_1360, %c0_1361, %c0_1362, %c0_1363, %c17_1364] : memref<1x2x2x2x1x222xbf16, #tpu.memory_space<vmem>>, vector<1x1x1x1x1x204xbf16>
    %523 = vector.shape_cast %522 : vector<1x1x1x1x1x204xbf16> to vector<1x204xbf16>
    %c12_1365 = arith.constant 12 : index
    %c1224_1366 = arith.constant 1224 : index
    %524 = vector.load %arg7[%c12_1365, %c1224_1366] : memref<27x1632xbf16, #tpu.memory_space<vmem>>, vector<1x204xbf16>
    tpu.vector_store %arg7[%c12_1365, %c1224_1366], %523 {strides = array<i32>} : memref<27x1632xbf16, #tpu.memory_space<vmem>>, vector<1x204xbf16>,
    %c0_1367 = arith.constant 0 : index
    %c0_1368 = arith.constant 0 : index
    %c0_1369 = arith.constant 0 : index
    %c1_1370 = arith.constant 1 : index
    %c0_1371 = arith.constant 0 : index
    %c17_1372 = arith.constant 17 : index
    %525 = vector.load %arg3[%c0_1367, %c0_1368, %c0_1369, %c1_1370, %c0_1371, %c17_1372] : memref<1x2x2x2x1x222xbf16, #tpu.memory_space<vmem>>, vector<1x1x1x1x1x204xbf16>
    %526 = vector.shape_cast %525 : vector<1x1x1x1x1x204xbf16> to vector<1x204xbf16>
    %c13_1373 = arith.constant 13 : index
    %c1224_1374 = arith.constant 1224 : index
    %527 = vector.load %arg7[%c13_1373, %c1224_1374] : memref<27x1632xbf16, #tpu.memory_space<vmem>>, vector<1x204xbf16>
    tpu.vector_store %arg7[%c13_1373, %c1224_1374], %526 {strides = array<i32>} : memref<27x1632xbf16, #tpu.memory_space<vmem>>, vector<1x204xbf16>,
    %c0_1375 = arith.constant 0 : index
    %c0_1376 = arith.constant 0 : index
    %c0_1377 = arith.constant 0 : index
    %c0_1378 = arith.constant 0 : index
    %c0_1379 = arith.constant 0 : index
    %c18_1380 = arith.constant 18 : index
    %528 = vector.load %arg3[%c0_1375, %c0_1376, %c0_1377, %c0_1378, %c0_1379, %c18_1380] : memref<1x2x2x2x1x222xbf16, #tpu.memory_space<vmem>>, vector<1x1x1x1x1x204xbf16>
    %529 = vector.shape_cast %528 : vector<1x1x1x1x1x204xbf16> to vector<1x204xbf16>
    %c14_1381 = arith.constant 14 : index
    %c1224_1382 = arith.constant 1224 : index
    %530 = vector.load %arg7[%c14_1381, %c1224_1382] : memref<27x1632xbf16, #tpu.memory_space<vmem>>, vector<1x204xbf16>
    tpu.vector_store %arg7[%c14_1381, %c1224_1382], %529 {strides = array<i32>} : memref<27x1632xbf16, #tpu.memory_space<vmem>>, vector<1x204xbf16>,
    %c0_1383 = arith.constant 0 : index
    %c0_1384 = arith.constant 0 : index
    %c1_1385 = arith.constant 1 : index
    %c0_1386 = arith.constant 0 : index
    %c0_1387 = arith.constant 0 : index
    %c17_1388 = arith.constant 17 : index
    %531 = vector.load %arg3[%c0_1383, %c0_1384, %c1_1385, %c0_1386, %c0_1387, %c17_1388] : memref<1x2x2x2x1x222xbf16, #tpu.memory_space<vmem>>, vector<1x1x1x1x1x204xbf16>
    %532 = vector.shape_cast %531 : vector<1x1x1x1x1x204xbf16> to vector<1x204xbf16>
    %c15_1389 = arith.constant 15 : index
    %c1224_1390 = arith.constant 1224 : index
    %533 = vector.load %arg7[%c15_1389, %c1224_1390] : memref<27x1632xbf16, #tpu.memory_space<vmem>>, vector<1x204xbf16>
    tpu.vector_store %arg7[%c15_1389, %c1224_1390], %532 {strides = array<i32>} : memref<27x1632xbf16, #tpu.memory_space<vmem>>, vector<1x204xbf16>,
    %c0_1391 = arith.constant 0 : index
    %c0_1392 = arith.constant 0 : index
    %c1_1393 = arith.constant 1 : index
    %c1_1394 = arith.constant 1 : index
    %c0_1395 = arith.constant 0 : index
    %c17_1396 = arith.constant 17 : index
    %534 = vector.load %arg3[%c0_1391, %c0_1392, %c1_1393, %c1_1394, %c0_1395, %c17_1396] : memref<1x2x2x2x1x222xbf16, #tpu.memory_space<vmem>>, vector<1x1x1x1x1x204xbf16>
    %535 = vector.shape_cast %534 : vector<1x1x1x1x1x204xbf16> to vector<1x204xbf16>
    %c16_1397 = arith.constant 16 : index
    %c1224_1398 = arith.constant 1224 : index
    %536 = vector.load %arg7[%c16_1397, %c1224_1398] : memref<27x1632xbf16, #tpu.memory_space<vmem>>, vector<1x204xbf16>
    tpu.vector_store %arg7[%c16_1397, %c1224_1398], %535 {strides = array<i32>} : memref<27x1632xbf16, #tpu.memory_space<vmem>>, vector<1x204xbf16>,
    %c0_1399 = arith.constant 0 : index
    %c0_1400 = arith.constant 0 : index
    %c1_1401 = arith.constant 1 : index
    %c0_1402 = arith.constant 0 : index
    %c0_1403 = arith.constant 0 : index
    %c18_1404 = arith.constant 18 : index
    %537 = vector.load %arg3[%c0_1399, %c0_1400, %c1_1401, %c0_1402, %c0_1403, %c18_1404] : memref<1x2x2x2x1x222xbf16, #tpu.memory_space<vmem>>, vector<1x1x1x1x1x204xbf16>
    %538 = vector.shape_cast %537 : vector<1x1x1x1x1x204xbf16> to vector<1x204xbf16>
    %c17_1405 = arith.constant 17 : index
    %c1224_1406 = arith.constant 1224 : index
    %539 = vector.load %arg7[%c17_1405, %c1224_1406] : memref<27x1632xbf16, #tpu.memory_space<vmem>>, vector<1x204xbf16>
    tpu.vector_store %arg7[%c17_1405, %c1224_1406], %538 {strides = array<i32>} : memref<27x1632xbf16, #tpu.memory_space<vmem>>, vector<1x204xbf16>,
    %c0_1407 = arith.constant 0 : index
    %c1_1408 = arith.constant 1 : index
    %c1_1409 = arith.constant 1 : index
    %c0_1410 = arith.constant 0 : index
    %c0_1411 = arith.constant 0 : index
    %c0_1412 = arith.constant 0 : index
    %540 = vector.load %arg3[%c0_1407, %c1_1408, %c1_1409, %c0_1410, %c0_1411, %c0_1412] : memref<1x2x2x2x1x222xbf16, #tpu.memory_space<vmem>>, vector<1x1x1x1x1x204xbf16>
    %541 = vector.shape_cast %540 : vector<1x1x1x1x1x204xbf16> to vector<1x204xbf16>
    %c18_1413 = arith.constant 18 : index
    %c1224_1414 = arith.constant 1224 : index
    %542 = vector.load %arg7[%c18_1413, %c1224_1414] : memref<27x1632xbf16, #tpu.memory_space<vmem>>, vector<1x204xbf16>
    tpu.vector_store %arg7[%c18_1413, %c1224_1414], %541 {strides = array<i32>} : memref<27x1632xbf16, #tpu.memory_space<vmem>>, vector<1x204xbf16>,
    %c0_1415 = arith.constant 0 : index
    %c1_1416 = arith.constant 1 : index
    %c1_1417 = arith.constant 1 : index
    %c1_1418 = arith.constant 1 : index
    %c0_1419 = arith.constant 0 : index
    %c0_1420 = arith.constant 0 : index
    %543 = vector.load %arg3[%c0_1415, %c1_1416, %c1_1417, %c1_1418, %c0_1419, %c0_1420] : memref<1x2x2x2x1x222xbf16, #tpu.memory_space<vmem>>, vector<1x1x1x1x1x204xbf16>
    %544 = vector.shape_cast %543 : vector<1x1x1x1x1x204xbf16> to vector<1x204xbf16>
    %c19_1421 = arith.constant 19 : index
    %c1224_1422 = arith.constant 1224 : index
    %545 = vector.load %arg7[%c19_1421, %c1224_1422] : memref<27x1632xbf16, #tpu.memory_space<vmem>>, vector<1x204xbf16>
    tpu.vector_store %arg7[%c19_1421, %c1224_1422], %544 {strides = array<i32>} : memref<27x1632xbf16, #tpu.memory_space<vmem>>, vector<1x204xbf16>,
    %c0_1423 = arith.constant 0 : index
    %c1_1424 = arith.constant 1 : index
    %c1_1425 = arith.constant 1 : index
    %c0_1426 = arith.constant 0 : index
    %c0_1427 = arith.constant 0 : index
    %c1_1428 = arith.constant 1 : index
    %546 = vector.load %arg3[%c0_1423, %c1_1424, %c1_1425, %c0_1426, %c0_1427, %c1_1428] : memref<1x2x2x2x1x222xbf16, #tpu.memory_space<vmem>>, vector<1x1x1x1x1x204xbf16>
    %547 = vector.shape_cast %546 : vector<1x1x1x1x1x204xbf16> to vector<1x204xbf16>
    %c20_1429 = arith.constant 20 : index
    %c1224_1430 = arith.constant 1224 : index
    %548 = vector.load %arg7[%c20_1429, %c1224_1430] : memref<27x1632xbf16, #tpu.memory_space<vmem>>, vector<1x204xbf16>
    tpu.vector_store %arg7[%c20_1429, %c1224_1430], %547 {strides = array<i32>} : memref<27x1632xbf16, #tpu.memory_space<vmem>>, vector<1x204xbf16>,
    %c0_1431 = arith.constant 0 : index
    %c1_1432 = arith.constant 1 : index
    %c0_1433 = arith.constant 0 : index
    %c0_1434 = arith.constant 0 : index
    %c0_1435 = arith.constant 0 : index
    %c17_1436 = arith.constant 17 : index
    %549 = vector.load %arg3[%c0_1431, %c1_1432, %c0_1433, %c0_1434, %c0_1435, %c17_1436] : memref<1x2x2x2x1x222xbf16, #tpu.memory_space<vmem>>, vector<1x1x1x1x1x204xbf16>
    %550 = vector.shape_cast %549 : vector<1x1x1x1x1x204xbf16> to vector<1x204xbf16>
    %c21_1437 = arith.constant 21 : index
    %c1224_1438 = arith.constant 1224 : index
    %551 = vector.load %arg7[%c21_1437, %c1224_1438] : memref<27x1632xbf16, #tpu.memory_space<vmem>>, vector<1x204xbf16>
    tpu.vector_store %arg7[%c21_1437, %c1224_1438], %550 {strides = array<i32>} : memref<27x1632xbf16, #tpu.memory_space<vmem>>, vector<1x204xbf16>,
    %c0_1439 = arith.constant 0 : index
    %c1_1440 = arith.constant 1 : index
    %c0_1441 = arith.constant 0 : index
    %c1_1442 = arith.constant 1 : index
    %c0_1443 = arith.constant 0 : index
    %c17_1444 = arith.constant 17 : index
    %552 = vector.load %arg3[%c0_1439, %c1_1440, %c0_1441, %c1_1442, %c0_1443, %c17_1444] : memref<1x2x2x2x1x222xbf16, #tpu.memory_space<vmem>>, vector<1x1x1x1x1x204xbf16>
    %553 = vector.shape_cast %552 : vector<1x1x1x1x1x204xbf16> to vector<1x204xbf16>
    %c22_1445 = arith.constant 22 : index
    %c1224_1446 = arith.constant 1224 : index
    %554 = vector.load %arg7[%c22_1445, %c1224_1446] : memref<27x1632xbf16, #tpu.memory_space<vmem>>, vector<1x204xbf16>
    tpu.vector_store %arg7[%c22_1445, %c1224_1446], %553 {strides = array<i32>} : memref<27x1632xbf16, #tpu.memory_space<vmem>>, vector<1x204xbf16>,
    %c0_1447 = arith.constant 0 : index
    %c1_1448 = arith.constant 1 : index
    %c0_1449 = arith.constant 0 : index
    %c0_1450 = arith.constant 0 : index
    %c0_1451 = arith.constant 0 : index
    %c18_1452 = arith.constant 18 : index
    %555 = vector.load %arg3[%c0_1447, %c1_1448, %c0_1449, %c0_1450, %c0_1451, %c18_1452] : memref<1x2x2x2x1x222xbf16, #tpu.memory_space<vmem>>, vector<1x1x1x1x1x204xbf16>
    %556 = vector.shape_cast %555 : vector<1x1x1x1x1x204xbf16> to vector<1x204xbf16>
    %c23_1453 = arith.constant 23 : index
    %c1224_1454 = arith.constant 1224 : index
    %557 = vector.load %arg7[%c23_1453, %c1224_1454] : memref<27x1632xbf16, #tpu.memory_space<vmem>>, vector<1x204xbf16>
    tpu.vector_store %arg7[%c23_1453, %c1224_1454], %556 {strides = array<i32>} : memref<27x1632xbf16, #tpu.memory_space<vmem>>, vector<1x204xbf16>,
    %c0_1455 = arith.constant 0 : index
    %c1_1456 = arith.constant 1 : index
    %c1_1457 = arith.constant 1 : index
    %c0_1458 = arith.constant 0 : index
    %c0_1459 = arith.constant 0 : index
    %c17_1460 = arith.constant 17 : index
    %558 = vector.load %arg3[%c0_1455, %c1_1456, %c1_1457, %c0_1458, %c0_1459, %c17_1460] : memref<1x2x2x2x1x222xbf16, #tpu.memory_space<vmem>>, vector<1x1x1x1x1x204xbf16>
    %559 = vector.shape_cast %558 : vector<1x1x1x1x1x204xbf16> to vector<1x204xbf16>
    %c24_1461 = arith.constant 24 : index
    %c1224_1462 = arith.constant 1224 : index
    %560 = vector.load %arg7[%c24_1461, %c1224_1462] : memref<27x1632xbf16, #tpu.memory_space<vmem>>, vector<1x204xbf16>
    tpu.vector_store %arg7[%c24_1461, %c1224_1462], %559 {strides = array<i32>} : memref<27x1632xbf16, #tpu.memory_space<vmem>>, vector<1x204xbf16>,
    %c0_1463 = arith.constant 0 : index
    %c1_1464 = arith.constant 1 : index
    %c1_1465 = arith.constant 1 : index
    %c1_1466 = arith.constant 1 : index
    %c0_1467 = arith.constant 0 : index
    %c17_1468 = arith.constant 17 : index
    %561 = vector.load %arg3[%c0_1463, %c1_1464, %c1_1465, %c1_1466, %c0_1467, %c17_1468] : memref<1x2x2x2x1x222xbf16, #tpu.memory_space<vmem>>, vector<1x1x1x1x1x204xbf16>
    %562 = vector.shape_cast %561 : vector<1x1x1x1x1x204xbf16> to vector<1x204xbf16>
    %c25_1469 = arith.constant 25 : index
    %c1224_1470 = arith.constant 1224 : index
    %563 = vector.load %arg7[%c25_1469, %c1224_1470] : memref<27x1632xbf16, #tpu.memory_space<vmem>>, vector<1x204xbf16>
    tpu.vector_store %arg7[%c25_1469, %c1224_1470], %562 {strides = array<i32>} : memref<27x1632xbf16, #tpu.memory_space<vmem>>, vector<1x204xbf16>,
    %c0_1471 = arith.constant 0 : index
    %c1_1472 = arith.constant 1 : index
    %c1_1473 = arith.constant 1 : index
    %c0_1474 = arith.constant 0 : index
    %c0_1475 = arith.constant 0 : index
    %c18_1476 = arith.constant 18 : index
    %564 = vector.load %arg3[%c0_1471, %c1_1472, %c1_1473, %c0_1474, %c0_1475, %c18_1476] : memref<1x2x2x2x1x222xbf16, #tpu.memory_space<vmem>>, vector<1x1x1x1x1x204xbf16>
    %565 = vector.shape_cast %564 : vector<1x1x1x1x1x204xbf16> to vector<1x204xbf16>
    %c26_1477 = arith.constant 26 : index
    %c1224_1478 = arith.constant 1224 : index
    %566 = vector.load %arg7[%c26_1477, %c1224_1478] : memref<27x1632xbf16, #tpu.memory_space<vmem>>, vector<1x204xbf16>
    tpu.vector_store %arg7[%c26_1477, %c1224_1478], %565 {strides = array<i32>} : memref<27x1632xbf16, #tpu.memory_space<vmem>>, vector<1x204xbf16>,
    %c0_1479 = arith.constant 0 : index
    %c1_1480 = arith.constant 1 : index
    %c1_1481 = arith.constant 1 : index
    %c1_1482 = arith.constant 1 : index
    %c0_1483 = arith.constant 0 : index
    %c0_1484 = arith.constant 0 : index
    %567 = vector.load %arg2[%c0_1479, %c1_1480, %c1_1481, %c1_1482, %c0_1483, %c0_1484] : memref<1x2x2x2x1x222xbf16, #tpu.memory_space<vmem>>, vector<1x1x1x1x1x204xbf16>
    %568 = vector.shape_cast %567 : vector<1x1x1x1x1x204xbf16> to vector<1x204xbf16>
    %c0_1485 = arith.constant 0 : index
    %c1428 = arith.constant 1428 : index
    %569 = vector.load %arg7[%c0_1485, %c1428] : memref<27x1632xbf16, #tpu.memory_space<vmem>>, vector<1x204xbf16>
    tpu.vector_store %arg7[%c0_1485, %c1428], %568 {strides = array<i32>} : memref<27x1632xbf16, #tpu.memory_space<vmem>>, vector<1x204xbf16>,
    %c0_1486 = arith.constant 0 : index
    %c1_1487 = arith.constant 1 : index
    %c1_1488 = arith.constant 1 : index
    %c0_1489 = arith.constant 0 : index
    %c0_1490 = arith.constant 0 : index
    %c1_1491 = arith.constant 1 : index
    %570 = vector.load %arg2[%c0_1486, %c1_1487, %c1_1488, %c0_1489, %c0_1490, %c1_1491] : memref<1x2x2x2x1x222xbf16, #tpu.memory_space<vmem>>, vector<1x1x1x1x1x204xbf16>
    %571 = vector.shape_cast %570 : vector<1x1x1x1x1x204xbf16> to vector<1x204xbf16>
    %c1_1492 = arith.constant 1 : index
    %c1428_1493 = arith.constant 1428 : index
    %572 = vector.load %arg7[%c1_1492, %c1428_1493] : memref<27x1632xbf16, #tpu.memory_space<vmem>>, vector<1x204xbf16>
    tpu.vector_store %arg7[%c1_1492, %c1428_1493], %571 {strides = array<i32>} : memref<27x1632xbf16, #tpu.memory_space<vmem>>, vector<1x204xbf16>,
    %c0_1494 = arith.constant 0 : index
    %c1_1495 = arith.constant 1 : index
    %c1_1496 = arith.constant 1 : index
    %c1_1497 = arith.constant 1 : index
    %c0_1498 = arith.constant 0 : index
    %c1_1499 = arith.constant 1 : index
    %573 = vector.load %arg2[%c0_1494, %c1_1495, %c1_1496, %c1_1497, %c0_1498, %c1_1499] : memref<1x2x2x2x1x222xbf16, #tpu.memory_space<vmem>>, vector<1x1x1x1x1x204xbf16>
    %574 = vector.shape_cast %573 : vector<1x1x1x1x1x204xbf16> to vector<1x204xbf16>
    %c2_1500 = arith.constant 2 : index
    %c1428_1501 = arith.constant 1428 : index
    %575 = vector.load %arg7[%c2_1500, %c1428_1501] : memref<27x1632xbf16, #tpu.memory_space<vmem>>, vector<1x204xbf16>
    tpu.vector_store %arg7[%c2_1500, %c1428_1501], %574 {strides = array<i32>} : memref<27x1632xbf16, #tpu.memory_space<vmem>>, vector<1x204xbf16>,
    %c0_1502 = arith.constant 0 : index
    %c1_1503 = arith.constant 1 : index
    %c0_1504 = arith.constant 0 : index
    %c1_1505 = arith.constant 1 : index
    %c0_1506 = arith.constant 0 : index
    %c17_1507 = arith.constant 17 : index
    %576 = vector.load %arg2[%c0_1502, %c1_1503, %c0_1504, %c1_1505, %c0_1506, %c17_1507] : memref<1x2x2x2x1x222xbf16, #tpu.memory_space<vmem>>, vector<1x1x1x1x1x204xbf16>
    %577 = vector.shape_cast %576 : vector<1x1x1x1x1x204xbf16> to vector<1x204xbf16>
    %c3_1508 = arith.constant 3 : index
    %c1428_1509 = arith.constant 1428 : index
    %578 = vector.load %arg7[%c3_1508, %c1428_1509] : memref<27x1632xbf16, #tpu.memory_space<vmem>>, vector<1x204xbf16>
    tpu.vector_store %arg7[%c3_1508, %c1428_1509], %577 {strides = array<i32>} : memref<27x1632xbf16, #tpu.memory_space<vmem>>, vector<1x204xbf16>,
    %c0_1510 = arith.constant 0 : index
    %c1_1511 = arith.constant 1 : index
    %c0_1512 = arith.constant 0 : index
    %c0_1513 = arith.constant 0 : index
    %c0_1514 = arith.constant 0 : index
    %c18_1515 = arith.constant 18 : index
    %579 = vector.load %arg2[%c0_1510, %c1_1511, %c0_1512, %c0_1513, %c0_1514, %c18_1515] : memref<1x2x2x2x1x222xbf16, #tpu.memory_space<vmem>>, vector<1x1x1x1x1x204xbf16>
    %580 = vector.shape_cast %579 : vector<1x1x1x1x1x204xbf16> to vector<1x204xbf16>
    %c4_1516 = arith.constant 4 : index
    %c1428_1517 = arith.constant 1428 : index
    %581 = vector.load %arg7[%c4_1516, %c1428_1517] : memref<27x1632xbf16, #tpu.memory_space<vmem>>, vector<1x204xbf16>
    tpu.vector_store %arg7[%c4_1516, %c1428_1517], %580 {strides = array<i32>} : memref<27x1632xbf16, #tpu.memory_space<vmem>>, vector<1x204xbf16>,
    %c0_1518 = arith.constant 0 : index
    %c1_1519 = arith.constant 1 : index
    %c0_1520 = arith.constant 0 : index
    %c1_1521 = arith.constant 1 : index
    %c0_1522 = arith.constant 0 : index
    %c18_1523 = arith.constant 18 : index
    %582 = vector.load %arg2[%c0_1518, %c1_1519, %c0_1520, %c1_1521, %c0_1522, %c18_1523] : memref<1x2x2x2x1x222xbf16, #tpu.memory_space<vmem>>, vector<1x1x1x1x1x204xbf16>
    %583 = vector.shape_cast %582 : vector<1x1x1x1x1x204xbf16> to vector<1x204xbf16>
    %c5_1524 = arith.constant 5 : index
    %c1428_1525 = arith.constant 1428 : index
    %584 = vector.load %arg7[%c5_1524, %c1428_1525] : memref<27x1632xbf16, #tpu.memory_space<vmem>>, vector<1x204xbf16>
    tpu.vector_store %arg7[%c5_1524, %c1428_1525], %583 {strides = array<i32>} : memref<27x1632xbf16, #tpu.memory_space<vmem>>, vector<1x204xbf16>,
    %c0_1526 = arith.constant 0 : index
    %c1_1527 = arith.constant 1 : index
    %c1_1528 = arith.constant 1 : index
    %c1_1529 = arith.constant 1 : index
    %c0_1530 = arith.constant 0 : index
    %c17_1531 = arith.constant 17 : index
    %585 = vector.load %arg2[%c0_1526, %c1_1527, %c1_1528, %c1_1529, %c0_1530, %c17_1531] : memref<1x2x2x2x1x222xbf16, #tpu.memory_space<vmem>>, vector<1x1x1x1x1x204xbf16>
    %586 = vector.shape_cast %585 : vector<1x1x1x1x1x204xbf16> to vector<1x204xbf16>
    %c6_1532 = arith.constant 6 : index
    %c1428_1533 = arith.constant 1428 : index
    %587 = vector.load %arg7[%c6_1532, %c1428_1533] : memref<27x1632xbf16, #tpu.memory_space<vmem>>, vector<1x204xbf16>
    tpu.vector_store %arg7[%c6_1532, %c1428_1533], %586 {strides = array<i32>} : memref<27x1632xbf16, #tpu.memory_space<vmem>>, vector<1x204xbf16>,
    %c0_1534 = arith.constant 0 : index
    %c1_1535 = arith.constant 1 : index
    %c1_1536 = arith.constant 1 : index
    %c0_1537 = arith.constant 0 : index
    %c0_1538 = arith.constant 0 : index
    %c18_1539 = arith.constant 18 : index
    %588 = vector.load %arg2[%c0_1534, %c1_1535, %c1_1536, %c0_1537, %c0_1538, %c18_1539] : memref<1x2x2x2x1x222xbf16, #tpu.memory_space<vmem>>, vector<1x1x1x1x1x204xbf16>
    %589 = vector.shape_cast %588 : vector<1x1x1x1x1x204xbf16> to vector<1x204xbf16>
    %c7_1540 = arith.constant 7 : index
    %c1428_1541 = arith.constant 1428 : index
    %590 = vector.load %arg7[%c7_1540, %c1428_1541] : memref<27x1632xbf16, #tpu.memory_space<vmem>>, vector<1x204xbf16>
    tpu.vector_store %arg7[%c7_1540, %c1428_1541], %589 {strides = array<i32>} : memref<27x1632xbf16, #tpu.memory_space<vmem>>, vector<1x204xbf16>,
    %c0_1542 = arith.constant 0 : index
    %c1_1543 = arith.constant 1 : index
    %c1_1544 = arith.constant 1 : index
    %c1_1545 = arith.constant 1 : index
    %c0_1546 = arith.constant 0 : index
    %c18_1547 = arith.constant 18 : index
    %591 = vector.load %arg2[%c0_1542, %c1_1543, %c1_1544, %c1_1545, %c0_1546, %c18_1547] : memref<1x2x2x2x1x222xbf16, #tpu.memory_space<vmem>>, vector<1x1x1x1x1x204xbf16>
    %592 = vector.shape_cast %591 : vector<1x1x1x1x1x204xbf16> to vector<1x204xbf16>
    %c8_1548 = arith.constant 8 : index
    %c1428_1549 = arith.constant 1428 : index
    %593 = vector.load %arg7[%c8_1548, %c1428_1549] : memref<27x1632xbf16, #tpu.memory_space<vmem>>, vector<1x204xbf16>
    tpu.vector_store %arg7[%c8_1548, %c1428_1549], %592 {strides = array<i32>} : memref<27x1632xbf16, #tpu.memory_space<vmem>>, vector<1x204xbf16>,
    %c0_1550 = arith.constant 0 : index
    %c0_1551 = arith.constant 0 : index
    %c1_1552 = arith.constant 1 : index
    %c1_1553 = arith.constant 1 : index
    %c0_1554 = arith.constant 0 : index
    %c0_1555 = arith.constant 0 : index
    %594 = vector.load %arg3[%c0_1550, %c0_1551, %c1_1552, %c1_1553, %c0_1554, %c0_1555] : memref<1x2x2x2x1x222xbf16, #tpu.memory_space<vmem>>, vector<1x1x1x1x1x204xbf16>
    %595 = vector.shape_cast %594 : vector<1x1x1x1x1x204xbf16> to vector<1x204xbf16>
    %c9_1556 = arith.constant 9 : index
    %c1428_1557 = arith.constant 1428 : index
    %596 = vector.load %arg7[%c9_1556, %c1428_1557] : memref<27x1632xbf16, #tpu.memory_space<vmem>>, vector<1x204xbf16>
    tpu.vector_store %arg7[%c9_1556, %c1428_1557], %595 {strides = array<i32>} : memref<27x1632xbf16, #tpu.memory_space<vmem>>, vector<1x204xbf16>,
    %c0_1558 = arith.constant 0 : index
    %c0_1559 = arith.constant 0 : index
    %c1_1560 = arith.constant 1 : index
    %c0_1561 = arith.constant 0 : index
    %c0_1562 = arith.constant 0 : index
    %c1_1563 = arith.constant 1 : index
    %597 = vector.load %arg3[%c0_1558, %c0_1559, %c1_1560, %c0_1561, %c0_1562, %c1_1563] : memref<1x2x2x2x1x222xbf16, #tpu.memory_space<vmem>>, vector<1x1x1x1x1x204xbf16>
    %598 = vector.shape_cast %597 : vector<1x1x1x1x1x204xbf16> to vector<1x204xbf16>
    %c10_1564 = arith.constant 10 : index
    %c1428_1565 = arith.constant 1428 : index
    %599 = vector.load %arg7[%c10_1564, %c1428_1565] : memref<27x1632xbf16, #tpu.memory_space<vmem>>, vector<1x204xbf16>
    tpu.vector_store %arg7[%c10_1564, %c1428_1565], %598 {strides = array<i32>} : memref<27x1632xbf16, #tpu.memory_space<vmem>>, vector<1x204xbf16>,
    %c0_1566 = arith.constant 0 : index
    %c0_1567 = arith.constant 0 : index
    %c1_1568 = arith.constant 1 : index
    %c1_1569 = arith.constant 1 : index
    %c0_1570 = arith.constant 0 : index
    %c1_1571 = arith.constant 1 : index
    %600 = vector.load %arg3[%c0_1566, %c0_1567, %c1_1568, %c1_1569, %c0_1570, %c1_1571] : memref<1x2x2x2x1x222xbf16, #tpu.memory_space<vmem>>, vector<1x1x1x1x1x204xbf16>
    %601 = vector.shape_cast %600 : vector<1x1x1x1x1x204xbf16> to vector<1x204xbf16>
    %c11_1572 = arith.constant 11 : index
    %c1428_1573 = arith.constant 1428 : index
    %602 = vector.load %arg7[%c11_1572, %c1428_1573] : memref<27x1632xbf16, #tpu.memory_space<vmem>>, vector<1x204xbf16>
    tpu.vector_store %arg7[%c11_1572, %c1428_1573], %601 {strides = array<i32>} : memref<27x1632xbf16, #tpu.memory_space<vmem>>, vector<1x204xbf16>,
    %c0_1574 = arith.constant 0 : index
    %c0_1575 = arith.constant 0 : index
    %c0_1576 = arith.constant 0 : index
    %c1_1577 = arith.constant 1 : index
    %c0_1578 = arith.constant 0 : index
    %c17_1579 = arith.constant 17 : index
    %603 = vector.load %arg3[%c0_1574, %c0_1575, %c0_1576, %c1_1577, %c0_1578, %c17_1579] : memref<1x2x2x2x1x222xbf16, #tpu.memory_space<vmem>>, vector<1x1x1x1x1x204xbf16>
    %604 = vector.shape_cast %603 : vector<1x1x1x1x1x204xbf16> to vector<1x204xbf16>
    %c12_1580 = arith.constant 12 : index
    %c1428_1581 = arith.constant 1428 : index
    %605 = vector.load %arg7[%c12_1580, %c1428_1581] : memref<27x1632xbf16, #tpu.memory_space<vmem>>, vector<1x204xbf16>
    tpu.vector_store %arg7[%c12_1580, %c1428_1581], %604 {strides = array<i32>} : memref<27x1632xbf16, #tpu.memory_space<vmem>>, vector<1x204xbf16>,
    %c0_1582 = arith.constant 0 : index
    %c0_1583 = arith.constant 0 : index
    %c0_1584 = arith.constant 0 : index
    %c0_1585 = arith.constant 0 : index
    %c0_1586 = arith.constant 0 : index
    %c18_1587 = arith.constant 18 : index
    %606 = vector.load %arg3[%c0_1582, %c0_1583, %c0_1584, %c0_1585, %c0_1586, %c18_1587] : memref<1x2x2x2x1x222xbf16, #tpu.memory_space<vmem>>, vector<1x1x1x1x1x204xbf16>
    %607 = vector.shape_cast %606 : vector<1x1x1x1x1x204xbf16> to vector<1x204xbf16>
    %c13_1588 = arith.constant 13 : index
    %c1428_1589 = arith.constant 1428 : index
    %608 = vector.load %arg7[%c13_1588, %c1428_1589] : memref<27x1632xbf16, #tpu.memory_space<vmem>>, vector<1x204xbf16>
    tpu.vector_store %arg7[%c13_1588, %c1428_1589], %607 {strides = array<i32>} : memref<27x1632xbf16, #tpu.memory_space<vmem>>, vector<1x204xbf16>,
    %c0_1590 = arith.constant 0 : index
    %c0_1591 = arith.constant 0 : index
    %c0_1592 = arith.constant 0 : index
    %c1_1593 = arith.constant 1 : index
    %c0_1594 = arith.constant 0 : index
    %c18_1595 = arith.constant 18 : index
    %609 = vector.load %arg3[%c0_1590, %c0_1591, %c0_1592, %c1_1593, %c0_1594, %c18_1595] : memref<1x2x2x2x1x222xbf16, #tpu.memory_space<vmem>>, vector<1x1x1x1x1x204xbf16>
    %610 = vector.shape_cast %609 : vector<1x1x1x1x1x204xbf16> to vector<1x204xbf16>
    %c14_1596 = arith.constant 14 : index
    %c1428_1597 = arith.constant 1428 : index
    %611 = vector.load %arg7[%c14_1596, %c1428_1597] : memref<27x1632xbf16, #tpu.memory_space<vmem>>, vector<1x204xbf16>
    tpu.vector_store %arg7[%c14_1596, %c1428_1597], %610 {strides = array<i32>} : memref<27x1632xbf16, #tpu.memory_space<vmem>>, vector<1x204xbf16>,
    %c0_1598 = arith.constant 0 : index
    %c0_1599 = arith.constant 0 : index
    %c1_1600 = arith.constant 1 : index
    %c1_1601 = arith.constant 1 : index
    %c0_1602 = arith.constant 0 : index
    %c17_1603 = arith.constant 17 : index
    %612 = vector.load %arg3[%c0_1598, %c0_1599, %c1_1600, %c1_1601, %c0_1602, %c17_1603] : memref<1x2x2x2x1x222xbf16, #tpu.memory_space<vmem>>, vector<1x1x1x1x1x204xbf16>
    %613 = vector.shape_cast %612 : vector<1x1x1x1x1x204xbf16> to vector<1x204xbf16>
    %c15_1604 = arith.constant 15 : index
    %c1428_1605 = arith.constant 1428 : index
    %614 = vector.load %arg7[%c15_1604, %c1428_1605] : memref<27x1632xbf16, #tpu.memory_space<vmem>>, vector<1x204xbf16>
    tpu.vector_store %arg7[%c15_1604, %c1428_1605], %613 {strides = array<i32>} : memref<27x1632xbf16, #tpu.memory_space<vmem>>, vector<1x204xbf16>,
    %c0_1606 = arith.constant 0 : index
    %c0_1607 = arith.constant 0 : index
    %c1_1608 = arith.constant 1 : index
    %c0_1609 = arith.constant 0 : index
    %c0_1610 = arith.constant 0 : index
    %c18_1611 = arith.constant 18 : index
    %615 = vector.load %arg3[%c0_1606, %c0_1607, %c1_1608, %c0_1609, %c0_1610, %c18_1611] : memref<1x2x2x2x1x222xbf16, #tpu.memory_space<vmem>>, vector<1x1x1x1x1x204xbf16>
    %616 = vector.shape_cast %615 : vector<1x1x1x1x1x204xbf16> to vector<1x204xbf16>
    %c16_1612 = arith.constant 16 : index
    %c1428_1613 = arith.constant 1428 : index
    %617 = vector.load %arg7[%c16_1612, %c1428_1613] : memref<27x1632xbf16, #tpu.memory_space<vmem>>, vector<1x204xbf16>
    tpu.vector_store %arg7[%c16_1612, %c1428_1613], %616 {strides = array<i32>} : memref<27x1632xbf16, #tpu.memory_space<vmem>>, vector<1x204xbf16>,
    %c0_1614 = arith.constant 0 : index
    %c0_1615 = arith.constant 0 : index
    %c1_1616 = arith.constant 1 : index
    %c1_1617 = arith.constant 1 : index
    %c0_1618 = arith.constant 0 : index
    %c18_1619 = arith.constant 18 : index
    %618 = vector.load %arg3[%c0_1614, %c0_1615, %c1_1616, %c1_1617, %c0_1618, %c18_1619] : memref<1x2x2x2x1x222xbf16, #tpu.memory_space<vmem>>, vector<1x1x1x1x1x204xbf16>
    %619 = vector.shape_cast %618 : vector<1x1x1x1x1x204xbf16> to vector<1x204xbf16>
    %c17_1620 = arith.constant 17 : index
    %c1428_1621 = arith.constant 1428 : index
    %620 = vector.load %arg7[%c17_1620, %c1428_1621] : memref<27x1632xbf16, #tpu.memory_space<vmem>>, vector<1x204xbf16>
    tpu.vector_store %arg7[%c17_1620, %c1428_1621], %619 {strides = array<i32>} : memref<27x1632xbf16, #tpu.memory_space<vmem>>, vector<1x204xbf16>,
    %c0_1622 = arith.constant 0 : index
    %c1_1623 = arith.constant 1 : index
    %c1_1624 = arith.constant 1 : index
    %c1_1625 = arith.constant 1 : index
    %c0_1626 = arith.constant 0 : index
    %c0_1627 = arith.constant 0 : index
    %621 = vector.load %arg3[%c0_1622, %c1_1623, %c1_1624, %c1_1625, %c0_1626, %c0_1627] : memref<1x2x2x2x1x222xbf16, #tpu.memory_space<vmem>>, vector<1x1x1x1x1x204xbf16>
    %622 = vector.shape_cast %621 : vector<1x1x1x1x1x204xbf16> to vector<1x204xbf16>
    %c18_1628 = arith.constant 18 : index
    %c1428_1629 = arith.constant 1428 : index
    %623 = vector.load %arg7[%c18_1628, %c1428_1629] : memref<27x1632xbf16, #tpu.memory_space<vmem>>, vector<1x204xbf16>
    tpu.vector_store %arg7[%c18_1628, %c1428_1629], %622 {strides = array<i32>} : memref<27x1632xbf16, #tpu.memory_space<vmem>>, vector<1x204xbf16>,
    %c0_1630 = arith.constant 0 : index
    %c1_1631 = arith.constant 1 : index
    %c1_1632 = arith.constant 1 : index
    %c0_1633 = arith.constant 0 : index
    %c0_1634 = arith.constant 0 : index
    %c1_1635 = arith.constant 1 : index
    %624 = vector.load %arg3[%c0_1630, %c1_1631, %c1_1632, %c0_1633, %c0_1634, %c1_1635] : memref<1x2x2x2x1x222xbf16, #tpu.memory_space<vmem>>, vector<1x1x1x1x1x204xbf16>
    %625 = vector.shape_cast %624 : vector<1x1x1x1x1x204xbf16> to vector<1x204xbf16>
    %c19_1636 = arith.constant 19 : index
    %c1428_1637 = arith.constant 1428 : index
    %626 = vector.load %arg7[%c19_1636, %c1428_1637] : memref<27x1632xbf16, #tpu.memory_space<vmem>>, vector<1x204xbf16>
    tpu.vector_store %arg7[%c19_1636, %c1428_1637], %625 {strides = array<i32>} : memref<27x1632xbf16, #tpu.memory_space<vmem>>, vector<1x204xbf16>,
    %c0_1638 = arith.constant 0 : index
    %c1_1639 = arith.constant 1 : index
    %c1_1640 = arith.constant 1 : index
    %c1_1641 = arith.constant 1 : index
    %c0_1642 = arith.constant 0 : index
    %c1_1643 = arith.constant 1 : index
    %627 = vector.load %arg3[%c0_1638, %c1_1639, %c1_1640, %c1_1641, %c0_1642, %c1_1643] : memref<1x2x2x2x1x222xbf16, #tpu.memory_space<vmem>>, vector<1x1x1x1x1x204xbf16>
    %628 = vector.shape_cast %627 : vector<1x1x1x1x1x204xbf16> to vector<1x204xbf16>
    %c20_1644 = arith.constant 20 : index
    %c1428_1645 = arith.constant 1428 : index
    %629 = vector.load %arg7[%c20_1644, %c1428_1645] : memref<27x1632xbf16, #tpu.memory_space<vmem>>, vector<1x204xbf16>
    tpu.vector_store %arg7[%c20_1644, %c1428_1645], %628 {strides = array<i32>} : memref<27x1632xbf16, #tpu.memory_space<vmem>>, vector<1x204xbf16>,
    %c0_1646 = arith.constant 0 : index
    %c1_1647 = arith.constant 1 : index
    %c0_1648 = arith.constant 0 : index
    %c1_1649 = arith.constant 1 : index
    %c0_1650 = arith.constant 0 : index
    %c17_1651 = arith.constant 17 : index
    %630 = vector.load %arg3[%c0_1646, %c1_1647, %c0_1648, %c1_1649, %c0_1650, %c17_1651] : memref<1x2x2x2x1x222xbf16, #tpu.memory_space<vmem>>, vector<1x1x1x1x1x204xbf16>
    %631 = vector.shape_cast %630 : vector<1x1x1x1x1x204xbf16> to vector<1x204xbf16>
    %c21_1652 = arith.constant 21 : index
    %c1428_1653 = arith.constant 1428 : index
    %632 = vector.load %arg7[%c21_1652, %c1428_1653] : memref<27x1632xbf16, #tpu.memory_space<vmem>>, vector<1x204xbf16>
    tpu.vector_store %arg7[%c21_1652, %c1428_1653], %631 {strides = array<i32>} : memref<27x1632xbf16, #tpu.memory_space<vmem>>, vector<1x204xbf16>,
    %c0_1654 = arith.constant 0 : index
    %c1_1655 = arith.constant 1 : index
    %c0_1656 = arith.constant 0 : index
    %c0_1657 = arith.constant 0 : index
    %c0_1658 = arith.constant 0 : index
    %c18_1659 = arith.constant 18 : index
    %633 = vector.load %arg3[%c0_1654, %c1_1655, %c0_1656, %c0_1657, %c0_1658, %c18_1659] : memref<1x2x2x2x1x222xbf16, #tpu.memory_space<vmem>>, vector<1x1x1x1x1x204xbf16>
    %634 = vector.shape_cast %633 : vector<1x1x1x1x1x204xbf16> to vector<1x204xbf16>
    %c22_1660 = arith.constant 22 : index
    %c1428_1661 = arith.constant 1428 : index
    %635 = vector.load %arg7[%c22_1660, %c1428_1661] : memref<27x1632xbf16, #tpu.memory_space<vmem>>, vector<1x204xbf16>
    tpu.vector_store %arg7[%c22_1660, %c1428_1661], %634 {strides = array<i32>} : memref<27x1632xbf16, #tpu.memory_space<vmem>>, vector<1x204xbf16>,
    %c0_1662 = arith.constant 0 : index
    %c1_1663 = arith.constant 1 : index
    %c0_1664 = arith.constant 0 : index
    %c1_1665 = arith.constant 1 : index
    %c0_1666 = arith.constant 0 : index
    %c18_1667 = arith.constant 18 : index
    %636 = vector.load %arg3[%c0_1662, %c1_1663, %c0_1664, %c1_1665, %c0_1666, %c18_1667] : memref<1x2x2x2x1x222xbf16, #tpu.memory_space<vmem>>, vector<1x1x1x1x1x204xbf16>
    %637 = vector.shape_cast %636 : vector<1x1x1x1x1x204xbf16> to vector<1x204xbf16>
    %c23_1668 = arith.constant 23 : index
    %c1428_1669 = arith.constant 1428 : index
    %638 = vector.load %arg7[%c23_1668, %c1428_1669] : memref<27x1632xbf16, #tpu.memory_space<vmem>>, vector<1x204xbf16>
    tpu.vector_store %arg7[%c23_1668, %c1428_1669], %637 {strides = array<i32>} : memref<27x1632xbf16, #tpu.memory_space<vmem>>, vector<1x204xbf16>,
    %c0_1670 = arith.constant 0 : index
    %c1_1671 = arith.constant 1 : index
    %c1_1672 = arith.constant 1 : index
    %c1_1673 = arith.constant 1 : index
    %c0_1674 = arith.constant 0 : index
    %c17_1675 = arith.constant 17 : index
    %639 = vector.load %arg3[%c0_1670, %c1_1671, %c1_1672, %c1_1673, %c0_1674, %c17_1675] : memref<1x2x2x2x1x222xbf16, #tpu.memory_space<vmem>>, vector<1x1x1x1x1x204xbf16>
    %640 = vector.shape_cast %639 : vector<1x1x1x1x1x204xbf16> to vector<1x204xbf16>
    %c24_1676 = arith.constant 24 : index
    %c1428_1677 = arith.constant 1428 : index
    %641 = vector.load %arg7[%c24_1676, %c1428_1677] : memref<27x1632xbf16, #tpu.memory_space<vmem>>, vector<1x204xbf16>
    tpu.vector_store %arg7[%c24_1676, %c1428_1677], %640 {strides = array<i32>} : memref<27x1632xbf16, #tpu.memory_space<vmem>>, vector<1x204xbf16>,
    %c0_1678 = arith.constant 0 : index
    %c1_1679 = arith.constant 1 : index
    %c1_1680 = arith.constant 1 : index
    %c0_1681 = arith.constant 0 : index
    %c0_1682 = arith.constant 0 : index
    %c18_1683 = arith.constant 18 : index
    %642 = vector.load %arg3[%c0_1678, %c1_1679, %c1_1680, %c0_1681, %c0_1682, %c18_1683] : memref<1x2x2x2x1x222xbf16, #tpu.memory_space<vmem>>, vector<1x1x1x1x1x204xbf16>
    %643 = vector.shape_cast %642 : vector<1x1x1x1x1x204xbf16> to vector<1x204xbf16>
    %c25_1684 = arith.constant 25 : index
    %c1428_1685 = arith.constant 1428 : index
    %644 = vector.load %arg7[%c25_1684, %c1428_1685] : memref<27x1632xbf16, #tpu.memory_space<vmem>>, vector<1x204xbf16>
    tpu.vector_store %arg7[%c25_1684, %c1428_1685], %643 {strides = array<i32>} : memref<27x1632xbf16, #tpu.memory_space<vmem>>, vector<1x204xbf16>,
    %c0_1686 = arith.constant 0 : index
    %c1_1687 = arith.constant 1 : index
    %c1_1688 = arith.constant 1 : index
    %c1_1689 = arith.constant 1 : index
    %c0_1690 = arith.constant 0 : index
    %c18_1691 = arith.constant 18 : index
    %645 = vector.load %arg3[%c0_1686, %c1_1687, %c1_1688, %c1_1689, %c0_1690, %c18_1691] : memref<1x2x2x2x1x222xbf16, #tpu.memory_space<vmem>>, vector<1x1x1x1x1x204xbf16>
    %646 = vector.shape_cast %645 : vector<1x1x1x1x1x204xbf16> to vector<1x204xbf16>
    %c26_1692 = arith.constant 26 : index
    %c1428_1693 = arith.constant 1428 : index
    %647 = vector.load %arg7[%c26_1692, %c1428_1693] : memref<27x1632xbf16, #tpu.memory_space<vmem>>, vector<1x204xbf16>
    tpu.vector_store %arg7[%c26_1692, %c1428_1693], %646 {strides = array<i32>} : memref<27x1632xbf16, #tpu.memory_space<vmem>>, vector<1x204xbf16>,
    %c0_1694 = arith.constant 0 : index
    %c0_1695 = arith.constant 0 : index
    %648 = vector.load %arg4[%c0_1694, %c0_1695] : memref<8x27xbf16, #tpu.memory_space<vmem>>, vector<8x27xbf16>
    %c0_1696 = arith.constant 0 : index
    %c0_1697 = arith.constant 0 : index
    %649 = vector.load %arg7[%c0_1696, %c0_1697] : memref<27x1632xbf16, #tpu.memory_space<vmem>>, vector<27x1632xbf16>
    %cst = arith.constant dense<0.000000e+00> : vector<8x1632xf32>
    %650 = tpu.matmul %648, %649, %cst {dimension_numbers = #tpu.dot_dimension_numbers<[1], [0], [0], [1], [0, 0, 1, 1], [], []>} : vector<8x27xbf16>, vector<27x1632xbf16>, vector<8x1632xf32> -> vector<8x1632xf32>
    %651 = vector.extract_strided_slice %650 {offsets = [0, 0], sizes = [8, 204], strides = [1, 1]} : vector<8x1632xf32> to vector<8x204xf32>
    %652 = vector.extract_strided_slice %650 {offsets = [0, 204], sizes = [8, 204], strides = [1, 1]} : vector<8x1632xf32> to vector<8x204xf32>
    %653 = arith.maximumf %651, %652 : vector<8x204xf32>
    %654 = vector.extract_strided_slice %650 {offsets = [0, 408], sizes = [8, 204], strides = [1, 1]} : vector<8x1632xf32> to vector<8x204xf32>
    %655 = arith.maximumf %653, %654 : vector<8x204xf32>
    %656 = vector.extract_strided_slice %650 {offsets = [0, 612], sizes = [8, 204], strides = [1, 1]} : vector<8x1632xf32> to vector<8x204xf32>
    %657 = arith.maximumf %655, %656 : vector<8x204xf32>
    %658 = vector.extract_strided_slice %650 {offsets = [0, 816], sizes = [8, 204], strides = [1, 1]} : vector<8x1632xf32> to vector<8x204xf32>
    %659 = arith.maximumf %657, %658 : vector<8x204xf32>
    %660 = vector.extract_strided_slice %650 {offsets = [0, 1020], sizes = [8, 204], strides = [1, 1]} : vector<8x1632xf32> to vector<8x204xf32>
    %661 = arith.maximumf %659, %660 : vector<8x204xf32>
    %662 = vector.extract_strided_slice %650 {offsets = [0, 1224], sizes = [8, 204], strides = [1, 1]} : vector<8x1632xf32> to vector<8x204xf32>
    %663 = arith.maximumf %661, %662 : vector<8x204xf32>
    %664 = vector.extract_strided_slice %650 {offsets = [0, 1428], sizes = [8, 204], strides = [1, 1]} : vector<8x1632xf32> to vector<8x204xf32>
    %665 = arith.maximumf %663, %664 : vector<8x204xf32>
    %c0_1698 = arith.constant 0 : index
    %c0_1699 = arith.constant 0 : index
    %666 = vector.load %arg5[%c0_1698, %c0_1699] : memref<8x1xf32, #tpu.memory_space<vmem>>, vector<8x1xf32>
    %667 = vector.broadcast %666 : vector<8x1xf32> to vector<8x204xf32>
    %668 = arith.addf %665, %667 : vector<8x204xf32>
    %cst_1700 = arith.constant 0.000000e+00 : f32
    %669 = vector.broadcast %cst_1700 : f32 to vector<8x204xf32>
    %670 = arith.maximumf %668, %669 : vector<8x204xf32>
    %671 = arith.truncf %670 : vector<8x204xf32> to vector<8x204xbf16>
    %c0_1701 = arith.constant 0 : index
    %c0_1702 = arith.constant 0 : index
    %c0_1703 = arith.constant 0 : index
    %c0_1704 = arith.constant 0 : index
    %672 = vector.load %arg6[%c0_1701, %c0_1702, %c0_1703, %c0_1704] : memref<1x1x8x204xbf16, #tpu.memory_space<vmem>>, vector<1x1x8x204xbf16>
    %673 = vector.shape_cast %672 : vector<1x1x8x204xbf16> to vector<8x204xbf16>
    %674 = vector.shape_cast %671 : vector<8x204xbf16> to vector<1x1x8x204xbf16>
    tpu.vector_store %arg6[%c0_1701, %c0_1702, %c0_1703, %c0_1704], %674 {strides = array<i32>} : memref<1x1x8x204xbf16, #tpu.memory_space<vmem>>, vector<1x1x8x204xbf16>,
    return
  }
  func.func @transform_0(%arg0: i32, %arg1: i32) -> (i32, i32, i32, i32, i32, i32) {
    %c0_i32 = arith.constant 0 : i32
    %c0_i32_0 = arith.constant 0 : i32
    %c0_i32_1 = arith.constant 0 : i32
    %c0_i32_2 = arith.constant 0 : i32
    %c0_i32_3 = arith.constant 0 : i32
    return %arg0, %arg1, %c0_i32, %c0_i32_0, %c0_i32_1, %c0_i32_2 : i32, i32, i32, i32, i32, i32
  }
  func.func @transform_1(%arg0: i32, %arg1: i32) -> (i32, i32, i32, i32, i32, i32) {
    %c1_i32 = arith.constant 1 : i32
    %0 = arith.addi %arg1, %c1_i32 : i32
    %c0_i32 = arith.constant 0 : i32
    %c0_i32_0 = arith.constant 0 : i32
    %c0_i32_1 = arith.constant 0 : i32
    %c0_i32_2 = arith.constant 0 : i32
    %c0_i32_3 = arith.constant 0 : i32
    return %arg0, %0, %c0_i32, %c0_i32_0, %c0_i32_1, %c0_i32_2 : i32, i32, i32, i32, i32, i32
  }
  func.func @transform_2(%arg0: i32, %arg1: i32) -> (i32, i32) {
    %c0_i32 = arith.constant 0 : i32
    %c0_i32_0 = arith.constant 0 : i32
    %c0_i32_1 = arith.constant 0 : i32
    return %c0_i32, %c0_i32_0 : i32, i32
  }
  func.func @transform_3(%arg0: i32, %arg1: i32) -> (i32, i32) {
    %c0_i32 = arith.constant 0 : i32
    %c0_i32_0 = arith.constant 0 : i32
    %c0_i32_1 = arith.constant 0 : i32
    return %c0_i32, %c0_i32_0 : i32, i32
  }
  func.func @transform_4(%arg0: i32, %arg1: i32) -> (i32, i32, i32, i32) {
    %c0_i32 = arith.constant 0 : i32
    %c0_i32_0 = arith.constant 0 : i32
    %c0_i32_1 = arith.constant 0 : i32
    return %arg0, %arg1, %c0_i32, %c0_i32_0 : i32, i32, i32, i32
  }
}

</mosaic_0001>

<llo_original>
// kernel: tpu_custom_call.1
$region0: #{tpu_custom_call.1}
  #allocation0 [shape = 'u32[]', space=smem, size = 0x4, offset = 0x4, fixed_abs, tag = 'smem constant byte address 0x4 - core index']
  #allocation1 [shape = 'u32[72,128]{1,0:T(1,128)}', space=vmem, size = 0x9000, scoped, tag = 'internal scratch']
  #allocation2 [shape = 'bf16[27,1632]{1,0:T(8,128)(2,1)}', space=vmem, size = 0x1a000, scoped, tag = 'scratch operand']
  %s0 = inlined_call_operand.vmem [shape: bf16[2,22,2,2,1,222], index: 0, kind: input, shape index: {}]
  %s1 = inlined_call_operand.vmem [shape: bf16[2,22,2,2,1,222], index: 1, kind: input, shape index: {}]
  %s2 = inlined_call_operand.vmem [shape: bf16[8,27], index: 2, kind: input, shape index: {}]
  %s3 = inlined_call_operand.vmem [shape: f32[8,1], index: 3, kind: input, shape index: {}]
  %s4 = inlined_call_operand.hbm [shape: bf16[2,10,8,204], index: 4, kind: output, shape index: {}]
  %s5 = sld [smem:[#allocation0]]
  $region49: #{tpu_custom_call.1} parent=0
    _
  %s7 = ssub.s32 1, %s5
  %s8 = scalar_select 0, %s7, %s5
  $region1: #{tpu_custom_call.1} parent=0
    #allocation3 [shape = 'u8[8192]{0}', space=vmem, size = 0x2000, scoped, tag = 'output window, operand 0']
    #allocation4 [shape = 's32[2]{0}', space=sflag, size = 0x8, scoped, tag = 'scoped memory for tpu_custom_call.1']
    %9 = vsyncpa [#allocation4], 0
    %s10 = scalar_lea.sflag [#allocation4], 1
    %11 = vsyncpa %s10, 0
    loop: start=0, step=1, limit=22
    $region2: #{tpu_custom_call.1} parent=1 // loop_pre_header
      _
    $region3: #{tpu_custom_call.1} parent=1 // loop_header
      %s13 = sphi 0, %s17
      %p14 = scmp.ge.s32.totalorder %s13, 22
      %s20 = sphi 0, %s32
      %s21 = sphi 0, %s28
      %s22 = sphi 0, %s20
      %s23 = sphi 0, %s21
      %s24 = sphi 0, %s22
      %s25 = sphi 0, %s23
      %s37 = sphi 0, %s39
      %s40 = sphi 0, %s37
      %s41 = sphi 0, %s40
      %s57 = sphi 0, %s41
      %s67 = sphi 0, %s69
      %s70 = sphi 0, %s67
      %s71 = sphi 0, %s70
      %s87 = sphi 0, %s71
      %s91 = sphi 0, %s91
      %s93 = sphi 0, %s91
      %s94 = sphi 0, %s93
      %s108 = sphi 0, %s94
      %s112 = sphi 0, %s112
      %s114 = sphi 0, %s112
      %s115 = sphi 0, %s114
      %s129 = sphi 0, %s115
      %s137 = sphi 0, %s139
      %s140 = sphi 0, %s137
      %s141 = sphi 0, %s140
      %s157 = sphi 0, %s141
    $region4: #{tpu_custom_call.1} parent=1 // loop_header_branch
      %16 = sbr.rel (%p14) target = $region8
    $region5: #{tpu_custom_call.1} parent=1 // loop_body
      %s18 = ssub.s32 %s13, 1
      %s19 = ssub.s32 %s13, 2
      %s26 = sadd.s32 1, %s21
      %p27 = scmp.ge.s32.totalorder %s26, 10
      %s28 = scalar_select %p27, 0, %s26
      %s29 = sadd.s32 1, %s20
      %s30 = scalar_select %p27, %s29, %s20
      %p31 = scmp.ge.s32.totalorder %s30, 2
      %s32 = scalar_select %p31, 0, %s30
      %s33 = ssub.s32 %s20, %s32
      %s34 = ssub.s32 %s21, %s28
      %s35 = sor.u32 %s33, %s34
      %p36 = scmp.eq.s32.totalorder %s35, 0
      %s38 = sadd.s32 %s37, 1
      %s39 = scalar_select %p36, %s37, %s38
      %p42 = pneg %p36
      %p43 = scmp.eq.s32.totalorder %s13, 19
      %p44 = por %p42, %p43
      %p45 = scmp.ne.s32.totalorder %s37, %s40
      %p46 = scmp.eq.s32.totalorder %s13, 0
      %p47 = por %p45, %p46
      %p48 = scmp.ne.s32.totalorder %s37, %s40
      %p49 = scmp.eq.s32.totalorder %s18, 19
      %p50 = por %p48, %p49
      %p51 = scmp.ne.s32.totalorder %s40, %s41
      %p52 = scmp.eq.s32.totalorder %s18, 0
      %p53 = por %p51, %p52
      %p54 = scmp.ne.s32.totalorder %s40, %s41
      %p55 = scmp.eq.s32.totalorder %s19, 19
      %p56 = por %p54, %p55
      %p58 = scmp.ne.s32.totalorder %s41, %s57
      %p59 = scmp.eq.s32.totalorder %s19, 0
      %p60 = por %p58, %p59
      %s61 = sadd.s32 %s21, 1
      %s62 = sadd.s32 %s28, 1
      %s63 = ssub.s32 %s20, %s32
      %s64 = ssub.s32 %s61, %s62
      %s65 = sor.u32 %s63, %s64
      %p66 = scmp.eq.s32.totalorder %s65, 0
      %s68 = sadd.s32 %s67, 1
      %s69 = scalar_select %p66, %s67, %s68
      %p72 = pneg %p66
      %p73 = scmp.eq.s32.totalorder %s13, 19
      %p74 = por %p72, %p73
      %p75 = scmp.ne.s32.totalorder %s67, %s70
      %p76 = scmp.eq.s32.totalorder %s13, 0
      %p77 = por %p75, %p76
      %p78 = scmp.ne.s32.totalorder %s67, %s70
      %p79 = scmp.eq.s32.totalorder %s18, 19
      %p80 = por %p78, %p79
      %p81 = scmp.ne.s32.totalorder %s70, %s71
      %p82 = scmp.eq.s32.totalorder %s18, 0
      %p83 = por %p81, %p82
      %p84 = scmp.ne.s32.totalorder %s70, %s71
      %p85 = scmp.eq.s32.totalorder %s19, 19
      %p86 = por %p84, %p85
      %p88 = scmp.ne.s32.totalorder %s71, %s87
      %p89 = scmp.eq.s32.totalorder %s19, 0
      %p90 = por %p88, %p89
      %s92 = sadd.s32 %s91, 1
      %p95 = scmp.eq.s32.totalorder %s13, 19
      %p96 = scmp.ne.s32.totalorder %s91, %s93
      %p97 = scmp.eq.s32.totalorder %s13, 0
      %p98 = por %p96, %p97
      %p99 = scmp.ne.s32.totalorder %s91, %s93
      %p100 = scmp.eq.s32.totalorder %s18, 19
      %p101 = por %p99, %p100
      %p102 = scmp.ne.s32.totalorder %s93, %s94
      %p103 = scmp.eq.s32.totalorder %s18, 0
      %p104 = por %p102, %p103
      %p105 = scmp.ne.s32.totalorder %s93, %s94
      %p106 = scmp.eq.s32.totalorder %s19, 19
      %p107 = por %p105, %p106
      %p109 = scmp.ne.s32.totalorder %s94, %s108
      %p110 = scmp.eq.s32.totalorder %s19, 0
      %p111 = por %p109, %p110
      %s113 = sadd.s32 %s112, 1
      %p116 = scmp.eq.s32.totalorder %s13, 19
      %p117 = scmp.ne.s32.totalorder %s112, %s114
      %p118 = scmp.eq.s32.totalorder %s13, 0
      %p119 = por %p117, %p118
      %p120 = scmp.ne.s32.totalorder %s112, %s114
      %p121 = scmp.eq.s32.totalorder %s18, 19
      %p122 = por %p120, %p121
      %p123 = scmp.ne.s32.totalorder %s114, %s115
      %p124 = scmp.eq.s32.totalorder %s18, 0
      %p125 = por %p123, %p124
      %p126 = scmp.ne.s32.totalorder %s114, %s115
      %p127 = scmp.eq.s32.totalorder %s19, 19
      %p128 = por %p126, %p127
      %p130 = scmp.ne.s32.totalorder %s115, %s129
      %p131 = scmp.eq.s32.totalorder %s19, 0
      %p132 = por %p130, %p131
      %s133 = ssub.s32 %s20, %s32
      %s134 = ssub.s32 %s21, %s28
      %s135 = sor.u32 %s133, %s134
      %p136 = scmp.eq.s32.totalorder %s135, 0
      %s138 = sadd.s32 %s137, 1
      %s139 = scalar_select %p136, %s137, %s138
      %p142 = pneg %p136
      %p143 = scmp.eq.s32.totalorder %s13, 19
      %p144 = por %p142, %p143
      %p145 = scmp.ne.s32.totalorder %s137, %s140
      %p146 = scmp.eq.s32.totalorder %s13, 0
      %p147 = por %p145, %p146
      %p148 = scmp.ne.s32.totalorder %s137, %s140
      %p149 = scmp.eq.s32.totalorder %s18, 19
      %p150 = por %p148, %p149
      %p151 = scmp.ne.s32.totalorder %s140, %s141
      %p152 = scmp.eq.s32.totalorder %s18, 0
      %p153 = por %p151, %p152
      %p154 = scmp.ne.s32.totalorder %s140, %s141
      %p155 = scmp.eq.s32.totalorder %s19, 19
      %p156 = por %p154, %p155
      %p158 = scmp.ne.s32.totalorder %s141, %s157
      %p159 = scmp.eq.s32.totalorder %s19, 0
      %p160 = por %p158, %p159
      %p161 = scmp.le.s32.totalorder 1, %s13
      %p162 = scmp.lt.s32.totalorder %s13, 21
      %p163 = pnand %p161, %p162
      %p164 = pneg %p163
      // Predicated region
      $region9: #{tpu_custom_call.1} parent=5 // pred_check
        _
      $region10: #{tpu_custom_call.1} parent=5 // pred_check_branch
        %166 = sbr.rel (%p163) target = $region12
      $region11: #{tpu_custom_call.1} parent=5 // pred_region
        %s167 = ssub.s32 %s13, 1
        // Predicated region
        $region13: #{tpu_custom_call.1} parent=11 // pred_check
          %p168 = pneg %p104
        $region14: #{tpu_custom_call.1} parent=11 // pred_check_branch
          %170 = sbr.rel (%p168) target = $region16
        $region15: #{tpu_custom_call.1} parent=11 // pred_region
          _
        $region16: #{tpu_custom_call.1} parent=11 // pred_fallthru
          _
        // Predicated region
        $region17: #{tpu_custom_call.1} parent=11 // pred_check
          %p171 = pneg %p125
        $region18: #{tpu_custom_call.1} parent=11 // pred_check_branch
          %173 = sbr.rel (%p171) target = $region20
        $region19: #{tpu_custom_call.1} parent=11 // pred_region
          _
        $region20: #{tpu_custom_call.1} parent=11 // pred_fallthru
          _
      $region12: #{tpu_custom_call.1} parent=5 // pred_fallthru
        _
      %p174 = scmp.lt.s32.totalorder %s13, 20
      // Predicated region
      $region21: #{tpu_custom_call.1} parent=5 // pred_check
        %p175 = pneg %p174
      $region22: #{tpu_custom_call.1} parent=5 // pred_check_branch
        %177 = sbr.rel (%p175) target = $region24
      $region23: #{tpu_custom_call.1} parent=5 // pred_region
        // Predicated region
        $region25: #{tpu_custom_call.1} parent=23 // pred_check
          %p178 = pneg %p47
        $region26: #{tpu_custom_call.1} parent=23 // pred_check_branch
          %180 = sbr.rel (%p178) target = $region28
        $region27: #{tpu_custom_call.1} parent=23 // pred_region
          %s181 = smul.u32 2, %s21
          %p182 = scmp.lt.s32.totalorder %s20, 1
          %s183 = scalar_select %p182, %s20, 1
          %p184 = scmp.lt.s32.totalorder %s181, 21
          %s185 = scalar_select %p184, %s181, 21
          %s186 = smul.addr %s185, 8
          %s187 = smul.addr %s183, 176
          %s188 = sadd.s32 %s186, %s187
          %s189 = scalar_lea.vmem %s0, %s188
          %s190 = smul.u32 2, %s21
        $region28: #{tpu_custom_call.1} parent=23 // pred_fallthru
          _
        // Predicated region
        $region29: #{tpu_custom_call.1} parent=23 // pred_check
          %p191 = pneg %p77
        $region30: #{tpu_custom_call.1} parent=23 // pred_check_branch
          %193 = sbr.rel (%p191) target = $region32
        $region31: #{tpu_custom_call.1} parent=23 // pred_region
          %s194 = sadd.s32 %s21, 1
          %s195 = smul.u32 2, %s194
          %p196 = scmp.lt.s32.totalorder %s20, 1
          %s197 = scalar_select %p196, %s20, 1
          %p198 = scmp.lt.s32.totalorder %s195, 21
          %s199 = scalar_select %p198, %s195, 21
          %s200 = smul.addr %s199, 8
          %s201 = smul.addr %s197, 176
          %s202 = sadd.s32 %s200, %s201
          %s203 = scalar_lea.vmem %s1, %s202
          %s204 = sadd.s32 %s21, 1
          %s205 = smul.u32 2, %s204
        $region32: #{tpu_custom_call.1} parent=23 // pred_fallthru
          _
      $region24: #{tpu_custom_call.1} parent=5 // pred_fallthru
        _
      %p206 = scmp.le.s32.totalorder 1, %s13
      %p207 = scmp.lt.s32.totalorder %s13, 21
      %p208 = pnand %p206, %p207
      %p209 = pneg %p208
      // Predicated region
      $region33: #{tpu_custom_call.1} parent=5 // pred_check
        _
      $region34: #{tpu_custom_call.1} parent=5 // pred_check_branch
        %211 = sbr.rel (%p208) target = $region36
      $region35: #{tpu_custom_call.1} parent=5 // pred_region
        %s212 = ssub.s32 %s13, 1
        %s213 = smul.u32 2, %s23
        %p214 = scmp.lt.s32.totalorder %s22, 1
        %s215 = scalar_select %p214, %s22, 1
        %p216 = scmp.lt.s32.totalorder %s213, 21
        %s217 = scalar_select %p216, %s213, 21
        %s218 = smul.addr %s217, 8
        %s219 = smul.addr %s215, 176
        %s220 = sadd.s32 %s218, %s219
        %s221 = scalar_lea.vmem %s0, %s220
        %p222 = pneg %p53
        %p223 = pneg %p50
        %s224 = sadd.s32 %s23, 1
        %s225 = smul.u32 2, %s224
        %p226 = scmp.lt.s32.totalorder %s22, 1
        %s227 = scalar_select %p226, %s22, 1
        %p228 = scmp.lt.s32.totalorder %s225, 21
        %s229 = scalar_select %p228, %s225, 21
        %s230 = smul.addr %s229, 8
        %s231 = smul.addr %s227, 176
        %s232 = sadd.s32 %s230, %s231
        %s233 = scalar_lea.vmem %s1, %s232
        %p234 = pneg %p83
        %p235 = pneg %p80
        %p236 = pneg %p104
        %p237 = pneg %p101
        %p238 = pneg %p125
        %p239 = pneg %p122
        %p240 = pneg %p153
        %p241 = pneg %p150
        %s242 = sand.u32 %s140, 1
        %s243 = scalar_lea.sflag [#allocation4], %s242
        %s244 = sand.u32 %s140, 1
        %s245 = smul.addr %s244, 8
        %s246 = scalar_lea.vmem [#allocation3], %s245
        %s247 = smul.u32 2, %s23
        %p248 = scmp.lt.s32.totalorder %s22, 1
        %s249 = scalar_select %p248, %s22, 1
        %p250 = scmp.lt.s32.totalorder %s247, 21
        %s251 = scalar_select %p250, %s247, 21
        %s252 = smul.addr %s251, 8
        %s253 = smul.addr %s249, 176
        %s254 = sadd.s32 %s252, %s253
        %s255 = scalar_lea.vmem %s0, %s254
        %s256 = smul.u32 2, %s23
        %s257 = sadd.s32 %s23, 1
        %s258 = smul.u32 2, %s257
        %p259 = scmp.lt.s32.totalorder %s22, 1
        %s260 = scalar_select %p259, %s22, 1
        %p261 = scmp.lt.s32.totalorder %s258, 21
        %s262 = scalar_select %p261, %s258, 21
        %s263 = smul.addr %s262, 8
        %s264 = smul.addr %s260, 176
        %s265 = sadd.s32 %s263, %s264
        %s266 = scalar_lea.vmem %s1, %s265
        %s267 = sadd.s32 %s23, 1
        %s268 = smul.u32 2, %s267
        %v270 = vld [vmem:[%s255] sm:$0x3]
        %272 = vst [vmem:[#allocation1] ss:$4 sm:$0xff] %v270
        %v273 = vld [vmem:[#allocation1] sm:$0xff]
        %vm275 = vcmask 1040384
        %vm276 = vsmask.f32 256
        %vm277 = vmand %vm275, %vm276
        %vm278 = vcmask 618500
        %vm279 = vsmask.f32 4352
        %vm280 = vmand %vm278, %vm279
        %vm281 = vmor %vm280, %vm277
        %v282 = vld [vmem:[#allocation2] sm:$0x11]
        %v283 = vsel %vm281, %v273, %v282
        %284 = vst [vmem:[#allocation2] sm:$0x11] %v283
        %s285 = scalar_lea.vmem %s255, 2
        %v286 = vld [vmem:[%s285] sm:$0x3]
        %288 = vst [vmem:[#allocation1] ss:$4 sm:$0xff] %v286
        %v289 = vld [vmem:[#allocation1] sm:$0xff]
        %v290 = vshll.u32 %v289, 16
        %vm293 = vsmask.f32 7938
        %vm294 = vmand %vm275, %vm293
        %vm295 = vsmask.f32 7954
        %vm296 = vmand %vm278, %vm295
        %vm297 = vmor %vm296, %vm294
        %v298 = vld [vmem:[#allocation2] sm:$0x11]
        %v299 = vsel %vm297, %v290, %v298
        %300 = vst [vmem:[#allocation2] sm:$0x11] %v299
        %v301 = vld [vmem:[%s255] sm:$0x3]
        %s303 = scalar_lea.vmem [#allocation1], 1
        %304 = vst [vmem:[%s303] ss:$4 sm:$0xff] %v301
        %v305 = vld [vmem:[#allocation1] sm:$0xff]
        %307 = vrot.lane.b32.xlu0 %v305, 127
        %v308 = vpop.permute.xlu0 %307
        %v309 = vrot.slane %v308, 4
        %vm310 = vcmask 1039360
        %v311 = vsel %vm310, %v308, %v309
        %vm313 = vcmask 1041409
        %vm314 = vsmask.f32 1280
        %vm315 = vmand %vm313, %vm314
        %vm316 = vcmask 619525
        %vm317 = vsmask.f32 5376
        %vm318 = vmand %vm316, %vm317
        %vm319 = vmor %vm318, %vm315
        %v320 = vld [vmem:[#allocation2] sm:$0x22]
        %v321 = vsel %vm319, %v311, %v320
        %322 = vst [vmem:[#allocation2] sm:$0x22] %v321
        %s323 = scalar_lea.vmem %s255, 4
        %v324 = vld [vmem:[%s323] sm:$0x3]
        %326 = vst [vmem:[#allocation1] ss:$4 sm:$0xff] %v324
        %v327 = vld [vmem:[#allocation1] sm:$0xff]
        %v328 = vshll.u32 %v327, 16
        %v330 = vrot.slane %v328, 7
        %vm332 = vsmask.f32 7942
        %vm333 = vmand %vm313, %vm332
        %vm334 = vsmask.f32 7958
        %vm335 = vmand %vm316, %vm334
        %vm336 = vmor %vm335, %vm333
        %v337 = vld [vmem:[#allocation2] sm:$0x22]
        %v338 = vsel %vm336, %v330, %v337
        %339 = vst [vmem:[#allocation2] sm:$0x22] %v338
        %s340 = scalar_lea.vmem %s255, 6
        %v341 = vld [vmem:[%s340] sm:$0x3]
        %s343 = scalar_lea.vmem [#allocation1], 2
        %344 = vst [vmem:[%s343] ss:$4 sm:$0xff] %v341
        %v345 = vld [vmem:[#allocation1] sm:$0xff]
        %vm347 = vcmask 1042434
        %vm348 = vsmask.f32 2304
        %vm349 = vmand %vm347, %vm348
        %vm350 = vcmask 620550
        %vm351 = vsmask.f32 6400
        %vm352 = vmand %vm350, %vm351
        %vm353 = vmor %vm352, %vm349
        %v354 = vld [vmem:[#allocation2] sm:$0x44]
        %v355 = vsel %vm353, %v345, %v354
        %356 = vst [vmem:[#allocation2] sm:$0x44] %v355
        %v357 = vld [vmem:[%s323] sm:$0x3]
        %359 = vst [vmem:[#allocation1] ss:$4 sm:$0xff] %v357
        %v360 = vld [vmem:[#allocation1] sm:$0xff]
        %v361 = vshll.u32 %v360, 16
        %v363 = vrot.slane %v361, 6
        %364 = vrot.lane.b32.xlu0 %v363, 127
        %v365 = vpop.permute.xlu0 %364
        %v366 = vrot.slane %v365, 4
        %v367 = vsel %vm310, %v365, %v366
        %vm369 = vsmask.f32 7946
        %vm370 = vmand %vm347, %vm369
        %vm371 = vsmask.f32 7962
        %vm372 = vmand %vm350, %vm371
        %vm373 = vmor %vm372, %vm370
        %v374 = vld [vmem:[#allocation2] sm:$0x44]
        %v375 = vsel %vm373, %v367, %v374
        %376 = vst [vmem:[#allocation2] sm:$0x44] %v375
        %v377 = vld [vmem:[%s255] sm:$0x3]
        %s379 = scalar_lea.vmem [#allocation1], 3
        %380 = vst [vmem:[%s379] ss:$4 sm:$0xff] %v377
        %v381 = vld [vmem:[#allocation1] sm:$0xff]
        %383 = vrot.lane.b32.xlu0 %v381, 111
        %v384 = vpop.permute.xlu0 %383
        %v385 = vrot.slane %v384, 4
        %vm386 = vcmask 908288
        %v387 = vsel %vm386, %v384, %v385
        %vm389 = vcmask 1043459
        %vm390 = vsmask.f32 3328
        %vm391 = vmand %vm389, %vm390
        %vm392 = vcmask 621575
        %vm393 = vsmask.f32 7424
        %vm394 = vmand %vm392, %vm393
        %vm395 = vmor %vm394, %vm391
        %v396 = vld [vmem:[#allocation2] sm:$0x88]
        %v397 = vsel %vm395, %v387, %v396
        %398 = vst [vmem:[#allocation2] sm:$0x88] %v397
        %v399 = vld [vmem:[%s285] sm:$0x3]
        %401 = vst [vmem:[#allocation1] ss:$4 sm:$0xff] %v399
        %v402 = vld [vmem:[#allocation1] sm:$0xff]
        %v403 = vshll.u32 %v402, 16
        %v405 = vrot.slane %v403, 5
        %406 = vrot.lane.b32.xlu0 %v405, 111
        %v407 = vpop.permute.xlu0 %406
        %v408 = vrot.slane %v407, 4
        %v409 = vsel %vm386, %v407, %v408
        %vm411 = vsmask.f32 7950
        %vm412 = vmand %vm389, %vm411
        %vm413 = vsmask.f32 7966
        %vm414 = vmand %vm392, %vm413
        %vm415 = vmor %vm414, %vm412
        %v416 = vld [vmem:[#allocation2] sm:$0x88]
        %v417 = vsel %vm415, %v409, %v416
        %418 = vst [vmem:[#allocation2] sm:$0x88] %v417
        %v419 = vld [vmem:[%s255] sm:$0x3]
        %421 = vst [vmem:[#allocation1] ss:$4 sm:$0xff] %v419
        %v422 = vld [vmem:[#allocation1] sm:$0xff]
        %424 = vrot.lane.b32.xlu0 %v422, 110
        %v425 = vpop.permute.xlu0 %424
        %v426 = vrot.slane %v425, 4
        %vm427 = vcmask 900096
        %v428 = vsel %vm427, %v425, %v426
        %v430 = vld [vmem:[#allocation2 + $0x34] sm:$0x11]
        %v431 = vsel %vm281, %v428, %v430
        %432 = vst [vmem:[#allocation2 + $0x34] sm:$0x11] %v431
        %s433 = scalar_lea.vmem %s255, 8
        %v434 = vld [vmem:[%s433] sm:$0x3]
        %436 = vst [vmem:[#allocation1] ss:$4 sm:$0xff] %v434
        %v437 = vld [vmem:[#allocation1] sm:$0xff]
        %v438 = vshll.u32 %v437, 16
        %v441 = vld [vmem:[#allocation2 + $0x34] sm:$0x11]
        %v442 = vsel %vm297, %v438, %v441
        %443 = vst [vmem:[#allocation2 + $0x34] sm:$0x11] %v442
        %s444 = scalar_lea.vmem %s255, 10
        %v445 = vld [vmem:[%s444] sm:$0x3]
        %s447 = scalar_lea.vmem [#allocation1], 1
        %448 = vst [vmem:[%s447] ss:$4 sm:$0xff] %v445
        %v449 = vld [vmem:[#allocation1] sm:$0xff]
        %v451 = vld [vmem:[#allocation2 + $0x34] sm:$0x22]
        %v452 = vsel %vm319, %v449, %v451
        %453 = vst [vmem:[#allocation2 + $0x34] sm:$0x22] %v452
        %v454 = vld [vmem:[%s433] sm:$0x3]
        %456 = vst [vmem:[#allocation1] ss:$4 sm:$0xff] %v454
        %v457 = vld [vmem:[#allocation1] sm:$0xff]
        %v458 = vshll.u32 %v457, 16
        %v460 = vrot.slane %v458, 7
        %461 = vrot.lane.b32.xlu0 %v460, 127
        %v462 = vpop.permute.xlu0 %461
        %v463 = vrot.slane %v462, 4
        %v464 = vsel %vm310, %v462, %v463
        %v466 = vld [vmem:[#allocation2 + $0x34] sm:$0x22]
        %v467 = vsel %vm336, %v464, %v466
        %468 = vst [vmem:[#allocation2 + $0x34] sm:$0x22] %v467
        %s469 = scalar_lea.vmem %s255, 12
        %v470 = vld [vmem:[%s469] sm:$0x3]
        %s472 = scalar_lea.vmem [#allocation1], 2
        %473 = vst [vmem:[%s472] ss:$4 sm:$0xff] %v470
        %v474 = vld [vmem:[#allocation1] sm:$0xff]
        %v476 = vld [vmem:[#allocation2 + $0x34] sm:$0x44]
        %v477 = vsel %vm353, %v474, %v476
        %478 = vst [vmem:[#allocation2 + $0x34] sm:$0x44] %v477
        %s479 = scalar_lea.vmem %s255, 14
        %v480 = vld [vmem:[%s479] sm:$0x3]
        %482 = vst [vmem:[#allocation1] ss:$4 sm:$0xff] %v480
        %v483 = vld [vmem:[#allocation1] sm:$0xff]
        %v484 = vshll.u32 %v483, 16
        %v486 = vrot.slane %v484, 6
        %v488 = vld [vmem:[#allocation2 + $0x34] sm:$0x44]
        %v489 = vsel %vm373, %v486, %v488
        %490 = vst [vmem:[#allocation2 + $0x34] sm:$0x44] %v489
        %v491 = vld [vmem:[%s469] sm:$0x3]
        %s493 = scalar_lea.vmem [#allocation1], 3
        %494 = vst [vmem:[%s493] ss:$4 sm:$0xff] %v491
        %v495 = vld [vmem:[#allocation1] sm:$0xff]
        %497 = vrot.lane.b32.xlu0 %v495, 127
        %v498 = vpop.permute.xlu0 %497
        %v499 = vrot.slane %v498, 4
        %v500 = vsel %vm310, %v498, %v499
        %v502 = vld [vmem:[#allocation2 + $0x34] sm:$0x88]
        %v503 = vsel %vm395, %v500, %v502
        %504 = vst [vmem:[#allocation2 + $0x34] sm:$0x88] %v503
        %v505 = vld [vmem:[%s433] sm:$0x3]
        %507 = vst [vmem:[#allocation1] ss:$4 sm:$0xff] %v505
        %v508 = vld [vmem:[#allocation1] sm:$0xff]
        %v509 = vshll.u32 %v508, 16
        %v511 = vrot.slane %v509, 5
        %512 = vrot.lane.b32.xlu0 %v511, 111
        %v513 = vpop.permute.xlu0 %512
        %v514 = vrot.slane %v513, 4
        %v515 = vsel %vm386, %v513, %v514
        %v517 = vld [vmem:[#allocation2 + $0x34] sm:$0x88]
        %v518 = vsel %vm415, %v515, %v517
        %519 = vst [vmem:[#allocation2 + $0x34] sm:$0x88] %v518
        %v520 = vld [vmem:[%s444] sm:$0x3]
        %522 = vst [vmem:[#allocation1] ss:$4 sm:$0xff] %v520
        %v523 = vld [vmem:[#allocation1] sm:$0xff]
        %525 = vrot.lane.b32.xlu0 %v523, 111
        %v526 = vpop.permute.xlu0 %525
        %v527 = vrot.slane %v526, 4
        %v528 = vsel %vm386, %v526, %v527
        %v530 = vld [vmem:[#allocation2 + $0x68] sm:$0x11]
        %v531 = vsel %vm281, %v528, %v530
        %532 = vst [vmem:[#allocation2 + $0x68] sm:$0x11] %v531
        %v533 = vld [vmem:[%s433] sm:$0x3]
        %535 = vst [vmem:[#allocation1] ss:$4 sm:$0xff] %v533
        %v536 = vld [vmem:[#allocation1] sm:$0xff]
        %v537 = vshll.u32 %v536, 16
        %539 = vrot.lane.b32.xlu0 %v537, 110
        %v540 = vpop.permute.xlu0 %539
        %v541 = vrot.slane %v540, 4
        %v542 = vsel %vm427, %v540, %v541
        %v544 = vld [vmem:[#allocation2 + $0x68] sm:$0x11]
        %v545 = vsel %vm297, %v542, %v544
        %546 = vst [vmem:[#allocation2 + $0x68] sm:$0x11] %v545
        %v547 = vld [vmem:[%s266] sm:$0x3]
        %s549 = scalar_lea.vmem [#allocation1], 1
        %550 = vst [vmem:[%s549] ss:$4 sm:$0xff] %v547
        %v551 = vld [vmem:[#allocation1] sm:$0xff]
        %v553 = vld [vmem:[#allocation2 + $0x68] sm:$0x22]
        %v554 = vsel %vm319, %v551, %v553
        %555 = vst [vmem:[#allocation2 + $0x68] sm:$0x22] %v554
        %s556 = scalar_lea.vmem %s266, 2
        %v557 = vld [vmem:[%s556] sm:$0x3]
        %559 = vst [vmem:[#allocation1] ss:$4 sm:$0xff] %v557
        %v560 = vld [vmem:[#allocation1] sm:$0xff]
        %v561 = vshll.u32 %v560, 16
        %v563 = vrot.slane %v561, 7
        %v565 = vld [vmem:[#allocation2 + $0x68] sm:$0x22]
        %v566 = vsel %vm336, %v563, %v565
        %567 = vst [vmem:[#allocation2 + $0x68] sm:$0x22] %v566
        %v568 = vld [vmem:[%s266] sm:$0x3]
        %s570 = scalar_lea.vmem [#allocation1], 2
        %571 = vst [vmem:[%s570] ss:$4 sm:$0xff] %v568
        %v572 = vld [vmem:[#allocation1] sm:$0xff]
        %574 = vrot.lane.b32.xlu0 %v572, 127
        %v575 = vpop.permute.xlu0 %574
        %v576 = vrot.slane %v575, 4
        %v577 = vsel %vm310, %v575, %v576
        %v579 = vld [vmem:[#allocation2 + $0x68] sm:$0x44]
        %v580 = vsel %vm353, %v577, %v579
        %581 = vst [vmem:[#allocation2 + $0x68] sm:$0x44] %v580
        %s582 = scalar_lea.vmem %s266, 4
        %v583 = vld [vmem:[%s582] sm:$0x3]
        %585 = vst [vmem:[#allocation1] ss:$4 sm:$0xff] %v583
        %v586 = vld [vmem:[#allocation1] sm:$0xff]
        %v587 = vshll.u32 %v586, 16
        %v589 = vrot.slane %v587, 6
        %v591 = vld [vmem:[#allocation2 + $0x68] sm:$0x44]
        %v592 = vsel %vm373, %v589, %v591
        %593 = vst [vmem:[#allocation2 + $0x68] sm:$0x44] %v592
        %s594 = scalar_lea.vmem %s266, 6
        %v595 = vld [vmem:[%s594] sm:$0x3]
        %s597 = scalar_lea.vmem [#allocation1], 3
        %598 = vst [vmem:[%s597] ss:$4 sm:$0xff] %v595
        %v599 = vld [vmem:[#allocation1] sm:$0xff]
        %v601 = vld [vmem:[#allocation2 + $0x68] sm:$0x88]
        %v602 = vsel %vm395, %v599, %v601
        %603 = vst [vmem:[#allocation2 + $0x68] sm:$0x88] %v602
        %v604 = vld [vmem:[%s582] sm:$0x3]
        %606 = vst [vmem:[#allocation1] ss:$4 sm:$0xff] %v604
        %v607 = vld [vmem:[#allocation1] sm:$0xff]
        %v608 = vshll.u32 %v607, 16
        %v610 = vrot.slane %v608, 5
        %611 = vrot.lane.b32.xlu0 %v610, 127
        %v612 = vpop.permute.xlu0 %611
        %v613 = vrot.slane %v612, 4
        %v614 = vsel %vm310, %v612, %v613
        %v616 = vld [vmem:[#allocation2 + $0x68] sm:$0x88]
        %v617 = vsel %vm415, %v614, %v616
        %618 = vst [vmem:[#allocation2 + $0x68] sm:$0x88] %v617
        %v619 = vld [vmem:[%s266] sm:$0x3]
        %621 = vst [vmem:[#allocation1] ss:$4 sm:$0xff] %v619
        %v622 = vld [vmem:[#allocation1] sm:$0xff]
        %624 = vrot.lane.b32.xlu0 %v622, 111
        %v625 = vpop.permute.xlu0 %624
        %v626 = vrot.slane %v625, 4
        %v627 = vsel %vm386, %v625, %v626
        %v629 = vld [vmem:[#allocation2 + $0x9c] sm:$0x11]
        %v630 = vsel %vm281, %v627, %v629
        %631 = vst [vmem:[#allocation2 + $0x9c] sm:$0x11] %v630
        %v632 = vld [vmem:[%s556] sm:$0x3]
        %634 = vst [vmem:[#allocation1] ss:$4 sm:$0xff] %v632
        %v635 = vld [vmem:[#allocation1] sm:$0xff]
        %v636 = vshll.u32 %v635, 16
        %638 = vrot.lane.b32.xlu0 %v636, 111
        %v639 = vpop.permute.xlu0 %638
        %v640 = vrot.slane %v639, 4
        %v641 = vsel %vm386, %v639, %v640
        %v643 = vld [vmem:[#allocation2 + $0x9c] sm:$0x11]
        %v644 = vsel %vm297, %v641, %v643
        %645 = vst [vmem:[#allocation2 + $0x9c] sm:$0x11] %v644
        %v646 = vld [vmem:[%s266] sm:$0x3]
        %s648 = scalar_lea.vmem [#allocation1], 1
        %649 = vst [vmem:[%s648] ss:$4 sm:$0xff] %v646
        %v650 = vld [vmem:[#allocation1] sm:$0xff]
        %652 = vrot.lane.b32.xlu0 %v650, 110
        %v653 = vpop.permute.xlu0 %652
        %v654 = vrot.slane %v653, 4
        %v655 = vsel %vm427, %v653, %v654
        %v657 = vld [vmem:[#allocation2 + $0x9c] sm:$0x22]
        %v658 = vsel %vm319, %v655, %v657
        %659 = vst [vmem:[#allocation2 + $0x9c] sm:$0x22] %v658
        %v660 = vld [vmem:[%s285] sm:$0x3]
        %662 = vst [vmem:[#allocation1] ss:$4 sm:$0xff] %v660
        %v663 = vld [vmem:[#allocation1] sm:$0xff]
        %665 = vrot.lane.b32.xlu0 %v663, 76
        %v666 = vpop.permute.xlu0 %665
        %v667 = vrot.slane %v666, 4
        %vm668 = vcmask 621568
        %v669 = vsel %vm668, %v667, %v666
        %vm672 = vcmask 1040992
        %vm673 = vmand %vm672, %vm276
        %vm674 = vcmask 1044484
        %vm675 = vmand %vm674, %vm279
        %vm676 = vmor %vm675, %vm673
        %v677 = vld [vmem:[#allocation2 + $0x4] sm:$0x11]
        %v678 = vsel %vm676, %v669, %v677
        %679 = vst [vmem:[#allocation2 + $0x4] sm:$0x11] %v678
        %vm680 = vcmask 188416
        %vm681 = vmand %vm680, %vm276
        %v682 = vld [vmem:[#allocation2 + $0xc] sm:$0x1]
        %v683 = vsel %vm681, %v667, %v682
        %684 = vst [vmem:[#allocation2 + $0xc] sm:$0x1] %v683
        %v685 = vld [vmem:[%s255] sm:$0x3]
        %687 = vst [vmem:[#allocation1] ss:$4 sm:$0xff] %v685
        %v688 = vld [vmem:[#allocation1] sm:$0xff]
        %v689 = vshll.u32 %v688, 16
        %691 = vrot.lane.b32.xlu0 %v689, 75
        %v692 = vpop.permute.xlu0 %691
        %v693 = vrot.slane %v692, 4
        %vm694 = vcmask 613376
        %v695 = vsel %vm694, %v693, %v692
        %vm698 = vmand %vm672, %vm293
        %vm699 = vmand %vm674, %vm295
        %vm700 = vmor %vm699, %vm698
        %v701 = vld [vmem:[#allocation2 + $0x4] sm:$0x11]
        %v702 = vsel %vm700, %v695, %v701
        %703 = vst [vmem:[#allocation2 + $0x4] sm:$0x11] %v702
        %vm704 = vmand %vm680, %vm293
        %v705 = vld [vmem:[#allocation2 + $0xc] sm:$0x1]
        %v706 = vsel %vm704, %v693, %v705
        %707 = vst [vmem:[#allocation2 + $0xc] sm:$0x1] %v706
        %v708 = vld [vmem:[%s285] sm:$0x3]
        %s710 = scalar_lea.vmem [#allocation1], 1
        %711 = vst [vmem:[%s710] ss:$4 sm:$0xff] %v708
        %v712 = vld [vmem:[#allocation1] sm:$0xff]
        %714 = vrot.lane.b32.xlu0 %v712, 75
        %v715 = vpop.permute.xlu0 %714
        %v716 = vrot.slane %v715, 4
        %v717 = vsel %vm694, %v716, %v715
        %vm720 = vcmask 1042017
        %vm721 = vmand %vm720, %vm314
        %vm722 = vcmask 1045509
        %vm723 = vmand %vm722, %vm317
        %vm724 = vmor %vm723, %vm721
        %v725 = vld [vmem:[#allocation2 + $0x4] sm:$0x22]
        %v726 = vsel %vm724, %v717, %v725
        %727 = vst [vmem:[#allocation2 + $0x4] sm:$0x22] %v726
        %vm728 = vcmask 189441
        %vm729 = vmand %vm728, %vm314
        %v730 = vld [vmem:[#allocation2 + $0xc] sm:$0x2]
        %v731 = vsel %vm729, %v716, %v730
        %732 = vst [vmem:[#allocation2 + $0xc] sm:$0x2] %v731
        %v733 = vld [vmem:[%s340] sm:$0x3]
        %735 = vst [vmem:[#allocation1] ss:$4 sm:$0xff] %v733
        %v736 = vld [vmem:[#allocation1] sm:$0xff]
        %v737 = vshll.u32 %v736, 16
        %v739 = vrot.slane %v737, 7
        %740 = vrot.lane.b32.xlu0 %v739, 76
        %v741 = vpop.permute.xlu0 %740
        %v742 = vrot.slane %v741, 4
        %v743 = vsel %vm668, %v742, %v741
        %vm746 = vmand %vm720, %vm332
        %vm747 = vmand %vm722, %vm334
        %vm748 = vmor %vm747, %vm746
        %v749 = vld [vmem:[#allocation2 + $0x4] sm:$0x22]
        %v750 = vsel %vm748, %v743, %v749
        %751 = vst [vmem:[#allocation2 + $0x4] sm:$0x22] %v750
        %vm752 = vmand %vm728, %vm332
        %v753 = vld [vmem:[#allocation2 + $0xc] sm:$0x2]
        %v754 = vsel %vm752, %v742, %v753
        %755 = vst [vmem:[#allocation2 + $0xc] sm:$0x2] %v754
        %v756 = vld [vmem:[%s323] sm:$0x3]
        %s758 = scalar_lea.vmem [#allocation1], 2
        %759 = vst [vmem:[%s758] ss:$4 sm:$0xff] %v756
        %v760 = vld [vmem:[#allocation1] sm:$0xff]
        %762 = vrot.lane.b32.xlu0 %v760, 75
        %v763 = vpop.permute.xlu0 %762
        %v764 = vrot.slane %v763, 4
        %v765 = vsel %vm694, %v764, %v763
        %vm768 = vcmask 1043042
        %vm769 = vmand %vm768, %vm348
        %vm770 = vcmask 1046534
        %vm771 = vmand %vm770, %vm351
        %vm772 = vmor %vm771, %vm769
        %v773 = vld [vmem:[#allocation2 + $0x4] sm:$0x44]
        %v774 = vsel %vm772, %v765, %v773
        %775 = vst [vmem:[#allocation2 + $0x4] sm:$0x44] %v774
        %vm776 = vcmask 190466
        %vm777 = vmand %vm776, %vm348
        %v778 = vld [vmem:[#allocation2 + $0xc] sm:$0x4]
        %v779 = vsel %vm777, %v764, %v778
        %780 = vst [vmem:[#allocation2 + $0xc] sm:$0x4] %v779
        %v781 = vld [vmem:[%s340] sm:$0x3]
        %783 = vst [vmem:[#allocation1] ss:$4 sm:$0xff] %v781
        %v784 = vld [vmem:[#allocation1] sm:$0xff]
        %v785 = vshll.u32 %v784, 16
        %v787 = vrot.slane %v785, 6
        %788 = vrot.lane.b32.xlu0 %v787, 75
        %v789 = vpop.permute.xlu0 %788
        %v790 = vrot.slane %v789, 4
        %v791 = vsel %vm694, %v790, %v789
        %vm794 = vmand %vm768, %vm369
        %vm795 = vmand %vm770, %vm371
        %vm796 = vmor %vm795, %vm794
        %v797 = vld [vmem:[#allocation2 + $0x4] sm:$0x44]
        %v798 = vsel %vm796, %v791, %v797
        %799 = vst [vmem:[#allocation2 + $0x4] sm:$0x44] %v798
        %vm800 = vmand %vm776, %vm369
        %v801 = vld [vmem:[#allocation2 + $0xc] sm:$0x4]
        %v802 = vsel %vm800, %v790, %v801
        %803 = vst [vmem:[#allocation2 + $0xc] sm:$0x4] %v802
        %v804 = vld [vmem:[%s285] sm:$0x3]
        %s806 = scalar_lea.vmem [#allocation1], 3
        %807 = vst [vmem:[%s806] ss:$4 sm:$0xff] %v804
        %v808 = vld [vmem:[#allocation1] sm:$0xff]
        %810 = vrot.lane.b32.xlu0 %v808, 59
        %v811 = vpop.permute.xlu0 %810
        %v812 = vrot.slane %v811, 4
        %vm813 = vcmask 482304
        %v814 = vsel %vm813, %v812, %v811
        %vm817 = vcmask 1044067
        %vm818 = vmand %vm817, %vm390
        %vm819 = vcmask 1047559
        %vm820 = vmand %vm819, %vm393
        %vm821 = vmor %vm820, %vm818
        %v822 = vld [vmem:[#allocation2 + $0x4] sm:$0x88]
        %v823 = vsel %vm821, %v814, %v822
        %824 = vst [vmem:[#allocation2 + $0x4] sm:$0x88] %v823
        %vm825 = vcmask 191491
        %vm826 = vmand %vm825, %vm390
        %v827 = vld [vmem:[#allocation2 + $0xc] sm:$0x8]
        %v828 = vsel %vm826, %v812, %v827
        %829 = vst [vmem:[#allocation2 + $0xc] sm:$0x8] %v828
        %v830 = vld [vmem:[%s255] sm:$0x3]
        %832 = vst [vmem:[#allocation1] ss:$4 sm:$0xff] %v830
        %v833 = vld [vmem:[#allocation1] sm:$0xff]
        %v834 = vshll.u32 %v833, 16
        %v836 = vrot.slane %v834, 5
        %837 = vrot.lane.b32.xlu0 %v836, 58
        %v838 = vpop.permute.xlu0 %837
        %v839 = vrot.slane %v838, 4
        %vm840 = vcmask 474112
        %v841 = vsel %vm840, %v839, %v838
        %vm844 = vmand %vm817, %vm411
        %vm845 = vmand %vm819, %vm413
        %vm846 = vmor %vm845, %vm844
        %v847 = vld [vmem:[#allocation2 + $0x4] sm:$0x88]
        %v848 = vsel %vm846, %v841, %v847
        %849 = vst [vmem:[#allocation2 + $0x4] sm:$0x88] %v848
        %vm850 = vmand %vm825, %vm411
        %v851 = vld [vmem:[#allocation2 + $0xc] sm:$0x8]
        %v852 = vsel %vm850, %v839, %v851
        %853 = vst [vmem:[#allocation2 + $0xc] sm:$0x8] %v852
        %v854 = vld [vmem:[%s285] sm:$0x3]
        %856 = vst [vmem:[#allocation1] ss:$4 sm:$0xff] %v854
        %v857 = vld [vmem:[#allocation1] sm:$0xff]
        %859 = vrot.lane.b32.xlu0 %v857, 58
        %v860 = vpop.permute.xlu0 %859
        %v861 = vrot.slane %v860, 4
        %v862 = vsel %vm840, %v861, %v860
        %v865 = vld [vmem:[#allocation2 + $0x38] sm:$0x11]
        %v866 = vsel %vm676, %v862, %v865
        %867 = vst [vmem:[#allocation2 + $0x38] sm:$0x11] %v866
        %v868 = vld [vmem:[#allocation2 + $0x40] sm:$0x1]
        %v869 = vsel %vm681, %v861, %v868
        %870 = vst [vmem:[#allocation2 + $0x40] sm:$0x1] %v869
        %v871 = vld [vmem:[%s444] sm:$0x3]
        %873 = vst [vmem:[#allocation1] ss:$4 sm:$0xff] %v871
        %v874 = vld [vmem:[#allocation1] sm:$0xff]
        %v875 = vshll.u32 %v874, 16
        %877 = vrot.lane.b32.xlu0 %v875, 76
        %v878 = vpop.permute.xlu0 %877
        %v879 = vrot.slane %v878, 4
        %v880 = vsel %vm668, %v879, %v878
        %v883 = vld [vmem:[#allocation2 + $0x38] sm:$0x11]
        %v884 = vsel %vm700, %v880, %v883
        %885 = vst [vmem:[#allocation2 + $0x38] sm:$0x11] %v884
        %v886 = vld [vmem:[#allocation2 + $0x40] sm:$0x1]
        %v887 = vsel %vm704, %v879, %v886
        %888 = vst [vmem:[#allocation2 + $0x40] sm:$0x1] %v887
        %v889 = vld [vmem:[%s433] sm:$0x3]
        %s891 = scalar_lea.vmem [#allocation1], 1
        %892 = vst [vmem:[%s891] ss:$4 sm:$0xff] %v889
        %v893 = vld [vmem:[#allocation1] sm:$0xff]
        %895 = vrot.lane.b32.xlu0 %v893, 75
        %v896 = vpop.permute.xlu0 %895
        %v897 = vrot.slane %v896, 4
        %v898 = vsel %vm694, %v897, %v896
        %v901 = vld [vmem:[#allocation2 + $0x38] sm:$0x22]
        %v902 = vsel %vm724, %v898, %v901
        %903 = vst [vmem:[#allocation2 + $0x38] sm:$0x22] %v902
        %v904 = vld [vmem:[#allocation2 + $0x40] sm:$0x2]
        %v905 = vsel %vm729, %v897, %v904
        %906 = vst [vmem:[#allocation2 + $0x40] sm:$0x2] %v905
        %v907 = vld [vmem:[%s444] sm:$0x3]
        %909 = vst [vmem:[#allocation1] ss:$4 sm:$0xff] %v907
        %v910 = vld [vmem:[#allocation1] sm:$0xff]
        %v911 = vshll.u32 %v910, 16
        %v913 = vrot.slane %v911, 7
        %914 = vrot.lane.b32.xlu0 %v913, 75
        %v915 = vpop.permute.xlu0 %914
        %v916 = vrot.slane %v915, 4
        %v917 = vsel %vm694, %v916, %v915
        %v920 = vld [vmem:[#allocation2 + $0x38] sm:$0x22]
        %v921 = vsel %vm748, %v917, %v920
        %922 = vst [vmem:[#allocation2 + $0x38] sm:$0x22] %v921
        %v923 = vld [vmem:[#allocation2 + $0x40] sm:$0x2]
        %v924 = vsel %vm752, %v916, %v923
        %925 = vst [vmem:[#allocation2 + $0x40] sm:$0x2] %v924
        %v926 = vld [vmem:[%s479] sm:$0x3]
        %s928 = scalar_lea.vmem [#allocation1], 2
        %929 = vst [vmem:[%s928] ss:$4 sm:$0xff] %v926
        %v930 = vld [vmem:[#allocation1] sm:$0xff]
        %932 = vrot.lane.b32.xlu0 %v930, 76
        %v933 = vpop.permute.xlu0 %932
        %v934 = vrot.slane %v933, 4
        %v935 = vsel %vm668, %v934, %v933
        %v938 = vld [vmem:[#allocation2 + $0x38] sm:$0x44]
        %v939 = vsel %vm772, %v935, %v938
        %940 = vst [vmem:[#allocation2 + $0x38] sm:$0x44] %v939
        %v941 = vld [vmem:[#allocation2 + $0x40] sm:$0x4]
        %v942 = vsel %vm777, %v934, %v941
        %943 = vst [vmem:[#allocation2 + $0x40] sm:$0x4] %v942
        %v944 = vld [vmem:[%s469] sm:$0x3]
        %946 = vst [vmem:[#allocation1] ss:$4 sm:$0xff] %v944
        %v947 = vld [vmem:[#allocation1] sm:$0xff]
        %v948 = vshll.u32 %v947, 16
        %v950 = vrot.slane %v948, 6
        %951 = vrot.lane.b32.xlu0 %v950, 75
        %v952 = vpop.permute.xlu0 %951
        %v953 = vrot.slane %v952, 4
        %v954 = vsel %vm694, %v953, %v952
        %v957 = vld [vmem:[#allocation2 + $0x38] sm:$0x44]
        %v958 = vsel %vm796, %v954, %v957
        %959 = vst [vmem:[#allocation2 + $0x38] sm:$0x44] %v958
        %v960 = vld [vmem:[#allocation2 + $0x40] sm:$0x4]
        %v961 = vsel %vm800, %v953, %v960
        %962 = vst [vmem:[#allocation2 + $0x40] sm:$0x4] %v961
        %v963 = vld [vmem:[%s479] sm:$0x3]
        %s965 = scalar_lea.vmem [#allocation1], 3
        %966 = vst [vmem:[%s965] ss:$4 sm:$0xff] %v963
        %v967 = vld [vmem:[#allocation1] sm:$0xff]
        %969 = vrot.lane.b32.xlu0 %v967, 75
        %v970 = vpop.permute.xlu0 %969
        %v971 = vrot.slane %v970, 4
        %v972 = vsel %vm694, %v971, %v970
        %v975 = vld [vmem:[#allocation2 + $0x38] sm:$0x88]
        %v976 = vsel %vm821, %v972, %v975
        %977 = vst [vmem:[#allocation2 + $0x38] sm:$0x88] %v976
        %v978 = vld [vmem:[#allocation2 + $0x40] sm:$0x8]
        %v979 = vsel %vm826, %v971, %v978
        %980 = vst [vmem:[#allocation2 + $0x40] sm:$0x8] %v979
        %v981 = vld [vmem:[%s444] sm:$0x3]
        %983 = vst [vmem:[#allocation1] ss:$4 sm:$0xff] %v981
        %v984 = vld [vmem:[#allocation1] sm:$0xff]
        %v985 = vshll.u32 %v984, 16
        %v987 = vrot.slane %v985, 5
        %988 = vrot.lane.b32.xlu0 %v987, 59
        %v989 = vpop.permute.xlu0 %988
        %v990 = vrot.slane %v989, 4
        %v991 = vsel %vm813, %v990, %v989
        %v994 = vld [vmem:[#allocation2 + $0x38] sm:$0x88]
        %v995 = vsel %vm846, %v991, %v994
        %996 = vst [vmem:[#allocation2 + $0x38] sm:$0x88] %v995
        %v997 = vld [vmem:[#allocation2 + $0x40] sm:$0x8]
        %v998 = vsel %vm850, %v990, %v997
        %999 = vst [vmem:[#allocation2 + $0x40] sm:$0x8] %v998
        %v1000 = vld [vmem:[%s433] sm:$0x3]
        %1002 = vst [vmem:[#allocation1] ss:$4 sm:$0xff] %v1000
        %v1003 = vld [vmem:[#allocation1] sm:$0xff]
        %1005 = vrot.lane.b32.xlu0 %v1003, 58
        %v1006 = vpop.permute.xlu0 %1005
        %v1007 = vrot.slane %v1006, 4
        %v1008 = vsel %vm840, %v1007, %v1006
        %v1011 = vld [vmem:[#allocation2 + $0x6c] sm:$0x11]
        %v1012 = vsel %vm676, %v1008, %v1011
        %1013 = vst [vmem:[#allocation2 + $0x6c] sm:$0x11] %v1012
        %v1014 = vld [vmem:[#allocation2 + $0x74] sm:$0x1]
        %v1015 = vsel %vm681, %v1007, %v1014
        %1016 = vst [vmem:[#allocation2 + $0x74] sm:$0x1] %v1015
        %v1017 = vld [vmem:[%s444] sm:$0x3]
        %1019 = vst [vmem:[#allocation1] ss:$4 sm:$0xff] %v1017
        %v1020 = vld [vmem:[#allocation1] sm:$0xff]
        %v1021 = vshll.u32 %v1020, 16
        %1023 = vrot.lane.b32.xlu0 %v1021, 58
        %v1024 = vpop.permute.xlu0 %1023
        %v1025 = vrot.slane %v1024, 4
        %v1026 = vsel %vm840, %v1025, %v1024
        %v1029 = vld [vmem:[#allocation2 + $0x6c] sm:$0x11]
        %v1030 = vsel %vm700, %v1026, %v1029
        %1031 = vst [vmem:[#allocation2 + $0x6c] sm:$0x11] %v1030
        %v1032 = vld [vmem:[#allocation2 + $0x74] sm:$0x1]
        %v1033 = vsel %vm704, %v1025, %v1032
        %1034 = vst [vmem:[#allocation2 + $0x74] sm:$0x1] %v1033
        %v1035 = vld [vmem:[%s556] sm:$0x3]
        %s1037 = scalar_lea.vmem [#allocation1], 1
        %1038 = vst [vmem:[%s1037] ss:$4 sm:$0xff] %v1035
        %v1039 = vld [vmem:[#allocation1] sm:$0xff]
        %1041 = vrot.lane.b32.xlu0 %v1039, 76
        %v1042 = vpop.permute.xlu0 %1041
        %v1043 = vrot.slane %v1042, 4
        %v1044 = vsel %vm668, %v1043, %v1042
        %v1047 = vld [vmem:[#allocation2 + $0x6c] sm:$0x22]
        %v1048 = vsel %vm724, %v1044, %v1047
        %1049 = vst [vmem:[#allocation2 + $0x6c] sm:$0x22] %v1048
        %v1050 = vld [vmem:[#allocation2 + $0x74] sm:$0x2]
        %v1051 = vsel %vm729, %v1043, %v1050
        %1052 = vst [vmem:[#allocation2 + $0x74] sm:$0x2] %v1051
        %v1053 = vld [vmem:[%s266] sm:$0x3]
        %1055 = vst [vmem:[#allocation1] ss:$4 sm:$0xff] %v1053
        %v1056 = vld [vmem:[#allocation1] sm:$0xff]
        %v1057 = vshll.u32 %v1056, 16
        %v1059 = vrot.slane %v1057, 7
        %1060 = vrot.lane.b32.xlu0 %v1059, 75
        %v1061 = vpop.permute.xlu0 %1060
        %v1062 = vrot.slane %v1061, 4
        %v1063 = vsel %vm694, %v1062, %v1061
        %v1066 = vld [vmem:[#allocation2 + $0x6c] sm:$0x22]
        %v1067 = vsel %vm748, %v1063, %v1066
        %1068 = vst [vmem:[#allocation2 + $0x6c] sm:$0x22] %v1067
        %v1069 = vld [vmem:[#allocation2 + $0x74] sm:$0x2]
        %v1070 = vsel %vm752, %v1062, %v1069
        %1071 = vst [vmem:[#allocation2 + $0x74] sm:$0x2] %v1070
        %v1072 = vld [vmem:[%s556] sm:$0x3]
        %s1074 = scalar_lea.vmem [#allocation1], 2
        %1075 = vst [vmem:[%s1074] ss:$4 sm:$0xff] %v1072
        %v1076 = vld [vmem:[#allocation1] sm:$0xff]
        %1078 = vrot.lane.b32.xlu0 %v1076, 75
        %v1079 = vpop.permute.xlu0 %1078
        %v1080 = vrot.slane %v1079, 4
        %v1081 = vsel %vm694, %v1080, %v1079
        %v1084 = vld [vmem:[#allocation2 + $0x6c] sm:$0x44]
        %v1085 = vsel %vm772, %v1081, %v1084
        %1086 = vst [vmem:[#allocation2 + $0x6c] sm:$0x44] %v1085
        %v1087 = vld [vmem:[#allocation2 + $0x74] sm:$0x4]
        %v1088 = vsel %vm777, %v1080, %v1087
        %1089 = vst [vmem:[#allocation2 + $0x74] sm:$0x4] %v1088
        %v1090 = vld [vmem:[%s594] sm:$0x3]
        %1092 = vst [vmem:[#allocation1] ss:$4 sm:$0xff] %v1090
        %v1093 = vld [vmem:[#allocation1] sm:$0xff]
        %v1094 = vshll.u32 %v1093, 16
        %v1096 = vrot.slane %v1094, 6
        %1097 = vrot.lane.b32.xlu0 %v1096, 76
        %v1098 = vpop.permute.xlu0 %1097
        %v1099 = vrot.slane %v1098, 4
        %v1100 = vsel %vm668, %v1099, %v1098
        %v1103 = vld [vmem:[#allocation2 + $0x6c] sm:$0x44]
        %v1104 = vsel %vm796, %v1100, %v1103
        %1105 = vst [vmem:[#allocation2 + $0x6c] sm:$0x44] %v1104
        %v1106 = vld [vmem:[#allocation2 + $0x74] sm:$0x4]
        %v1107 = vsel %vm800, %v1099, %v1106
        %1108 = vst [vmem:[#allocation2 + $0x74] sm:$0x4] %v1107
        %v1109 = vld [vmem:[%s582] sm:$0x3]
        %s1111 = scalar_lea.vmem [#allocation1], 3
        %1112 = vst [vmem:[%s1111] ss:$4 sm:$0xff] %v1109
        %v1113 = vld [vmem:[#allocation1] sm:$0xff]
        %1115 = vrot.lane.b32.xlu0 %v1113, 75
        %v1116 = vpop.permute.xlu0 %1115
        %v1117 = vrot.slane %v1116, 4
        %v1118 = vsel %vm694, %v1117, %v1116
        %v1121 = vld [vmem:[#allocation2 + $0x6c] sm:$0x88]
        %v1122 = vsel %vm821, %v1118, %v1121
        %1123 = vst [vmem:[#allocation2 + $0x6c] sm:$0x88] %v1122
        %v1124 = vld [vmem:[#allocation2 + $0x74] sm:$0x8]
        %v1125 = vsel %vm826, %v1117, %v1124
        %1126 = vst [vmem:[#allocation2 + $0x74] sm:$0x8] %v1125
        %v1127 = vld [vmem:[%s594] sm:$0x3]
        %1129 = vst [vmem:[#allocation1] ss:$4 sm:$0xff] %v1127
        %v1130 = vld [vmem:[#allocation1] sm:$0xff]
        %v1131 = vshll.u32 %v1130, 16
        %v1133 = vrot.slane %v1131, 5
        %1134 = vrot.lane.b32.xlu0 %v1133, 75
        %v1135 = vpop.permute.xlu0 %1134
        %v1136 = vrot.slane %v1135, 4
        %v1137 = vsel %vm694, %v1136, %v1135
        %v1140 = vld [vmem:[#allocation2 + $0x6c] sm:$0x88]
        %v1141 = vsel %vm846, %v1137, %v1140
        %1142 = vst [vmem:[#allocation2 + $0x6c] sm:$0x88] %v1141
        %v1143 = vld [vmem:[#allocation2 + $0x74] sm:$0x8]
        %v1144 = vsel %vm850, %v1136, %v1143
        %1145 = vst [vmem:[#allocation2 + $0x74] sm:$0x8] %v1144
        %v1146 = vld [vmem:[%s556] sm:$0x3]
        %1148 = vst [vmem:[#allocation1] ss:$4 sm:$0xff] %v1146
        %v1149 = vld [vmem:[#allocation1] sm:$0xff]
        %1151 = vrot.lane.b32.xlu0 %v1149, 59
        %v1152 = vpop.permute.xlu0 %1151
        %v1153 = vrot.slane %v1152, 4
        %v1154 = vsel %vm813, %v1153, %v1152
        %v1157 = vld [vmem:[#allocation2 + $0xa0] sm:$0x11]
        %v1158 = vsel %vm676, %v1154, %v1157
        %1159 = vst [vmem:[#allocation2 + $0xa0] sm:$0x11] %v1158
        %v1160 = vld [vmem:[#allocation2 + $0xa8] sm:$0x1]
        %v1161 = vsel %vm681, %v1153, %v1160
        %1162 = vst [vmem:[#allocation2 + $0xa8] sm:$0x1] %v1161
        %v1163 = vld [vmem:[%s266] sm:$0x3]
        %1165 = vst [vmem:[#allocation1] ss:$4 sm:$0xff] %v1163
        %v1166 = vld [vmem:[#allocation1] sm:$0xff]
        %v1167 = vshll.u32 %v1166, 16
        %1169 = vrot.lane.b32.xlu0 %v1167, 58
        %v1170 = vpop.permute.xlu0 %1169
        %v1171 = vrot.slane %v1170, 4
        %v1172 = vsel %vm840, %v1171, %v1170
        %v1175 = vld [vmem:[#allocation2 + $0xa0] sm:$0x11]
        %v1176 = vsel %vm700, %v1172, %v1175
        %1177 = vst [vmem:[#allocation2 + $0xa0] sm:$0x11] %v1176
        %v1178 = vld [vmem:[#allocation2 + $0xa8] sm:$0x1]
        %v1179 = vsel %vm704, %v1171, %v1178
        %1180 = vst [vmem:[#allocation2 + $0xa8] sm:$0x1] %v1179
        %v1181 = vld [vmem:[%s556] sm:$0x3]
        %s1183 = scalar_lea.vmem [#allocation1], 1
        %1184 = vst [vmem:[%s1183] ss:$4 sm:$0xff] %v1181
        %v1185 = vld [vmem:[#allocation1] sm:$0xff]
        %1187 = vrot.lane.b32.xlu0 %v1185, 58
        %v1188 = vpop.permute.xlu0 %1187
        %v1189 = vrot.slane %v1188, 4
        %v1190 = vsel %vm840, %v1189, %v1188
        %v1193 = vld [vmem:[#allocation2 + $0xa0] sm:$0x22]
        %v1194 = vsel %vm724, %v1190, %v1193
        %1195 = vst [vmem:[#allocation2 + $0xa0] sm:$0x22] %v1194
        %v1196 = vld [vmem:[#allocation2 + $0xa8] sm:$0x2]
        %v1197 = vsel %vm729, %v1189, %v1196
        %1198 = vst [vmem:[#allocation2 + $0xa8] sm:$0x2] %v1197
        %v1199 = vld [vmem:[%s323] sm:$0x3]
        %1201 = vst [vmem:[#allocation1] ss:$4 sm:$0xff] %v1199
        %v1202 = vld [vmem:[#allocation1] sm:$0xff]
        %1204 = vrot.lane.b32.xlu0 %v1202, 24
        %v1205 = vpop.permute.xlu0 %1204
        %v1206 = vrot.slane %v1205, 4
        %vm1207 = vcmask 195584
        %v1208 = vsel %vm1207, %v1206, %v1205
        %vm1210 = vcmask 1040576
        %vm1211 = vmand %vm1210, %vm276
        %vm1212 = vcmask 815108
        %vm1213 = vmand %vm1212, %vm279
        %vm1214 = vmor %vm1213, %vm1211
        %v1215 = vld [vmem:[#allocation2 + $0xc] sm:$0x11]
        %v1216 = vsel %vm1214, %v1208, %v1215
        %1217 = vst [vmem:[#allocation2 + $0xc] sm:$0x11] %v1216
        %v1218 = vld [vmem:[%s340] sm:$0x3]
        %1220 = vst [vmem:[#allocation1] ss:$4 sm:$0xff] %v1218
        %v1221 = vld [vmem:[#allocation1] sm:$0xff]
        %v1222 = vshll.u32 %v1221, 16
        %1224 = vrot.lane.b32.xlu0 %v1222, 24
        %v1225 = vpop.permute.xlu0 %1224
        %v1226 = vrot.slane %v1225, 4
        %v1227 = vsel %vm1207, %v1226, %v1225
        %vm1229 = vmand %vm1210, %vm293
        %vm1230 = vmand %vm1212, %vm295
        %vm1231 = vmor %vm1230, %vm1229
        %v1232 = vld [vmem:[#allocation2 + $0xc] sm:$0x11]
        %v1233 = vsel %vm1231, %v1227, %v1232
        %1234 = vst [vmem:[#allocation2 + $0xc] sm:$0x11] %v1233
        %v1235 = vld [vmem:[%s323] sm:$0x3]
        %s1237 = scalar_lea.vmem [#allocation1], 1
        %1238 = vst [vmem:[%s1237] ss:$4 sm:$0xff] %v1235
        %v1239 = vld [vmem:[#allocation1] sm:$0xff]
        %1241 = vrot.lane.b32.xlu0 %v1239, 23
        %v1242 = vpop.permute.xlu0 %1241
        %v1243 = vrot.slane %v1242, 4
        %vm1244 = vcmask 187392
        %v1245 = vsel %vm1244, %v1243, %v1242
        %vm1247 = vcmask 1041601
        %vm1248 = vmand %vm1247, %vm314
        %vm1249 = vcmask 816133
        %vm1250 = vmand %vm1249, %vm317
        %vm1251 = vmor %vm1250, %vm1248
        %v1252 = vld [vmem:[#allocation2 + $0xc] sm:$0x22]
        %v1253 = vsel %vm1251, %v1245, %v1252
        %1254 = vst [vmem:[#allocation2 + $0xc] sm:$0x22] %v1253
        %v1255 = vld [vmem:[%s255] sm:$0x3]
        %1257 = vst [vmem:[#allocation1] ss:$4 sm:$0xff] %v1255
        %v1258 = vld [vmem:[#allocation1] sm:$0xff]
        %v1259 = vshll.u32 %v1258, 16
        %v1261 = vrot.slane %v1259, 7
        %1262 = vrot.lane.b32.xlu0 %v1261, 7
        %v1263 = vpop.permute.xlu0 %1262
        %v1264 = vrot.slane %v1263, 4
        %vm1265 = vcmask 56320
        %v1266 = vsel %vm1265, %v1264, %v1263
        %vm1268 = vmand %vm1247, %vm332
        %vm1269 = vmand %vm1249, %vm334
        %vm1270 = vmor %vm1269, %vm1268
        %v1271 = vld [vmem:[#allocation2 + $0xc] sm:$0x22]
        %v1272 = vsel %vm1270, %v1266, %v1271
        %1273 = vst [vmem:[#allocation2 + $0xc] sm:$0x22] %v1272
        %v1274 = vld [vmem:[%s285] sm:$0x3]
        %s1276 = scalar_lea.vmem [#allocation1], 2
        %1277 = vst [vmem:[%s1276] ss:$4 sm:$0xff] %v1274
        %v1278 = vld [vmem:[#allocation1] sm:$0xff]
        %1280 = vrot.lane.b32.xlu0 %v1278, 7
        %v1281 = vpop.permute.xlu0 %1280
        %v1282 = vrot.slane %v1281, 4
        %v1283 = vsel %vm1265, %v1282, %v1281
        %vm1285 = vcmask 1042626
        %vm1286 = vmand %vm1285, %vm348
        %vm1287 = vcmask 817158
        %vm1288 = vmand %vm1287, %vm351
        %vm1289 = vmor %vm1288, %vm1286
        %v1290 = vld [vmem:[#allocation2 + $0xc] sm:$0x44]
        %v1291 = vsel %vm1289, %v1283, %v1290
        %1292 = vst [vmem:[#allocation2 + $0xc] sm:$0x44] %v1291
        %v1293 = vld [vmem:[%s255] sm:$0x3]
        %1295 = vst [vmem:[#allocation1] ss:$4 sm:$0xff] %v1293
        %v1296 = vld [vmem:[#allocation1] sm:$0xff]
        %v1297 = vshll.u32 %v1296, 16
        %v1299 = vrot.slane %v1297, 6
        %1300 = vrot.lane.b32.xlu0 %v1299, 6
        %v1301 = vpop.permute.xlu0 %1300
        %v1302 = vrot.slane %v1301, 4
        %vm1303 = vcmask 48128
        %v1304 = vsel %vm1303, %v1302, %v1301
        %vm1306 = vmand %vm1285, %vm369
        %vm1307 = vmand %vm1287, %vm371
        %vm1308 = vmor %vm1307, %vm1306
        %v1309 = vld [vmem:[#allocation2 + $0xc] sm:$0x44]
        %v1310 = vsel %vm1308, %v1304, %v1309
        %1311 = vst [vmem:[#allocation2 + $0xc] sm:$0x44] %v1310
        %v1312 = vld [vmem:[%s323] sm:$0x3]
        %s1314 = scalar_lea.vmem [#allocation1], 3
        %1315 = vst [vmem:[%s1314] ss:$4 sm:$0xff] %v1312
        %v1316 = vld [vmem:[#allocation1] sm:$0xff]
        %1318 = vrot.lane.b32.xlu0 %v1316, 7
        %v1319 = vpop.permute.xlu0 %1318
        %v1320 = vrot.slane %v1319, 4
        %v1321 = vsel %vm1265, %v1320, %v1319
        %vm1323 = vcmask 1043651
        %vm1324 = vmand %vm1323, %vm390
        %vm1325 = vcmask 818183
        %vm1326 = vmand %vm1325, %vm393
        %vm1327 = vmor %vm1326, %vm1324
        %v1328 = vld [vmem:[#allocation2 + $0xc] sm:$0x88]
        %v1329 = vsel %vm1327, %v1321, %v1328
        %1330 = vst [vmem:[#allocation2 + $0xc] sm:$0x88] %v1329
        %v1331 = vld [vmem:[%s340] sm:$0x3]
        %1333 = vst [vmem:[#allocation1] ss:$4 sm:$0xff] %v1331
        %v1334 = vld [vmem:[#allocation1] sm:$0xff]
        %v1335 = vshll.u32 %v1334, 16
        %v1337 = vrot.slane %v1335, 5
        %1338 = vrot.lane.b32.xlu0 %v1337, 7
        %v1339 = vpop.permute.xlu0 %1338
        %v1340 = vrot.slane %v1339, 4
        %v1341 = vsel %vm1265, %v1340, %v1339
        %vm1343 = vmand %vm1323, %vm411
        %vm1344 = vmand %vm1325, %vm413
        %vm1345 = vmor %vm1344, %vm1343
        %v1346 = vld [vmem:[#allocation2 + $0xc] sm:$0x88]
        %v1347 = vsel %vm1345, %v1341, %v1346
        %1348 = vst [vmem:[#allocation2 + $0xc] sm:$0x88] %v1347
        %v1349 = vld [vmem:[%s323] sm:$0x3]
        %1351 = vst [vmem:[#allocation1] ss:$4 sm:$0xff] %v1349
        %v1352 = vld [vmem:[#allocation1] sm:$0xff]
        %1354 = vrot.lane.b32.xlu0 %v1352, 6
        %v1355 = vpop.permute.xlu0 %1354
        %v1356 = vrot.slane %v1355, 4
        %v1357 = vsel %vm1303, %v1356, %v1355
        %v1359 = vld [vmem:[#allocation2 + $0x40] sm:$0x11]
        %v1360 = vsel %vm1214, %v1357, %v1359
        %1361 = vst [vmem:[#allocation2 + $0x40] sm:$0x11] %v1360
        %v1362 = vld [vmem:[%s469] sm:$0x3]
        %1364 = vst [vmem:[#allocation1] ss:$4 sm:$0xff] %v1362
        %v1365 = vld [vmem:[#allocation1] sm:$0xff]
        %v1366 = vshll.u32 %v1365, 16
        %1368 = vrot.lane.b32.xlu0 %v1366, 24
        %v1369 = vpop.permute.xlu0 %1368
        %v1370 = vrot.slane %v1369, 4
        %v1371 = vsel %vm1207, %v1370, %v1369
        %v1373 = vld [vmem:[#allocation2 + $0x40] sm:$0x11]
        %v1374 = vsel %vm1231, %v1371, %v1373
        %1375 = vst [vmem:[#allocation2 + $0x40] sm:$0x11] %v1374
        %v1376 = vld [vmem:[%s479] sm:$0x3]
        %s1378 = scalar_lea.vmem [#allocation1], 1
        %1379 = vst [vmem:[%s1378] ss:$4 sm:$0xff] %v1376
        %v1380 = vld [vmem:[#allocation1] sm:$0xff]
        %1382 = vrot.lane.b32.xlu0 %v1380, 24
        %v1383 = vpop.permute.xlu0 %1382
        %v1384 = vrot.slane %v1383, 4
        %v1385 = vsel %vm1207, %v1384, %v1383
        %v1387 = vld [vmem:[#allocation2 + $0x40] sm:$0x22]
        %v1388 = vsel %vm1251, %v1385, %v1387
        %1389 = vst [vmem:[#allocation2 + $0x40] sm:$0x22] %v1388
        %v1390 = vld [vmem:[%s469] sm:$0x3]
        %1392 = vst [vmem:[#allocation1] ss:$4 sm:$0xff] %v1390
        %v1393 = vld [vmem:[#allocation1] sm:$0xff]
        %v1394 = vshll.u32 %v1393, 16
        %v1396 = vrot.slane %v1394, 7
        %1397 = vrot.lane.b32.xlu0 %v1396, 23
        %v1398 = vpop.permute.xlu0 %1397
        %v1399 = vrot.slane %v1398, 4
        %v1400 = vsel %vm1244, %v1399, %v1398
        %v1402 = vld [vmem:[#allocation2 + $0x40] sm:$0x22]
        %v1403 = vsel %vm1270, %v1400, %v1402
        %1404 = vst [vmem:[#allocation2 + $0x40] sm:$0x22] %v1403
        %v1405 = vld [vmem:[%s433] sm:$0x3]
        %s1407 = scalar_lea.vmem [#allocation1], 2
        %1408 = vst [vmem:[%s1407] ss:$4 sm:$0xff] %v1405
        %v1409 = vld [vmem:[#allocation1] sm:$0xff]
        %1411 = vrot.lane.b32.xlu0 %v1409, 7
        %v1412 = vpop.permute.xlu0 %1411
        %v1413 = vrot.slane %v1412, 4
        %v1414 = vsel %vm1265, %v1413, %v1412
        %v1416 = vld [vmem:[#allocation2 + $0x40] sm:$0x44]
        %v1417 = vsel %vm1289, %v1414, %v1416
        %1418 = vst [vmem:[#allocation2 + $0x40] sm:$0x44] %v1417
        %v1419 = vld [vmem:[%s444] sm:$0x3]
        %1421 = vst [vmem:[#allocation1] ss:$4 sm:$0xff] %v1419
        %v1422 = vld [vmem:[#allocation1] sm:$0xff]
        %v1423 = vshll.u32 %v1422, 16
        %v1425 = vrot.slane %v1423, 6
        %1426 = vrot.lane.b32.xlu0 %v1425, 7
        %v1427 = vpop.permute.xlu0 %1426
        %v1428 = vrot.slane %v1427, 4
        %v1429 = vsel %vm1265, %v1428, %v1427
        %v1431 = vld [vmem:[#allocation2 + $0x40] sm:$0x44]
        %v1432 = vsel %vm1308, %v1429, %v1431
        %1433 = vst [vmem:[#allocation2 + $0x40] sm:$0x44] %v1432
        %v1434 = vld [vmem:[%s433] sm:$0x3]
        %s1436 = scalar_lea.vmem [#allocation1], 3
        %1437 = vst [vmem:[%s1436] ss:$4 sm:$0xff] %v1434
        %v1438 = vld [vmem:[#allocation1] sm:$0xff]
        %1440 = vrot.lane.b32.xlu0 %v1438, 6
        %v1441 = vpop.permute.xlu0 %1440
        %v1442 = vrot.slane %v1441, 4
        %v1443 = vsel %vm1303, %v1442, %v1441
        %v1445 = vld [vmem:[#allocation2 + $0x40] sm:$0x88]
        %v1446 = vsel %vm1327, %v1443, %v1445
        %1447 = vst [vmem:[#allocation2 + $0x40] sm:$0x88] %v1446
        %v1448 = vld [vmem:[%s469] sm:$0x3]
        %1450 = vst [vmem:[#allocation1] ss:$4 sm:$0xff] %v1448
        %v1451 = vld [vmem:[#allocation1] sm:$0xff]
        %v1452 = vshll.u32 %v1451, 16
        %v1454 = vrot.slane %v1452, 5
        %1455 = vrot.lane.b32.xlu0 %v1454, 7
        %v1456 = vpop.permute.xlu0 %1455
        %v1457 = vrot.slane %v1456, 4
        %v1458 = vsel %vm1265, %v1457, %v1456
        %v1460 = vld [vmem:[#allocation2 + $0x40] sm:$0x88]
        %v1461 = vsel %vm1345, %v1458, %v1460
        %1462 = vst [vmem:[#allocation2 + $0x40] sm:$0x88] %v1461
        %v1463 = vld [vmem:[%s479] sm:$0x3]
        %1465 = vst [vmem:[#allocation1] ss:$4 sm:$0xff] %v1463
        %v1466 = vld [vmem:[#allocation1] sm:$0xff]
        %1468 = vrot.lane.b32.xlu0 %v1466, 7
        %v1469 = vpop.permute.xlu0 %1468
        %v1470 = vrot.slane %v1469, 4
        %v1471 = vsel %vm1265, %v1470, %v1469
        %v1473 = vld [vmem:[#allocation2 + $0x74] sm:$0x11]
        %v1474 = vsel %vm1214, %v1471, %v1473
        %1475 = vst [vmem:[#allocation2 + $0x74] sm:$0x11] %v1474
        %v1476 = vld [vmem:[%s469] sm:$0x3]
        %1478 = vst [vmem:[#allocation1] ss:$4 sm:$0xff] %v1476
        %v1479 = vld [vmem:[#allocation1] sm:$0xff]
        %v1480 = vshll.u32 %v1479, 16
        %1482 = vrot.lane.b32.xlu0 %v1480, 6
        %v1483 = vpop.permute.xlu0 %1482
        %v1484 = vrot.slane %v1483, 4
        %v1485 = vsel %vm1303, %v1484, %v1483
        %v1487 = vld [vmem:[#allocation2 + $0x74] sm:$0x11]
        %v1488 = vsel %vm1231, %v1485, %v1487
        %1489 = vst [vmem:[#allocation2 + $0x74] sm:$0x11] %v1488
        %v1490 = vld [vmem:[%s582] sm:$0x3]
        %s1492 = scalar_lea.vmem [#allocation1], 1
        %1493 = vst [vmem:[%s1492] ss:$4 sm:$0xff] %v1490
        %v1494 = vld [vmem:[#allocation1] sm:$0xff]
        %1496 = vrot.lane.b32.xlu0 %v1494, 24
        %v1497 = vpop.permute.xlu0 %1496
        %v1498 = vrot.slane %v1497, 4
        %v1499 = vsel %vm1207, %v1498, %v1497
        %v1501 = vld [vmem:[#allocation2 + $0x74] sm:$0x22]
        %v1502 = vsel %vm1251, %v1499, %v1501
        %1503 = vst [vmem:[#allocation2 + $0x74] sm:$0x22] %v1502
        %v1504 = vld [vmem:[%s594] sm:$0x3]
        %1506 = vst [vmem:[#allocation1] ss:$4 sm:$0xff] %v1504
        %v1507 = vld [vmem:[#allocation1] sm:$0xff]
        %v1508 = vshll.u32 %v1507, 16
        %v1510 = vrot.slane %v1508, 7
        %1511 = vrot.lane.b32.xlu0 %v1510, 24
        %v1512 = vpop.permute.xlu0 %1511
        %v1513 = vrot.slane %v1512, 4
        %v1514 = vsel %vm1207, %v1513, %v1512
        %v1516 = vld [vmem:[#allocation2 + $0x74] sm:$0x22]
        %v1517 = vsel %vm1270, %v1514, %v1516
        %1518 = vst [vmem:[#allocation2 + $0x74] sm:$0x22] %v1517
        %v1519 = vld [vmem:[%s582] sm:$0x3]
        %s1521 = scalar_lea.vmem [#allocation1], 2
        %1522 = vst [vmem:[%s1521] ss:$4 sm:$0xff] %v1519
        %v1523 = vld [vmem:[#allocation1] sm:$0xff]
        %1525 = vrot.lane.b32.xlu0 %v1523, 23
        %v1526 = vpop.permute.xlu0 %1525
        %v1527 = vrot.slane %v1526, 4
        %v1528 = vsel %vm1244, %v1527, %v1526
        %v1530 = vld [vmem:[#allocation2 + $0x74] sm:$0x44]
        %v1531 = vsel %vm1289, %v1528, %v1530
        %1532 = vst [vmem:[#allocation2 + $0x74] sm:$0x44] %v1531
        %v1533 = vld [vmem:[%s266] sm:$0x3]
        %1535 = vst [vmem:[#allocation1] ss:$4 sm:$0xff] %v1533
        %v1536 = vld [vmem:[#allocation1] sm:$0xff]
        %v1537 = vshll.u32 %v1536, 16
        %v1539 = vrot.slane %v1537, 6
        %1540 = vrot.lane.b32.xlu0 %v1539, 7
        %v1541 = vpop.permute.xlu0 %1540
        %v1542 = vrot.slane %v1541, 4
        %v1543 = vsel %vm1265, %v1542, %v1541
        %v1545 = vld [vmem:[#allocation2 + $0x74] sm:$0x44]
        %v1546 = vsel %vm1308, %v1543, %v1545
        %1547 = vst [vmem:[#allocation2 + $0x74] sm:$0x44] %v1546
        %v1548 = vld [vmem:[%s556] sm:$0x3]
        %s1550 = scalar_lea.vmem [#allocation1], 3
        %1551 = vst [vmem:[%s1550] ss:$4 sm:$0xff] %v1548
        %v1552 = vld [vmem:[#allocation1] sm:$0xff]
        %1554 = vrot.lane.b32.xlu0 %v1552, 7
        %v1555 = vpop.permute.xlu0 %1554
        %v1556 = vrot.slane %v1555, 4
        %v1557 = vsel %vm1265, %v1556, %v1555
        %v1559 = vld [vmem:[#allocation2 + $0x74] sm:$0x88]
        %v1560 = vsel %vm1327, %v1557, %v1559
        %1561 = vst [vmem:[#allocation2 + $0x74] sm:$0x88] %v1560
        %v1562 = vld [vmem:[%s266] sm:$0x3]
        %1564 = vst [vmem:[#allocation1] ss:$4 sm:$0xff] %v1562
        %v1565 = vld [vmem:[#allocation1] sm:$0xff]
        %v1566 = vshll.u32 %v1565, 16
        %v1568 = vrot.slane %v1566, 5
        %1569 = vrot.lane.b32.xlu0 %v1568, 6
        %v1570 = vpop.permute.xlu0 %1569
        %v1571 = vrot.slane %v1570, 4
        %v1572 = vsel %vm1303, %v1571, %v1570
        %v1574 = vld [vmem:[#allocation2 + $0x74] sm:$0x88]
        %v1575 = vsel %vm1345, %v1572, %v1574
        %1576 = vst [vmem:[#allocation2 + $0x74] sm:$0x88] %v1575
        %v1577 = vld [vmem:[%s582] sm:$0x3]
        %1579 = vst [vmem:[#allocation1] ss:$4 sm:$0xff] %v1577
        %v1580 = vld [vmem:[#allocation1] sm:$0xff]
        %1582 = vrot.lane.b32.xlu0 %v1580, 7
        %v1583 = vpop.permute.xlu0 %1582
        %v1584 = vrot.slane %v1583, 4
        %v1585 = vsel %vm1265, %v1584, %v1583
        %v1587 = vld [vmem:[#allocation2 + $0xa8] sm:$0x11]
        %v1588 = vsel %vm1214, %v1585, %v1587
        %1589 = vst [vmem:[#allocation2 + $0xa8] sm:$0x11] %v1588
        %v1590 = vld [vmem:[%s594] sm:$0x3]
        %1592 = vst [vmem:[#allocation1] ss:$4 sm:$0xff] %v1590
        %v1593 = vld [vmem:[#allocation1] sm:$0xff]
        %v1594 = vshll.u32 %v1593, 16
        %1596 = vrot.lane.b32.xlu0 %v1594, 7
        %v1597 = vpop.permute.xlu0 %1596
        %v1598 = vrot.slane %v1597, 4
        %v1599 = vsel %vm1265, %v1598, %v1597
        %v1601 = vld [vmem:[#allocation2 + $0xa8] sm:$0x11]
        %v1602 = vsel %vm1231, %v1599, %v1601
        %1603 = vst [vmem:[#allocation2 + $0xa8] sm:$0x11] %v1602
        %v1604 = vld [vmem:[%s582] sm:$0x3]
        %s1606 = scalar_lea.vmem [#allocation1], 1
        %1607 = vst [vmem:[%s1606] ss:$4 sm:$0xff] %v1604
        %v1608 = vld [vmem:[#allocation1] sm:$0xff]
        %1610 = vrot.lane.b32.xlu0 %v1608, 6
        %v1611 = vpop.permute.xlu0 %1610
        %v1612 = vrot.slane %v1611, 4
        %v1613 = vsel %vm1303, %v1612, %v1611
        %v1615 = vld [vmem:[#allocation2 + $0xa8] sm:$0x22]
        %v1616 = vsel %vm1251, %v1613, %v1615
        %1617 = vst [vmem:[#allocation2 + $0xa8] sm:$0x22] %v1616
        %v1618 = vld [vmem:[%s340] sm:$0x3]
        %1620 = vst [vmem:[#allocation1] ss:$4 sm:$0xff] %v1618
        %v1621 = vld [vmem:[#allocation1] sm:$0xff]
        %1623 = vrot.lane.b32.xlu0 %v1621, 100
        %v1624 = vpop.permute.xlu0 %1623
        %v1625 = vrot.slane %v1624, 4
        %vm1626 = vcmask 818176
        %v1627 = vsel %vm1626, %v1625, %v1624
        %vm1630 = vcmask 1041184
        %vm1631 = vmand %vm1630, %vm276
        %vm1632 = vmor %vm675, %vm1631
        %v1633 = vld [vmem:[#allocation2 + $0x10] sm:$0x11]
        %v1634 = vsel %vm1632, %v1627, %v1633
        %1635 = vst [vmem:[#allocation2 + $0x10] sm:$0x11] %v1634
        %vm1636 = vcmask 385024
        %vm1637 = vmand %vm1636, %vm276
        %v1638 = vld [vmem:[#allocation2 + $0x18] sm:$0x1]
        %v1639 = vsel %vm1637, %v1625, %v1638
        %1640 = vst [vmem:[#allocation2 + $0x18] sm:$0x1] %v1639
        %v1641 = vld [vmem:[%s323] sm:$0x3]
        %1643 = vst [vmem:[#allocation1] ss:$4 sm:$0xff] %v1641
        %v1644 = vld [vmem:[#allocation1] sm:$0xff]
        %v1645 = vshll.u32 %v1644, 16
        %1647 = vrot.lane.b32.xlu0 %v1645, 99
        %v1648 = vpop.permute.xlu0 %1647
        %v1649 = vrot.slane %v1648, 4
        %vm1650 = vcmask 809984
        %v1651 = vsel %vm1650, %v1649, %v1648
        %vm1654 = vmand %vm1630, %vm293
        %vm1655 = vmor %vm699, %vm1654
        %v1656 = vld [vmem:[#allocation2 + $0x10] sm:$0x11]
        %v1657 = vsel %vm1655, %v1651, %v1656
        %1658 = vst [vmem:[#allocation2 + $0x10] sm:$0x11] %v1657
        %vm1659 = vmand %vm1636, %vm293
        %v1660 = vld [vmem:[#allocation2 + $0x18] sm:$0x1]
        %v1661 = vsel %vm1659, %v1649, %v1660
        %1662 = vst [vmem:[#allocation2 + $0x18] sm:$0x1] %v1661
        %v1663 = vld [vmem:[%s340] sm:$0x3]
        %s1665 = scalar_lea.vmem [#allocation1], 1
        %1666 = vst [vmem:[%s1665] ss:$4 sm:$0xff] %v1663
        %v1667 = vld [vmem:[#allocation1] sm:$0xff]
        %1669 = vrot.lane.b32.xlu0 %v1667, 99
        %v1670 = vpop.permute.xlu0 %1669
        %v1671 = vrot.slane %v1670, 4
        %v1672 = vsel %vm1650, %v1671, %v1670
        %vm1675 = vcmask 1042209
        %vm1676 = vmand %vm1675, %vm314
        %vm1677 = vmor %vm723, %vm1676
        %v1678 = vld [vmem:[#allocation2 + $0x10] sm:$0x22]
        %v1679 = vsel %vm1677, %v1672, %v1678
        %1680 = vst [vmem:[#allocation2 + $0x10] sm:$0x22] %v1679
        %vm1681 = vcmask 386049
        %vm1682 = vmand %vm1681, %vm314
        %v1683 = vld [vmem:[#allocation2 + $0x18] sm:$0x2]
        %v1684 = vsel %vm1682, %v1671, %v1683
        %1685 = vst [vmem:[#allocation2 + $0x18] sm:$0x2] %v1684
        %v1686 = vld [vmem:[%s285] sm:$0x3]
        %1688 = vst [vmem:[#allocation1] ss:$4 sm:$0xff] %v1686
        %v1689 = vld [vmem:[#allocation1] sm:$0xff]
        %v1690 = vshll.u32 %v1689, 16
        %v1692 = vrot.slane %v1690, 7
        %1693 = vrot.lane.b32.xlu0 %v1692, 83
        %v1694 = vpop.permute.xlu0 %1693
        %v1695 = vrot.slane %v1694, 4
        %vm1696 = vcmask 678912
        %v1697 = vsel %vm1696, %v1695, %v1694
        %vm1700 = vmand %vm1675, %vm332
        %vm1701 = vmor %vm747, %vm1700
        %v1702 = vld [vmem:[#allocation2 + $0x10] sm:$0x22]
        %v1703 = vsel %vm1701, %v1697, %v1702
        %1704 = vst [vmem:[#allocation2 + $0x10] sm:$0x22] %v1703
        %vm1705 = vmand %vm1681, %vm332
        %v1706 = vld [vmem:[#allocation2 + $0x18] sm:$0x2]
        %v1707 = vsel %vm1705, %v1695, %v1706
        %1708 = vst [vmem:[#allocation2 + $0x18] sm:$0x2] %v1707
        %v1709 = vld [vmem:[%s255] sm:$0x3]
        %s1711 = scalar_lea.vmem [#allocation1], 2
        %1712 = vst [vmem:[%s1711] ss:$4 sm:$0xff] %v1709
        %v1713 = vld [vmem:[#allocation1] sm:$0xff]
        %1715 = vrot.lane.b32.xlu0 %v1713, 82
        %v1716 = vpop.permute.xlu0 %1715
        %v1717 = vrot.slane %v1716, 4
        %vm1718 = vcmask 670720
        %v1719 = vsel %vm1718, %v1717, %v1716
        %vm1722 = vcmask 1043234
        %vm1723 = vmand %vm1722, %vm348
        %vm1724 = vmor %vm771, %vm1723
        %v1725 = vld [vmem:[#allocation2 + $0x10] sm:$0x44]
        %v1726 = vsel %vm1724, %v1719, %v1725
        %1727 = vst [vmem:[#allocation2 + $0x10] sm:$0x44] %v1726
        %vm1728 = vcmask 387074
        %vm1729 = vmand %vm1728, %vm348
        %v1730 = vld [vmem:[#allocation2 + $0x18] sm:$0x4]
        %v1731 = vsel %vm1729, %v1717, %v1730
        %1732 = vst [vmem:[#allocation2 + $0x18] sm:$0x4] %v1731
        %v1733 = vld [vmem:[%s285] sm:$0x3]
        %1735 = vst [vmem:[#allocation1] ss:$4 sm:$0xff] %v1733
        %v1736 = vld [vmem:[#allocation1] sm:$0xff]
        %v1737 = vshll.u32 %v1736, 16
        %v1739 = vrot.slane %v1737, 6
        %1740 = vrot.lane.b32.xlu0 %v1739, 82
        %v1741 = vpop.permute.xlu0 %1740
        %v1742 = vrot.slane %v1741, 4
        %v1743 = vsel %vm1718, %v1742, %v1741
        %vm1746 = vmand %vm1722, %vm369
        %vm1747 = vmor %vm795, %vm1746
        %v1748 = vld [vmem:[#allocation2 + $0x10] sm:$0x44]
        %v1749 = vsel %vm1747, %v1743, %v1748
        %1750 = vst [vmem:[#allocation2 + $0x10] sm:$0x44] %v1749
        %vm1751 = vmand %vm1728, %vm369
        %v1752 = vld [vmem:[#allocation2 + $0x18] sm:$0x4]
        %v1753 = vsel %vm1751, %v1742, %v1752
        %1754 = vst [vmem:[#allocation2 + $0x18] sm:$0x4] %v1753
        %v1755 = vld [vmem:[%s340] sm:$0x3]
        %s1757 = scalar_lea.vmem [#allocation1], 3
        %1758 = vst [vmem:[%s1757] ss:$4 sm:$0xff] %v1755
        %v1759 = vld [vmem:[#allocation1] sm:$0xff]
        %1761 = vrot.lane.b32.xlu0 %v1759, 83
        %v1762 = vpop.permute.xlu0 %1761
        %v1763 = vrot.slane %v1762, 4
        %v1764 = vsel %vm1696, %v1763, %v1762
        %vm1767 = vcmask 1044259
        %vm1768 = vmand %vm1767, %vm390
        %vm1769 = vmor %vm820, %vm1768
        %v1770 = vld [vmem:[#allocation2 + $0x10] sm:$0x88]
        %v1771 = vsel %vm1769, %v1764, %v1770
        %1772 = vst [vmem:[#allocation2 + $0x10] sm:$0x88] %v1771
        %vm1773 = vcmask 388099
        %vm1774 = vmand %vm1773, %vm390
        %v1775 = vld [vmem:[#allocation2 + $0x18] sm:$0x8]
        %v1776 = vsel %vm1774, %v1763, %v1775
        %1777 = vst [vmem:[#allocation2 + $0x18] sm:$0x8] %v1776
        %v1778 = vld [vmem:[%s323] sm:$0x3]
        %1780 = vst [vmem:[#allocation1] ss:$4 sm:$0xff] %v1778
        %v1781 = vld [vmem:[#allocation1] sm:$0xff]
        %v1782 = vshll.u32 %v1781, 16
        %v1784 = vrot.slane %v1782, 5
        %1785 = vrot.lane.b32.xlu0 %v1784, 82
        %v1786 = vpop.permute.xlu0 %1785
        %v1787 = vrot.slane %v1786, 4
        %v1788 = vsel %vm1718, %v1787, %v1786
        %vm1791 = vmand %vm1767, %vm411
        %vm1792 = vmor %vm845, %vm1791
        %v1793 = vld [vmem:[#allocation2 + $0x10] sm:$0x88]
        %v1794 = vsel %vm1792, %v1788, %v1793
        %1795 = vst [vmem:[#allocation2 + $0x10] sm:$0x88] %v1794
        %vm1796 = vmand %vm1773, %vm411
        %v1797 = vld [vmem:[#allocation2 + $0x18] sm:$0x8]
        %v1798 = vsel %vm1796, %v1787, %v1797
        %1799 = vst [vmem:[#allocation2 + $0x18] sm:$0x8] %v1798
        %v1800 = vld [vmem:[%s340] sm:$0x3]
        %1802 = vst [vmem:[#allocation1] ss:$4 sm:$0xff] %v1800
        %v1803 = vld [vmem:[#allocation1] sm:$0xff]
        %1805 = vrot.lane.b32.xlu0 %v1803, 82
        %v1806 = vpop.permute.xlu0 %1805
        %v1807 = vrot.slane %v1806, 4
        %v1808 = vsel %vm1718, %v1807, %v1806
        %v1811 = vld [vmem:[#allocation2 + $0x44] sm:$0x11]
        %v1812 = vsel %vm1632, %v1808, %v1811
        %1813 = vst [vmem:[#allocation2 + $0x44] sm:$0x11] %v1812
        %v1814 = vld [vmem:[#allocation2 + $0x4c] sm:$0x1]
        %v1815 = vsel %vm1637, %v1807, %v1814
        %1816 = vst [vmem:[#allocation2 + $0x4c] sm:$0x1] %v1815
        %v1817 = vld [vmem:[%s479] sm:$0x3]
        %1819 = vst [vmem:[#allocation1] ss:$4 sm:$0xff] %v1817
        %v1820 = vld [vmem:[#allocation1] sm:$0xff]
        %v1821 = vshll.u32 %v1820, 16
        %1823 = vrot.lane.b32.xlu0 %v1821, 100
        %v1824 = vpop.permute.xlu0 %1823
        %v1825 = vrot.slane %v1824, 4
        %v1826 = vsel %vm1626, %v1825, %v1824
        %v1829 = vld [vmem:[#allocation2 + $0x44] sm:$0x11]
        %v1830 = vsel %vm1655, %v1826, %v1829
        %1831 = vst [vmem:[#allocation2 + $0x44] sm:$0x11] %v1830
        %v1832 = vld [vmem:[#allocation2 + $0x4c] sm:$0x1]
        %v1833 = vsel %vm1659, %v1825, %v1832
        %1834 = vst [vmem:[#allocation2 + $0x4c] sm:$0x1] %v1833
        %v1835 = vld [vmem:[%s469] sm:$0x3]
        %s1837 = scalar_lea.vmem [#allocation1], 1
        %1838 = vst [vmem:[%s1837] ss:$4 sm:$0xff] %v1835
        %v1839 = vld [vmem:[#allocation1] sm:$0xff]
        %1841 = vrot.lane.b32.xlu0 %v1839, 99
        %v1842 = vpop.permute.xlu0 %1841
        %v1843 = vrot.slane %v1842, 4
        %v1844 = vsel %vm1650, %v1843, %v1842
        %v1847 = vld [vmem:[#allocation2 + $0x44] sm:$0x22]
        %v1848 = vsel %vm1677, %v1844, %v1847
        %1849 = vst [vmem:[#allocation2 + $0x44] sm:$0x22] %v1848
        %v1850 = vld [vmem:[#allocation2 + $0x4c] sm:$0x2]
        %v1851 = vsel %vm1682, %v1843, %v1850
        %1852 = vst [vmem:[#allocation2 + $0x4c] sm:$0x2] %v1851
        %v1853 = vld [vmem:[%s479] sm:$0x3]
        %1855 = vst [vmem:[#allocation1] ss:$4 sm:$0xff] %v1853
        %v1856 = vld [vmem:[#allocation1] sm:$0xff]
        %v1857 = vshll.u32 %v1856, 16
        %v1859 = vrot.slane %v1857, 7
        %1860 = vrot.lane.b32.xlu0 %v1859, 99
        %v1861 = vpop.permute.xlu0 %1860
        %v1862 = vrot.slane %v1861, 4
        %v1863 = vsel %vm1650, %v1862, %v1861
        %v1866 = vld [vmem:[#allocation2 + $0x44] sm:$0x22]
        %v1867 = vsel %vm1701, %v1863, %v1866
        %1868 = vst [vmem:[#allocation2 + $0x44] sm:$0x22] %v1867
        %v1869 = vld [vmem:[#allocation2 + $0x4c] sm:$0x2]
        %v1870 = vsel %vm1705, %v1862, %v1869
        %1871 = vst [vmem:[#allocation2 + $0x4c] sm:$0x2] %v1870
        %v1872 = vld [vmem:[%s444] sm:$0x3]
        %s1874 = scalar_lea.vmem [#allocation1], 2
        %1875 = vst [vmem:[%s1874] ss:$4 sm:$0xff] %v1872
        %v1876 = vld [vmem:[#allocation1] sm:$0xff]
        %1878 = vrot.lane.b32.xlu0 %v1876, 83
        %v1879 = vpop.permute.xlu0 %1878
        %v1880 = vrot.slane %v1879, 4
        %v1881 = vsel %vm1696, %v1880, %v1879
        %v1884 = vld [vmem:[#allocation2 + $0x44] sm:$0x44]
        %v1885 = vsel %vm1724, %v1881, %v1884
        %1886 = vst [vmem:[#allocation2 + $0x44] sm:$0x44] %v1885
        %v1887 = vld [vmem:[#allocation2 + $0x4c] sm:$0x4]
        %v1888 = vsel %vm1729, %v1880, %v1887
        %1889 = vst [vmem:[#allocation2 + $0x4c] sm:$0x4] %v1888
        %v1890 = vld [vmem:[%s433] sm:$0x3]
        %1892 = vst [vmem:[#allocation1] ss:$4 sm:$0xff] %v1890
        %v1893 = vld [vmem:[#allocation1] sm:$0xff]
        %v1894 = vshll.u32 %v1893, 16
        %v1896 = vrot.slane %v1894, 6
        %1897 = vrot.lane.b32.xlu0 %v1896, 82
        %v1898 = vpop.permute.xlu0 %1897
        %v1899 = vrot.slane %v1898, 4
        %v1900 = vsel %vm1718, %v1899, %v1898
        %v1903 = vld [vmem:[#allocation2 + $0x44] sm:$0x44]
        %v1904 = vsel %vm1747, %v1900, %v1903
        %1905 = vst [vmem:[#allocation2 + $0x44] sm:$0x44] %v1904
        %v1906 = vld [vmem:[#allocation2 + $0x4c] sm:$0x4]
        %v1907 = vsel %vm1751, %v1899, %v1906
        %1908 = vst [vmem:[#allocation2 + $0x4c] sm:$0x4] %v1907
        %v1909 = vld [vmem:[%s444] sm:$0x3]
        %s1911 = scalar_lea.vmem [#allocation1], 3
        %1912 = vst [vmem:[%s1911] ss:$4 sm:$0xff] %v1909
        %v1913 = vld [vmem:[#allocation1] sm:$0xff]
        %1915 = vrot.lane.b32.xlu0 %v1913, 82
        %v1916 = vpop.permute.xlu0 %1915
        %v1917 = vrot.slane %v1916, 4
        %v1918 = vsel %vm1718, %v1917, %v1916
        %v1921 = vld [vmem:[#allocation2 + $0x44] sm:$0x88]
        %v1922 = vsel %vm1769, %v1918, %v1921
        %1923 = vst [vmem:[#allocation2 + $0x44] sm:$0x88] %v1922
        %v1924 = vld [vmem:[#allocation2 + $0x4c] sm:$0x8]
        %v1925 = vsel %vm1774, %v1917, %v1924
        %1926 = vst [vmem:[#allocation2 + $0x4c] sm:$0x8] %v1925
        %v1927 = vld [vmem:[%s479] sm:$0x3]
        %1929 = vst [vmem:[#allocation1] ss:$4 sm:$0xff] %v1927
        %v1930 = vld [vmem:[#allocation1] sm:$0xff]
        %v1931 = vshll.u32 %v1930, 16
        %v1933 = vrot.slane %v1931, 5
        %1934 = vrot.lane.b32.xlu0 %v1933, 83
        %v1935 = vpop.permute.xlu0 %1934
        %v1936 = vrot.slane %v1935, 4
        %v1937 = vsel %vm1696, %v1936, %v1935
        %v1940 = vld [vmem:[#allocation2 + $0x44] sm:$0x88]
        %v1941 = vsel %vm1792, %v1937, %v1940
        %1942 = vst [vmem:[#allocation2 + $0x44] sm:$0x88] %v1941
        %v1943 = vld [vmem:[#allocation2 + $0x4c] sm:$0x8]
        %v1944 = vsel %vm1796, %v1936, %v1943
        %1945 = vst [vmem:[#allocation2 + $0x4c] sm:$0x8] %v1944
        %v1946 = vld [vmem:[%s469] sm:$0x3]
        %1948 = vst [vmem:[#allocation1] ss:$4 sm:$0xff] %v1946
        %v1949 = vld [vmem:[#allocation1] sm:$0xff]
        %1951 = vrot.lane.b32.xlu0 %v1949, 82
        %v1952 = vpop.permute.xlu0 %1951
        %v1953 = vrot.slane %v1952, 4
        %v1954 = vsel %vm1718, %v1953, %v1952
        %v1957 = vld [vmem:[#allocation2 + $0x78] sm:$0x11]
        %v1958 = vsel %vm1632, %v1954, %v1957
        %1959 = vst [vmem:[#allocation2 + $0x78] sm:$0x11] %v1958
        %v1960 = vld [vmem:[#allocation2 + $0x80] sm:$0x1]
        %v1961 = vsel %vm1637, %v1953, %v1960
        %1962 = vst [vmem:[#allocation2 + $0x80] sm:$0x1] %v1961
        %v1963 = vld [vmem:[%s479] sm:$0x3]
        %1965 = vst [vmem:[#allocation1] ss:$4 sm:$0xff] %v1963
        %v1966 = vld [vmem:[#allocation1] sm:$0xff]
        %v1967 = vshll.u32 %v1966, 16
        %1969 = vrot.lane.b32.xlu0 %v1967, 82
        %v1970 = vpop.permute.xlu0 %1969
        %v1971 = vrot.slane %v1970, 4
        %v1972 = vsel %vm1718, %v1971, %v1970
        %v1975 = vld [vmem:[#allocation2 + $0x78] sm:$0x11]
        %v1976 = vsel %vm1655, %v1972, %v1975
        %1977 = vst [vmem:[#allocation2 + $0x78] sm:$0x11] %v1976
        %v1978 = vld [vmem:[#allocation2 + $0x80] sm:$0x1]
        %v1979 = vsel %vm1659, %v1971, %v1978
        %1980 = vst [vmem:[#allocation2 + $0x80] sm:$0x1] %v1979
        %v1981 = vld [vmem:[%s594] sm:$0x3]
        %s1983 = scalar_lea.vmem [#allocation1], 1
        %1984 = vst [vmem:[%s1983] ss:$4 sm:$0xff] %v1981
        %v1985 = vld [vmem:[#allocation1] sm:$0xff]
        %1987 = vrot.lane.b32.xlu0 %v1985, 100
        %v1988 = vpop.permute.xlu0 %1987
        %v1989 = vrot.slane %v1988, 4
        %v1990 = vsel %vm1626, %v1989, %v1988
        %v1993 = vld [vmem:[#allocation2 + $0x78] sm:$0x22]
        %v1994 = vsel %vm1677, %v1990, %v1993
        %1995 = vst [vmem:[#allocation2 + $0x78] sm:$0x22] %v1994
        %v1996 = vld [vmem:[#allocation2 + $0x80] sm:$0x2]
        %v1997 = vsel %vm1682, %v1989, %v1996
        %1998 = vst [vmem:[#allocation2 + $0x80] sm:$0x2] %v1997
        %v1999 = vld [vmem:[%s582] sm:$0x3]
        %2001 = vst [vmem:[#allocation1] ss:$4 sm:$0xff] %v1999
        %v2002 = vld [vmem:[#allocation1] sm:$0xff]
        %v2003 = vshll.u32 %v2002, 16
        %v2005 = vrot.slane %v2003, 7
        %2006 = vrot.lane.b32.xlu0 %v2005, 99
        %v2007 = vpop.permute.xlu0 %2006
        %v2008 = vrot.slane %v2007, 4
        %v2009 = vsel %vm1650, %v2008, %v2007
        %v2012 = vld [vmem:[#allocation2 + $0x78] sm:$0x22]
        %v2013 = vsel %vm1701, %v2009, %v2012
        %2014 = vst [vmem:[#allocation2 + $0x78] sm:$0x22] %v2013
        %v2015 = vld [vmem:[#allocation2 + $0x80] sm:$0x2]
        %v2016 = vsel %vm1705, %v2008, %v2015
        %2017 = vst [vmem:[#allocation2 + $0x80] sm:$0x2] %v2016
        %v2018 = vld [vmem:[%s594] sm:$0x3]
        %s2020 = scalar_lea.vmem [#allocation1], 2
        %2021 = vst [vmem:[%s2020] ss:$4 sm:$0xff] %v2018
        %v2022 = vld [vmem:[#allocation1] sm:$0xff]
        %2024 = vrot.lane.b32.xlu0 %v2022, 99
        %v2025 = vpop.permute.xlu0 %2024
        %v2026 = vrot.slane %v2025, 4
        %v2027 = vsel %vm1650, %v2026, %v2025
        %v2030 = vld [vmem:[#allocation2 + $0x78] sm:$0x44]
        %v2031 = vsel %vm1724, %v2027, %v2030
        %2032 = vst [vmem:[#allocation2 + $0x78] sm:$0x44] %v2031
        %v2033 = vld [vmem:[#allocation2 + $0x80] sm:$0x4]
        %v2034 = vsel %vm1729, %v2026, %v2033
        %2035 = vst [vmem:[#allocation2 + $0x80] sm:$0x4] %v2034
        %v2036 = vld [vmem:[%s556] sm:$0x3]
        %2038 = vst [vmem:[#allocation1] ss:$4 sm:$0xff] %v2036
        %v2039 = vld [vmem:[#allocation1] sm:$0xff]
        %v2040 = vshll.u32 %v2039, 16
        %v2042 = vrot.slane %v2040, 6
        %2043 = vrot.lane.b32.xlu0 %v2042, 83
        %v2044 = vpop.permute.xlu0 %2043
        %v2045 = vrot.slane %v2044, 4
        %v2046 = vsel %vm1696, %v2045, %v2044
        %v2049 = vld [vmem:[#allocation2 + $0x78] sm:$0x44]
        %v2050 = vsel %vm1747, %v2046, %v2049
        %2051 = vst [vmem:[#allocation2 + $0x78] sm:$0x44] %v2050
        %v2052 = vld [vmem:[#allocation2 + $0x80] sm:$0x4]
        %v2053 = vsel %vm1751, %v2045, %v2052
        %2054 = vst [vmem:[#allocation2 + $0x80] sm:$0x4] %v2053
        %v2055 = vld [vmem:[%s266] sm:$0x3]
        %s2057 = scalar_lea.vmem [#allocation1], 3
        %2058 = vst [vmem:[%s2057] ss:$4 sm:$0xff] %v2055
        %v2059 = vld [vmem:[#allocation1] sm:$0xff]
        %2061 = vrot.lane.b32.xlu0 %v2059, 82
        %v2062 = vpop.permute.xlu0 %2061
        %v2063 = vrot.slane %v2062, 4
        %v2064 = vsel %vm1718, %v2063, %v2062
        %v2067 = vld [vmem:[#allocation2 + $0x78] sm:$0x88]
        %v2068 = vsel %vm1769, %v2064, %v2067
        %2069 = vst [vmem:[#allocation2 + $0x78] sm:$0x88] %v2068
        %v2070 = vld [vmem:[#allocation2 + $0x80] sm:$0x8]
        %v2071 = vsel %vm1774, %v2063, %v2070
        %2072 = vst [vmem:[#allocation2 + $0x80] sm:$0x8] %v2071
        %v2073 = vld [vmem:[%s556] sm:$0x3]
        %2075 = vst [vmem:[#allocation1] ss:$4 sm:$0xff] %v2073
        %v2076 = vld [vmem:[#allocation1] sm:$0xff]
        %v2077 = vshll.u32 %v2076, 16
        %v2079 = vrot.slane %v2077, 5
        %2080 = vrot.lane.b32.xlu0 %v2079, 82
        %v2081 = vpop.permute.xlu0 %2080
        %v2082 = vrot.slane %v2081, 4
        %v2083 = vsel %vm1718, %v2082, %v2081
        %v2086 = vld [vmem:[#allocation2 + $0x78] sm:$0x88]
        %v2087 = vsel %vm1792, %v2083, %v2086
        %2088 = vst [vmem:[#allocation2 + $0x78] sm:$0x88] %v2087
        %v2089 = vld [vmem:[#allocation2 + $0x80] sm:$0x8]
        %v2090 = vsel %vm1796, %v2082, %v2089
        %2091 = vst [vmem:[#allocation2 + $0x80] sm:$0x8] %v2090
        %v2092 = vld [vmem:[%s594] sm:$0x3]
        %2094 = vst [vmem:[#allocation1] ss:$4 sm:$0xff] %v2092
        %v2095 = vld [vmem:[#allocation1] sm:$0xff]
        %2097 = vrot.lane.b32.xlu0 %v2095, 83
        %v2098 = vpop.permute.xlu0 %2097
        %v2099 = vrot.slane %v2098, 4
        %v2100 = vsel %vm1696, %v2099, %v2098
        %v2103 = vld [vmem:[#allocation2 + $0xac] sm:$0x11]
        %v2104 = vsel %vm1632, %v2100, %v2103
        %2105 = vst [vmem:[#allocation2 + $0xac] sm:$0x11] %v2104
        %v2106 = vld [vmem:[#allocation2 + $0xb4] sm:$0x1]
        %v2107 = vsel %vm1637, %v2099, %v2106
        %2108 = vst [vmem:[#allocation2 + $0xb4] sm:$0x1] %v2107
        %v2109 = vld [vmem:[%s582] sm:$0x3]
        %2111 = vst [vmem:[#allocation1] ss:$4 sm:$0xff] %v2109
        %v2112 = vld [vmem:[#allocation1] sm:$0xff]
        %v2113 = vshll.u32 %v2112, 16
        %2115 = vrot.lane.b32.xlu0 %v2113, 82
        %v2116 = vpop.permute.xlu0 %2115
        %v2117 = vrot.slane %v2116, 4
        %v2118 = vsel %vm1718, %v2117, %v2116
        %v2121 = vld [vmem:[#allocation2 + $0xac] sm:$0x11]
        %v2122 = vsel %vm1655, %v2118, %v2121
        %2123 = vst [vmem:[#allocation2 + $0xac] sm:$0x11] %v2122
        %v2124 = vld [vmem:[#allocation2 + $0xb4] sm:$0x1]
        %v2125 = vsel %vm1659, %v2117, %v2124
        %2126 = vst [vmem:[#allocation2 + $0xb4] sm:$0x1] %v2125
        %v2127 = vld [vmem:[%s594] sm:$0x3]
        %s2129 = scalar_lea.vmem [#allocation1], 1
        %2130 = vst [vmem:[%s2129] ss:$4 sm:$0xff] %v2127
        %v2131 = vld [vmem:[#allocation1] sm:$0xff]
        %2133 = vrot.lane.b32.xlu0 %v2131, 82
        %v2134 = vpop.permute.xlu0 %2133
        %v2135 = vrot.slane %v2134, 4
        %v2136 = vsel %vm1718, %v2135, %v2134
        %v2139 = vld [vmem:[#allocation2 + $0xac] sm:$0x22]
        %v2140 = vsel %vm1677, %v2136, %v2139
        %2141 = vst [vmem:[#allocation2 + $0xac] sm:$0x22] %v2140
        %v2142 = vld [vmem:[#allocation2 + $0xb4] sm:$0x2]
        %v2143 = vsel %vm1682, %v2135, %v2142
        %2144 = vst [vmem:[#allocation2 + $0xb4] sm:$0x2] %v2143
        %v2145 = vld [vmem:[%s433] sm:$0x3]
        %2147 = vst [vmem:[#allocation1] ss:$4 sm:$0xff] %v2145
        %v2148 = vld [vmem:[#allocation1] sm:$0xff]
        %2150 = vrot.lane.b32.xlu0 %v2148, 48
        %v2151 = vpop.permute.xlu0 %2150
        %v2152 = vrot.slane %v2151, 4
        %vm2153 = vcmask 392192
        %v2154 = vsel %vm2153, %v2152, %v2151
        %vm2156 = vcmask 1040768
        %vm2157 = vmand %vm2156, %vm276
        %vm2158 = vcmask 1011716
        %vm2159 = vmand %vm2158, %vm279
        %vm2160 = vmor %vm2159, %vm2157
        %v2161 = vld [vmem:[#allocation2 + $0x18] sm:$0x11]
        %v2162 = vsel %vm2160, %v2154, %v2161
        %2163 = vst [vmem:[#allocation2 + $0x18] sm:$0x11] %v2162
        %v2164 = vld [vmem:[%s444] sm:$0x3]
        %2166 = vst [vmem:[#allocation1] ss:$4 sm:$0xff] %v2164
        %v2167 = vld [vmem:[#allocation1] sm:$0xff]
        %v2168 = vshll.u32 %v2167, 16
        %2170 = vrot.lane.b32.xlu0 %v2168, 48
        %v2171 = vpop.permute.xlu0 %2170
        %v2172 = vrot.slane %v2171, 4
        %v2173 = vsel %vm2153, %v2172, %v2171
        %vm2175 = vmand %vm2156, %vm293
        %vm2176 = vmand %vm2158, %vm295
        %vm2177 = vmor %vm2176, %vm2175
        %v2178 = vld [vmem:[#allocation2 + $0x18] sm:$0x11]
        %v2179 = vsel %vm2177, %v2173, %v2178
        %2180 = vst [vmem:[#allocation2 + $0x18] sm:$0x11] %v2179
        %v2181 = vld [vmem:[%s433] sm:$0x3]
        %s2183 = scalar_lea.vmem [#allocation1], 1
        %2184 = vst [vmem:[%s2183] ss:$4 sm:$0xff] %v2181
        %v2185 = vld [vmem:[#allocation1] sm:$0xff]
        %2187 = vrot.lane.b32.xlu0 %v2185, 47
        %v2188 = vpop.permute.xlu0 %2187
        %v2189 = vrot.slane %v2188, 4
        %vm2190 = vcmask 384000
        %v2191 = vsel %vm2190, %v2189, %v2188
        %vm2193 = vcmask 1041793
        %vm2194 = vmand %vm2193, %vm314
        %vm2195 = vcmask 1012741
        %vm2196 = vmand %vm2195, %vm317
        %vm2197 = vmor %vm2196, %vm2194
        %v2198 = vld [vmem:[#allocation2 + $0x18] sm:$0x22]
        %v2199 = vsel %vm2197, %v2191, %v2198
        %2200 = vst [vmem:[#allocation2 + $0x18] sm:$0x22] %v2199
        %v2201 = vld [vmem:[%s469] sm:$0x3]
        %2203 = vst [vmem:[#allocation1] ss:$4 sm:$0xff] %v2201
        %v2204 = vld [vmem:[#allocation1] sm:$0xff]
        %v2205 = vshll.u32 %v2204, 16
        %v2207 = vrot.slane %v2205, 7
        %2208 = vrot.lane.b32.xlu0 %v2207, 48
        %v2209 = vpop.permute.xlu0 %2208
        %v2210 = vrot.slane %v2209, 4
        %v2211 = vsel %vm2153, %v2210, %v2209
        %vm2213 = vmand %vm2193, %vm332
        %vm2214 = vmand %vm2195, %vm334
        %vm2215 = vmor %vm2214, %vm2213
        %v2216 = vld [vmem:[#allocation2 + $0x18] sm:$0x22]
        %v2217 = vsel %vm2215, %v2211, %v2216
        %2218 = vst [vmem:[#allocation2 + $0x18] sm:$0x22] %v2217
        %v2219 = vld [vmem:[%s479] sm:$0x3]
        %s2221 = scalar_lea.vmem [#allocation1], 2
        %2222 = vst [vmem:[%s2221] ss:$4 sm:$0xff] %v2219
        %v2223 = vld [vmem:[#allocation1] sm:$0xff]
        %2225 = vrot.lane.b32.xlu0 %v2223, 48
        %v2226 = vpop.permute.xlu0 %2225
        %v2227 = vrot.slane %v2226, 4
        %v2228 = vsel %vm2153, %v2227, %v2226
        %vm2230 = vcmask 1042818
        %vm2231 = vmand %vm2230, %vm348
        %vm2232 = vcmask 1013766
        %vm2233 = vmand %vm2232, %vm351
        %vm2234 = vmor %vm2233, %vm2231
        %v2235 = vld [vmem:[#allocation2 + $0x18] sm:$0x44]
        %v2236 = vsel %vm2234, %v2228, %v2235
        %2237 = vst [vmem:[#allocation2 + $0x18] sm:$0x44] %v2236
        %v2238 = vld [vmem:[%s469] sm:$0x3]
        %2240 = vst [vmem:[#allocation1] ss:$4 sm:$0xff] %v2238
        %v2241 = vld [vmem:[#allocation1] sm:$0xff]
        %v2242 = vshll.u32 %v2241, 16
        %v2244 = vrot.slane %v2242, 6
        %2245 = vrot.lane.b32.xlu0 %v2244, 47
        %v2246 = vpop.permute.xlu0 %2245
        %v2247 = vrot.slane %v2246, 4
        %v2248 = vsel %vm2190, %v2247, %v2246
        %vm2250 = vmand %vm2230, %vm369
        %vm2251 = vmand %vm2232, %vm371
        %vm2252 = vmor %vm2251, %vm2250
        %v2253 = vld [vmem:[#allocation2 + $0x18] sm:$0x44]
        %v2254 = vsel %vm2252, %v2248, %v2253
        %2255 = vst [vmem:[#allocation2 + $0x18] sm:$0x44] %v2254
        %v2256 = vld [vmem:[%s433] sm:$0x3]
        %s2258 = scalar_lea.vmem [#allocation1], 3
        %2259 = vst [vmem:[%s2258] ss:$4 sm:$0xff] %v2256
        %v2260 = vld [vmem:[#allocation1] sm:$0xff]
        %2262 = vrot.lane.b32.xlu0 %v2260, 31
        %v2263 = vpop.permute.xlu0 %2262
        %v2264 = vrot.slane %v2263, 4
        %vm2265 = vcmask 252928
        %v2266 = vsel %vm2265, %v2264, %v2263
        %vm2268 = vcmask 1043843
        %vm2269 = vmand %vm2268, %vm390
        %vm2270 = vcmask 1014791
        %vm2271 = vmand %vm2270, %vm393
        %vm2272 = vmor %vm2271, %vm2269
        %v2273 = vld [vmem:[#allocation2 + $0x18] sm:$0x88]
        %v2274 = vsel %vm2272, %v2266, %v2273
        %2275 = vst [vmem:[#allocation2 + $0x18] sm:$0x88] %v2274
        %v2276 = vld [vmem:[%s444] sm:$0x3]
        %2278 = vst [vmem:[#allocation1] ss:$4 sm:$0xff] %v2276
        %v2279 = vld [vmem:[#allocation1] sm:$0xff]
        %v2280 = vshll.u32 %v2279, 16
        %v2282 = vrot.slane %v2280, 5
        %2283 = vrot.lane.b32.xlu0 %v2282, 31
        %v2284 = vpop.permute.xlu0 %2283
        %v2285 = vrot.slane %v2284, 4
        %v2286 = vsel %vm2265, %v2285, %v2284
        %vm2288 = vmand %vm2268, %vm411
        %vm2289 = vmand %vm2270, %vm413
        %vm2290 = vmor %vm2289, %vm2288
        %v2291 = vld [vmem:[#allocation2 + $0x18] sm:$0x88]
        %v2292 = vsel %vm2290, %v2286, %v2291
        %2293 = vst [vmem:[#allocation2 + $0x18] sm:$0x88] %v2292
        %v2294 = vld [vmem:[%s433] sm:$0x3]
        %2296 = vst [vmem:[#allocation1] ss:$4 sm:$0xff] %v2294
        %v2297 = vld [vmem:[#allocation1] sm:$0xff]
        %2299 = vrot.lane.b32.xlu0 %v2297, 30
        %v2300 = vpop.permute.xlu0 %2299
        %v2301 = vrot.slane %v2300, 4
        %vm2302 = vcmask 244736
        %v2303 = vsel %vm2302, %v2301, %v2300
        %v2305 = vld [vmem:[#allocation2 + $0x4c] sm:$0x11]
        %v2306 = vsel %vm2160, %v2303, %v2305
        %2307 = vst [vmem:[#allocation2 + $0x4c] sm:$0x11] %v2306
        %v2308 = vld [vmem:[%s266] sm:$0x3]
        %2310 = vst [vmem:[#allocation1] ss:$4 sm:$0xff] %v2308
        %v2311 = vld [vmem:[#allocation1] sm:$0xff]
        %v2312 = vshll.u32 %v2311, 16
        %2314 = vrot.lane.b32.xlu0 %v2312, 48
        %v2315 = vpop.permute.xlu0 %2314
        %v2316 = vrot.slane %v2315, 4
        %v2317 = vsel %vm2153, %v2316, %v2315
        %v2319 = vld [vmem:[#allocation2 + $0x4c] sm:$0x11]
        %v2320 = vsel %vm2177, %v2317, %v2319
        %2321 = vst [vmem:[#allocation2 + $0x4c] sm:$0x11] %v2320
        %v2322 = vld [vmem:[%s556] sm:$0x3]
        %s2324 = scalar_lea.vmem [#allocation1], 1
        %2325 = vst [vmem:[%s2324] ss:$4 sm:$0xff] %v2322
        %v2326 = vld [vmem:[#allocation1] sm:$0xff]
        %2328 = vrot.lane.b32.xlu0 %v2326, 48
        %v2329 = vpop.permute.xlu0 %2328
        %v2330 = vrot.slane %v2329, 4
        %v2331 = vsel %vm2153, %v2330, %v2329
        %v2333 = vld [vmem:[#allocation2 + $0x4c] sm:$0x22]
        %v2334 = vsel %vm2197, %v2331, %v2333
        %2335 = vst [vmem:[#allocation2 + $0x4c] sm:$0x22] %v2334
        %v2336 = vld [vmem:[%s266] sm:$0x3]
        %2338 = vst [vmem:[#allocation1] ss:$4 sm:$0xff] %v2336
        %v2339 = vld [vmem:[#allocation1] sm:$0xff]
        %v2340 = vshll.u32 %v2339, 16
        %v2342 = vrot.slane %v2340, 7
        %2343 = vrot.lane.b32.xlu0 %v2342, 47
        %v2344 = vpop.permute.xlu0 %2343
        %v2345 = vrot.slane %v2344, 4
        %v2346 = vsel %vm2190, %v2345, %v2344
        %v2348 = vld [vmem:[#allocation2 + $0x4c] sm:$0x22]
        %v2349 = vsel %vm2215, %v2346, %v2348
        %2350 = vst [vmem:[#allocation2 + $0x4c] sm:$0x22] %v2349
        %v2351 = vld [vmem:[%s582] sm:$0x3]
        %s2353 = scalar_lea.vmem [#allocation1], 2
        %2354 = vst [vmem:[%s2353] ss:$4 sm:$0xff] %v2351
        %v2355 = vld [vmem:[#allocation1] sm:$0xff]
        %2357 = vrot.lane.b32.xlu0 %v2355, 48
        %v2358 = vpop.permute.xlu0 %2357
        %v2359 = vrot.slane %v2358, 4
        %v2360 = vsel %vm2153, %v2359, %v2358
        %v2362 = vld [vmem:[#allocation2 + $0x4c] sm:$0x44]
        %v2363 = vsel %vm2234, %v2360, %v2362
        %2364 = vst [vmem:[#allocation2 + $0x4c] sm:$0x44] %v2363
        %v2365 = vld [vmem:[%s594] sm:$0x3]
        %2367 = vst [vmem:[#allocation1] ss:$4 sm:$0xff] %v2365
        %v2368 = vld [vmem:[#allocation1] sm:$0xff]
        %v2369 = vshll.u32 %v2368, 16
        %v2371 = vrot.slane %v2369, 6
        %2372 = vrot.lane.b32.xlu0 %v2371, 48
        %v2373 = vpop.permute.xlu0 %2372
        %v2374 = vrot.slane %v2373, 4
        %v2375 = vsel %vm2153, %v2374, %v2373
        %v2377 = vld [vmem:[#allocation2 + $0x4c] sm:$0x44]
        %v2378 = vsel %vm2252, %v2375, %v2377
        %2379 = vst [vmem:[#allocation2 + $0x4c] sm:$0x44] %v2378
        %v2380 = vld [vmem:[%s582] sm:$0x3]
        %s2382 = scalar_lea.vmem [#allocation1], 3
        %2383 = vst [vmem:[%s2382] ss:$4 sm:$0xff] %v2380
        %v2384 = vld [vmem:[#allocation1] sm:$0xff]
        %2386 = vrot.lane.b32.xlu0 %v2384, 47
        %v2387 = vpop.permute.xlu0 %2386
        %v2388 = vrot.slane %v2387, 4
        %v2389 = vsel %vm2190, %v2388, %v2387
        %v2391 = vld [vmem:[#allocation2 + $0x4c] sm:$0x88]
        %v2392 = vsel %vm2272, %v2389, %v2391
        %2393 = vst [vmem:[#allocation2 + $0x4c] sm:$0x88] %v2392
        %v2394 = vld [vmem:[%s266] sm:$0x3]
        %2396 = vst [vmem:[#allocation1] ss:$4 sm:$0xff] %v2394
        %v2397 = vld [vmem:[#allocation1] sm:$0xff]
        %v2398 = vshll.u32 %v2397, 16
        %v2400 = vrot.slane %v2398, 5
        %2401 = vrot.lane.b32.xlu0 %v2400, 31
        %v2402 = vpop.permute.xlu0 %2401
        %v2403 = vrot.slane %v2402, 4
        %v2404 = vsel %vm2265, %v2403, %v2402
        %v2406 = vld [vmem:[#allocation2 + $0x4c] sm:$0x88]
        %v2407 = vsel %vm2290, %v2404, %v2406
        %2408 = vst [vmem:[#allocation2 + $0x4c] sm:$0x88] %v2407
        %v2409 = vld [vmem:[%s556] sm:$0x3]
        %2411 = vst [vmem:[#allocation1] ss:$4 sm:$0xff] %v2409
        %v2412 = vld [vmem:[#allocation1] sm:$0xff]
        %2414 = vrot.lane.b32.xlu0 %v2412, 31
        %v2415 = vpop.permute.xlu0 %2414
        %v2416 = vrot.slane %v2415, 4
        %v2417 = vsel %vm2265, %v2416, %v2415
        %v2419 = vld [vmem:[#allocation2 + $0x80] sm:$0x11]
        %v2420 = vsel %vm2160, %v2417, %v2419
        %2421 = vst [vmem:[#allocation2 + $0x80] sm:$0x11] %v2420
        %v2422 = vld [vmem:[%s266] sm:$0x3]
        %2424 = vst [vmem:[#allocation1] ss:$4 sm:$0xff] %v2422
        %v2425 = vld [vmem:[#allocation1] sm:$0xff]
        %v2426 = vshll.u32 %v2425, 16
        %2428 = vrot.lane.b32.xlu0 %v2426, 30
        %v2429 = vpop.permute.xlu0 %2428
        %v2430 = vrot.slane %v2429, 4
        %v2431 = vsel %vm2302, %v2430, %v2429
        %v2433 = vld [vmem:[#allocation2 + $0x80] sm:$0x11]
        %v2434 = vsel %vm2177, %v2431, %v2433
        %2435 = vst [vmem:[#allocation2 + $0x80] sm:$0x11] %v2434
        %s2436 = scalar_lea.vmem %s266, 8
        %v2437 = vld [vmem:[%s2436] sm:$0x3]
        %s2439 = scalar_lea.vmem [#allocation1], 1
        %2440 = vst [vmem:[%s2439] ss:$4 sm:$0xff] %v2437
        %v2441 = vld [vmem:[#allocation1] sm:$0xff]
        %2443 = vrot.lane.b32.xlu0 %v2441, 48
        %v2444 = vpop.permute.xlu0 %2443
        %v2445 = vrot.slane %v2444, 4
        %v2446 = vsel %vm2153, %v2445, %v2444
        %v2448 = vld [vmem:[#allocation2 + $0x80] sm:$0x22]
        %v2449 = vsel %vm2197, %v2446, %v2448
        %2450 = vst [vmem:[#allocation2 + $0x80] sm:$0x22] %v2449
        %s2451 = scalar_lea.vmem %s266, 10
        %v2452 = vld [vmem:[%s2451] sm:$0x3]
        %2454 = vst [vmem:[#allocation1] ss:$4 sm:$0xff] %v2452
        %v2455 = vld [vmem:[#allocation1] sm:$0xff]
        %v2456 = vshll.u32 %v2455, 16
        %v2458 = vrot.slane %v2456, 7
        %2459 = vrot.lane.b32.xlu0 %v2458, 48
        %v2460 = vpop.permute.xlu0 %2459
        %v2461 = vrot.slane %v2460, 4
        %v2462 = vsel %vm2153, %v2461, %v2460
        %v2464 = vld [vmem:[#allocation2 + $0x80] sm:$0x22]
        %v2465 = vsel %vm2215, %v2462, %v2464
        %2466 = vst [vmem:[#allocation2 + $0x80] sm:$0x22] %v2465
        %v2467 = vld [vmem:[%s2436] sm:$0x3]
        %s2469 = scalar_lea.vmem [#allocation1], 2
        %2470 = vst [vmem:[%s2469] ss:$4 sm:$0xff] %v2467
        %v2471 = vld [vmem:[#allocation1] sm:$0xff]
        %2473 = vrot.lane.b32.xlu0 %v2471, 47
        %v2474 = vpop.permute.xlu0 %2473
        %v2475 = vrot.slane %v2474, 4
        %v2476 = vsel %vm2190, %v2475, %v2474
        %v2478 = vld [vmem:[#allocation2 + $0x80] sm:$0x44]
        %v2479 = vsel %vm2234, %v2476, %v2478
        %2480 = vst [vmem:[#allocation2 + $0x80] sm:$0x44] %v2479
        %s2481 = scalar_lea.vmem %s266, 12
        %v2482 = vld [vmem:[%s2481] sm:$0x3]
        %2484 = vst [vmem:[#allocation1] ss:$4 sm:$0xff] %v2482
        %v2485 = vld [vmem:[#allocation1] sm:$0xff]
        %v2486 = vshll.u32 %v2485, 16
        %v2488 = vrot.slane %v2486, 6
        %2489 = vrot.lane.b32.xlu0 %v2488, 48
        %v2490 = vpop.permute.xlu0 %2489
        %v2491 = vrot.slane %v2490, 4
        %v2492 = vsel %vm2153, %v2491, %v2490
        %v2494 = vld [vmem:[#allocation2 + $0x80] sm:$0x44]
        %v2495 = vsel %vm2252, %v2492, %v2494
        %2496 = vst [vmem:[#allocation2 + $0x80] sm:$0x44] %v2495
        %s2497 = scalar_lea.vmem %s266, 14
        %v2498 = vld [vmem:[%s2497] sm:$0x3]
        %s2500 = scalar_lea.vmem [#allocation1], 3
        %2501 = vst [vmem:[%s2500] ss:$4 sm:$0xff] %v2498
        %v2502 = vld [vmem:[#allocation1] sm:$0xff]
        %2504 = vrot.lane.b32.xlu0 %v2502, 48
        %v2505 = vpop.permute.xlu0 %2504
        %v2506 = vrot.slane %v2505, 4
        %v2507 = vsel %vm2153, %v2506, %v2505
        %v2509 = vld [vmem:[#allocation2 + $0x80] sm:$0x88]
        %v2510 = vsel %vm2272, %v2507, %v2509
        %2511 = vst [vmem:[#allocation2 + $0x80] sm:$0x88] %v2510
        %v2512 = vld [vmem:[%s2481] sm:$0x3]
        %2514 = vst [vmem:[#allocation1] ss:$4 sm:$0xff] %v2512
        %v2515 = vld [vmem:[#allocation1] sm:$0xff]
        %v2516 = vshll.u32 %v2515, 16
        %v2518 = vrot.slane %v2516, 5
        %2519 = vrot.lane.b32.xlu0 %v2518, 47
        %v2520 = vpop.permute.xlu0 %2519
        %v2521 = vrot.slane %v2520, 4
        %v2522 = vsel %vm2190, %v2521, %v2520
        %v2524 = vld [vmem:[#allocation2 + $0x80] sm:$0x88]
        %v2525 = vsel %vm2290, %v2522, %v2524
        %2526 = vst [vmem:[#allocation2 + $0x80] sm:$0x88] %v2525
        %v2527 = vld [vmem:[%s2436] sm:$0x3]
        %2529 = vst [vmem:[#allocation1] ss:$4 sm:$0xff] %v2527
        %v2530 = vld [vmem:[#allocation1] sm:$0xff]
        %2532 = vrot.lane.b32.xlu0 %v2530, 31
        %v2533 = vpop.permute.xlu0 %2532
        %v2534 = vrot.slane %v2533, 4
        %v2535 = vsel %vm2265, %v2534, %v2533
        %v2537 = vld [vmem:[#allocation2 + $0xb4] sm:$0x11]
        %v2538 = vsel %vm2160, %v2535, %v2537
        %2539 = vst [vmem:[#allocation2 + $0xb4] sm:$0x11] %v2538
        %v2540 = vld [vmem:[%s2451] sm:$0x3]
        %2542 = vst [vmem:[#allocation1] ss:$4 sm:$0xff] %v2540
        %v2543 = vld [vmem:[#allocation1] sm:$0xff]
        %v2544 = vshll.u32 %v2543, 16
        %2546 = vrot.lane.b32.xlu0 %v2544, 31
        %v2547 = vpop.permute.xlu0 %2546
        %v2548 = vrot.slane %v2547, 4
        %v2549 = vsel %vm2265, %v2548, %v2547
        %v2551 = vld [vmem:[#allocation2 + $0xb4] sm:$0x11]
        %v2552 = vsel %vm2177, %v2549, %v2551
        %2553 = vst [vmem:[#allocation2 + $0xb4] sm:$0x11] %v2552
        %v2554 = vld [vmem:[%s2436] sm:$0x3]
        %s2556 = scalar_lea.vmem [#allocation1], 1
        %2557 = vst [vmem:[%s2556] ss:$4 sm:$0xff] %v2554
        %v2558 = vld [vmem:[#allocation1] sm:$0xff]
        %2560 = vrot.lane.b32.xlu0 %v2558, 30
        %v2561 = vpop.permute.xlu0 %2560
        %v2562 = vrot.slane %v2561, 4
        %v2563 = vsel %vm2302, %v2562, %v2561
        %v2565 = vld [vmem:[#allocation2 + $0xb4] sm:$0x22]
        %v2566 = vsel %vm2197, %v2563, %v2565
        %2567 = vst [vmem:[#allocation2 + $0xb4] sm:$0x22] %v2566
        %v2568 = vld [vmem:[%s444] sm:$0x3]
        %2570 = vst [vmem:[#allocation1] ss:$4 sm:$0xff] %v2568
        %v2571 = vld [vmem:[#allocation1] sm:$0xff]
        %2573 = vrot.lane.b32.xlu0 %v2571, 124
        %v2574 = vpop.permute.xlu0 %2573
        %v2575 = vrot.slane %v2574, 4
        %vm2576 = vcmask 1014784
        %v2577 = vsel %vm2576, %v2575, %v2574
        %vm2580 = vcmask 1041376
        %vm2581 = vmand %vm2580, %vm276
        %vm2582 = vmor %vm675, %vm2581
        %v2583 = vld [vmem:[#allocation2 + $0x1c] sm:$0x11]
        %v2584 = vsel %vm2582, %v2577, %v2583
        %2585 = vst [vmem:[#allocation2 + $0x1c] sm:$0x11] %v2584
        %vm2586 = vcmask 581632
        %vm2587 = vmand %vm2586, %vm276
        %v2588 = vld [vmem:[#allocation2 + $0x24] sm:$0x1]
        %v2589 = vsel %vm2587, %v2575, %v2588
        %2590 = vst [vmem:[#allocation2 + $0x24] sm:$0x1] %v2589
        %v2591 = vld [vmem:[%s433] sm:$0x3]
        %2593 = vst [vmem:[#allocation1] ss:$4 sm:$0xff] %v2591
        %v2594 = vld [vmem:[#allocation1] sm:$0xff]
        %v2595 = vshll.u32 %v2594, 16
        %2597 = vrot.lane.b32.xlu0 %v2595, 123
        %v2598 = vpop.permute.xlu0 %2597
        %v2599 = vrot.slane %v2598, 4
        %vm2600 = vcmask 1006592
        %v2601 = vsel %vm2600, %v2599, %v2598
        %vm2604 = vmand %vm2580, %vm293
        %vm2605 = vmor %vm699, %vm2604
        %v2606 = vld [vmem:[#allocation2 + $0x1c] sm:$0x11]
        %v2607 = vsel %vm2605, %v2601, %v2606
        %2608 = vst [vmem:[#allocation2 + $0x1c] sm:$0x11] %v2607
        %vm2609 = vmand %vm2586, %vm293
        %v2610 = vld [vmem:[#allocation2 + $0x24] sm:$0x1]
        %v2611 = vsel %vm2609, %v2599, %v2610
        %2612 = vst [vmem:[#allocation2 + $0x24] sm:$0x1] %v2611
        %v2613 = vld [vmem:[%s444] sm:$0x3]
        %s2615 = scalar_lea.vmem [#allocation1], 1
        %2616 = vst [vmem:[%s2615] ss:$4 sm:$0xff] %v2613
        %v2617 = vld [vmem:[#allocation1] sm:$0xff]
        %2619 = vrot.lane.b32.xlu0 %v2617, 123
        %v2620 = vpop.permute.xlu0 %2619
        %v2621 = vrot.slane %v2620, 4
        %v2622 = vsel %vm2600, %v2621, %v2620
        %vm2625 = vcmask 1042401
        %vm2626 = vmand %vm2625, %vm314
        %vm2627 = vmor %vm723, %vm2626
        %v2628 = vld [vmem:[#allocation2 + $0x1c] sm:$0x22]
        %v2629 = vsel %vm2627, %v2622, %v2628
        %2630 = vst [vmem:[#allocation2 + $0x1c] sm:$0x22] %v2629
        %vm2631 = vcmask 582657
        %vm2632 = vmand %vm2631, %vm314
        %v2633 = vld [vmem:[#allocation2 + $0x24] sm:$0x2]
        %v2634 = vsel %vm2632, %v2621, %v2633
        %2635 = vst [vmem:[#allocation2 + $0x24] sm:$0x2] %v2634
        %v2636 = vld [vmem:[%s479] sm:$0x3]
        %2638 = vst [vmem:[#allocation1] ss:$4 sm:$0xff] %v2636
        %v2639 = vld [vmem:[#allocation1] sm:$0xff]
        %v2640 = vshll.u32 %v2639, 16
        %v2642 = vrot.slane %v2640, 7
        %2643 = vrot.lane.b32.xlu0 %v2642, 124
        %v2644 = vpop.permute.xlu0 %2643
        %v2645 = vrot.slane %v2644, 4
        %v2646 = vsel %vm2576, %v2645, %v2644
        %vm2649 = vmand %vm2625, %vm332
        %vm2650 = vmor %vm747, %vm2649
        %v2651 = vld [vmem:[#allocation2 + $0x1c] sm:$0x22]
        %v2652 = vsel %vm2650, %v2646, %v2651
        %2653 = vst [vmem:[#allocation2 + $0x1c] sm:$0x22] %v2652
        %vm2654 = vmand %vm2631, %vm332
        %v2655 = vld [vmem:[#allocation2 + $0x24] sm:$0x2]
        %v2656 = vsel %vm2654, %v2645, %v2655
        %2657 = vst [vmem:[#allocation2 + $0x24] sm:$0x2] %v2656
        %v2658 = vld [vmem:[%s469] sm:$0x3]
        %s2660 = scalar_lea.vmem [#allocation1], 2
        %2661 = vst [vmem:[%s2660] ss:$4 sm:$0xff] %v2658
        %v2662 = vld [vmem:[#allocation1] sm:$0xff]
        %2664 = vrot.lane.b32.xlu0 %v2662, 123
        %v2665 = vpop.permute.xlu0 %2664
        %v2666 = vrot.slane %v2665, 4
        %v2667 = vsel %vm2600, %v2666, %v2665
        %vm2670 = vcmask 1043426
        %vm2671 = vmand %vm2670, %vm348
        %vm2672 = vmor %vm771, %vm2671
        %v2673 = vld [vmem:[#allocation2 + $0x1c] sm:$0x44]
        %v2674 = vsel %vm2672, %v2667, %v2673
        %2675 = vst [vmem:[#allocation2 + $0x1c] sm:$0x44] %v2674
        %vm2676 = vcmask 583682
        %vm2677 = vmand %vm2676, %vm348
        %v2678 = vld [vmem:[#allocation2 + $0x24] sm:$0x4]
        %v2679 = vsel %vm2677, %v2666, %v2678
        %2680 = vst [vmem:[#allocation2 + $0x24] sm:$0x4] %v2679
        %v2681 = vld [vmem:[%s479] sm:$0x3]
        %2683 = vst [vmem:[#allocation1] ss:$4 sm:$0xff] %v2681
        %v2684 = vld [vmem:[#allocation1] sm:$0xff]
        %v2685 = vshll.u32 %v2684, 16
        %v2687 = vrot.slane %v2685, 6
        %2688 = vrot.lane.b32.xlu0 %v2687, 123
        %v2689 = vpop.permute.xlu0 %2688
        %v2690 = vrot.slane %v2689, 4
        %v2691 = vsel %vm2600, %v2690, %v2689
        %vm2694 = vmand %vm2670, %vm369
        %vm2695 = vmor %vm795, %vm2694
        %v2696 = vld [vmem:[#allocation2 + $0x1c] sm:$0x44]
        %v2697 = vsel %vm2695, %v2691, %v2696
        %2698 = vst [vmem:[#allocation2 + $0x1c] sm:$0x44] %v2697
        %vm2699 = vmand %vm2676, %vm369
        %v2700 = vld [vmem:[#allocation2 + $0x24] sm:$0x4]
        %v2701 = vsel %vm2699, %v2690, %v2700
        %2702 = vst [vmem:[#allocation2 + $0x24] sm:$0x4] %v2701
        %v2703 = vld [vmem:[%s444] sm:$0x3]
        %s2705 = scalar_lea.vmem [#allocation1], 3
        %2706 = vst [vmem:[%s2705] ss:$4 sm:$0xff] %v2703
        %v2707 = vld [vmem:[#allocation1] sm:$0xff]
        %2709 = vrot.lane.b32.xlu0 %v2707, 107
        %v2710 = vpop.permute.xlu0 %2709
        %v2711 = vrot.slane %v2710, 4
        %vm2712 = vcmask 875520
        %v2713 = vsel %vm2712, %v2711, %v2710
        %vm2716 = vcmask 1044451
        %vm2717 = vmand %vm2716, %vm390
        %vm2718 = vmor %vm820, %vm2717
        %v2719 = vld [vmem:[#allocation2 + $0x1c] sm:$0x88]
        %v2720 = vsel %vm2718, %v2713, %v2719
        %2721 = vst [vmem:[#allocation2 + $0x1c] sm:$0x88] %v2720
        %vm2722 = vcmask 584707
        %vm2723 = vmand %vm2722, %vm390
        %v2724 = vld [vmem:[#allocation2 + $0x24] sm:$0x8]
        %v2725 = vsel %vm2723, %v2711, %v2724
        %2726 = vst [vmem:[#allocation2 + $0x24] sm:$0x8] %v2725
        %v2727 = vld [vmem:[%s433] sm:$0x3]
        %2729 = vst [vmem:[#allocation1] ss:$4 sm:$0xff] %v2727
        %v2730 = vld [vmem:[#allocation1] sm:$0xff]
        %v2731 = vshll.u32 %v2730, 16
        %v2733 = vrot.slane %v2731, 5
        %2734 = vrot.lane.b32.xlu0 %v2733, 106
        %v2735 = vpop.permute.xlu0 %2734
        %v2736 = vrot.slane %v2735, 4
        %vm2737 = vcmask 867328
        %v2738 = vsel %vm2737, %v2736, %v2735
        %vm2741 = vmand %vm2716, %vm411
        %vm2742 = vmor %vm845, %vm2741
        %v2743 = vld [vmem:[#allocation2 + $0x1c] sm:$0x88]
        %v2744 = vsel %vm2742, %v2738, %v2743
        %2745 = vst [vmem:[#allocation2 + $0x1c] sm:$0x88] %v2744
        %vm2746 = vmand %vm2722, %vm411
        %v2747 = vld [vmem:[#allocation2 + $0x24] sm:$0x8]
        %v2748 = vsel %vm2746, %v2736, %v2747
        %2749 = vst [vmem:[#allocation2 + $0x24] sm:$0x8] %v2748
        %v2750 = vld [vmem:[%s444] sm:$0x3]
        %2752 = vst [vmem:[#allocation1] ss:$4 sm:$0xff] %v2750
        %v2753 = vld [vmem:[#allocation1] sm:$0xff]
        %2755 = vrot.lane.b32.xlu0 %v2753, 106
        %v2756 = vpop.permute.xlu0 %2755
        %v2757 = vrot.slane %v2756, 4
        %v2758 = vsel %vm2737, %v2757, %v2756
        %v2761 = vld [vmem:[#allocation2 + $0x50] sm:$0x11]
        %v2762 = vsel %vm2582, %v2758, %v2761
        %2763 = vst [vmem:[#allocation2 + $0x50] sm:$0x11] %v2762
        %v2764 = vld [vmem:[#allocation2 + $0x58] sm:$0x1]
        %v2765 = vsel %vm2587, %v2757, %v2764
        %2766 = vst [vmem:[#allocation2 + $0x58] sm:$0x1] %v2765
        %v2767 = vld [vmem:[%s556] sm:$0x3]
        %2769 = vst [vmem:[#allocation1] ss:$4 sm:$0xff] %v2767
        %v2770 = vld [vmem:[#allocation1] sm:$0xff]
        %v2771 = vshll.u32 %v2770, 16
        %2773 = vrot.lane.b32.xlu0 %v2771, 124
        %v2774 = vpop.permute.xlu0 %2773
        %v2775 = vrot.slane %v2774, 4
        %v2776 = vsel %vm2576, %v2775, %v2774
        %v2779 = vld [vmem:[#allocation2 + $0x50] sm:$0x11]
        %v2780 = vsel %vm2605, %v2776, %v2779
        %2781 = vst [vmem:[#allocation2 + $0x50] sm:$0x11] %v2780
        %v2782 = vld [vmem:[#allocation2 + $0x58] sm:$0x1]
        %v2783 = vsel %vm2609, %v2775, %v2782
        %2784 = vst [vmem:[#allocation2 + $0x58] sm:$0x1] %v2783
        %v2785 = vld [vmem:[%s266] sm:$0x3]
        %s2787 = scalar_lea.vmem [#allocation1], 1
        %2788 = vst [vmem:[%s2787] ss:$4 sm:$0xff] %v2785
        %v2789 = vld [vmem:[#allocation1] sm:$0xff]
        %2791 = vrot.lane.b32.xlu0 %v2789, 123
        %v2792 = vpop.permute.xlu0 %2791
        %v2793 = vrot.slane %v2792, 4
        %v2794 = vsel %vm2600, %v2793, %v2792
        %v2797 = vld [vmem:[#allocation2 + $0x50] sm:$0x22]
        %v2798 = vsel %vm2627, %v2794, %v2797
        %2799 = vst [vmem:[#allocation2 + $0x50] sm:$0x22] %v2798
        %v2800 = vld [vmem:[#allocation2 + $0x58] sm:$0x2]
        %v2801 = vsel %vm2632, %v2793, %v2800
        %2802 = vst [vmem:[#allocation2 + $0x58] sm:$0x2] %v2801
        %v2803 = vld [vmem:[%s556] sm:$0x3]
        %2805 = vst [vmem:[#allocation1] ss:$4 sm:$0xff] %v2803
        %v2806 = vld [vmem:[#allocation1] sm:$0xff]
        %v2807 = vshll.u32 %v2806, 16
        %v2809 = vrot.slane %v2807, 7
        %2810 = vrot.lane.b32.xlu0 %v2809, 123
        %v2811 = vpop.permute.xlu0 %2810
        %v2812 = vrot.slane %v2811, 4
        %v2813 = vsel %vm2600, %v2812, %v2811
        %v2816 = vld [vmem:[#allocation2 + $0x50] sm:$0x22]
        %v2817 = vsel %vm2650, %v2813, %v2816
        %2818 = vst [vmem:[#allocation2 + $0x50] sm:$0x22] %v2817
        %v2819 = vld [vmem:[#allocation2 + $0x58] sm:$0x2]
        %v2820 = vsel %vm2654, %v2812, %v2819
        %2821 = vst [vmem:[#allocation2 + $0x58] sm:$0x2] %v2820
        %v2822 = vld [vmem:[%s594] sm:$0x3]
        %s2824 = scalar_lea.vmem [#allocation1], 2
        %2825 = vst [vmem:[%s2824] ss:$4 sm:$0xff] %v2822
        %v2826 = vld [vmem:[#allocation1] sm:$0xff]
        %2828 = vrot.lane.b32.xlu0 %v2826, 124
        %v2829 = vpop.permute.xlu0 %2828
        %v2830 = vrot.slane %v2829, 4
        %v2831 = vsel %vm2576, %v2830, %v2829
        %v2834 = vld [vmem:[#allocation2 + $0x50] sm:$0x44]
        %v2835 = vsel %vm2672, %v2831, %v2834
        %2836 = vst [vmem:[#allocation2 + $0x50] sm:$0x44] %v2835
        %v2837 = vld [vmem:[#allocation2 + $0x58] sm:$0x4]
        %v2838 = vsel %vm2677, %v2830, %v2837
        %2839 = vst [vmem:[#allocation2 + $0x58] sm:$0x4] %v2838
        %v2840 = vld [vmem:[%s582] sm:$0x3]
        %2842 = vst [vmem:[#allocation1] ss:$4 sm:$0xff] %v2840
        %v2843 = vld [vmem:[#allocation1] sm:$0xff]
        %v2844 = vshll.u32 %v2843, 16
        %v2846 = vrot.slane %v2844, 6
        %2847 = vrot.lane.b32.xlu0 %v2846, 123
        %v2848 = vpop.permute.xlu0 %2847
        %v2849 = vrot.slane %v2848, 4
        %v2850 = vsel %vm2600, %v2849, %v2848
        %v2853 = vld [vmem:[#allocation2 + $0x50] sm:$0x44]
        %v2854 = vsel %vm2695, %v2850, %v2853
        %2855 = vst [vmem:[#allocation2 + $0x50] sm:$0x44] %v2854
        %v2856 = vld [vmem:[#allocation2 + $0x58] sm:$0x4]
        %v2857 = vsel %vm2699, %v2849, %v2856
        %2858 = vst [vmem:[#allocation2 + $0x58] sm:$0x4] %v2857
        %v2859 = vld [vmem:[%s594] sm:$0x3]
        %s2861 = scalar_lea.vmem [#allocation1], 3
        %2862 = vst [vmem:[%s2861] ss:$4 sm:$0xff] %v2859
        %v2863 = vld [vmem:[#allocation1] sm:$0xff]
        %2865 = vrot.lane.b32.xlu0 %v2863, 123
        %v2866 = vpop.permute.xlu0 %2865
        %v2867 = vrot.slane %v2866, 4
        %v2868 = vsel %vm2600, %v2867, %v2866
        %v2871 = vld [vmem:[#allocation2 + $0x50] sm:$0x88]
        %v2872 = vsel %vm2718, %v2868, %v2871
        %2873 = vst [vmem:[#allocation2 + $0x50] sm:$0x88] %v2872
        %v2874 = vld [vmem:[#allocation2 + $0x58] sm:$0x8]
        %v2875 = vsel %vm2723, %v2867, %v2874
        %2876 = vst [vmem:[#allocation2 + $0x58] sm:$0x8] %v2875
        %v2877 = vld [vmem:[%s556] sm:$0x3]
        %2879 = vst [vmem:[#allocation1] ss:$4 sm:$0xff] %v2877
        %v2880 = vld [vmem:[#allocation1] sm:$0xff]
        %v2881 = vshll.u32 %v2880, 16
        %v2883 = vrot.slane %v2881, 5
        %2884 = vrot.lane.b32.xlu0 %v2883, 107
        %v2885 = vpop.permute.xlu0 %2884
        %v2886 = vrot.slane %v2885, 4
        %v2887 = vsel %vm2712, %v2886, %v2885
        %v2890 = vld [vmem:[#allocation2 + $0x50] sm:$0x88]
        %v2891 = vsel %vm2742, %v2887, %v2890
        %2892 = vst [vmem:[#allocation2 + $0x50] sm:$0x88] %v2891
        %v2893 = vld [vmem:[#allocation2 + $0x58] sm:$0x8]
        %v2894 = vsel %vm2746, %v2886, %v2893
        %2895 = vst [vmem:[#allocation2 + $0x58] sm:$0x8] %v2894
        %v2896 = vld [vmem:[%s266] sm:$0x3]
        %2898 = vst [vmem:[#allocation1] ss:$4 sm:$0xff] %v2896
        %v2899 = vld [vmem:[#allocation1] sm:$0xff]
        %2901 = vrot.lane.b32.xlu0 %v2899, 106
        %v2902 = vpop.permute.xlu0 %2901
        %v2903 = vrot.slane %v2902, 4
        %v2904 = vsel %vm2737, %v2903, %v2902
        %v2907 = vld [vmem:[#allocation2 + $0x84] sm:$0x11]
        %v2908 = vsel %vm2582, %v2904, %v2907
        %2909 = vst [vmem:[#allocation2 + $0x84] sm:$0x11] %v2908
        %v2910 = vld [vmem:[#allocation2 + $0x8c] sm:$0x1]
        %v2911 = vsel %vm2587, %v2903, %v2910
        %2912 = vst [vmem:[#allocation2 + $0x8c] sm:$0x1] %v2911
        %v2913 = vld [vmem:[%s556] sm:$0x3]
        %2915 = vst [vmem:[#allocation1] ss:$4 sm:$0xff] %v2913
        %v2916 = vld [vmem:[#allocation1] sm:$0xff]
        %v2917 = vshll.u32 %v2916, 16
        %2919 = vrot.lane.b32.xlu0 %v2917, 106
        %v2920 = vpop.permute.xlu0 %2919
        %v2921 = vrot.slane %v2920, 4
        %v2922 = vsel %vm2737, %v2921, %v2920
        %v2925 = vld [vmem:[#allocation2 + $0x84] sm:$0x11]
        %v2926 = vsel %vm2605, %v2922, %v2925
        %2927 = vst [vmem:[#allocation2 + $0x84] sm:$0x11] %v2926
        %v2928 = vld [vmem:[#allocation2 + $0x8c] sm:$0x1]
        %v2929 = vsel %vm2609, %v2921, %v2928
        %2930 = vst [vmem:[#allocation2 + $0x8c] sm:$0x1] %v2929
        %v2931 = vld [vmem:[%s2451] sm:$0x3]
        %s2933 = scalar_lea.vmem [#allocation1], 1
        %2934 = vst [vmem:[%s2933] ss:$4 sm:$0xff] %v2931
        %v2935 = vld [vmem:[#allocation1] sm:$0xff]
        %2937 = vrot.lane.b32.xlu0 %v2935, 124
        %v2938 = vpop.permute.xlu0 %2937
        %v2939 = vrot.slane %v2938, 4
        %v2940 = vsel %vm2576, %v2939, %v2938
        %v2943 = vld [vmem:[#allocation2 + $0x84] sm:$0x22]
        %v2944 = vsel %vm2627, %v2940, %v2943
        %2945 = vst [vmem:[#allocation2 + $0x84] sm:$0x22] %v2944
        %v2946 = vld [vmem:[#allocation2 + $0x8c] sm:$0x2]
        %v2947 = vsel %vm2632, %v2939, %v2946
        %2948 = vst [vmem:[#allocation2 + $0x8c] sm:$0x2] %v2947
        %v2949 = vld [vmem:[%s2436] sm:$0x3]
        %2951 = vst [vmem:[#allocation1] ss:$4 sm:$0xff] %v2949
        %v2952 = vld [vmem:[#allocation1] sm:$0xff]
        %v2953 = vshll.u32 %v2952, 16
        %v2955 = vrot.slane %v2953, 7
        %2956 = vrot.lane.b32.xlu0 %v2955, 123
        %v2957 = vpop.permute.xlu0 %2956
        %v2958 = vrot.slane %v2957, 4
        %v2959 = vsel %vm2600, %v2958, %v2957
        %v2962 = vld [vmem:[#allocation2 + $0x84] sm:$0x22]
        %v2963 = vsel %vm2650, %v2959, %v2962
        %2964 = vst [vmem:[#allocation2 + $0x84] sm:$0x22] %v2963
        %v2965 = vld [vmem:[#allocation2 + $0x8c] sm:$0x2]
        %v2966 = vsel %vm2654, %v2958, %v2965
        %2967 = vst [vmem:[#allocation2 + $0x8c] sm:$0x2] %v2966
        %v2968 = vld [vmem:[%s2451] sm:$0x3]
        %s2970 = scalar_lea.vmem [#allocation1], 2
        %2971 = vst [vmem:[%s2970] ss:$4 sm:$0xff] %v2968
        %v2972 = vld [vmem:[#allocation1] sm:$0xff]
        %2974 = vrot.lane.b32.xlu0 %v2972, 123
        %v2975 = vpop.permute.xlu0 %2974
        %v2976 = vrot.slane %v2975, 4
        %v2977 = vsel %vm2600, %v2976, %v2975
        %v2980 = vld [vmem:[#allocation2 + $0x84] sm:$0x44]
        %v2981 = vsel %vm2672, %v2977, %v2980
        %2982 = vst [vmem:[#allocation2 + $0x84] sm:$0x44] %v2981
        %v2983 = vld [vmem:[#allocation2 + $0x8c] sm:$0x4]
        %v2984 = vsel %vm2677, %v2976, %v2983
        %2985 = vst [vmem:[#allocation2 + $0x8c] sm:$0x4] %v2984
        %v2986 = vld [vmem:[%s2497] sm:$0x3]
        %2988 = vst [vmem:[#allocation1] ss:$4 sm:$0xff] %v2986
        %v2989 = vld [vmem:[#allocation1] sm:$0xff]
        %v2990 = vshll.u32 %v2989, 16
        %v2992 = vrot.slane %v2990, 6
        %2993 = vrot.lane.b32.xlu0 %v2992, 124
        %v2994 = vpop.permute.xlu0 %2993
        %v2995 = vrot.slane %v2994, 4
        %v2996 = vsel %vm2576, %v2995, %v2994
        %v2999 = vld [vmem:[#allocation2 + $0x84] sm:$0x44]
        %v3000 = vsel %vm2695, %v2996, %v2999
        %3001 = vst [vmem:[#allocation2 + $0x84] sm:$0x44] %v3000
        %v3002 = vld [vmem:[#allocation2 + $0x8c] sm:$0x4]
        %v3003 = vsel %vm2699, %v2995, %v3002
        %3004 = vst [vmem:[#allocation2 + $0x8c] sm:$0x4] %v3003
        %v3005 = vld [vmem:[%s2481] sm:$0x3]
        %s3007 = scalar_lea.vmem [#allocation1], 3
        %3008 = vst [vmem:[%s3007] ss:$4 sm:$0xff] %v3005
        %v3009 = vld [vmem:[#allocation1] sm:$0xff]
        %3011 = vrot.lane.b32.xlu0 %v3009, 123
        %v3012 = vpop.permute.xlu0 %3011
        %v3013 = vrot.slane %v3012, 4
        %v3014 = vsel %vm2600, %v3013, %v3012
        %v3017 = vld [vmem:[#allocation2 + $0x84] sm:$0x88]
        %v3018 = vsel %vm2718, %v3014, %v3017
        %3019 = vst [vmem:[#allocation2 + $0x84] sm:$0x88] %v3018
        %v3020 = vld [vmem:[#allocation2 + $0x8c] sm:$0x8]
        %v3021 = vsel %vm2723, %v3013, %v3020
        %3022 = vst [vmem:[#allocation2 + $0x8c] sm:$0x8] %v3021
        %v3023 = vld [vmem:[%s2497] sm:$0x3]
        %3025 = vst [vmem:[#allocation1] ss:$4 sm:$0xff] %v3023
        %v3026 = vld [vmem:[#allocation1] sm:$0xff]
        %v3027 = vshll.u32 %v3026, 16
        %v3029 = vrot.slane %v3027, 5
        %3030 = vrot.lane.b32.xlu0 %v3029, 123
        %v3031 = vpop.permute.xlu0 %3030
        %v3032 = vrot.slane %v3031, 4
        %v3033 = vsel %vm2600, %v3032, %v3031
        %v3036 = vld [vmem:[#allocation2 + $0x84] sm:$0x88]
        %v3037 = vsel %vm2742, %v3033, %v3036
        %3038 = vst [vmem:[#allocation2 + $0x84] sm:$0x88] %v3037
        %v3039 = vld [vmem:[#allocation2 + $0x8c] sm:$0x8]
        %v3040 = vsel %vm2746, %v3032, %v3039
        %3041 = vst [vmem:[#allocation2 + $0x8c] sm:$0x8] %v3040
        %v3042 = vld [vmem:[%s2451] sm:$0x3]
        %3044 = vst [vmem:[#allocation1] ss:$4 sm:$0xff] %v3042
        %v3045 = vld [vmem:[#allocation1] sm:$0xff]
        %3047 = vrot.lane.b32.xlu0 %v3045, 107
        %v3048 = vpop.permute.xlu0 %3047
        %v3049 = vrot.slane %v3048, 4
        %v3050 = vsel %vm2712, %v3049, %v3048
        %v3053 = vld [vmem:[#allocation2 + $0xb8] sm:$0x11]
        %v3054 = vsel %vm2582, %v3050, %v3053
        %3055 = vst [vmem:[#allocation2 + $0xb8] sm:$0x11] %v3054
        %v3056 = vld [vmem:[#allocation2 + $0xc0] sm:$0x1]
        %v3057 = vsel %vm2587, %v3049, %v3056
        %3058 = vst [vmem:[#allocation2 + $0xc0] sm:$0x1] %v3057
        %v3059 = vld [vmem:[%s2436] sm:$0x3]
        %3061 = vst [vmem:[#allocation1] ss:$4 sm:$0xff] %v3059
        %v3062 = vld [vmem:[#allocation1] sm:$0xff]
        %v3063 = vshll.u32 %v3062, 16
        %3065 = vrot.lane.b32.xlu0 %v3063, 106
        %v3066 = vpop.permute.xlu0 %3065
        %v3067 = vrot.slane %v3066, 4
        %v3068 = vsel %vm2737, %v3067, %v3066
        %v3071 = vld [vmem:[#allocation2 + $0xb8] sm:$0x11]
        %v3072 = vsel %vm2605, %v3068, %v3071
        %3073 = vst [vmem:[#allocation2 + $0xb8] sm:$0x11] %v3072
        %v3074 = vld [vmem:[#allocation2 + $0xc0] sm:$0x1]
        %v3075 = vsel %vm2609, %v3067, %v3074
        %3076 = vst [vmem:[#allocation2 + $0xc0] sm:$0x1] %v3075
        %v3077 = vld [vmem:[%s2451] sm:$0x3]
        %s3079 = scalar_lea.vmem [#allocation1], 1
        %3080 = vst [vmem:[%s3079] ss:$4 sm:$0xff] %v3077
        %v3081 = vld [vmem:[#allocation1] sm:$0xff]
        %3083 = vrot.lane.b32.xlu0 %v3081, 106
        %v3084 = vpop.permute.xlu0 %3083
        %v3085 = vrot.slane %v3084, 4
        %v3086 = vsel %vm2737, %v3085, %v3084
        %v3089 = vld [vmem:[#allocation2 + $0xb8] sm:$0x22]
        %v3090 = vsel %vm2627, %v3086, %v3089
        %3091 = vst [vmem:[#allocation2 + $0xb8] sm:$0x22] %v3090
        %v3092 = vld [vmem:[#allocation2 + $0xc0] sm:$0x2]
        %v3093 = vsel %vm2632, %v3085, %v3092
        %3094 = vst [vmem:[#allocation2 + $0xc0] sm:$0x2] %v3093
        %v3095 = vld [vmem:[%s469] sm:$0x3]
        %3097 = vst [vmem:[#allocation1] ss:$4 sm:$0xff] %v3095
        %v3098 = vld [vmem:[#allocation1] sm:$0xff]
        %3100 = vrot.lane.b32.xlu0 %v3098, 72
        %v3101 = vpop.permute.xlu0 %3100
        %v3102 = vrot.slane %v3101, 4
        %vm3103 = vcmask 588800
        %v3104 = vsel %vm3103, %v3102, %v3101
        %vm3107 = vcmask 1040960
        %vm3108 = vmand %vm3107, %vm276
        %vm3109 = vmor %vm675, %vm3108
        %v3110 = vld [vmem:[#allocation2 + $0x24] sm:$0x11]
        %v3111 = vsel %vm3109, %v3104, %v3110
        %3112 = vst [vmem:[#allocation2 + $0x24] sm:$0x11] %v3111
        %vm3113 = vcmask 155648
        %vm3114 = vmand %vm3113, %vm276
        %v3115 = vld [vmem:[#allocation2 + $0x2c] sm:$0x1]
        %v3116 = vsel %vm3114, %v3102, %v3115
        %3117 = vst [vmem:[#allocation2 + $0x2c] sm:$0x1] %v3116
        %v3118 = vld [vmem:[%s479] sm:$0x3]
        %3120 = vst [vmem:[#allocation1] ss:$4 sm:$0xff] %v3118
        %v3121 = vld [vmem:[#allocation1] sm:$0xff]
        %v3122 = vshll.u32 %v3121, 16
        %3124 = vrot.lane.b32.xlu0 %v3122, 72
        %v3125 = vpop.permute.xlu0 %3124
        %v3126 = vrot.slane %v3125, 4
        %v3127 = vsel %vm3103, %v3126, %v3125
        %vm3130 = vmand %vm3107, %vm293
        %vm3131 = vmor %vm699, %vm3130
        %v3132 = vld [vmem:[#allocation2 + $0x24] sm:$0x11]
        %v3133 = vsel %vm3131, %v3127, %v3132
        %3134 = vst [vmem:[#allocation2 + $0x24] sm:$0x11] %v3133
        %vm3135 = vmand %vm3113, %vm293
        %v3136 = vld [vmem:[#allocation2 + $0x2c] sm:$0x1]
        %v3137 = vsel %vm3135, %v3126, %v3136
        %3138 = vst [vmem:[#allocation2 + $0x2c] sm:$0x1] %v3137
        %v3139 = vld [vmem:[%s469] sm:$0x3]
        %s3141 = scalar_lea.vmem [#allocation1], 1
        %3142 = vst [vmem:[%s3141] ss:$4 sm:$0xff] %v3139
        %v3143 = vld [vmem:[#allocation1] sm:$0xff]
        %3145 = vrot.lane.b32.xlu0 %v3143, 71
        %v3146 = vpop.permute.xlu0 %3145
        %v3147 = vrot.slane %v3146, 4
        %vm3148 = vcmask 580608
        %v3149 = vsel %vm3148, %v3147, %v3146
        %vm3152 = vcmask 1041985
        %vm3153 = vmand %vm3152, %vm314
        %vm3154 = vmor %vm723, %vm3153
        %v3155 = vld [vmem:[#allocation2 + $0x24] sm:$0x22]
        %v3156 = vsel %vm3154, %v3149, %v3155
        %3157 = vst [vmem:[#allocation2 + $0x24] sm:$0x22] %v3156
        %vm3158 = vcmask 156673
        %vm3159 = vmand %vm3158, %vm314
        %v3160 = vld [vmem:[#allocation2 + $0x2c] sm:$0x2]
        %v3161 = vsel %vm3159, %v3147, %v3160
        %3162 = vst [vmem:[#allocation2 + $0x2c] sm:$0x2] %v3161
        %v3163 = vld [vmem:[%s433] sm:$0x3]
        %3165 = vst [vmem:[#allocation1] ss:$4 sm:$0xff] %v3163
        %v3166 = vld [vmem:[#allocation1] sm:$0xff]
        %v3167 = vshll.u32 %v3166, 16
        %v3169 = vrot.slane %v3167, 7
        %3170 = vrot.lane.b32.xlu0 %v3169, 55
        %v3171 = vpop.permute.xlu0 %3170
        %v3172 = vrot.slane %v3171, 4
        %vm3173 = vcmask 449536
        %v3174 = vsel %vm3173, %v3172, %v3171
        %vm3177 = vmand %vm3152, %vm332
        %vm3178 = vmor %vm747, %vm3177
        %v3179 = vld [vmem:[#allocation2 + $0x24] sm:$0x22]
        %v3180 = vsel %vm3178, %v3174, %v3179
        %3181 = vst [vmem:[#allocation2 + $0x24] sm:$0x22] %v3180
        %vm3182 = vmand %vm3158, %vm332
        %v3183 = vld [vmem:[#allocation2 + $0x2c] sm:$0x2]
        %v3184 = vsel %vm3182, %v3172, %v3183
        %3185 = vst [vmem:[#allocation2 + $0x2c] sm:$0x2] %v3184
        %v3186 = vld [vmem:[%s444] sm:$0x3]
        %s3188 = scalar_lea.vmem [#allocation1], 2
        %3189 = vst [vmem:[%s3188] ss:$4 sm:$0xff] %v3186
        %v3190 = vld [vmem:[#allocation1] sm:$0xff]
        %3192 = vrot.lane.b32.xlu0 %v3190, 55
        %v3193 = vpop.permute.xlu0 %3192
        %v3194 = vrot.slane %v3193, 4
        %v3195 = vsel %vm3173, %v3194, %v3193
        %vm3198 = vcmask 1043010
        %vm3199 = vmand %vm3198, %vm348
        %vm3200 = vmor %vm771, %vm3199
        %v3201 = vld [vmem:[#allocation2 + $0x24] sm:$0x44]
        %v3202 = vsel %vm3200, %v3195, %v3201
        %3203 = vst [vmem:[#allocation2 + $0x24] sm:$0x44] %v3202
        %vm3204 = vcmask 157698
        %vm3205 = vmand %vm3204, %vm348
        %v3206 = vld [vmem:[#allocation2 + $0x2c] sm:$0x4]
        %v3207 = vsel %vm3205, %v3194, %v3206
        %3208 = vst [vmem:[#allocation2 + $0x2c] sm:$0x4] %v3207
        %v3209 = vld [vmem:[%s433] sm:$0x3]
        %3211 = vst [vmem:[#allocation1] ss:$4 sm:$0xff] %v3209
        %v3212 = vld [vmem:[#allocation1] sm:$0xff]
        %v3213 = vshll.u32 %v3212, 16
        %v3215 = vrot.slane %v3213, 6
        %3216 = vrot.lane.b32.xlu0 %v3215, 54
        %v3217 = vpop.permute.xlu0 %3216
        %v3218 = vrot.slane %v3217, 4
        %vm3219 = vcmask 441344
        %v3220 = vsel %vm3219, %v3218, %v3217
        %vm3223 = vmand %vm3198, %vm369
        %vm3224 = vmor %vm795, %vm3223
        %v3225 = vld [vmem:[#allocation2 + $0x24] sm:$0x44]
        %v3226 = vsel %vm3224, %v3220, %v3225
        %3227 = vst [vmem:[#allocation2 + $0x24] sm:$0x44] %v3226
        %vm3228 = vmand %vm3204, %vm369
        %v3229 = vld [vmem:[#allocation2 + $0x2c] sm:$0x4]
        %v3230 = vsel %vm3228, %v3218, %v3229
        %3231 = vst [vmem:[#allocation2 + $0x2c] sm:$0x4] %v3230
        %v3232 = vld [vmem:[%s469] sm:$0x3]
        %s3234 = scalar_lea.vmem [#allocation1], 3
        %3235 = vst [vmem:[%s3234] ss:$4 sm:$0xff] %v3232
        %v3236 = vld [vmem:[#allocation1] sm:$0xff]
        %3238 = vrot.lane.b32.xlu0 %v3236, 55
        %v3239 = vpop.permute.xlu0 %3238
        %v3240 = vrot.slane %v3239, 4
        %v3241 = vsel %vm3173, %v3240, %v3239
        %vm3244 = vcmask 1044035
        %vm3245 = vmand %vm3244, %vm390
        %vm3246 = vmor %vm820, %vm3245
        %v3247 = vld [vmem:[#allocation2 + $0x24] sm:$0x88]
        %v3248 = vsel %vm3246, %v3241, %v3247
        %3249 = vst [vmem:[#allocation2 + $0x24] sm:$0x88] %v3248
        %vm3250 = vcmask 158723
        %vm3251 = vmand %vm3250, %vm390
        %v3252 = vld [vmem:[#allocation2 + $0x2c] sm:$0x8]
        %v3253 = vsel %vm3251, %v3240, %v3252
        %3254 = vst [vmem:[#allocation2 + $0x2c] sm:$0x8] %v3253
        %v3255 = vld [vmem:[%s479] sm:$0x3]
        %3257 = vst [vmem:[#allocation1] ss:$4 sm:$0xff] %v3255
        %v3258 = vld [vmem:[#allocation1] sm:$0xff]
        %v3259 = vshll.u32 %v3258, 16
        %v3261 = vrot.slane %v3259, 5
        %3262 = vrot.lane.b32.xlu0 %v3261, 55
        %v3263 = vpop.permute.xlu0 %3262
        %v3264 = vrot.slane %v3263, 4
        %v3265 = vsel %vm3173, %v3264, %v3263
        %vm3268 = vmand %vm3244, %vm411
        %vm3269 = vmor %vm845, %vm3268
        %v3270 = vld [vmem:[#allocation2 + $0x24] sm:$0x88]
        %v3271 = vsel %vm3269, %v3265, %v3270
        %3272 = vst [vmem:[#allocation2 + $0x24] sm:$0x88] %v3271
        %vm3273 = vmand %vm3250, %vm411
        %v3274 = vld [vmem:[#allocation2 + $0x2c] sm:$0x8]
        %v3275 = vsel %vm3273, %v3264, %v3274
        %3276 = vst [vmem:[#allocation2 + $0x2c] sm:$0x8] %v3275
        %v3277 = vld [vmem:[%s469] sm:$0x3]
        %3279 = vst [vmem:[#allocation1] ss:$4 sm:$0xff] %v3277
        %v3280 = vld [vmem:[#allocation1] sm:$0xff]
        %3282 = vrot.lane.b32.xlu0 %v3280, 54
        %v3283 = vpop.permute.xlu0 %3282
        %v3284 = vrot.slane %v3283, 4
        %v3285 = vsel %vm3219, %v3284, %v3283
        %v3288 = vld [vmem:[#allocation2 + $0x58] sm:$0x11]
        %v3289 = vsel %vm3109, %v3285, %v3288
        %3290 = vst [vmem:[#allocation2 + $0x58] sm:$0x11] %v3289
        %v3291 = vld [vmem:[#allocation2 + $0x60] sm:$0x1]
        %v3292 = vsel %vm3114, %v3284, %v3291
        %3293 = vst [vmem:[#allocation2 + $0x60] sm:$0x1] %v3292
        %v3294 = vld [vmem:[%s582] sm:$0x3]
        %3296 = vst [vmem:[#allocation1] ss:$4 sm:$0xff] %v3294
        %v3297 = vld [vmem:[#allocation1] sm:$0xff]
        %v3298 = vshll.u32 %v3297, 16
        %3300 = vrot.lane.b32.xlu0 %v3298, 72
        %v3301 = vpop.permute.xlu0 %3300
        %v3302 = vrot.slane %v3301, 4
        %v3303 = vsel %vm3103, %v3302, %v3301
        %v3306 = vld [vmem:[#allocation2 + $0x58] sm:$0x11]
        %v3307 = vsel %vm3131, %v3303, %v3306
        %3308 = vst [vmem:[#allocation2 + $0x58] sm:$0x11] %v3307
        %v3309 = vld [vmem:[#allocation2 + $0x60] sm:$0x1]
        %v3310 = vsel %vm3135, %v3302, %v3309
        %3311 = vst [vmem:[#allocation2 + $0x60] sm:$0x1] %v3310
        %v3312 = vld [vmem:[%s594] sm:$0x3]
        %s3314 = scalar_lea.vmem [#allocation1], 1
        %3315 = vst [vmem:[%s3314] ss:$4 sm:$0xff] %v3312
        %v3316 = vld [vmem:[#allocation1] sm:$0xff]
        %3318 = vrot.lane.b32.xlu0 %v3316, 72
        %v3319 = vpop.permute.xlu0 %3318
        %v3320 = vrot.slane %v3319, 4
        %v3321 = vsel %vm3103, %v3320, %v3319
        %v3324 = vld [vmem:[#allocation2 + $0x58] sm:$0x22]
        %v3325 = vsel %vm3154, %v3321, %v3324
        %3326 = vst [vmem:[#allocation2 + $0x58] sm:$0x22] %v3325
        %v3327 = vld [vmem:[#allocation2 + $0x60] sm:$0x2]
        %v3328 = vsel %vm3159, %v3320, %v3327
        %3329 = vst [vmem:[#allocation2 + $0x60] sm:$0x2] %v3328
        %v3330 = vld [vmem:[%s582] sm:$0x3]
        %3332 = vst [vmem:[#allocation1] ss:$4 sm:$0xff] %v3330
        %v3333 = vld [vmem:[#allocation1] sm:$0xff]
        %v3334 = vshll.u32 %v3333, 16
        %v3336 = vrot.slane %v3334, 7
        %3337 = vrot.lane.b32.xlu0 %v3336, 71
        %v3338 = vpop.permute.xlu0 %3337
        %v3339 = vrot.slane %v3338, 4
        %v3340 = vsel %vm3148, %v3339, %v3338
        %v3343 = vld [vmem:[#allocation2 + $0x58] sm:$0x22]
        %v3344 = vsel %vm3178, %v3340, %v3343
        %3345 = vst [vmem:[#allocation2 + $0x58] sm:$0x22] %v3344
        %v3346 = vld [vmem:[#allocation2 + $0x60] sm:$0x2]
        %v3347 = vsel %vm3182, %v3339, %v3346
        %3348 = vst [vmem:[#allocation2 + $0x60] sm:$0x2] %v3347
        %v3349 = vld [vmem:[%s266] sm:$0x3]
        %s3351 = scalar_lea.vmem [#allocation1], 2
        %3352 = vst [vmem:[%s3351] ss:$4 sm:$0xff] %v3349
        %v3353 = vld [vmem:[#allocation1] sm:$0xff]
        %3355 = vrot.lane.b32.xlu0 %v3353, 55
        %v3356 = vpop.permute.xlu0 %3355
        %v3357 = vrot.slane %v3356, 4
        %v3358 = vsel %vm3173, %v3357, %v3356
        %v3361 = vld [vmem:[#allocation2 + $0x58] sm:$0x44]
        %v3362 = vsel %vm3200, %v3358, %v3361
        %3363 = vst [vmem:[#allocation2 + $0x58] sm:$0x44] %v3362
        %v3364 = vld [vmem:[#allocation2 + $0x60] sm:$0x4]
        %v3365 = vsel %vm3205, %v3357, %v3364
        %3366 = vst [vmem:[#allocation2 + $0x60] sm:$0x4] %v3365
        %v3367 = vld [vmem:[%s556] sm:$0x3]
        %3369 = vst [vmem:[#allocation1] ss:$4 sm:$0xff] %v3367
        %v3370 = vld [vmem:[#allocation1] sm:$0xff]
        %v3371 = vshll.u32 %v3370, 16
        %v3373 = vrot.slane %v3371, 6
        %3374 = vrot.lane.b32.xlu0 %v3373, 55
        %v3375 = vpop.permute.xlu0 %3374
        %v3376 = vrot.slane %v3375, 4
        %v3377 = vsel %vm3173, %v3376, %v3375
        %v3380 = vld [vmem:[#allocation2 + $0x58] sm:$0x44]
        %v3381 = vsel %vm3224, %v3377, %v3380
        %3382 = vst [vmem:[#allocation2 + $0x58] sm:$0x44] %v3381
        %v3383 = vld [vmem:[#allocation2 + $0x60] sm:$0x4]
        %v3384 = vsel %vm3228, %v3376, %v3383
        %3385 = vst [vmem:[#allocation2 + $0x60] sm:$0x4] %v3384
        %v3386 = vld [vmem:[%s266] sm:$0x3]
        %s3388 = scalar_lea.vmem [#allocation1], 3
        %3389 = vst [vmem:[%s3388] ss:$4 sm:$0xff] %v3386
        %v3390 = vld [vmem:[#allocation1] sm:$0xff]
        %3392 = vrot.lane.b32.xlu0 %v3390, 54
        %v3393 = vpop.permute.xlu0 %3392
        %v3394 = vrot.slane %v3393, 4
        %v3395 = vsel %vm3219, %v3394, %v3393
        %v3398 = vld [vmem:[#allocation2 + $0x58] sm:$0x88]
        %v3399 = vsel %vm3246, %v3395, %v3398
        %3400 = vst [vmem:[#allocation2 + $0x58] sm:$0x88] %v3399
        %v3401 = vld [vmem:[#allocation2 + $0x60] sm:$0x8]
        %v3402 = vsel %vm3251, %v3394, %v3401
        %3403 = vst [vmem:[#allocation2 + $0x60] sm:$0x8] %v3402
        %v3404 = vld [vmem:[%s582] sm:$0x3]
        %3406 = vst [vmem:[#allocation1] ss:$4 sm:$0xff] %v3404
        %v3407 = vld [vmem:[#allocation1] sm:$0xff]
        %v3408 = vshll.u32 %v3407, 16
        %v3410 = vrot.slane %v3408, 5
        %3411 = vrot.lane.b32.xlu0 %v3410, 55
        %v3412 = vpop.permute.xlu0 %3411
        %v3413 = vrot.slane %v3412, 4
        %v3414 = vsel %vm3173, %v3413, %v3412
        %v3417 = vld [vmem:[#allocation2 + $0x58] sm:$0x88]
        %v3418 = vsel %vm3269, %v3414, %v3417
        %3419 = vst [vmem:[#allocation2 + $0x58] sm:$0x88] %v3418
        %v3420 = vld [vmem:[#allocation2 + $0x60] sm:$0x8]
        %v3421 = vsel %vm3273, %v3413, %v3420
        %3422 = vst [vmem:[#allocation2 + $0x60] sm:$0x8] %v3421
        %v3423 = vld [vmem:[%s594] sm:$0x3]
        %3425 = vst [vmem:[#allocation1] ss:$4 sm:$0xff] %v3423
        %v3426 = vld [vmem:[#allocation1] sm:$0xff]
        %3428 = vrot.lane.b32.xlu0 %v3426, 55
        %v3429 = vpop.permute.xlu0 %3428
        %v3430 = vrot.slane %v3429, 4
        %v3431 = vsel %vm3173, %v3430, %v3429
        %v3434 = vld [vmem:[#allocation2 + $0x8c] sm:$0x11]
        %v3435 = vsel %vm3109, %v3431, %v3434
        %3436 = vst [vmem:[#allocation2 + $0x8c] sm:$0x11] %v3435
        %v3437 = vld [vmem:[#allocation2 + $0x94] sm:$0x1]
        %v3438 = vsel %vm3114, %v3430, %v3437
        %3439 = vst [vmem:[#allocation2 + $0x94] sm:$0x1] %v3438
        %v3440 = vld [vmem:[%s582] sm:$0x3]
        %3442 = vst [vmem:[#allocation1] ss:$4 sm:$0xff] %v3440
        %v3443 = vld [vmem:[#allocation1] sm:$0xff]
        %v3444 = vshll.u32 %v3443, 16
        %3446 = vrot.lane.b32.xlu0 %v3444, 54
        %v3447 = vpop.permute.xlu0 %3446
        %v3448 = vrot.slane %v3447, 4
        %v3449 = vsel %vm3219, %v3448, %v3447
        %v3452 = vld [vmem:[#allocation2 + $0x8c] sm:$0x11]
        %v3453 = vsel %vm3131, %v3449, %v3452
        %3454 = vst [vmem:[#allocation2 + $0x8c] sm:$0x11] %v3453
        %v3455 = vld [vmem:[#allocation2 + $0x94] sm:$0x1]
        %v3456 = vsel %vm3135, %v3448, %v3455
        %3457 = vst [vmem:[#allocation2 + $0x94] sm:$0x1] %v3456
        %v3458 = vld [vmem:[%s2481] sm:$0x3]
        %s3460 = scalar_lea.vmem [#allocation1], 1
        %3461 = vst [vmem:[%s3460] ss:$4 sm:$0xff] %v3458
        %v3462 = vld [vmem:[#allocation1] sm:$0xff]
        %3464 = vrot.lane.b32.xlu0 %v3462, 72
        %v3465 = vpop.permute.xlu0 %3464
        %v3466 = vrot.slane %v3465, 4
        %v3467 = vsel %vm3103, %v3466, %v3465
        %v3470 = vld [vmem:[#allocation2 + $0x8c] sm:$0x22]
        %v3471 = vsel %vm3154, %v3467, %v3470
        %3472 = vst [vmem:[#allocation2 + $0x8c] sm:$0x22] %v3471
        %v3473 = vld [vmem:[#allocation2 + $0x94] sm:$0x2]
        %v3474 = vsel %vm3159, %v3466, %v3473
        %3475 = vst [vmem:[#allocation2 + $0x94] sm:$0x2] %v3474
        %v3476 = vld [vmem:[%s2497] sm:$0x3]
        %3478 = vst [vmem:[#allocation1] ss:$4 sm:$0xff] %v3476
        %v3479 = vld [vmem:[#allocation1] sm:$0xff]
        %v3480 = vshll.u32 %v3479, 16
        %v3482 = vrot.slane %v3480, 7
        %3483 = vrot.lane.b32.xlu0 %v3482, 72
        %v3484 = vpop.permute.xlu0 %3483
        %v3485 = vrot.slane %v3484, 4
        %v3486 = vsel %vm3103, %v3485, %v3484
        %v3489 = vld [vmem:[#allocation2 + $0x8c] sm:$0x22]
        %v3490 = vsel %vm3178, %v3486, %v3489
        %3491 = vst [vmem:[#allocation2 + $0x8c] sm:$0x22] %v3490
        %v3492 = vld [vmem:[#allocation2 + $0x94] sm:$0x2]
        %v3493 = vsel %vm3182, %v3485, %v3492
        %3494 = vst [vmem:[#allocation2 + $0x94] sm:$0x2] %v3493
        %v3495 = vld [vmem:[%s2481] sm:$0x3]
        %s3497 = scalar_lea.vmem [#allocation1], 2
        %3498 = vst [vmem:[%s3497] ss:$4 sm:$0xff] %v3495
        %v3499 = vld [vmem:[#allocation1] sm:$0xff]
        %3501 = vrot.lane.b32.xlu0 %v3499, 71
        %v3502 = vpop.permute.xlu0 %3501
        %v3503 = vrot.slane %v3502, 4
        %v3504 = vsel %vm3148, %v3503, %v3502
        %v3507 = vld [vmem:[#allocation2 + $0x8c] sm:$0x44]
        %v3508 = vsel %vm3200, %v3504, %v3507
        %3509 = vst [vmem:[#allocation2 + $0x8c] sm:$0x44] %v3508
        %v3510 = vld [vmem:[#allocation2 + $0x94] sm:$0x4]
        %v3511 = vsel %vm3205, %v3503, %v3510
        %3512 = vst [vmem:[#allocation2 + $0x94] sm:$0x4] %v3511
        %v3513 = vld [vmem:[%s2436] sm:$0x3]
        %3515 = vst [vmem:[#allocation1] ss:$4 sm:$0xff] %v3513
        %v3516 = vld [vmem:[#allocation1] sm:$0xff]
        %v3517 = vshll.u32 %v3516, 16
        %v3519 = vrot.slane %v3517, 6
        %3520 = vrot.lane.b32.xlu0 %v3519, 55
        %v3521 = vpop.permute.xlu0 %3520
        %v3522 = vrot.slane %v3521, 4
        %v3523 = vsel %vm3173, %v3522, %v3521
        %v3526 = vld [vmem:[#allocation2 + $0x8c] sm:$0x44]
        %v3527 = vsel %vm3224, %v3523, %v3526
        %3528 = vst [vmem:[#allocation2 + $0x8c] sm:$0x44] %v3527
        %v3529 = vld [vmem:[#allocation2 + $0x94] sm:$0x4]
        %v3530 = vsel %vm3228, %v3522, %v3529
        %3531 = vst [vmem:[#allocation2 + $0x94] sm:$0x4] %v3530
        %v3532 = vld [vmem:[%s2451] sm:$0x3]
        %s3534 = scalar_lea.vmem [#allocation1], 3
        %3535 = vst [vmem:[%s3534] ss:$4 sm:$0xff] %v3532
        %v3536 = vld [vmem:[#allocation1] sm:$0xff]
        %3538 = vrot.lane.b32.xlu0 %v3536, 55
        %v3539 = vpop.permute.xlu0 %3538
        %v3540 = vrot.slane %v3539, 4
        %v3541 = vsel %vm3173, %v3540, %v3539
        %v3544 = vld [vmem:[#allocation2 + $0x8c] sm:$0x88]
        %v3545 = vsel %vm3246, %v3541, %v3544
        %3546 = vst [vmem:[#allocation2 + $0x8c] sm:$0x88] %v3545
        %v3547 = vld [vmem:[#allocation2 + $0x94] sm:$0x8]
        %v3548 = vsel %vm3251, %v3540, %v3547
        %3549 = vst [vmem:[#allocation2 + $0x94] sm:$0x8] %v3548
        %v3550 = vld [vmem:[%s2436] sm:$0x3]
        %3552 = vst [vmem:[#allocation1] ss:$4 sm:$0xff] %v3550
        %v3553 = vld [vmem:[#allocation1] sm:$0xff]
        %v3554 = vshll.u32 %v3553, 16
        %v3556 = vrot.slane %v3554, 5
        %3557 = vrot.lane.b32.xlu0 %v3556, 54
        %v3558 = vpop.permute.xlu0 %3557
        %v3559 = vrot.slane %v3558, 4
        %v3560 = vsel %vm3219, %v3559, %v3558
        %v3563 = vld [vmem:[#allocation2 + $0x8c] sm:$0x88]
        %v3564 = vsel %vm3269, %v3560, %v3563
        %3565 = vst [vmem:[#allocation2 + $0x8c] sm:$0x88] %v3564
        %v3566 = vld [vmem:[#allocation2 + $0x94] sm:$0x8]
        %v3567 = vsel %vm3273, %v3559, %v3566
        %3568 = vst [vmem:[#allocation2 + $0x94] sm:$0x8] %v3567
        %v3569 = vld [vmem:[%s2481] sm:$0x3]
        %3571 = vst [vmem:[#allocation1] ss:$4 sm:$0xff] %v3569
        %v3572 = vld [vmem:[#allocation1] sm:$0xff]
        %3574 = vrot.lane.b32.xlu0 %v3572, 55
        %v3575 = vpop.permute.xlu0 %3574
        %v3576 = vrot.slane %v3575, 4
        %v3577 = vsel %vm3173, %v3576, %v3575
        %v3580 = vld [vmem:[#allocation2 + $0xc0] sm:$0x11]
        %v3581 = vsel %vm3109, %v3577, %v3580
        %3582 = vst [vmem:[#allocation2 + $0xc0] sm:$0x11] %v3581
        %v3583 = vld [vmem:[#allocation2 + $0xc8] sm:$0x1]
        %v3584 = vsel %vm3114, %v3576, %v3583
        %3585 = vst [vmem:[#allocation2 + $0xc8] sm:$0x1] %v3584
        %v3586 = vld [vmem:[%s2497] sm:$0x3]
        %3588 = vst [vmem:[#allocation1] ss:$4 sm:$0xff] %v3586
        %v3589 = vld [vmem:[#allocation1] sm:$0xff]
        %v3590 = vshll.u32 %v3589, 16
        %3592 = vrot.lane.b32.xlu0 %v3590, 55
        %v3593 = vpop.permute.xlu0 %3592
        %v3594 = vrot.slane %v3593, 4
        %v3595 = vsel %vm3173, %v3594, %v3593
        %v3598 = vld [vmem:[#allocation2 + $0xc0] sm:$0x11]
        %v3599 = vsel %vm3131, %v3595, %v3598
        %3600 = vst [vmem:[#allocation2 + $0xc0] sm:$0x11] %v3599
        %v3601 = vld [vmem:[#allocation2 + $0xc8] sm:$0x1]
        %v3602 = vsel %vm3135, %v3594, %v3601
        %3603 = vst [vmem:[#allocation2 + $0xc8] sm:$0x1] %v3602
        %v3604 = vld [vmem:[%s2481] sm:$0x3]
        %s3606 = scalar_lea.vmem [#allocation1], 1
        %3607 = vst [vmem:[%s3606] ss:$4 sm:$0xff] %v3604
        %v3608 = vld [vmem:[#allocation1] sm:$0xff]
        %3610 = vrot.lane.b32.xlu0 %v3608, 54
        %v3611 = vpop.permute.xlu0 %3610
        %v3612 = vrot.slane %v3611, 4
        %v3613 = vsel %vm3219, %v3612, %v3611
        %v3616 = vld [vmem:[#allocation2 + $0xc0] sm:$0x22]
        %v3617 = vsel %vm3154, %v3613, %v3616
        %3618 = vst [vmem:[#allocation2 + $0xc0] sm:$0x22] %v3617
        %v3619 = vld [vmem:[#allocation2 + $0xc8] sm:$0x2]
        %v3620 = vsel %vm3159, %v3612, %v3619
        %3621 = vst [vmem:[#allocation2 + $0xc8] sm:$0x2] %v3620
        %v3622 = vld [vmem:[%s479] sm:$0x3]
        %3624 = vst [vmem:[#allocation1] ss:$4 sm:$0xff] %v3622
        %v3625 = vld [vmem:[#allocation1] sm:$0xff]
        %3627 = vrot.lane.b32.xlu0 %v3625, 20
        %v3628 = vpop.permute.xlu0 %3627
        %v3629 = vrot.slane %v3628, 4
        %vm3630 = vcmask 162816
        %v3631 = vsel %vm3630, %v3629, %v3628
        %vm3633 = vcmask 1040544
        %vm3634 = vmand %vm3633, %vm276
        %vm3635 = vcmask 782340
        %vm3636 = vmand %vm3635, %vm279
        %vm3637 = vmor %vm3636, %vm3634
        %v3638 = vld [vmem:[#allocation2 + $0x2c] sm:$0x11]
        %v3639 = vsel %vm3637, %v3631, %v3638
        %3640 = vst [vmem:[#allocation2 + $0x2c] sm:$0x11] %v3639
        %v3641 = vld [vmem:[%s469] sm:$0x3]
        %3643 = vst [vmem:[#allocation1] ss:$4 sm:$0xff] %v3641
        %v3644 = vld [vmem:[#allocation1] sm:$0xff]
        %v3645 = vshll.u32 %v3644, 16
        %3647 = vrot.lane.b32.xlu0 %v3645, 19
        %v3648 = vpop.permute.xlu0 %3647
        %v3649 = vrot.slane %v3648, 4
        %vm3650 = vcmask 154624
        %v3651 = vsel %vm3650, %v3649, %v3648
        %vm3653 = vmand %vm3633, %vm293
        %vm3654 = vmand %vm3635, %vm295
        %vm3655 = vmor %vm3654, %vm3653
        %v3656 = vld [vmem:[#allocation2 + $0x2c] sm:$0x11]
        %v3657 = vsel %vm3655, %v3651, %v3656
        %3658 = vst [vmem:[#allocation2 + $0x2c] sm:$0x11] %v3657
        %v3659 = vld [vmem:[%s479] sm:$0x3]
        %s3661 = scalar_lea.vmem [#allocation1], 1
        %3662 = vst [vmem:[%s3661] ss:$4 sm:$0xff] %v3659
        %v3663 = vld [vmem:[#allocation1] sm:$0xff]
        %3665 = vrot.lane.b32.xlu0 %v3663, 19
        %v3666 = vpop.permute.xlu0 %3665
        %v3667 = vrot.slane %v3666, 4
        %v3668 = vsel %vm3650, %v3667, %v3666
        %vm3670 = vcmask 1041569
        %vm3671 = vmand %vm3670, %vm314
        %vm3672 = vcmask 783365
        %vm3673 = vmand %vm3672, %vm317
        %vm3674 = vmor %vm3673, %vm3671
        %v3675 = vld [vmem:[#allocation2 + $0x2c] sm:$0x22]
        %v3676 = vsel %vm3674, %v3668, %v3675
        %3677 = vst [vmem:[#allocation2 + $0x2c] sm:$0x22] %v3676
        %v3678 = vld [vmem:[%s444] sm:$0x3]
        %3680 = vst [vmem:[#allocation1] ss:$4 sm:$0xff] %v3678
        %v3681 = vld [vmem:[#allocation1] sm:$0xff]
        %v3682 = vshll.u32 %v3681, 16
        %v3684 = vrot.slane %v3682, 7
        %3685 = vrot.lane.b32.xlu0 %v3684, 3
        %v3686 = vpop.permute.xlu0 %3685
        %v3687 = vrot.slane %v3686, 4
        %vm3688 = vcmask 23552
        %v3689 = vsel %vm3688, %v3687, %v3686
        %vm3691 = vmand %vm3670, %vm332
        %vm3692 = vmand %vm3672, %vm334
        %vm3693 = vmor %vm3692, %vm3691
        %v3694 = vld [vmem:[#allocation2 + $0x2c] sm:$0x22]
        %v3695 = vsel %vm3693, %v3689, %v3694
        %3696 = vst [vmem:[#allocation2 + $0x2c] sm:$0x22] %v3695
        %v3697 = vld [vmem:[%s433] sm:$0x3]
        %s3699 = scalar_lea.vmem [#allocation1], 2
        %3700 = vst [vmem:[%s3699] ss:$4 sm:$0xff] %v3697
        %v3701 = vld [vmem:[#allocation1] sm:$0xff]
        %3703 = vrot.lane.b32.xlu0 %v3701, 2
        %v3704 = vpop.permute.xlu0 %3703
        %v3705 = vrot.slane %v3704, 4
        %vm3706 = vcmask 15360
        %v3707 = vsel %vm3706, %v3705, %v3704
        %vm3709 = vcmask 1042594
        %vm3710 = vmand %vm3709, %vm348
        %vm3711 = vcmask 784390
        %vm3712 = vmand %vm3711, %vm351
        %vm3713 = vmor %vm3712, %vm3710
        %v3714 = vld [vmem:[#allocation2 + $0x2c] sm:$0x44]
        %v3715 = vsel %vm3713, %v3707, %v3714
        %3716 = vst [vmem:[#allocation2 + $0x2c] sm:$0x44] %v3715
        %v3717 = vld [vmem:[%s444] sm:$0x3]
        %3719 = vst [vmem:[#allocation1] ss:$4 sm:$0xff] %v3717
        %v3720 = vld [vmem:[#allocation1] sm:$0xff]
        %v3721 = vshll.u32 %v3720, 16
        %v3723 = vrot.slane %v3721, 6
        %3724 = vrot.lane.b32.xlu0 %v3723, 2
        %v3725 = vpop.permute.xlu0 %3724
        %v3726 = vrot.slane %v3725, 4
        %v3727 = vsel %vm3706, %v3726, %v3725
        %vm3729 = vmand %vm3709, %vm369
        %vm3730 = vmand %vm3711, %vm371
        %vm3731 = vmor %vm3730, %vm3729
        %v3732 = vld [vmem:[#allocation2 + $0x2c] sm:$0x44]
        %v3733 = vsel %vm3731, %v3727, %v3732
        %3734 = vst [vmem:[#allocation2 + $0x2c] sm:$0x44] %v3733
        %v3735 = vld [vmem:[%s479] sm:$0x3]
        %s3737 = scalar_lea.vmem [#allocation1], 3
        %3738 = vst [vmem:[%s3737] ss:$4 sm:$0xff] %v3735
        %v3739 = vld [vmem:[#allocation1] sm:$0xff]
        %3741 = vrot.lane.b32.xlu0 %v3739, 3
        %v3742 = vpop.permute.xlu0 %3741
        %v3743 = vrot.slane %v3742, 4
        %v3744 = vsel %vm3688, %v3743, %v3742
        %vm3746 = vcmask 1043619
        %vm3747 = vmand %vm3746, %vm390
        %vm3748 = vcmask 785415
        %vm3749 = vmand %vm3748, %vm393
        %vm3750 = vmor %vm3749, %vm3747
        %v3751 = vld [vmem:[#allocation2 + $0x2c] sm:$0x88]
        %v3752 = vsel %vm3750, %v3744, %v3751
        %3753 = vst [vmem:[#allocation2 + $0x2c] sm:$0x88] %v3752
        %v3754 = vld [vmem:[%s469] sm:$0x3]
        %3756 = vst [vmem:[#allocation1] ss:$4 sm:$0xff] %v3754
        %v3757 = vld [vmem:[#allocation1] sm:$0xff]
        %v3758 = vshll.u32 %v3757, 16
        %v3760 = vrot.slane %v3758, 5
        %3761 = vrot.lane.b32.xlu0 %v3760, 2
        %v3762 = vpop.permute.xlu0 %3761
        %v3763 = vrot.slane %v3762, 4
        %v3764 = vsel %vm3706, %v3763, %v3762
        %vm3766 = vmand %vm3746, %vm411
        %vm3767 = vmand %vm3748, %vm413
        %vm3768 = vmor %vm3767, %vm3766
        %v3769 = vld [vmem:[#allocation2 + $0x2c] sm:$0x88]
        %v3770 = vsel %vm3768, %v3764, %v3769
        %3771 = vst [vmem:[#allocation2 + $0x2c] sm:$0x88] %v3770
        %v3772 = vld [vmem:[%s479] sm:$0x3]
        %3774 = vst [vmem:[#allocation1] ss:$4 sm:$0xff] %v3772
        %v3775 = vld [vmem:[#allocation1] sm:$0xff]
        %3777 = vrot.lane.b32.xlu0 %v3775, 2
        %v3778 = vpop.permute.xlu0 %3777
        %v3779 = vrot.slane %v3778, 4
        %v3780 = vsel %vm3706, %v3779, %v3778
        %v3782 = vld [vmem:[#allocation2 + $0x60] sm:$0x11]
        %v3783 = vsel %vm3637, %v3780, %v3782
        %3784 = vst [vmem:[#allocation2 + $0x60] sm:$0x11] %v3783
        %v3785 = vld [vmem:[%s594] sm:$0x3]
        %3787 = vst [vmem:[#allocation1] ss:$4 sm:$0xff] %v3785
        %v3788 = vld [vmem:[#allocation1] sm:$0xff]
        %v3789 = vshll.u32 %v3788, 16
        %3791 = vrot.lane.b32.xlu0 %v3789, 20
        %v3792 = vpop.permute.xlu0 %3791
        %v3793 = vrot.slane %v3792, 4
        %v3794 = vsel %vm3630, %v3793, %v3792
        %v3796 = vld [vmem:[#allocation2 + $0x60] sm:$0x11]
        %v3797 = vsel %vm3655, %v3794, %v3796
        %3798 = vst [vmem:[#allocation2 + $0x60] sm:$0x11] %v3797
        %v3799 = vld [vmem:[%s582] sm:$0x3]
        %s3801 = scalar_lea.vmem [#allocation1], 1
        %3802 = vst [vmem:[%s3801] ss:$4 sm:$0xff] %v3799
        %v3803 = vld [vmem:[#allocation1] sm:$0xff]
        %3805 = vrot.lane.b32.xlu0 %v3803, 19
        %v3806 = vpop.permute.xlu0 %3805
        %v3807 = vrot.slane %v3806, 4
        %v3808 = vsel %vm3650, %v3807, %v3806
        %v3810 = vld [vmem:[#allocation2 + $0x60] sm:$0x22]
        %v3811 = vsel %vm3674, %v3808, %v3810
        %3812 = vst [vmem:[#allocation2 + $0x60] sm:$0x22] %v3811
        %v3813 = vld [vmem:[%s594] sm:$0x3]
        %3815 = vst [vmem:[#allocation1] ss:$4 sm:$0xff] %v3813
        %v3816 = vld [vmem:[#allocation1] sm:$0xff]
        %v3817 = vshll.u32 %v3816, 16
        %v3819 = vrot.slane %v3817, 7
        %3820 = vrot.lane.b32.xlu0 %v3819, 19
        %v3821 = vpop.permute.xlu0 %3820
        %v3822 = vrot.slane %v3821, 4
        %v3823 = vsel %vm3650, %v3822, %v3821
        %v3825 = vld [vmem:[#allocation2 + $0x60] sm:$0x22]
        %v3826 = vsel %vm3693, %v3823, %v3825
        %3827 = vst [vmem:[#allocation2 + $0x60] sm:$0x22] %v3826
        %v3828 = vld [vmem:[%s556] sm:$0x3]
        %s3830 = scalar_lea.vmem [#allocation1], 2
        %3831 = vst [vmem:[%s3830] ss:$4 sm:$0xff] %v3828
        %v3832 = vld [vmem:[#allocation1] sm:$0xff]
        %3834 = vrot.lane.b32.xlu0 %v3832, 3
        %v3835 = vpop.permute.xlu0 %3834
        %v3836 = vrot.slane %v3835, 4
        %v3837 = vsel %vm3688, %v3836, %v3835
        %v3839 = vld [vmem:[#allocation2 + $0x60] sm:$0x44]
        %v3840 = vsel %vm3713, %v3837, %v3839
        %3841 = vst [vmem:[#allocation2 + $0x60] sm:$0x44] %v3840
        %v3842 = vld [vmem:[%s266] sm:$0x3]
        %3844 = vst [vmem:[#allocation1] ss:$4 sm:$0xff] %v3842
        %v3845 = vld [vmem:[#allocation1] sm:$0xff]
        %v3846 = vshll.u32 %v3845, 16
        %v3848 = vrot.slane %v3846, 6
        %3849 = vrot.lane.b32.xlu0 %v3848, 2
        %v3850 = vpop.permute.xlu0 %3849
        %v3851 = vrot.slane %v3850, 4
        %v3852 = vsel %vm3706, %v3851, %v3850
        %v3854 = vld [vmem:[#allocation2 + $0x60] sm:$0x44]
        %v3855 = vsel %vm3731, %v3852, %v3854
        %3856 = vst [vmem:[#allocation2 + $0x60] sm:$0x44] %v3855
        %v3857 = vld [vmem:[%s556] sm:$0x3]
        %s3859 = scalar_lea.vmem [#allocation1], 3
        %3860 = vst [vmem:[%s3859] ss:$4 sm:$0xff] %v3857
        %v3861 = vld [vmem:[#allocation1] sm:$0xff]
        %3863 = vrot.lane.b32.xlu0 %v3861, 2
        %v3864 = vpop.permute.xlu0 %3863
        %v3865 = vrot.slane %v3864, 4
        %v3866 = vsel %vm3706, %v3865, %v3864
        %v3868 = vld [vmem:[#allocation2 + $0x60] sm:$0x88]
        %v3869 = vsel %vm3750, %v3866, %v3868
        %3870 = vst [vmem:[#allocation2 + $0x60] sm:$0x88] %v3869
        %v3871 = vld [vmem:[%s594] sm:$0x3]
        %3873 = vst [vmem:[#allocation1] ss:$4 sm:$0xff] %v3871
        %v3874 = vld [vmem:[#allocation1] sm:$0xff]
        %v3875 = vshll.u32 %v3874, 16
        %v3877 = vrot.slane %v3875, 5
        %3878 = vrot.lane.b32.xlu0 %v3877, 3
        %v3879 = vpop.permute.xlu0 %3878
        %v3880 = vrot.slane %v3879, 4
        %v3881 = vsel %vm3688, %v3880, %v3879
        %v3883 = vld [vmem:[#allocation2 + $0x60] sm:$0x88]
        %v3884 = vsel %vm3768, %v3881, %v3883
        %3885 = vst [vmem:[#allocation2 + $0x60] sm:$0x88] %v3884
        %v3886 = vld [vmem:[%s582] sm:$0x3]
        %3888 = vst [vmem:[#allocation1] ss:$4 sm:$0xff] %v3886
        %v3889 = vld [vmem:[#allocation1] sm:$0xff]
        %3891 = vrot.lane.b32.xlu0 %v3889, 2
        %v3892 = vpop.permute.xlu0 %3891
        %v3893 = vrot.slane %v3892, 4
        %v3894 = vsel %vm3706, %v3893, %v3892
        %v3896 = vld [vmem:[#allocation2 + $0x94] sm:$0x11]
        %v3897 = vsel %vm3637, %v3894, %v3896
        %3898 = vst [vmem:[#allocation2 + $0x94] sm:$0x11] %v3897
        %v3899 = vld [vmem:[%s594] sm:$0x3]
        %3901 = vst [vmem:[#allocation1] ss:$4 sm:$0xff] %v3899
        %v3902 = vld [vmem:[#allocation1] sm:$0xff]
        %v3903 = vshll.u32 %v3902, 16
        %3905 = vrot.lane.b32.xlu0 %v3903, 2
        %v3906 = vpop.permute.xlu0 %3905
        %v3907 = vrot.slane %v3906, 4
        %v3908 = vsel %vm3706, %v3907, %v3906
        %v3910 = vld [vmem:[#allocation2 + $0x94] sm:$0x11]
        %v3911 = vsel %vm3655, %v3908, %v3910
        %3912 = vst [vmem:[#allocation2 + $0x94] sm:$0x11] %v3911
        %v3913 = vld [vmem:[%s2497] sm:$0x3]
        %s3915 = scalar_lea.vmem [#allocation1], 1
        %3916 = vst [vmem:[%s3915] ss:$4 sm:$0xff] %v3913
        %v3917 = vld [vmem:[#allocation1] sm:$0xff]
        %3919 = vrot.lane.b32.xlu0 %v3917, 20
        %v3920 = vpop.permute.xlu0 %3919
        %v3921 = vrot.slane %v3920, 4
        %v3922 = vsel %vm3630, %v3921, %v3920
        %v3924 = vld [vmem:[#allocation2 + $0x94] sm:$0x22]
        %v3925 = vsel %vm3674, %v3922, %v3924
        %3926 = vst [vmem:[#allocation2 + $0x94] sm:$0x22] %v3925
        %v3927 = vld [vmem:[%s2481] sm:$0x3]
        %3929 = vst [vmem:[#allocation1] ss:$4 sm:$0xff] %v3927
        %v3930 = vld [vmem:[#allocation1] sm:$0xff]
        %v3931 = vshll.u32 %v3930, 16
        %v3933 = vrot.slane %v3931, 7
        %3934 = vrot.lane.b32.xlu0 %v3933, 19
        %v3935 = vpop.permute.xlu0 %3934
        %v3936 = vrot.slane %v3935, 4
        %v3937 = vsel %vm3650, %v3936, %v3935
        %v3939 = vld [vmem:[#allocation2 + $0x94] sm:$0x22]
        %v3940 = vsel %vm3693, %v3937, %v3939
        %3941 = vst [vmem:[#allocation2 + $0x94] sm:$0x22] %v3940
        %v3942 = vld [vmem:[%s2497] sm:$0x3]
        %s3944 = scalar_lea.vmem [#allocation1], 2
        %3945 = vst [vmem:[%s3944] ss:$4 sm:$0xff] %v3942
        %v3946 = vld [vmem:[#allocation1] sm:$0xff]
        %3948 = vrot.lane.b32.xlu0 %v3946, 19
        %v3949 = vpop.permute.xlu0 %3948
        %v3950 = vrot.slane %v3949, 4
        %v3951 = vsel %vm3650, %v3950, %v3949
        %v3953 = vld [vmem:[#allocation2 + $0x94] sm:$0x44]
        %v3954 = vsel %vm3713, %v3951, %v3953
        %3955 = vst [vmem:[#allocation2 + $0x94] sm:$0x44] %v3954
        %v3956 = vld [vmem:[%s2451] sm:$0x3]
        %3958 = vst [vmem:[#allocation1] ss:$4 sm:$0xff] %v3956
        %v3959 = vld [vmem:[#allocation1] sm:$0xff]
        %v3960 = vshll.u32 %v3959, 16
        %v3962 = vrot.slane %v3960, 6
        %3963 = vrot.lane.b32.xlu0 %v3962, 3
        %v3964 = vpop.permute.xlu0 %3963
        %v3965 = vrot.slane %v3964, 4
        %v3966 = vsel %vm3688, %v3965, %v3964
        %v3968 = vld [vmem:[#allocation2 + $0x94] sm:$0x44]
        %v3969 = vsel %vm3731, %v3966, %v3968
        %3970 = vst [vmem:[#allocation2 + $0x94] sm:$0x44] %v3969
        %v3971 = vld [vmem:[%s2436] sm:$0x3]
        %s3973 = scalar_lea.vmem [#allocation1], 3
        %3974 = vst [vmem:[%s3973] ss:$4 sm:$0xff] %v3971
        %v3975 = vld [vmem:[#allocation1] sm:$0xff]
        %3977 = vrot.lane.b32.xlu0 %v3975, 2
        %v3978 = vpop.permute.xlu0 %3977
        %v3979 = vrot.slane %v3978, 4
        %v3980 = vsel %vm3706, %v3979, %v3978
        %v3982 = vld [vmem:[#allocation2 + $0x94] sm:$0x88]
        %v3983 = vsel %vm3750, %v3980, %v3982
        %3984 = vst [vmem:[#allocation2 + $0x94] sm:$0x88] %v3983
        %v3985 = vld [vmem:[%s2451] sm:$0x3]
        %3987 = vst [vmem:[#allocation1] ss:$4 sm:$0xff] %v3985
        %v3988 = vld [vmem:[#allocation1] sm:$0xff]
        %v3989 = vshll.u32 %v3988, 16
        %v3991 = vrot.slane %v3989, 5
        %3992 = vrot.lane.b32.xlu0 %v3991, 2
        %v3993 = vpop.permute.xlu0 %3992
        %v3994 = vrot.slane %v3993, 4
        %v3995 = vsel %vm3706, %v3994, %v3993
        %v3997 = vld [vmem:[#allocation2 + $0x94] sm:$0x88]
        %v3998 = vsel %vm3768, %v3995, %v3997
        %3999 = vst [vmem:[#allocation2 + $0x94] sm:$0x88] %v3998
        %v4000 = vld [vmem:[%s2497] sm:$0x3]
        %4002 = vst [vmem:[#allocation1] ss:$4 sm:$0xff] %v4000
        %v4003 = vld [vmem:[#allocation1] sm:$0xff]
        %4005 = vrot.lane.b32.xlu0 %v4003, 3
        %v4006 = vpop.permute.xlu0 %4005
        %v4007 = vrot.slane %v4006, 4
        %v4008 = vsel %vm3688, %v4007, %v4006
        %v4010 = vld [vmem:[#allocation2 + $0xc8] sm:$0x11]
        %v4011 = vsel %vm3637, %v4008, %v4010
        %4012 = vst [vmem:[#allocation2 + $0xc8] sm:$0x11] %v4011
        %v4013 = vld [vmem:[%s2481] sm:$0x3]
        %4015 = vst [vmem:[#allocation1] ss:$4 sm:$0xff] %v4013
        %v4016 = vld [vmem:[#allocation1] sm:$0xff]
        %v4017 = vshll.u32 %v4016, 16
        %4019 = vrot.lane.b32.xlu0 %v4017, 2
        %v4020 = vpop.permute.xlu0 %4019
        %v4021 = vrot.slane %v4020, 4
        %v4022 = vsel %vm3706, %v4021, %v4020
        %v4024 = vld [vmem:[#allocation2 + $0xc8] sm:$0x11]
        %v4025 = vsel %vm3655, %v4022, %v4024
        %4026 = vst [vmem:[#allocation2 + $0xc8] sm:$0x11] %v4025
        %v4027 = vld [vmem:[%s2497] sm:$0x3]
        %s4029 = scalar_lea.vmem [#allocation1], 1
        %4030 = vst [vmem:[%s4029] ss:$4 sm:$0xff] %v4027
        %v4031 = vld [vmem:[#allocation1] sm:$0xff]
        %4033 = vrot.lane.b32.xlu0 %v4031, 2
        %v4034 = vpop.permute.xlu0 %4033
        %v4035 = vrot.slane %v4034, 4
        %v4036 = vsel %vm3706, %v4035, %v4034
        %v4038 = vld [vmem:[#allocation2 + $0xc8] sm:$0x22]
        %v4039 = vsel %vm3674, %v4036, %v4038
        %4040 = vst [vmem:[#allocation2 + $0xc8] sm:$0x22] %v4039
        %v4041 = vld [vmem:[%s2] sm:$0xf]
        %v4042 = vld [vmem:[#allocation2] sm:$0xff]
        %v4043 = vld [vmem:[#allocation2 + $0x8] sm:$0xff]
        %v4044 = vld [vmem:[#allocation2 + $0x10] sm:$0xff]
        %v4045 = vld [vmem:[#allocation2 + $0x18] sm:$0xff]
        %v4046 = vld [vmem:[#allocation2 + $0x20] sm:$0xff]
        %v4047 = vld [vmem:[#allocation2 + $0x28] sm:$0xff]
        %v4048 = vld [vmem:[#allocation2 + $0x30] sm:$0xf]
        %v4049 = vld [vmem:[#allocation2 + $0x34] sm:$0xff]
        %v4050 = vld [vmem:[#allocation2 + $0x3c] sm:$0xff]
        %v4051 = vld [vmem:[#allocation2 + $0x44] sm:$0xff]
        %v4052 = vld [vmem:[#allocation2 + $0x4c] sm:$0xff]
        %v4053 = vld [vmem:[#allocation2 + $0x54] sm:$0xff]
        %v4054 = vld [vmem:[#allocation2 + $0x5c] sm:$0xff]
        %v4055 = vld [vmem:[#allocation2 + $0x64] sm:$0xf]
        %v4056 = vld [vmem:[#allocation2 + $0x68] sm:$0xff]
        %v4057 = vld [vmem:[#allocation2 + $0x70] sm:$0xff]
        %v4058 = vld [vmem:[#allocation2 + $0x78] sm:$0xff]
        %v4059 = vld [vmem:[#allocation2 + $0x80] sm:$0xff]
        %v4060 = vld [vmem:[#allocation2 + $0x88] sm:$0xff]
        %v4061 = vld [vmem:[#allocation2 + $0x90] sm:$0xff]
        %v4062 = vld [vmem:[#allocation2 + $0x98] sm:$0xf]
        %v4063 = vld [vmem:[#allocation2 + $0x9c] sm:$0x33]
        %v4064 = vld [vmem:[#allocation2 + $0xa4] sm:$0x33]
        %v4065 = vld [vmem:[#allocation2 + $0xac] sm:$0x33]
        %v4066 = vld [vmem:[#allocation2 + $0xb4] sm:$0x33]
        %v4067 = vld [vmem:[#allocation2 + $0xbc] sm:$0x33]
        %v4068 = vld [vmem:[#allocation2 + $0xc4] sm:$0x33]
        %v4069 = vld [vmem:[#allocation2 + $0xcc] sm:$0x3]
        %v4098 = vunpack.c.l.b16 %v4042
        %v4099 = vunpack.c.h.b16 %v4042
        %v4100 = vunpack.c.l.b16 %v4043
        %v4101 = vunpack.c.h.b16 %v4043
        %v4102 = vunpack.c.l.b16 %v4044
        %v4103 = vunpack.c.h.b16 %v4044
        %v4104 = vunpack.c.l.b16 %v4045
        %v4105 = vunpack.c.h.b16 %v4045
        %v4106 = vunpack.c.l.b16 %v4046
        %v4107 = vunpack.c.h.b16 %v4046
        %v4108 = vunpack.c.l.b16 %v4047
        %v4109 = vunpack.c.h.b16 %v4047
        %v4110 = vunpack.c.l.b16 %v4048
        %v4111 = vunpack.c.l.b16 %v4049
        %v4112 = vunpack.c.h.b16 %v4049
        %v4113 = vunpack.c.l.b16 %v4050
        %v4114 = vunpack.c.h.b16 %v4050
        %v4115 = vunpack.c.l.b16 %v4051
        %v4116 = vunpack.c.h.b16 %v4051
        %v4117 = vunpack.c.l.b16 %v4052
        %v4118 = vunpack.c.h.b16 %v4052
        %v4119 = vunpack.c.l.b16 %v4053
        %v4120 = vunpack.c.h.b16 %v4053
        %v4121 = vunpack.c.l.b16 %v4054
        %v4122 = vunpack.c.h.b16 %v4054
        %v4123 = vunpack.c.l.b16 %v4055
        %v4124 = vunpack.c.l.b16 %v4056
        %v4125 = vunpack.c.h.b16 %v4056
        %v4126 = vunpack.c.l.b16 %v4057
        %v4127 = vunpack.c.h.b16 %v4057
        %v4128 = vunpack.c.l.b16 %v4058
        %v4129 = vunpack.c.h.b16 %v4058
        %v4130 = vunpack.c.l.b16 %v4059
        %v4131 = vunpack.c.h.b16 %v4059
        %v4132 = vunpack.c.l.b16 %v4060
        %v4133 = vunpack.c.h.b16 %v4060
        %v4134 = vunpack.c.l.b16 %v4061
        %v4135 = vunpack.c.h.b16 %v4061
        %v4136 = vunpack.c.l.b16 %v4062
        %v4137 = vunpack.c.l.b16 %v4063
        %v4138 = vunpack.c.h.b16 %v4063
        %v4139 = vunpack.c.l.b16 %v4064
        %v4140 = vunpack.c.h.b16 %v4064
        %v4141 = vunpack.c.l.b16 %v4065
        %v4142 = vunpack.c.h.b16 %v4065
        %v4143 = vunpack.c.l.b16 %v4066
        %v4144 = vunpack.c.h.b16 %v4066
        %v4145 = vunpack.c.l.b16 %v4067
        %v4146 = vunpack.c.h.b16 %v4067
        %v4147 = vunpack.c.l.b16 %v4068
        %v4148 = vunpack.c.h.b16 %v4068
        %v4149 = vunpack.c.l.b16 %v4069
        %v4150 = vpack.c.b16 %v4111, %v4098
        %v4151 = vpack.c.b16 %v4112, %v4099
        %v4152 = vpack.c.b16 %v4113, %v4100
        %v4153 = vpack.c.b16 %v4114, %v4101
        %v4154 = vpack.c.b16 %v4115, %v4102
        %v4155 = vpack.c.b16 %v4116, %v4103
        %v4156 = vpack.c.b16 %v4117, %v4104
        %v4157 = vpack.c.b16 %v4118, %v4105
        %v4158 = vpack.c.b16 %v4119, %v4106
        %v4159 = vpack.c.b16 %v4120, %v4107
        %v4160 = vpack.c.b16 %v4121, %v4108
        %v4161 = vpack.c.b16 %v4122, %v4109
        %v4162 = vpack.c.b16 %v4123, %v4110
        %v4163 = vpack.c.b16 %v4137, %v4124
        %v4164 = vpack.c.b16 %v4138, %v4125
        %v4165 = vpack.c.b16 %v4139, %v4126
        %v4166 = vpack.c.b16 %v4140, %v4127
        %v4167 = vpack.c.b16 %v4141, %v4128
        %v4168 = vpack.c.b16 %v4142, %v4129
        %v4169 = vpack.c.b16 %v4143, %v4130
        %v4170 = vpack.c.b16 %v4144, %v4131
        %v4171 = vpack.c.b16 %v4145, %v4132
        %v4172 = vpack.c.b16 %v4146, %v4133
        %v4173 = vpack.c.b16 %v4147, %v4134
        %v4174 = vpack.c.b16 %v4148, %v4135
        %v4175 = vpack.c.b16 %v4149, %v4136
        %vm4189 = vcmask 220160
        %v4191 = vsel %vm4189, %v4041, 0
        %vm4193 = vcmask 1044480
        %vm4194 = vcmask 1045504
        %v4195 = vsel %vm4193, 4294967295, 65535
        %v4196 = vsel %vm4194, %v4195, 0
        %v4198 = vand.u32 %v4163, %v4196
        %v4201 = vand.u32 %v4164, %v4196
        %v4204 = vand.u32 %v4165, %v4196
        %v4207 = vand.u32 %v4166, %v4196
        %v4210 = vand.u32 %v4167, %v4196
        %v4213 = vand.u32 %v4168, %v4196
        %v4216 = vand.u32 %v4169, %v4196
        %v4219 = vand.u32 %v4170, %v4196
        %v4222 = vand.u32 %v4171, %v4196
        %v4225 = vand.u32 %v4172, %v4196
        %v4228 = vand.u32 %v4173, %v4196
        %v4231 = vand.u32 %v4174, %v4196
        %v4234 = vand.u32 %v4175, %v4196
        %4236 = vmatpush.bf16.msra.mxu0 0
        %4237 = vmatpush.bf16.msra.mxu0 0
        %4238 = vmatpush.bf16.msra.mxu0 0
        %4239 = vmatpush.bf16.msra.mxu0 0
        %4240 = vmatpush.bf16.msra.mxu0 0
        %4241 = vmatpush.bf16.msra.mxu0 0
        %4242 = vmatpush.bf16.msra.mxu0 %v4198
        %4243 = vmatpush.bf16.msra.mxu0 %v4150
        %4244 = vmatmul.bf16.gmra.mxu0 %v4191
        %v4245 = vpop.f32.mrf.mxu0
        %v4246 = vadd.f32 0.0, %v4245
        %v4247 = vpop.f32.mrf.mxu0
        %4248 = vdwg.mxu0
        %4249 = vmatpush.bf16.msra.mxu0 0
        %4250 = vmatpush.bf16.msra.mxu0 0
        %4251 = vmatpush.bf16.msra.mxu0 0
        %4252 = vmatpush.bf16.msra.mxu0 0
        %4253 = vmatpush.bf16.msra.mxu0 0
        %4254 = vmatpush.bf16.msra.mxu0 0
        %4255 = vmatpush.bf16.msra.mxu0 %v4201
        %4256 = vmatpush.bf16.msra.mxu0 %v4151
        %4257 = vmatmul.bf16.gmra.mxu0 %v4191
        %v4258 = vpop.f32.mrf.mxu0
        %v4259 = vadd.f32 0.0, %v4258
        %v4260 = vpop.f32.mrf.mxu0
        %4261 = vdwg.mxu0
        %4262 = vmatpush.bf16.msra.mxu0 0
        %4263 = vmatpush.bf16.msra.mxu0 0
        %4264 = vmatpush.bf16.msra.mxu0 0
        %4265 = vmatpush.bf16.msra.mxu0 0
        %4266 = vmatpush.bf16.msra.mxu0 0
        %4267 = vmatpush.bf16.msra.mxu0 0
        %4268 = vmatpush.bf16.msra.mxu0 %v4204
        %4269 = vmatpush.bf16.msra.mxu0 %v4152
        %4270 = vmatmul.bf16.gmra.mxu0 %v4191
        %v4271 = vpop.f32.mrf.mxu0
        %v4272 = vadd.f32 0.0, %v4271
        %v4273 = vpop.f32.mrf.mxu0
        %4274 = vdwg.mxu0
        %4275 = vmatpush.bf16.msra.mxu0 0
        %4276 = vmatpush.bf16.msra.mxu0 0
        %4277 = vmatpush.bf16.msra.mxu0 0
        %4278 = vmatpush.bf16.msra.mxu0 0
        %4279 = vmatpush.bf16.msra.mxu0 0
        %4280 = vmatpush.bf16.msra.mxu0 0
        %4281 = vmatpush.bf16.msra.mxu0 %v4207
        %4282 = vmatpush.bf16.msra.mxu0 %v4153
        %4283 = vmatmul.bf16.gmra.mxu0 %v4191
        %v4284 = vpop.f32.mrf.mxu0
        %v4285 = vadd.f32 0.0, %v4284
        %v4286 = vpop.f32.mrf.mxu0
        %4287 = vdwg.mxu0
        %4288 = vmatpush.bf16.msra.mxu0 0
        %4289 = vmatpush.bf16.msra.mxu0 0
        %4290 = vmatpush.bf16.msra.mxu0 0
        %4291 = vmatpush.bf16.msra.mxu0 0
        %4292 = vmatpush.bf16.msra.mxu0 0
        %4293 = vmatpush.bf16.msra.mxu0 0
        %4294 = vmatpush.bf16.msra.mxu0 %v4210
        %4295 = vmatpush.bf16.msra.mxu0 %v4154
        %4296 = vmatmul.bf16.gmra.mxu0 %v4191
        %v4297 = vpop.f32.mrf.mxu0
        %v4298 = vadd.f32 0.0, %v4297
        %v4299 = vpop.f32.mrf.mxu0
        %4300 = vdwg.mxu0
        %4301 = vmatpush.bf16.msra.mxu0 0
        %4302 = vmatpush.bf16.msra.mxu0 0
        %4303 = vmatpush.bf16.msra.mxu0 0
        %4304 = vmatpush.bf16.msra.mxu0 0
        %4305 = vmatpush.bf16.msra.mxu0 0
        %4306 = vmatpush.bf16.msra.mxu0 0
        %4307 = vmatpush.bf16.msra.mxu0 %v4213
        %4308 = vmatpush.bf16.msra.mxu0 %v4155
        %4309 = vmatmul.bf16.gmra.mxu0 %v4191
        %v4310 = vpop.f32.mrf.mxu0
        %v4311 = vadd.f32 0.0, %v4310
        %v4312 = vpop.f32.mrf.mxu0
        %4313 = vdwg.mxu0
        %4314 = vmatpush.bf16.msra.mxu0 0
        %4315 = vmatpush.bf16.msra.mxu0 0
        %4316 = vmatpush.bf16.msra.mxu0 0
        %4317 = vmatpush.bf16.msra.mxu0 0
        %4318 = vmatpush.bf16.msra.mxu0 0
        %4319 = vmatpush.bf16.msra.mxu0 0
        %4320 = vmatpush.bf16.msra.mxu0 %v4216
        %4321 = vmatpush.bf16.msra.mxu0 %v4156
        %4322 = vmatmul.bf16.gmra.mxu0 %v4191
        %v4323 = vpop.f32.mrf.mxu0
        %v4324 = vadd.f32 0.0, %v4323
        %v4325 = vpop.f32.mrf.mxu0
        %4326 = vdwg.mxu0
        %4327 = vmatpush.bf16.msra.mxu0 0
        %4328 = vmatpush.bf16.msra.mxu0 0
        %4329 = vmatpush.bf16.msra.mxu0 0
        %4330 = vmatpush.bf16.msra.mxu0 0
        %4331 = vmatpush.bf16.msra.mxu0 0
        %4332 = vmatpush.bf16.msra.mxu0 0
        %4333 = vmatpush.bf16.msra.mxu0 %v4219
        %4334 = vmatpush.bf16.msra.mxu0 %v4157
        %4335 = vmatmul.bf16.gmra.mxu0 %v4191
        %v4336 = vpop.f32.mrf.mxu0
        %v4337 = vadd.f32 0.0, %v4336
        %v4338 = vpop.f32.mrf.mxu0
        %4339 = vdwg.mxu0
        %4340 = vmatpush.bf16.msra.mxu0 0
        %4341 = vmatpush.bf16.msra.mxu0 0
        %4342 = vmatpush.bf16.msra.mxu0 0
        %4343 = vmatpush.bf16.msra.mxu0 0
        %4344 = vmatpush.bf16.msra.mxu0 0
        %4345 = vmatpush.bf16.msra.mxu0 0
        %4346 = vmatpush.bf16.msra.mxu0 %v4222
        %4347 = vmatpush.bf16.msra.mxu0 %v4158
        %4348 = vmatmul.bf16.gmra.mxu0 %v4191
        %v4349 = vpop.f32.mrf.mxu0
        %v4350 = vadd.f32 0.0, %v4349
        %v4351 = vpop.f32.mrf.mxu0
        %4352 = vdwg.mxu0
        %4353 = vmatpush.bf16.msra.mxu0 0
        %4354 = vmatpush.bf16.msra.mxu0 0
        %4355 = vmatpush.bf16.msra.mxu0 0
        %4356 = vmatpush.bf16.msra.mxu0 0
        %4357 = vmatpush.bf16.msra.mxu0 0
        %4358 = vmatpush.bf16.msra.mxu0 0
        %4359 = vmatpush.bf16.msra.mxu0 %v4225
        %4360 = vmatpush.bf16.msra.mxu0 %v4159
        %4361 = vmatmul.bf16.gmra.mxu0 %v4191
        %v4362 = vpop.f32.mrf.mxu0
        %v4363 = vadd.f32 0.0, %v4362
        %v4364 = vpop.f32.mrf.mxu0
        %4365 = vdwg.mxu0
        %4366 = vmatpush.bf16.msra.mxu0 0
        %4367 = vmatpush.bf16.msra.mxu0 0
        %4368 = vmatpush.bf16.msra.mxu0 0
        %4369 = vmatpush.bf16.msra.mxu0 0
        %4370 = vmatpush.bf16.msra.mxu0 0
        %4371 = vmatpush.bf16.msra.mxu0 0
        %4372 = vmatpush.bf16.msra.mxu0 %v4228
        %4373 = vmatpush.bf16.msra.mxu0 %v4160
        %4374 = vmatmul.bf16.gmra.mxu0 %v4191
        %v4375 = vpop.f32.mrf.mxu0
        %v4376 = vadd.f32 0.0, %v4375
        %v4377 = vpop.f32.mrf.mxu0
        %4378 = vdwg.mxu0
        %4379 = vmatpush.bf16.msra.mxu0 0
        %4380 = vmatpush.bf16.msra.mxu0 0
        %4381 = vmatpush.bf16.msra.mxu0 0
        %4382 = vmatpush.bf16.msra.mxu0 0
        %4383 = vmatpush.bf16.msra.mxu0 0
        %4384 = vmatpush.bf16.msra.mxu0 0
        %4385 = vmatpush.bf16.msra.mxu0 %v4231
        %4386 = vmatpush.bf16.msra.mxu0 %v4161
        %4387 = vmatmul.bf16.gmra.mxu0 %v4191
        %v4388 = vpop.f32.mrf.mxu0
        %v4389 = vadd.f32 0.0, %v4388
        %v4390 = vpop.f32.mrf.mxu0
        %4391 = vdwg.mxu0
        %4392 = vmatpush.bf16.msra.mxu0 0
        %4393 = vmatpush.bf16.msra.mxu0 0
        %4394 = vmatpush.bf16.msra.mxu0 0
        %4395 = vmatpush.bf16.msra.mxu0 0
        %4396 = vmatpush.bf16.msra.mxu0 0
        %4397 = vmatpush.bf16.msra.mxu0 0
        %4398 = vmatpush.bf16.msra.mxu0 %v4234
        %4399 = vmatpush.bf16.msra.mxu0 %v4162
        %4400 = vmatmul.bf16.gmra.mxu0 %v4191
        %v4401 = vpop.f32.mrf.mxu0
        %v4402 = vadd.f32 0.0, %v4401
        %v4403 = vpop.f32.mrf.mxu0
        %4404 = vdwg.mxu0
        %4408 = vrot.lane.b32.xlu0 %v4259, 52
        %v4409 = vpop.permute.xlu0 %4408
        %4410 = vrot.lane.b32.xlu0 %v4272, 52
        %v4411 = vpop.permute.xlu0 %4410
        %4412 = vrot.lane.b32.xlu0 %v4285, 52
        %v4413 = vpop.permute.xlu0 %4412
        %vm4414 = vcmask 424960
        %v4415 = vsel %vm4414, %v4409, %v4411
        %v4416 = vsel %vm4414, %v4411, %v4413
        %v4419 = vmax.f32 %v4246, %v4415
        %v4420 = vmax.f32 %v4259, %v4416
        %4422 = vrot.lane.b32.xlu0 %v4285, 104
        %v4423 = vpop.permute.xlu0 %4422
        %4424 = vrot.lane.b32.xlu0 %v4298, 104
        %v4425 = vpop.permute.xlu0 %4424
        %vm4426 = vcmask 850944
        %v4427 = vsel %vm4426, %v4423, %v4425
        %v4430 = vmax.f32 %v4419, %v4427
        %v4431 = vmax.f32 %v4420, %v4425
        %4434 = vrot.lane.b32.xlu0 %v4298, 28
        %v4435 = vpop.permute.xlu0 %4434
        %4436 = vrot.lane.b32.xlu0 %v4311, 28
        %v4437 = vpop.permute.xlu0 %4436
        %4438 = vrot.lane.b32.xlu0 %v4324, 28
        %v4439 = vpop.permute.xlu0 %4438
        %vm4440 = vcmask 228352
        %v4441 = vsel %vm4440, %v4435, %v4437
        %v4442 = vsel %vm4440, %v4437, %v4439
        %v4445 = vmax.f32 %v4430, %v4441
        %v4446 = vmax.f32 %v4431, %v4442
        %4448 = vrot.lane.b32.xlu0 %v4324, 80
        %v4449 = vpop.permute.xlu0 %4448
        %4450 = vrot.lane.b32.xlu0 %v4337, 80
        %v4451 = vpop.permute.xlu0 %4450
        %vm4452 = vcmask 654336
        %v4453 = vsel %vm4452, %v4449, %v4451
        %v4456 = vmax.f32 %v4445, %v4453
        %v4457 = vmax.f32 %v4446, %v4451
        %4460 = vrot.lane.b32.xlu0 %v4337, 4
        %v4461 = vpop.permute.xlu0 %4460
        %4462 = vrot.lane.b32.xlu0 %v4350, 4
        %v4463 = vpop.permute.xlu0 %4462
        %4464 = vrot.lane.b32.xlu0 %v4363, 4
        %v4465 = vpop.permute.xlu0 %4464
        %vm4466 = vcmask 31744
        %v4467 = vsel %vm4466, %v4461, %v4463
        %v4468 = vsel %vm4466, %v4463, %v4465
        %v4471 = vmax.f32 %v4456, %v4467
        %v4472 = vmax.f32 %v4457, %v4468
        %4475 = vrot.lane.b32.xlu0 %v4363, 56
        %v4476 = vpop.permute.xlu0 %4475
        %4477 = vrot.lane.b32.xlu0 %v4376, 56
        %v4478 = vpop.permute.xlu0 %4477
        %4479 = vrot.lane.b32.xlu0 %v4389, 56
        %v4480 = vpop.permute.xlu0 %4479
        %vm4481 = vcmask 457728
        %v4482 = vsel %vm4481, %v4476, %v4478
        %v4483 = vsel %vm4481, %v4478, %v4480
        %v4486 = vmax.f32 %v4471, %v4482
        %v4487 = vmax.f32 %v4472, %v4483
        %4489 = vrot.lane.b32.xlu0 %v4389, 108
        %v4490 = vpop.permute.xlu0 %4489
        %4491 = vrot.lane.b32.xlu0 %v4402, 108
        %v4492 = vpop.permute.xlu0 %4491
        %vm4493 = vcmask 883712
        %v4494 = vsel %vm4493, %v4490, %v4492
        %v4497 = vmax.f32 %v4486, %v4494
        %v4498 = vmax.f32 %v4487, %v4492
        %v4499 = vld [vmem:[%s3] sm:$0xff]
        %4501 = vset.pattern.permute.xlu0 0
        %4502 = vperm.xlu0 %4501, %v4499
        %v4503 = vpop.permute.xlu0 %4502
        %v4505 = vadd.f32 %v4497, %v4503
        %v4506 = vadd.f32 %v4498, %v4503
        %v4507 = vmax.f32 %v4505, 0.0
        %v4508 = vmax.f32 %v4506, 0.0
        %v4509 = vpack.c.bf16 %v4508, %v4507
        %vm4510 = vcmask 1043456
        %vm4511 = vcmask 621572
        %vm4512 = vmor %vm4511, %vm4510
        %4513 = vst.msk [vmem:[%s246] sm:$0xff] %vm4512, %v4509
        %s4514 = sand.u32 %s140, 1
        %s4515 = scalar_lea.sflag [#allocation4], %s4514
        %s4516 = sand.u32 %s140, 1
        %s4517 = smul.addr %s4516, 8
        %s4518 = scalar_lea.vmem [#allocation3], %s4517
        // Predicated region
        $region37: #{tpu_custom_call.1} parent=35 // pred_check
          %p4519 = pneg %p150
        $region38: #{tpu_custom_call.1} parent=35 // pred_check_branch
          %4521 = sbr.rel (%p4519) target = $region40
        $region39: #{tpu_custom_call.1} parent=35 // pred_region
          %4523 = vsyncadd %s4515, 0
          %s4524 = smul.addr %s23, 2
          %s4525 = smul.addr %s22, 20
          %s4526 = sadd.s32 %s4524, %s4525
          %s4527 = smul.addr %s4526, 4
          %s4528 = scalar_lea.hbm %s4, %s4527
          %s4530 = sshll.u32 %s4518, 4
          %s4531 = int_to_ptr.vmem [resolvable:$true] %s4530
          %s4532 = sshll.u32 %s4528, 4
          %s4533 = int_to_ptr.hbm [resolvable:$true] %s4532
          %4535 = dma.vmem_to_hbm [thread:$0]  %s4531, 128, %s4533, %s4515
        $region40: #{tpu_custom_call.1} parent=35 // pred_fallthru
          _
      $region36: #{tpu_custom_call.1} parent=5 // pred_fallthru
        _
      %p4536 = scmp.le.s32.totalorder 2, %s13
      // Predicated region
      $region41: #{tpu_custom_call.1} parent=5 // pred_check
        %p4537 = pneg %p4536
      $region42: #{tpu_custom_call.1} parent=5 // pred_check_branch
        %4539 = sbr.rel (%p4537) target = $region44
      $region43: #{tpu_custom_call.1} parent=5 // pred_region
        %s4540 = ssub.s32 %s13, 2
        // Predicated region
        $region45: #{tpu_custom_call.1} parent=43 // pred_check
          %p4541 = pneg %p156
        $region46: #{tpu_custom_call.1} parent=43 // pred_check_branch
          %4543 = sbr.rel (%p4541) target = $region48
        $region47: #{tpu_custom_call.1} parent=43 // pred_region
          %s4544 = sand.u32 %s141, 1
          %s4545 = scalar_lea.sflag [#allocation4], %s4544
          %s4546 = sand.u32 %s141, 1
          %s4547 = smul.addr %s4546, 8
          %s4548 = scalar_lea.vmem [#allocation3], %s4547
          %4550 = dma.done %s4545, 128
        $region48: #{tpu_custom_call.1} parent=43 // pred_fallthru
          _
      $region44: #{tpu_custom_call.1} parent=5 // pred_fallthru
        _
    $region6: #{tpu_custom_call.1} parent=1 // loop_footer
      %s17 = sadd.s32 1, %s13
    $region7: #{tpu_custom_call.1} parent=1 // loop_footer_branch
      %12 = sbr.rel target = $region3
    $region8: #{tpu_custom_call.1} parent=1 // loop_exit
      _
    %4551 = vsyncpa [#allocation4], 1
    %s4552 = scalar_lea.sflag [#allocation4], 1
    %4553 = vsyncpa %s4552, 1

</llo_original>
